<compile_context>
chip_gen: v7x
topology: tpu7x:2x2x1
jax: 0.10.0
libtpu: 0.0.40
codegen_flags: <defaults>
</compile_context>

<pallas_src>
import functools
import math

import jax
import jax.numpy as jnp
from jax import lax
from jax.experimental import pallas as pl
from jax.experimental.pallas import tpu as pltpu

EMBED_DIM = 256   # AttentionBlock default
NUM_HEADS = 8     # AttentionBlock default
EPS = 1e-5        # torch GroupNorm / LayerNorm default


# ---------------------------------------------------------------------------
# in-kernel 3x3 conv (stride 1, pad 1) on a channels-major flattened tile
# ---------------------------------------------------------------------------
def _conv3x3_taps(x, w9_ref, H, W):
    """x: (Cin, H*W) f32.  w9_ref: VMEM ref (9, Cout, Cin), tap t = ky*3+kx.
    Returns (Cout, H*W) f32.  Shifts are lane rolls + boundary masks."""
    HW = H * W
    idx = lax.broadcasted_iota(jnp.int32, (1, HW), 1)
    if W & (W - 1) == 0:
        col = idx & (W - 1)
    else:
        # TODO(synk): non power-of-two W falls back to a vector remainder.
        col = idx % W
    cout = w9_ref.shape[1]
    acc = jnp.zeros((cout, HW), jnp.float32)
    t = 0
    for dy in (-1, 0, 1):
        for dx in (-1, 0, 1):
            shift = dy * W + dx
            tap = x if shift == 0 else pltpu.roll(x, (-shift) % HW, axis=1)
            conds = []
            if dy < 0:
                conds.append(idx >= W)            # y - 1 >= 0
            if dy > 0:
                conds.append(idx < HW - W)        # y + 1 <  H
            if dx < 0:
                conds.append(col >= 1)            # x - 1 >= 0
            if dx > 0:
                conds.append(col < W - 1)         # x + 1 <  W
            if conds:
                ok = conds[0]
                for c in conds[1:]:
                    ok = ok & c
                tap = tap * jnp.where(ok, 1.0, 0.0)
            acc = acc + jnp.dot(w9_ref[t], tap,
                                preferred_element_type=jnp.float32)
            t += 1
    return acc


# ---------------------------------------------------------------------------
# kernel A: GroupNorm(8) + SpatialAttention (stats + conv + sigmoid)
#           + ChannelAttention, fused, grid over batch
# ---------------------------------------------------------------------------
def _pre_kernel(x_ref, g1_ref, b1_ref, saw_ref, w1_ref, w2_ref,
                xg_ref, sa_ref, ca_ref, *, num_groups, H, W):
    x = x_ref[0]                                        # (C, HW)
    C, HW = x.shape
    cg = C // num_groups
    # GroupNorm(num_groups)
    if cg == 1:                                         # each group = one channel row
        mu = jnp.sum(x, axis=1, keepdims=True) / HW
        d = x - mu
        var = jnp.sum(d * d, axis=1, keepdims=True) / HW
        xn = d * lax.rsqrt(var + EPS)
    else:
        xr = x.reshape(num_groups, cg * HW)
        mu = jnp.sum(xr, axis=1, keepdims=True) / (cg * HW)
        d = xr - mu
        var = jnp.sum(d * d, axis=1, keepdims=True) / (cg * HW)
        xn = (d * lax.rsqrt(var + EPS)).reshape(C, HW)
    xg = xn * g1_ref[...] + b1_ref[...]
    xg_ref[0] = xg
    # SpatialAttention: [min, mean, max] over channels -> conv3x3 -> sigmoid
    mn = jnp.min(xg, axis=0, keepdims=True)
    av = jnp.sum(xg, axis=0, keepdims=True) / C
    mx = jnp.max(xg, axis=0, keepdims=True)
    stats = jnp.concatenate([mn, av, mx], axis=0)       # (3, HW), torch order
    sa = _conv3x3_taps(stats, saw_ref, H, W)            # (1, HW)
    sa_ref[0] = 1.0 / (1.0 + jnp.exp(-sa))
    # ChannelAttention: GAP -> FC + ReLU -> FC + sigmoid -> scale
    pooled = jnp.sum(xg, axis=1, keepdims=True) / HW    # (C, 1)
    hid = jnp.maximum(
        jnp.dot(w1_ref[...], pooled, preferred_element_type=jnp.float32), 0.0)
    gate = jnp.dot(w2_ref[...], hid, preferred_element_type=jnp.float32)
    gate = 1.0 / (1.0 + jnp.exp(-gate))                 # (C, 1)
    ca_ref[0] = xg * gate


# ---------------------------------------------------------------------------
# kernel B: whole PBMSA in one step (embed -> QKV -> MHA over batch axis
#           per torch default batch_first=False -> out proj -> restore)
# ---------------------------------------------------------------------------
def _pbmsa_kernel(p_ref, pew_ref, peb_ref, inw_ref, inb_ref,
                  ow_ref, ob_ref, rw_ref, rb_ref, mh_ref, mht_ref,
                  o_ref, *, batch, num_heads):
    BP, _ = p_ref.shape
    E = pew_ref.shape[1]
    P = BP // batch
    dh = E // num_heads
    scale = 1.0 / math.sqrt(dh)

    def mm(a, w_ref, b_ref):                            # bf16 MXU, f32 accumulate
        r = jnp.dot(a.astype(jnp.bfloat16), w_ref[...],
                    preferred_element_type=jnp.float32)
        return r + b_ref[...]

    emb = mm(p_ref[...], pew_ref, peb_ref)              # (BP, E)
    qkv = mm(emb, inw_ref, inb_ref)                     # (BP, 3E)
    q = qkv[:, :E]
    k = qkv[:, E:2 * E]
    v = qkv[:, 2 * E:]
    mh = mh_ref[...]                                    # (E, heads) 0/1 head mask
    mht = mht_ref[...]                                  # (heads, E)
    qs = [q[i * P:(i + 1) * P, :] for i in range(batch)]
    ks = [k[i * P:(i + 1) * P, :] for i in range(batch)]
    vs = [v[i * P:(i + 1) * P, :] for i in range(batch)]
    for i in range(batch):
        # s[j][p, h] = <q_i[p, head h], k_j[p, head h]> * scale
        s = [jnp.dot(qs[i] * ks[j], mh,
                     preferred_element_type=jnp.float32) * scale
             for j in range(batch)]
        m = s[0]
        for sj in s[1:]:
            m = jnp.maximum(m, sj)
        e = [jnp.exp(sj - m) for sj in s]
        den = e[0]
        for ej in e[1:]:
            den = den + ej
        inv = 1.0 / den
        attn = None
        for j in range(batch):
            w = jnp.dot(e[j] * inv, mht,
                        preferred_element_type=jnp.float32)  # broadcast p over head lanes
            c = w * vs[j]
            attn = c if attn is None else attn + c
        proj = mm(attn, ow_ref, ob_ref)                 # (P, E)
        rest = mm(proj, rw_ref, rb_ref)                 # (P, pdim)
        o_ref[pl.ds(i * P, P), :] = rest


# ---------------------------------------------------------------------------
# kernel C: conv3x3 (1+2C -> C) + bias fused with LayerNorm([C,H,W])
# ---------------------------------------------------------------------------
def _conv_ln_kernel(h_ref, w9_ref, cb_ref, lg_ref, lb_ref, o_ref, *, H, W):
    h = h_ref[0]                                        # (1+2C, HW)
    y = _conv3x3_taps(h, w9_ref, H, W) + cb_ref[...]    # (C, HW)
    n = y.shape[0] * y.shape[1]
    mu = jnp.sum(jnp.sum(y, axis=1, keepdims=True), axis=0, keepdims=True) / n
    d = y - mu
    var = jnp.sum(jnp.sum(d * d, axis=1, keepdims=True),
                  axis=0, keepdims=True) / n
    o_ref[0] = d * lax.rsqrt(var + EPS) * lg_ref[...] + lb_ref[...]


# ---------------------------------------------------------------------------
# wrappers
# ---------------------------------------------------------------------------
def _pbmsa(xg, p, B, C, H, W):
    pdim = p["pe_w"].shape[0]
    ps = math.isqrt(pdim // C)
    nh, nw = H // ps, W // ps
    P = nh * nw
    # torch: unfold(2).unfold(3).permute(0,2,3,1,4,5) -> feature order (c, py, px)
    patches = (xg.reshape(B, C, nh, ps, nw, ps)
                 .transpose(0, 2, 4, 1, 3, 5)
                 .reshape(B * P, pdim))
    rest = pl.pallas_call(
        functools.partial(_pbmsa_kernel, batch=B, num_heads=NUM_HEADS),
        out_shape=jax.ShapeDtypeStruct((B * P, pdim), jnp.float32),
    )(patches, p["pe_w"], p["pe_b"], p["in_w"], p["in_b"],
      p["out_w"], p["out_b"], p["re_w"], p["re_b"], p["mh"], p["mht"])
    return (rest.reshape(B, nh, nw, C, ps, ps)
                .transpose(0, 3, 1, 4, 2, 5)
                .reshape(B, C, H * W))


def attention_block_forward(x, p):
    B, C, H, W = x.shape
    HW = H * W
    Cc = 1 + 2 * C

    xg, sa, ca = pl.pallas_call(
        functools.partial(_pre_kernel, num_groups=8, H=H, W=W),
        grid=(B,),
        in_specs=[
            pl.BlockSpec((1, C, HW), lambda b: (b, 0, 0)),
            pl.BlockSpec((C, 1), lambda b: (0, 0)),
            pl.BlockSpec((C, 1), lambda b: (0, 0)),
            pl.BlockSpec((9, 1, 3), lambda b: (0, 0, 0)),
            pl.BlockSpec((C // 2, C), lambda b: (0, 0)),
            pl.BlockSpec((C, C // 2), lambda b: (0, 0)),
        ],
        out_specs=(
            pl.BlockSpec((1, C, HW), lambda b: (b, 0, 0)),
            pl.BlockSpec((1, 1, HW), lambda b: (b, 0, 0)),
            pl.BlockSpec((1, C, HW), lambda b: (b, 0, 0)),
        ),
        out_shape=(
            jax.ShapeDtypeStruct((B, C, HW), jnp.float32),
            jax.ShapeDtypeStruct((B, 1, HW), jnp.float32),
            jax.ShapeDtypeStruct((B, C, HW), jnp.float32),
        ),
        compiler_params=pltpu.CompilerParams(dimension_semantics=("parallel",)),
    )(x.reshape(B, C, HW), p["gn1_g"], p["gn1_b"], p["sa_w9"],
      p["ca_w1"], p["ca_w2"])

    pb = _pbmsa(xg, p, B, C, H, W)                      # (B, C, HW)

    # GroupNorm(1, 1+2C) + exact GELU stay as fused XLA glue.
    # TODO(synk): erf has no Mosaic lowering; exact nn.GELU() kept outside the kernel.
    cat = jnp.concatenate([sa, ca, pb], axis=1)         # (B, 1+2C, HW)
    mu = jnp.mean(cat, axis=(1, 2), keepdims=True)
    var = jnp.mean(jnp.square(cat - mu), axis=(1, 2), keepdims=True)
    h = (cat - mu) * lax.rsqrt(var + EPS)
    h = h * p["gn2_g"][None, :, None] + p["gn2_b"][None, :, None]
    h = jax.nn.gelu(h, approximate=False)

    out = pl.pallas_call(
        functools.partial(_conv_ln_kernel, H=H, W=W),
        grid=(B,),
        in_specs=[
            pl.BlockSpec((1, Cc, HW), lambda b: (b, 0, 0)),
            pl.BlockSpec((9, C, Cc), lambda b: (0, 0, 0)),
            pl.BlockSpec((C, 1), lambda b: (0, 0)),
            pl.BlockSpec((C, HW), lambda b: (0, 0)),
            pl.BlockSpec((C, HW), lambda b: (0, 0)),
        ],
        out_specs=pl.BlockSpec((1, C, HW), lambda b: (b, 0, 0)),
        out_shape=jax.ShapeDtypeStruct((B, C, HW), jnp.float32),
        compiler_params=pltpu.CompilerParams(dimension_semantics=("parallel",)),
    )(h, p["conv_w9"], p["conv_b"], p["ln_g"], p["ln_b"])
    return out.reshape(B, C, H, W)


def core_block_forward(x, cb):
    x1 = x
    for p in cb["b1"]:
        x1 = attention_block_forward(x1, p)
    x2 = x1
    for p in cb["b2"]:
        x2 = attention_block_forward(x2, p)
    return x + x2


@jax.jit
def res_core_blocks_forward(x, params):
    x1 = core_block_forward(x, params[0])
    x2 = core_block_forward(x1, params[1])
    x3 = core_block_forward(x + x2, params[2])
    x4 = core_block_forward(x3, params[3])
    x5 = core_block_forward(x3 + x4, params[4])
    x6 = core_block_forward(x5, params[5])
    return x5 + x6


# ---------------------------------------------------------------------------
# deterministic synthetic parameters (torch layout) + one-time kernel re-layout
# ---------------------------------------------------------------------------
def _normal(key, shape, scale):
    return scale * jax.random.normal(key, shape, jnp.float32)


def init_attention_block(key, C, img, ps):
    ks = iter(jax.random.split(key, 24))
    nxt = lambda: next(ks)
    E = EMBED_DIM
    pdim = ps * ps * C
    return dict(
        gn1_g=1.0 + _normal(nxt(), (C,), 0.1),
        gn1_b=_normal(nxt(), (C,), 0.1),
        sa_w=_normal(nxt(), (1, 3, 3, 3), 0.3),                  # Conv2d(3,1,3,bias=False)
        ca_w1=_normal(nxt(), (C // 2, C), 1.0 / math.sqrt(C)),
        ca_w2=_normal(nxt(), (C, C // 2), 1.0 / math.sqrt(C // 2)),
        pe_w=_normal(nxt(), (E, pdim), 1.0 / math.sqrt(pdim)),
        pe_b=_normal(nxt(), (E,), 0.01),
        in_w=_normal(nxt(), (3 * E, E), 1.0 / math.sqrt(E)),
        in_b=_normal(nxt(), (3 * E,), 0.01),
        out_w=_normal(nxt(), (E, E), 1.0 / math.sqrt(E)),
        out_b=_normal(nxt(), (E,), 0.01),
        re_w=_normal(nxt(), (pdim, E), 1.0 / math.sqrt(E)),
        re_b=_normal(nxt(), (pdim,), 0.01),
        conv_w=_normal(nxt(), (C, 1 + 2 * C, 3, 3),
                       1.0 / math.sqrt(9 * (1 + 2 * C))),
        conv_b=_normal(nxt(), (C,), 0.01),
        gn2_g=1.0 + _normal(nxt(), (1 + 2 * C,), 0.1),
        gn2_b=_normal(nxt(), (1 + 2 * C,), 0.1),
        ln_g=1.0 + _normal(nxt(), (C, img, img), 0.1),
        ln_b=_normal(nxt(), (C, img, img), 0.1),
    )


def _conv_to_taps(w):
    """(Cout, Cin, 3, 3) torch conv weight -> (9, Cout, Cin) per-tap matrices."""
    cout, cin = w.shape[0], w.shape[1]
    return jnp.transpose(w.reshape(cout, cin, 9), (2, 0, 1))


def prepare_attention_block(raw):
    """One-time weight re-layout (transpose / reshape / bf16 cast) so the
    jitted forward does zero per-step weight glue."""
    C = raw["gn1_g"].shape[0]
    E = EMBED_DIM
    dh = E // NUM_HEADS
    head = (jnp.arange(E)[:, None] // dh
            == jnp.arange(NUM_HEADS)[None, :]).astype(jnp.float32)
    return dict(
        gn1_g=raw["gn1_g"].reshape(C, 1),
        gn1_b=raw["gn1_b"].reshape(C, 1),
        sa_w9=_conv_to_taps(raw["sa_w"]),
        ca_w1=raw["ca_w1"],
        ca_w2=raw["ca_w2"],
        pe_w=raw["pe_w"].T.astype(jnp.bfloat16),   # (pdim, E)
        pe_b=raw["pe_b"].reshape(1, -1),
        in_w=raw["in_w"].T.astype(jnp.bfloat16),   # (E, 3E)
        in_b=raw["in_b"].reshape(1, -1),
        out_w=raw["out_w"].T.astype(jnp.bfloat16),  # (E, E)
        out_b=raw["out_b"].reshape(1, -1),
        re_w=raw["re_w"].T.astype(jnp.bfloat16),   # (E, pdim)
        re_b=raw["re_b"].reshape(1, -1),
        mh=head,
        mht=head.T,
        gn2_g=raw["gn2_g"],
        gn2_b=raw["gn2_b"],
        conv_w9=_conv_to_taps(raw["conv_w"]),
        conv_b=raw["conv_b"].reshape(C, 1),
        ln_g=raw["ln_g"].reshape(C, -1),
        ln_b=raw["ln_b"].reshape(C, -1),
    )


def init_core_block(key, C, fs):
    k1, k2, k3, k4 = jax.random.split(key, 4)
    # patch-size schedule matches CoreBlock: blocks1 = [2, 4], blocks2 = [4, 4]
    return {
        "b1": [prepare_attention_block(init_attention_block(k1, C, fs, 2)),
               prepare_attention_block(init_attention_block(k2, C, fs, 4))],
        "b2": [prepare_attention_block(init_attention_block(k3, C, fs, 4)),
               prepare_attention_block(init_attention_block(k4, C, fs, 4))],
    }


def init_res_core_blocks(key, C, fs):
    return [init_core_block(k, C, fs) for k in jax.random.split(key, 6)]


if __name__ == "__main__":
    key = jax.random.PRNGKey(0)
    B, C, FS = 2, 8, 16          # batch, in_features (GroupNorm(8,.) needs %8==0), feature_size
    params = init_res_core_blocks(key, C, FS)
    x = jax.random.normal(jax.random.fold_in(key, 1234), (B, C, FS, FS), jnp.float32)
    out = res_core_blocks_forward(x, params)
    out = jax.block_until_ready(out)
    assert out.shape == (B, C, FS, FS)
    assert bool(jnp.isfinite(out).all())
    print("KERNEL_OK")
</pallas_src>

<mosaic_0001>
module attributes {stable_mosaic.version = 11 : i64} {
  func.func @_pre_kernel(%arg0: i32, %arg1: memref<1x8x256xf32, #tpu.memory_space<vmem>>, %arg2: memref<8x1xf32, #tpu.memory_space<vmem>>, %arg3: memref<8x1xf32, #tpu.memory_space<vmem>>, %arg4: memref<9x1x3xf32, #tpu.memory_space<vmem>>, %arg5: memref<4x8xf32, #tpu.memory_space<vmem>>, %arg6: memref<8x4xf32, #tpu.memory_space<vmem>>, %arg7: memref<1x8x256xf32, #tpu.memory_space<vmem>>, %arg8: memref<1x1x256xf32, #tpu.memory_space<vmem>>, %arg9: memref<1x8x256xf32, #tpu.memory_space<vmem>>) attributes {dimension_semantics = [#tpu.dimension_semantics<parallel>], iteration_bounds = array<i64: 2>, scalar_prefetch = 0 : i64, scratch_operands = 0 : i64, tpu.core_type = #tpu.core_type<tc>, window_params = [{transform_indices = @transform_0, window_bounds = array<i64: 1, 8, 256>}, {pipeline_mode = #tpu.pipeline_mode<synchronous>, transform_indices = @transform_1, window_bounds = array<i64: 8, 1>}, {pipeline_mode = #tpu.pipeline_mode<synchronous>, transform_indices = @transform_2, window_bounds = array<i64: 8, 1>}, {pipeline_mode = #tpu.pipeline_mode<synchronous>, transform_indices = @transform_3, window_bounds = array<i64: 9, 1, 3>}, {pipeline_mode = #tpu.pipeline_mode<synchronous>, transform_indices = @transform_4, window_bounds = array<i64: 4, 8>}, {pipeline_mode = #tpu.pipeline_mode<synchronous>, transform_indices = @transform_5, window_bounds = array<i64: 8, 4>}, {transform_indices = @transform_6, window_bounds = array<i64: 1, 8, 256>}, {transform_indices = @transform_7, window_bounds = array<i64: 1, 1, 256>}, {transform_indices = @transform_8, window_bounds = array<i64: 1, 8, 256>}]} {
    %c0 = arith.constant 0 : index
    %c0_0 = arith.constant 0 : index
    %c0_1 = arith.constant 0 : index
    %0 = vector.load %arg1[%c0, %c0_0, %c0_1] : memref<1x8x256xf32, #tpu.memory_space<vmem>>, vector<1x8x256xf32>
    %1 = vector.shape_cast %0 : vector<1x8x256xf32> to vector<8x256xf32>
    %cst = arith.constant dense<0.000000e+00> : vector<8xf32>
    %2 = vector.multi_reduction <add>, %1, %cst [1] : vector<8x256xf32> to vector<8xf32>
    %3 = vector.shape_cast %2 : vector<8xf32> to vector<8x1xf32>
    %cst_2 = arith.constant 2.560000e+02 : f32
    %4 = vector.broadcast %cst_2 : f32 to vector<8x1xf32>
    %5 = arith.divf %3, %4 : vector<8x1xf32>
    %6 = vector.broadcast %5 : vector<8x1xf32> to vector<8x256xf32>
    %7 = arith.subf %1, %6 : vector<8x256xf32>
    %8 = arith.mulf %7, %7 : vector<8x256xf32>
    %cst_3 = arith.constant dense<0.000000e+00> : vector<8xf32>
    %9 = vector.multi_reduction <add>, %8, %cst_3 [1] : vector<8x256xf32> to vector<8xf32>
    %10 = vector.shape_cast %9 : vector<8xf32> to vector<8x1xf32>
    %cst_4 = arith.constant 2.560000e+02 : f32
    %11 = vector.broadcast %cst_4 : f32 to vector<8x1xf32>
    %12 = arith.divf %10, %11 : vector<8x1xf32>
    %cst_5 = arith.constant 9.99999974E-6 : f32
    %13 = vector.broadcast %cst_5 : f32 to vector<8x1xf32>
    %14 = arith.addf %12, %13 : vector<8x1xf32>
    %15 = math.rsqrt %14 : vector<8x1xf32>
    %16 = vector.broadcast %15 : vector<8x1xf32> to vector<8x256xf32>
    %17 = arith.mulf %7, %16 : vector<8x256xf32>
    %c0_6 = arith.constant 0 : index
    %c0_7 = arith.constant 0 : index
    %18 = vector.load %arg2[%c0_6, %c0_7] : memref<8x1xf32, #tpu.memory_space<vmem>>, vector<8x1xf32>
    %19 = vector.broadcast %18 : vector<8x1xf32> to vector<8x256xf32>
    %20 = arith.mulf %17, %19 : vector<8x256xf32>
    %c0_8 = arith.constant 0 : index
    %c0_9 = arith.constant 0 : index
    %21 = vector.load %arg3[%c0_8, %c0_9] : memref<8x1xf32, #tpu.memory_space<vmem>>, vector<8x1xf32>
    %22 = vector.broadcast %21 : vector<8x1xf32> to vector<8x256xf32>
    %23 = arith.addf %20, %22 : vector<8x256xf32>
    %c0_10 = arith.constant 0 : index
    %c0_11 = arith.constant 0 : index
    %c0_12 = arith.constant 0 : index
    %24 = vector.load %arg7[%c0_10, %c0_11, %c0_12] : memref<1x8x256xf32, #tpu.memory_space<vmem>>, vector<1x8x256xf32>
    %25 = vector.shape_cast %24 : vector<1x8x256xf32> to vector<8x256xf32>
    %26 = vector.shape_cast %23 : vector<8x256xf32> to vector<1x8x256xf32>
    tpu.vector_store %arg7[%c0_10, %c0_11, %c0_12], %26 {strides = array<i32>} : memref<1x8x256xf32, #tpu.memory_space<vmem>>, vector<1x8x256xf32>,
    %cst_13 = arith.constant dense<0x7F800000> : vector<256xf32>
    %27 = vector.multi_reduction <minimumf>, %23, %cst_13 [0] : vector<8x256xf32> to vector<256xf32>
    %28 = vector.shape_cast %27 : vector<256xf32> to vector<1x256xf32>
    %cst_14 = arith.constant dense<0.000000e+00> : vector<256xf32>
    %29 = vector.multi_reduction <add>, %23, %cst_14 [0] : vector<8x256xf32> to vector<256xf32>
    %30 = vector.shape_cast %29 : vector<256xf32> to vector<1x256xf32>
    %cst_15 = arith.constant 8.000000e+00 : f32
    %31 = vector.broadcast %cst_15 : f32 to vector<1x256xf32>
    %32 = arith.divf %30, %31 : vector<1x256xf32>
    %cst_16 = arith.constant dense<0xFF800000> : vector<256xf32>
    %33 = vector.multi_reduction <maximumf>, %23, %cst_16 [0] : vector<8x256xf32> to vector<256xf32>
    %34 = vector.shape_cast %33 : vector<256xf32> to vector<1x256xf32>
    %35 = tpu.concatenate %28, %32, %34 in 0 : vector<1x256xf32>, vector<1x256xf32>, vector<1x256xf32> -> vector<3x256xf32>
    %36 = tpu.iota {dimensions = array<i32: 1>} : vector<1x256xi32>
    %c15_i32 = arith.constant 15 : i32
    %37 = vector.broadcast %c15_i32 : i32 to vector<1x256xi32>
    %38 = arith.andi %36, %37 : vector<1x256xi32>
    %cst_17 = arith.constant 0.000000e+00 : f32
    %39 = vector.broadcast %cst_17 : f32 to vector<1x256xf32>
    %c17_i32 = arith.constant 17 : i32
    %40 = tpu.dynamic_rotate %35 by %c17_i32 dim 1 : vector<3x256xf32>, i32 -> vector<3x256xf32>
    %c16_i32 = arith.constant 16 : i32
    %41 = vector.broadcast %c16_i32 : i32 to vector<1x256xi32>
    %42 = arith.cmpi sge, %36, %41 : vector<1x256xi32>
    %c1_i32 = arith.constant 1 : i32
    %43 = vector.broadcast %c1_i32 : i32 to vector<1x256xi32>
    %44 = arith.cmpi sge, %38, %43 : vector<1x256xi32>
    %45 = arith.andi %42, %44 : vector<1x256xi1>
    %cst_18 = arith.constant 1.000000e+00 : f32
    %cst_19 = arith.constant 0.000000e+00 : f32
    %46 = vector.broadcast %cst_18 : f32 to vector<1x256xf32>
    %47 = vector.broadcast %cst_19 : f32 to vector<1x256xf32>
    %48 = arith.select %45, %46, %47 : vector<1x256xi1>, vector<1x256xf32>
    %49 = vector.broadcast %48 : vector<1x256xf32> to vector<3x256xf32>
    %50 = arith.mulf %40, %49 : vector<3x256xf32>
    %c0_20 = arith.constant 0 : index
    %c0_21 = arith.constant 0 : index
    %c0_22 = arith.constant 0 : index
    %51 = vector.load %arg4[%c0_20, %c0_21, %c0_22] : memref<9x1x3xf32, #tpu.memory_space<vmem>>, vector<1x1x3xf32>
    %52 = vector.shape_cast %51 : vector<1x1x3xf32> to vector<1x3xf32>
    %cst_23 = arith.constant dense<0.000000e+00> : vector<1x256xf32>
    %53 = tpu.matmul %52, %50, %cst_23 {dimension_numbers = #tpu.dot_dimension_numbers<[1], [0], [0], [1], [0, 0, 1, 1], [], []>} : vector<1x3xf32>, vector<3x256xf32>, vector<1x256xf32> -> vector<1x256xf32>
    %54 = arith.addf %39, %53 : vector<1x256xf32>
    %c16_i32_24 = arith.constant 16 : i32
    %55 = tpu.dynamic_rotate %35 by %c16_i32_24 dim 1 : vector<3x256xf32>, i32 -> vector<3x256xf32>
    %c16_i32_25 = arith.constant 16 : i32
    %56 = vector.broadcast %c16_i32_25 : i32 to vector<1x256xi32>
    %57 = arith.cmpi sge, %36, %56 : vector<1x256xi32>
    %cst_26 = arith.constant 1.000000e+00 : f32
    %cst_27 = arith.constant 0.000000e+00 : f32
    %58 = vector.broadcast %cst_26 : f32 to vector<1x256xf32>
    %59 = vector.broadcast %cst_27 : f32 to vector<1x256xf32>
    %60 = arith.select %57, %58, %59 : vector<1x256xi1>, vector<1x256xf32>
    %61 = vector.broadcast %60 : vector<1x256xf32> to vector<3x256xf32>
    %62 = arith.mulf %55, %61 : vector<3x256xf32>
    %c1 = arith.constant 1 : index
    %c0_28 = arith.constant 0 : index
    %c0_29 = arith.constant 0 : index
    %63 = vector.load %arg4[%c1, %c0_28, %c0_29] : memref<9x1x3xf32, #tpu.memory_space<vmem>>, vector<1x1x3xf32>
    %64 = vector.shape_cast %63 : vector<1x1x3xf32> to vector<1x3xf32>
    %cst_30 = arith.constant dense<0.000000e+00> : vector<1x256xf32>
    %65 = tpu.matmul %64, %62, %cst_30 {dimension_numbers = #tpu.dot_dimension_numbers<[1], [0], [0], [1], [0, 0, 1, 1], [], []>} : vector<1x3xf32>, vector<3x256xf32>, vector<1x256xf32> -> vector<1x256xf32>
    %66 = arith.addf %54, %65 : vector<1x256xf32>
    %c15_i32_31 = arith.constant 15 : i32
    %67 = tpu.dynamic_rotate %35 by %c15_i32_31 dim 1 : vector<3x256xf32>, i32 -> vector<3x256xf32>
    %c16_i32_32 = arith.constant 16 : i32
    %68 = vector.broadcast %c16_i32_32 : i32 to vector<1x256xi32>
    %69 = arith.cmpi sge, %36, %68 : vector<1x256xi32>
    %c15_i32_33 = arith.constant 15 : i32
    %70 = vector.broadcast %c15_i32_33 : i32 to vector<1x256xi32>
    %71 = arith.cmpi slt, %38, %70 : vector<1x256xi32>
    %72 = arith.andi %69, %71 : vector<1x256xi1>
    %cst_34 = arith.constant 1.000000e+00 : f32
    %cst_35 = arith.constant 0.000000e+00 : f32
    %73 = vector.broadcast %cst_34 : f32 to vector<1x256xf32>
    %74 = vector.broadcast %cst_35 : f32 to vector<1x256xf32>
    %75 = arith.select %72, %73, %74 : vector<1x256xi1>, vector<1x256xf32>
    %76 = vector.broadcast %75 : vector<1x256xf32> to vector<3x256xf32>
    %77 = arith.mulf %67, %76 : vector<3x256xf32>
    %c2 = arith.constant 2 : index
    %c0_36 = arith.constant 0 : index
    %c0_37 = arith.constant 0 : index
    %78 = vector.load %arg4[%c2, %c0_36, %c0_37] : memref<9x1x3xf32, #tpu.memory_space<vmem>>, vector<1x1x3xf32>
    %79 = vector.shape_cast %78 : vector<1x1x3xf32> to vector<1x3xf32>
    %cst_38 = arith.constant dense<0.000000e+00> : vector<1x256xf32>
    %80 = tpu.matmul %79, %77, %cst_38 {dimension_numbers = #tpu.dot_dimension_numbers<[1], [0], [0], [1], [0, 0, 1, 1], [], []>} : vector<1x3xf32>, vector<3x256xf32>, vector<1x256xf32> -> vector<1x256xf32>
    %81 = arith.addf %66, %80 : vector<1x256xf32>
    %c1_i32_39 = arith.constant 1 : i32
    %82 = tpu.dynamic_rotate %35 by %c1_i32_39 dim 1 : vector<3x256xf32>, i32 -> vector<3x256xf32>
    %c1_i32_40 = arith.constant 1 : i32
    %83 = vector.broadcast %c1_i32_40 : i32 to vector<1x256xi32>
    %84 = arith.cmpi sge, %38, %83 : vector<1x256xi32>
    %cst_41 = arith.constant 1.000000e+00 : f32
    %cst_42 = arith.constant 0.000000e+00 : f32
    %85 = vector.broadcast %cst_41 : f32 to vector<1x256xf32>
    %86 = vector.broadcast %cst_42 : f32 to vector<1x256xf32>
    %87 = arith.select %84, %85, %86 : vector<1x256xi1>, vector<1x256xf32>
    %88 = vector.broadcast %87 : vector<1x256xf32> to vector<3x256xf32>
    %89 = arith.mulf %82, %88 : vector<3x256xf32>
    %c3 = arith.constant 3 : index
    %c0_43 = arith.constant 0 : index
    %c0_44 = arith.constant 0 : index
    %90 = vector.load %arg4[%c3, %c0_43, %c0_44] : memref<9x1x3xf32, #tpu.memory_space<vmem>>, vector<1x1x3xf32>
    %91 = vector.shape_cast %90 : vector<1x1x3xf32> to vector<1x3xf32>
    %cst_45 = arith.constant dense<0.000000e+00> : vector<1x256xf32>
    %92 = tpu.matmul %91, %89, %cst_45 {dimension_numbers = #tpu.dot_dimension_numbers<[1], [0], [0], [1], [0, 0, 1, 1], [], []>} : vector<1x3xf32>, vector<3x256xf32>, vector<1x256xf32> -> vector<1x256xf32>
    %93 = arith.addf %81, %92 : vector<1x256xf32>
    %c4 = arith.constant 4 : index
    %c0_46 = arith.constant 0 : index
    %c0_47 = arith.constant 0 : index
    %94 = vector.load %arg4[%c4, %c0_46, %c0_47] : memref<9x1x3xf32, #tpu.memory_space<vmem>>, vector<1x1x3xf32>
    %95 = vector.shape_cast %94 : vector<1x1x3xf32> to vector<1x3xf32>
    %cst_48 = arith.constant dense<0.000000e+00> : vector<1x256xf32>
    %96 = tpu.matmul %95, %35, %cst_48 {dimension_numbers = #tpu.dot_dimension_numbers<[1], [0], [0], [1], [0, 0, 1, 1], [], []>} : vector<1x3xf32>, vector<3x256xf32>, vector<1x256xf32> -> vector<1x256xf32>
    %97 = arith.addf %93, %96 : vector<1x256xf32>
    %c255_i32 = arith.constant 255 : i32
    %98 = tpu.dynamic_rotate %35 by %c255_i32 dim 1 : vector<3x256xf32>, i32 -> vector<3x256xf32>
    %c15_i32_49 = arith.constant 15 : i32
    %99 = vector.broadcast %c15_i32_49 : i32 to vector<1x256xi32>
    %100 = arith.cmpi slt, %38, %99 : vector<1x256xi32>
    %cst_50 = arith.constant 1.000000e+00 : f32
    %cst_51 = arith.constant 0.000000e+00 : f32
    %101 = vector.broadcast %cst_50 : f32 to vector<1x256xf32>
    %102 = vector.broadcast %cst_51 : f32 to vector<1x256xf32>
    %103 = arith.select %100, %101, %102 : vector<1x256xi1>, vector<1x256xf32>
    %104 = vector.broadcast %103 : vector<1x256xf32> to vector<3x256xf32>
    %105 = arith.mulf %98, %104 : vector<3x256xf32>
    %c5 = arith.constant 5 : index
    %c0_52 = arith.constant 0 : index
    %c0_53 = arith.constant 0 : index
    %106 = vector.load %arg4[%c5, %c0_52, %c0_53] : memref<9x1x3xf32, #tpu.memory_space<vmem>>, vector<1x1x3xf32>
    %107 = vector.shape_cast %106 : vector<1x1x3xf32> to vector<1x3xf32>
    %cst_54 = arith.constant dense<0.000000e+00> : vector<1x256xf32>
    %108 = tpu.matmul %107, %105, %cst_54 {dimension_numbers = #tpu.dot_dimension_numbers<[1], [0], [0], [1], [0, 0, 1, 1], [], []>} : vector<1x3xf32>, vector<3x256xf32>, vector<1x256xf32> -> vector<1x256xf32>
    %109 = arith.addf %97, %108 : vector<1x256xf32>
    %c241_i32 = arith.constant 241 : i32
    %110 = tpu.dynamic_rotate %35 by %c241_i32 dim 1 : vector<3x256xf32>, i32 -> vector<3x256xf32>
    %c240_i32 = arith.constant 240 : i32
    %111 = vector.broadcast %c240_i32 : i32 to vector<1x256xi32>
    %112 = arith.cmpi slt, %36, %111 : vector<1x256xi32>
    %c1_i32_55 = arith.constant 1 : i32
    %113 = vector.broadcast %c1_i32_55 : i32 to vector<1x256xi32>
    %114 = arith.cmpi sge, %38, %113 : vector<1x256xi32>
    %115 = arith.andi %112, %114 : vector<1x256xi1>
    %cst_56 = arith.constant 1.000000e+00 : f32
    %cst_57 = arith.constant 0.000000e+00 : f32
    %116 = vector.broadcast %cst_56 : f32 to vector<1x256xf32>
    %117 = vector.broadcast %cst_57 : f32 to vector<1x256xf32>
    %118 = arith.select %115, %116, %117 : vector<1x256xi1>, vector<1x256xf32>
    %119 = vector.broadcast %118 : vector<1x256xf32> to vector<3x256xf32>
    %120 = arith.mulf %110, %119 : vector<3x256xf32>
    %c6 = arith.constant 6 : index
    %c0_58 = arith.constant 0 : index
    %c0_59 = arith.constant 0 : index
    %121 = vector.load %arg4[%c6, %c0_58, %c0_59] : memref<9x1x3xf32, #tpu.memory_space<vmem>>, vector<1x1x3xf32>
    %122 = vector.shape_cast %121 : vector<1x1x3xf32> to vector<1x3xf32>
    %cst_60 = arith.constant dense<0.000000e+00> : vector<1x256xf32>
    %123 = tpu.matmul %122, %120, %cst_60 {dimension_numbers = #tpu.dot_dimension_numbers<[1], [0], [0], [1], [0, 0, 1, 1], [], []>} : vector<1x3xf32>, vector<3x256xf32>, vector<1x256xf32> -> vector<1x256xf32>
    %124 = arith.addf %109, %123 : vector<1x256xf32>
    %c240_i32_61 = arith.constant 240 : i32
    %125 = tpu.dynamic_rotate %35 by %c240_i32_61 dim 1 : vector<3x256xf32>, i32 -> vector<3x256xf32>
    %c240_i32_62 = arith.constant 240 : i32
    %126 = vector.broadcast %c240_i32_62 : i32 to vector<1x256xi32>
    %127 = arith.cmpi slt, %36, %126 : vector<1x256xi32>
    %cst_63 = arith.constant 1.000000e+00 : f32
    %cst_64 = arith.constant 0.000000e+00 : f32
    %128 = vector.broadcast %cst_63 : f32 to vector<1x256xf32>
    %129 = vector.broadcast %cst_64 : f32 to vector<1x256xf32>
    %130 = arith.select %127, %128, %129 : vector<1x256xi1>, vector<1x256xf32>
    %131 = vector.broadcast %130 : vector<1x256xf32> to vector<3x256xf32>
    %132 = arith.mulf %125, %131 : vector<3x256xf32>
    %c7 = arith.constant 7 : index
    %c0_65 = arith.constant 0 : index
    %c0_66 = arith.constant 0 : index
    %133 = vector.load %arg4[%c7, %c0_65, %c0_66] : memref<9x1x3xf32, #tpu.memory_space<vmem>>, vector<1x1x3xf32>
    %134 = vector.shape_cast %133 : vector<1x1x3xf32> to vector<1x3xf32>
    %cst_67 = arith.constant dense<0.000000e+00> : vector<1x256xf32>
    %135 = tpu.matmul %134, %132, %cst_67 {dimension_numbers = #tpu.dot_dimension_numbers<[1], [0], [0], [1], [0, 0, 1, 1], [], []>} : vector<1x3xf32>, vector<3x256xf32>, vector<1x256xf32> -> vector<1x256xf32>
    %136 = arith.addf %124, %135 : vector<1x256xf32>
    %c239_i32 = arith.constant 239 : i32
    %137 = tpu.dynamic_rotate %35 by %c239_i32 dim 1 : vector<3x256xf32>, i32 -> vector<3x256xf32>
    %c240_i32_68 = arith.constant 240 : i32
    %138 = vector.broadcast %c240_i32_68 : i32 to vector<1x256xi32>
    %139 = arith.cmpi slt, %36, %138 : vector<1x256xi32>
    %c15_i32_69 = arith.constant 15 : i32
    %140 = vector.broadcast %c15_i32_69 : i32 to vector<1x256xi32>
    %141 = arith.cmpi slt, %38, %140 : vector<1x256xi32>
    %142 = arith.andi %139, %141 : vector<1x256xi1>
    %cst_70 = arith.constant 1.000000e+00 : f32
    %cst_71 = arith.constant 0.000000e+00 : f32
    %143 = vector.broadcast %cst_70 : f32 to vector<1x256xf32>
    %144 = vector.broadcast %cst_71 : f32 to vector<1x256xf32>
    %145 = arith.select %142, %143, %144 : vector<1x256xi1>, vector<1x256xf32>
    %146 = vector.broadcast %145 : vector<1x256xf32> to vector<3x256xf32>
    %147 = arith.mulf %137, %146 : vector<3x256xf32>
    %c8 = arith.constant 8 : index
    %c0_72 = arith.constant 0 : index
    %c0_73 = arith.constant 0 : index
    %148 = vector.load %arg4[%c8, %c0_72, %c0_73] : memref<9x1x3xf32, #tpu.memory_space<vmem>>, vector<1x1x3xf32>
    %149 = vector.shape_cast %148 : vector<1x1x3xf32> to vector<1x3xf32>
    %cst_74 = arith.constant dense<0.000000e+00> : vector<1x256xf32>
    %150 = tpu.matmul %149, %147, %cst_74 {dimension_numbers = #tpu.dot_dimension_numbers<[1], [0], [0], [1], [0, 0, 1, 1], [], []>} : vector<1x3xf32>, vector<3x256xf32>, vector<1x256xf32> -> vector<1x256xf32>
    %151 = arith.addf %136, %150 : vector<1x256xf32>
    %cst_75 = arith.constant 0.000000e+00 : f32
    %152 = vector.broadcast %cst_75 : f32 to vector<1x256xf32>
    %153 = arith.subf %152, %151 : vector<1x256xf32>
    %154 = math.exp %153 : vector<1x256xf32>
    %cst_76 = arith.constant 1.000000e+00 : f32
    %155 = vector.broadcast %cst_76 : f32 to vector<1x256xf32>
    %156 = arith.addf %155, %154 : vector<1x256xf32>
    %cst_77 = arith.constant 1.000000e+00 : f32
    %157 = vector.broadcast %cst_77 : f32 to vector<1x256xf32>
    %158 = arith.divf %157, %156 : vector<1x256xf32>
    %c0_78 = arith.constant 0 : index
    %c0_79 = arith.constant 0 : index
    %c0_80 = arith.constant 0 : index
    %159 = vector.load %arg8[%c0_78, %c0_79, %c0_80] : memref<1x1x256xf32, #tpu.memory_space<vmem>>, vector<1x1x256xf32>
    %160 = vector.shape_cast %159 : vector<1x1x256xf32> to vector<1x256xf32>
    %161 = vector.shape_cast %158 : vector<1x256xf32> to vector<1x1x256xf32>
    tpu.vector_store %arg8[%c0_78, %c0_79, %c0_80], %161 {strides = array<i32>} : memref<1x1x256xf32, #tpu.memory_space<vmem>>, vector<1x1x256xf32>,
    %cst_81 = arith.constant dense<0.000000e+00> : vector<8xf32>
    %162 = vector.multi_reduction <add>, %23, %cst_81 [1] : vector<8x256xf32> to vector<8xf32>
    %163 = vector.shape_cast %162 : vector<8xf32> to vector<8x1xf32>
    %cst_82 = arith.constant 2.560000e+02 : f32
    %164 = vector.broadcast %cst_82 : f32 to vector<8x1xf32>
    %165 = arith.divf %163, %164 : vector<8x1xf32>
    %c0_83 = arith.constant 0 : index
    %c0_84 = arith.constant 0 : index
    %166 = vector.load %arg5[%c0_83, %c0_84] : memref<4x8xf32, #tpu.memory_space<vmem>>, vector<4x8xf32>
    %cst_85 = arith.constant dense<0.000000e+00> : vector<4x1xf32>
    %167 = tpu.matmul %166, %165, %cst_85 {dimension_numbers = #tpu.dot_dimension_numbers<[1], [0], [0], [1], [0, 0, 1, 1], [], []>} : vector<4x8xf32>, vector<8x1xf32>, vector<4x1xf32> -> vector<4x1xf32>
    %cst_86 = arith.constant 0.000000e+00 : f32
    %168 = vector.broadcast %cst_86 : f32 to vector<4x1xf32>
    %169 = arith.maximumf %167, %168 : vector<4x1xf32>
    %c0_87 = arith.constant 0 : index
    %c0_88 = arith.constant 0 : index
    %170 = vector.load %arg6[%c0_87, %c0_88] : memref<8x4xf32, #tpu.memory_space<vmem>>, vector<8x4xf32>
    %cst_89 = arith.constant dense<0.000000e+00> : vector<8x1xf32>
    %171 = tpu.matmul %170, %169, %cst_89 {dimension_numbers = #tpu.dot_dimension_numbers<[1], [0], [0], [1], [0, 0, 1, 1], [], []>} : vector<8x4xf32>, vector<4x1xf32>, vector<8x1xf32> -> vector<8x1xf32>
    %cst_90 = arith.constant 0.000000e+00 : f32
    %172 = vector.broadcast %cst_90 : f32 to vector<8x1xf32>
    %173 = arith.subf %172, %171 : vector<8x1xf32>
    %174 = math.exp %173 : vector<8x1xf32>
    %cst_91 = arith.constant 1.000000e+00 : f32
    %175 = vector.broadcast %cst_91 : f32 to vector<8x1xf32>
    %176 = arith.addf %175, %174 : vector<8x1xf32>
    %cst_92 = arith.constant 1.000000e+00 : f32
    %177 = vector.broadcast %cst_92 : f32 to vector<8x1xf32>
    %178 = arith.divf %177, %176 : vector<8x1xf32>
    %179 = vector.broadcast %178 : vector<8x1xf32> to vector<8x256xf32>
    %180 = arith.mulf %23, %179 : vector<8x256xf32>
    %c0_93 = arith.constant 0 : index
    %c0_94 = arith.constant 0 : index
    %c0_95 = arith.constant 0 : index
    %181 = vector.load %arg9[%c0_93, %c0_94, %c0_95] : memref<1x8x256xf32, #tpu.memory_space<vmem>>, vector<1x8x256xf32>
    %182 = vector.shape_cast %181 : vector<1x8x256xf32> to vector<8x256xf32>
    %183 = vector.shape_cast %180 : vector<8x256xf32> to vector<1x8x256xf32>
    tpu.vector_store %arg9[%c0_93, %c0_94, %c0_95], %183 {strides = array<i32>} : memref<1x8x256xf32, #tpu.memory_space<vmem>>, vector<1x8x256xf32>,
    return
  }
  func.func @transform_0(%arg0: i32) -> (i32, i32, i32) {
    %c0_i32 = arith.constant 0 : i32
    %c0_i32_0 = arith.constant 0 : i32
    %c0_i32_1 = arith.constant 0 : i32
    return %arg0, %c0_i32, %c0_i32_0 : i32, i32, i32
  }
  func.func @transform_1(%arg0: i32) -> (i32, i32) {
    %c0_i32 = arith.constant 0 : i32
    %c0_i32_0 = arith.constant 0 : i32
    %c0_i32_1 = arith.constant 0 : i32
    return %c0_i32, %c0_i32_0 : i32, i32
  }
  func.func @transform_2(%arg0: i32) -> (i32, i32) {
    %c0_i32 = arith.constant 0 : i32
    %c0_i32_0 = arith.constant 0 : i32
    %c0_i32_1 = arith.constant 0 : i32
    return %c0_i32, %c0_i32_0 : i32, i32
  }
  func.func @transform_3(%arg0: i32) -> (i32, i32, i32) {
    %c0_i32 = arith.constant 0 : i32
    %c0_i32_0 = arith.constant 0 : i32
    %c0_i32_1 = arith.constant 0 : i32
    %c0_i32_2 = arith.constant 0 : i32
    return %c0_i32, %c0_i32_0, %c0_i32_1 : i32, i32, i32
  }
  func.func @transform_4(%arg0: i32) -> (i32, i32) {
    %c0_i32 = arith.constant 0 : i32
    %c0_i32_0 = arith.constant 0 : i32
    %c0_i32_1 = arith.constant 0 : i32
    return %c0_i32, %c0_i32_0 : i32, i32
  }
  func.func @transform_5(%arg0: i32) -> (i32, i32) {
    %c0_i32 = arith.constant 0 : i32
    %c0_i32_0 = arith.constant 0 : i32
    %c0_i32_1 = arith.constant 0 : i32
    return %c0_i32, %c0_i32_0 : i32, i32
  }
  func.func @transform_6(%arg0: i32) -> (i32, i32, i32) {
    %c0_i32 = arith.constant 0 : i32
    %c0_i32_0 = arith.constant 0 : i32
    %c0_i32_1 = arith.constant 0 : i32
    return %arg0, %c0_i32, %c0_i32_0 : i32, i32, i32
  }
  func.func @transform_7(%arg0: i32) -> (i32, i32, i32) {
    %c0_i32 = arith.constant 0 : i32
    %c0_i32_0 = arith.constant 0 : i32
    %c0_i32_1 = arith.constant 0 : i32
    return %arg0, %c0_i32, %c0_i32_0 : i32, i32, i32
  }
  func.func @transform_8(%arg0: i32) -> (i32, i32, i32) {
    %c0_i32 = arith.constant 0 : i32
    %c0_i32_0 = arith.constant 0 : i32
    %c0_i32_1 = arith.constant 0 : i32
    return %arg0, %c0_i32, %c0_i32_0 : i32, i32, i32
  }
}

module attributes {stable_mosaic.version = 11 : i64} {
  func.func @_pbmsa_kernel(%arg0: memref<128x32xf32, #tpu.memory_space<vmem>>, %arg1: memref<32x256xbf16, #tpu.memory_space<vmem>>, %arg2: memref<1x256xf32, #tpu.memory_space<vmem>>, %arg3: memref<256x768xbf16, #tpu.memory_space<vmem>>, %arg4: memref<1x768xf32, #tpu.memory_space<vmem>>, %arg5: memref<256x256xbf16, #tpu.memory_space<vmem>>, %arg6: memref<1x256xf32, #tpu.memory_space<vmem>>, %arg7: memref<256x32xbf16, #tpu.memory_space<vmem>>, %arg8: memref<1x32xf32, #tpu.memory_space<vmem>>, %arg9: memref<256x8xf32, #tpu.memory_space<vmem>>, %arg10: memref<8x256xf32, #tpu.memory_space<vmem>>, %arg11: memref<128x32xf32, #tpu.memory_space<vmem>>) attributes {dimension_semantics = [], scalar_prefetch = 0 : i64, scratch_operands = 0 : i64, tpu.core_type = #tpu.core_type<tc>} {
    %c0 = arith.constant 0 : index
    %c0_0 = arith.constant 0 : index
    %0 = vector.load %arg0[%c0, %c0_0] : memref<128x32xf32, #tpu.memory_space<vmem>>, vector<128x32xf32>
    %1 = arith.truncf %0 : vector<128x32xf32> to vector<128x32xbf16>
    %c0_1 = arith.constant 0 : index
    %c0_2 = arith.constant 0 : index
    %2 = vector.load %arg1[%c0_1, %c0_2] : memref<32x256xbf16, #tpu.memory_space<vmem>>, vector<32x256xbf16>
    %cst = arith.constant dense<0.000000e+00> : vector<128x256xf32>
    %3 = tpu.matmul %1, %2, %cst {dimension_numbers = #tpu.dot_dimension_numbers<[1], [0], [0], [1], [0, 0, 1, 1], [], []>} : vector<128x32xbf16>, vector<32x256xbf16>, vector<128x256xf32> -> vector<128x256xf32>
    %c0_3 = arith.constant 0 : index
    %c0_4 = arith.constant 0 : index
    %4 = vector.load %arg2[%c0_3, %c0_4] : memref<1x256xf32, #tpu.memory_space<vmem>>, vector<1x256xf32>
    %5 = vector.broadcast %4 : vector<1x256xf32> to vector<128x256xf32>
    %6 = arith.addf %3, %5 : vector<128x256xf32>
    %7 = arith.truncf %6 : vector<128x256xf32> to vector<128x256xbf16>
    %c0_5 = arith.constant 0 : index
    %c0_6 = arith.constant 0 : index
    %8 = vector.load %arg3[%c0_5, %c0_6] : memref<256x768xbf16, #tpu.memory_space<vmem>>, vector<256x768xbf16>
    %cst_7 = arith.constant dense<0.000000e+00> : vector<128x768xf32>
    %9 = tpu.matmul %7, %8, %cst_7 {dimension_numbers = #tpu.dot_dimension_numbers<[1], [0], [0], [1], [0, 0, 1, 1], [], []>} : vector<128x256xbf16>, vector<256x768xbf16>, vector<128x768xf32> -> vector<128x768xf32>
    %c0_8 = arith.constant 0 : index
    %c0_9 = arith.constant 0 : index
    %10 = vector.load %arg4[%c0_8, %c0_9] : memref<1x768xf32, #tpu.memory_space<vmem>>, vector<1x768xf32>
    %11 = vector.broadcast %10 : vector<1x768xf32> to vector<128x768xf32>
    %12 = arith.addf %9, %11 : vector<128x768xf32>
    %13 = vector.extract_strided_slice %12 {offsets = [0, 0], sizes = [128, 256], strides = [1, 1]} : vector<128x768xf32> to vector<128x256xf32>
    %14 = vector.extract_strided_slice %12 {offsets = [0, 256], sizes = [128, 256], strides = [1, 1]} : vector<128x768xf32> to vector<128x256xf32>
    %15 = vector.extract_strided_slice %12 {offsets = [0, 512], sizes = [128, 256], strides = [1, 1]} : vector<128x768xf32> to vector<128x256xf32>
    %c0_10 = arith.constant 0 : index
    %c0_11 = arith.constant 0 : index
    %16 = vector.load %arg9[%c0_10, %c0_11] : memref<256x8xf32, #tpu.memory_space<vmem>>, vector<256x8xf32>
    %c0_12 = arith.constant 0 : index
    %c0_13 = arith.constant 0 : index
    %17 = vector.load %arg10[%c0_12, %c0_13] : memref<8x256xf32, #tpu.memory_space<vmem>>, vector<8x256xf32>
    %18 = vector.extract_strided_slice %13 {offsets = [0, 0], sizes = [64, 256], strides = [1, 1]} : vector<128x256xf32> to vector<64x256xf32>
    %19 = vector.extract_strided_slice %13 {offsets = [64, 0], sizes = [64, 256], strides = [1, 1]} : vector<128x256xf32> to vector<64x256xf32>
    %20 = vector.extract_strided_slice %14 {offsets = [0, 0], sizes = [64, 256], strides = [1, 1]} : vector<128x256xf32> to vector<64x256xf32>
    %21 = vector.extract_strided_slice %14 {offsets = [64, 0], sizes = [64, 256], strides = [1, 1]} : vector<128x256xf32> to vector<64x256xf32>
    %22 = vector.extract_strided_slice %15 {offsets = [0, 0], sizes = [64, 256], strides = [1, 1]} : vector<128x256xf32> to vector<64x256xf32>
    %23 = vector.extract_strided_slice %15 {offsets = [64, 0], sizes = [64, 256], strides = [1, 1]} : vector<128x256xf32> to vector<64x256xf32>
    %24 = arith.mulf %18, %20 : vector<64x256xf32>
    %cst_14 = arith.constant dense<0.000000e+00> : vector<64x8xf32>
    %25 = tpu.matmul %24, %16, %cst_14 {dimension_numbers = #tpu.dot_dimension_numbers<[1], [0], [0], [1], [0, 0, 1, 1], [], []>} : vector<64x256xf32>, vector<256x8xf32>, vector<64x8xf32> -> vector<64x8xf32>
    %cst_15 = arith.constant 0.176776692 : f32
    %26 = vector.broadcast %cst_15 : f32 to vector<64x8xf32>
    %27 = arith.mulf %25, %26 : vector<64x8xf32>
    %28 = arith.mulf %18, %21 : vector<64x256xf32>
    %cst_16 = arith.constant dense<0.000000e+00> : vector<64x8xf32>
    %29 = tpu.matmul %28, %16, %cst_16 {dimension_numbers = #tpu.dot_dimension_numbers<[1], [0], [0], [1], [0, 0, 1, 1], [], []>} : vector<64x256xf32>, vector<256x8xf32>, vector<64x8xf32> -> vector<64x8xf32>
    %cst_17 = arith.constant 0.176776692 : f32
    %30 = vector.broadcast %cst_17 : f32 to vector<64x8xf32>
    %31 = arith.mulf %29, %30 : vector<64x8xf32>
    %32 = arith.maximumf %27, %31 : vector<64x8xf32>
    %33 = arith.subf %27, %32 : vector<64x8xf32>
    %34 = math.exp %33 : vector<64x8xf32>
    %35 = arith.subf %31, %32 : vector<64x8xf32>
    %36 = math.exp %35 : vector<64x8xf32>
    %37 = arith.addf %34, %36 : vector<64x8xf32>
    %cst_18 = arith.constant 1.000000e+00 : f32
    %38 = vector.broadcast %cst_18 : f32 to vector<64x8xf32>
    %39 = arith.divf %38, %37 : vector<64x8xf32>
    %40 = arith.mulf %34, %39 : vector<64x8xf32>
    %cst_19 = arith.constant dense<0.000000e+00> : vector<64x256xf32>
    %41 = tpu.matmul %40, %17, %cst_19 {dimension_numbers = #tpu.dot_dimension_numbers<[1], [0], [0], [1], [0, 0, 1, 1], [], []>} : vector<64x8xf32>, vector<8x256xf32>, vector<64x256xf32> -> vector<64x256xf32>
    %42 = arith.mulf %41, %22 : vector<64x256xf32>
    %43 = arith.mulf %36, %39 : vector<64x8xf32>
    %cst_20 = arith.constant dense<0.000000e+00> : vector<64x256xf32>
    %44 = tpu.matmul %43, %17, %cst_20 {dimension_numbers = #tpu.dot_dimension_numbers<[1], [0], [0], [1], [0, 0, 1, 1], [], []>} : vector<64x8xf32>, vector<8x256xf32>, vector<64x256xf32> -> vector<64x256xf32>
    %45 = arith.mulf %44, %23 : vector<64x256xf32>
    %46 = arith.addf %42, %45 : vector<64x256xf32>
    %47 = arith.truncf %46 : vector<64x256xf32> to vector<64x256xbf16>
    %c0_21 = arith.constant 0 : index
    %c0_22 = arith.constant 0 : index
    %48 = vector.load %arg5[%c0_21, %c0_22] : memref<256x256xbf16, #tpu.memory_space<vmem>>, vector<256x256xbf16>
    %cst_23 = arith.constant dense<0.000000e+00> : vector<64x256xf32>
    %49 = tpu.matmul %47, %48, %cst_23 {dimension_numbers = #tpu.dot_dimension_numbers<[1], [0], [0], [1], [0, 0, 1, 1], [], []>} : vector<64x256xbf16>, vector<256x256xbf16>, vector<64x256xf32> -> vector<64x256xf32>
    %c0_24 = arith.constant 0 : index
    %c0_25 = arith.constant 0 : index
    %50 = vector.load %arg6[%c0_24, %c0_25] : memref<1x256xf32, #tpu.memory_space<vmem>>, vector<1x256xf32>
    %51 = vector.broadcast %50 : vector<1x256xf32> to vector<64x256xf32>
    %52 = arith.addf %49, %51 : vector<64x256xf32>
    %53 = arith.truncf %52 : vector<64x256xf32> to vector<64x256xbf16>
    %c0_26 = arith.constant 0 : index
    %c0_27 = arith.constant 0 : index
    %54 = vector.load %arg7[%c0_26, %c0_27] : memref<256x32xbf16, #tpu.memory_space<vmem>>, vector<256x32xbf16>
    %cst_28 = arith.constant dense<0.000000e+00> : vector<64x32xf32>
    %55 = tpu.matmul %53, %54, %cst_28 {dimension_numbers = #tpu.dot_dimension_numbers<[1], [0], [0], [1], [0, 0, 1, 1], [], []>} : vector<64x256xbf16>, vector<256x32xbf16>, vector<64x32xf32> -> vector<64x32xf32>
    %c0_29 = arith.constant 0 : index
    %c0_30 = arith.constant 0 : index
    %56 = vector.load %arg8[%c0_29, %c0_30] : memref<1x32xf32, #tpu.memory_space<vmem>>, vector<1x32xf32>
    %57 = vector.broadcast %56 : vector<1x32xf32> to vector<64x32xf32>
    %58 = arith.addf %55, %57 : vector<64x32xf32>
    %c0_31 = arith.constant 0 : index
    %c0_32 = arith.constant 0 : index
    %59 = vector.load %arg11[%c0_31, %c0_32] : memref<128x32xf32, #tpu.memory_space<vmem>>, vector<64x32xf32>
    tpu.vector_store %arg11[%c0_31, %c0_32], %58 {strides = array<i32>} : memref<128x32xf32, #tpu.memory_space<vmem>>, vector<64x32xf32>,
    %60 = arith.mulf %19, %20 : vector<64x256xf32>
    %cst_33 = arith.constant dense<0.000000e+00> : vector<64x8xf32>
    %61 = tpu.matmul %60, %16, %cst_33 {dimension_numbers = #tpu.dot_dimension_numbers<[1], [0], [0], [1], [0, 0, 1, 1], [], []>} : vector<64x256xf32>, vector<256x8xf32>, vector<64x8xf32> -> vector<64x8xf32>
    %cst_34 = arith.constant 0.176776692 : f32
    %62 = vector.broadcast %cst_34 : f32 to vector<64x8xf32>
    %63 = arith.mulf %61, %62 : vector<64x8xf32>
    %64 = arith.mulf %19, %21 : vector<64x256xf32>
    %cst_35 = arith.constant dense<0.000000e+00> : vector<64x8xf32>
    %65 = tpu.matmul %64, %16, %cst_35 {dimension_numbers = #tpu.dot_dimension_numbers<[1], [0], [0], [1], [0, 0, 1, 1], [], []>} : vector<64x256xf32>, vector<256x8xf32>, vector<64x8xf32> -> vector<64x8xf32>
    %cst_36 = arith.constant 0.176776692 : f32
    %66 = vector.broadcast %cst_36 : f32 to vector<64x8xf32>
    %67 = arith.mulf %65, %66 : vector<64x8xf32>
    %68 = arith.maximumf %63, %67 : vector<64x8xf32>
    %69 = arith.subf %63, %68 : vector<64x8xf32>
    %70 = math.exp %69 : vector<64x8xf32>
    %71 = arith.subf %67, %68 : vector<64x8xf32>
    %72 = math.exp %71 : vector<64x8xf32>
    %73 = arith.addf %70, %72 : vector<64x8xf32>
    %cst_37 = arith.constant 1.000000e+00 : f32
    %74 = vector.broadcast %cst_37 : f32 to vector<64x8xf32>
    %75 = arith.divf %74, %73 : vector<64x8xf32>
    %76 = arith.mulf %70, %75 : vector<64x8xf32>
    %cst_38 = arith.constant dense<0.000000e+00> : vector<64x256xf32>
    %77 = tpu.matmul %76, %17, %cst_38 {dimension_numbers = #tpu.dot_dimension_numbers<[1], [0], [0], [1], [0, 0, 1, 1], [], []>} : vector<64x8xf32>, vector<8x256xf32>, vector<64x256xf32> -> vector<64x256xf32>
    %78 = arith.mulf %77, %22 : vector<64x256xf32>
    %79 = arith.mulf %72, %75 : vector<64x8xf32>
    %cst_39 = arith.constant dense<0.000000e+00> : vector<64x256xf32>
    %80 = tpu.matmul %79, %17, %cst_39 {dimension_numbers = #tpu.dot_dimension_numbers<[1], [0], [0], [1], [0, 0, 1, 1], [], []>} : vector<64x8xf32>, vector<8x256xf32>, vector<64x256xf32> -> vector<64x256xf32>
    %81 = arith.mulf %80, %23 : vector<64x256xf32>
    %82 = arith.addf %78, %81 : vector<64x256xf32>
    %83 = arith.truncf %82 : vector<64x256xf32> to vector<64x256xbf16>
    %c0_40 = arith.constant 0 : index
    %c0_41 = arith.constant 0 : index
    %84 = vector.load %arg5[%c0_40, %c0_41] : memref<256x256xbf16, #tpu.memory_space<vmem>>, vector<256x256xbf16>
    %cst_42 = arith.constant dense<0.000000e+00> : vector<64x256xf32>
    %85 = tpu.matmul %83, %84, %cst_42 {dimension_numbers = #tpu.dot_dimension_numbers<[1], [0], [0], [1], [0, 0, 1, 1], [], []>} : vector<64x256xbf16>, vector<256x256xbf16>, vector<64x256xf32> -> vector<64x256xf32>
    %c0_43 = arith.constant 0 : index
    %c0_44 = arith.constant 0 : index
    %86 = vector.load %arg6[%c0_43, %c0_44] : memref<1x256xf32, #tpu.memory_space<vmem>>, vector<1x256xf32>
    %87 = vector.broadcast %86 : vector<1x256xf32> to vector<64x256xf32>
    %88 = arith.addf %85, %87 : vector<64x256xf32>
    %89 = arith.truncf %88 : vector<64x256xf32> to vector<64x256xbf16>
    %c0_45 = arith.constant 0 : index
    %c0_46 = arith.constant 0 : index
    %90 = vector.load %arg7[%c0_45, %c0_46] : memref<256x32xbf16, #tpu.memory_space<vmem>>, vector<256x32xbf16>
    %cst_47 = arith.constant dense<0.000000e+00> : vector<64x32xf32>
    %91 = tpu.matmul %89, %90, %cst_47 {dimension_numbers = #tpu.dot_dimension_numbers<[1], [0], [0], [1], [0, 0, 1, 1], [], []>} : vector<64x256xbf16>, vector<256x32xbf16>, vector<64x32xf32> -> vector<64x32xf32>
    %c0_48 = arith.constant 0 : index
    %c0_49 = arith.constant 0 : index
    %92 = vector.load %arg8[%c0_48, %c0_49] : memref<1x32xf32, #tpu.memory_space<vmem>>, vector<1x32xf32>
    %93 = vector.broadcast %92 : vector<1x32xf32> to vector<64x32xf32>
    %94 = arith.addf %91, %93 : vector<64x32xf32>
    %c64 = arith.constant 64 : index
    %c0_50 = arith.constant 0 : index
    %95 = vector.load %arg11[%c64, %c0_50] : memref<128x32xf32, #tpu.memory_space<vmem>>, vector<64x32xf32>
    tpu.vector_store %arg11[%c64, %c0_50], %94 {strides = array<i32>} : memref<128x32xf32, #tpu.memory_space<vmem>>, vector<64x32xf32>,
    return
  }
}

module attributes {stable_mosaic.version = 11 : i64} {
  func.func @_conv_ln_kernel(%arg0: i32, %arg1: memref<1x17x256xf32, #tpu.memory_space<vmem>>, %arg2: memref<9x8x17xf32, #tpu.memory_space<vmem>>, %arg3: memref<8x1xf32, #tpu.memory_space<vmem>>, %arg4: memref<8x256xf32, #tpu.memory_space<vmem>>, %arg5: memref<8x256xf32, #tpu.memory_space<vmem>>, %arg6: memref<1x8x256xf32, #tpu.memory_space<vmem>>) attributes {dimension_semantics = [#tpu.dimension_semantics<parallel>], iteration_bounds = array<i64: 2>, scalar_prefetch = 0 : i64, scratch_operands = 0 : i64, tpu.core_type = #tpu.core_type<tc>, window_params = [{transform_indices = @transform_0, window_bounds = array<i64: 1, 17, 256>}, {pipeline_mode = #tpu.pipeline_mode<synchronous>, transform_indices = @transform_1, window_bounds = array<i64: 9, 8, 17>}, {pipeline_mode = #tpu.pipeline_mode<synchronous>, transform_indices = @transform_2, window_bounds = array<i64: 8, 1>}, {pipeline_mode = #tpu.pipeline_mode<synchronous>, transform_indices = @transform_3, window_bounds = array<i64: 8, 256>}, {pipeline_mode = #tpu.pipeline_mode<synchronous>, transform_indices = @transform_4, window_bounds = array<i64: 8, 256>}, {transform_indices = @transform_5, window_bounds = array<i64: 1, 8, 256>}]} {
    %c0 = arith.constant 0 : index
    %c0_0 = arith.constant 0 : index
    %c0_1 = arith.constant 0 : index
    %0 = vector.load %arg1[%c0, %c0_0, %c0_1] : memref<1x17x256xf32, #tpu.memory_space<vmem>>, vector<1x17x256xf32>
    %1 = vector.shape_cast %0 : vector<1x17x256xf32> to vector<17x256xf32>
    %2 = tpu.iota {dimensions = array<i32: 1>} : vector<1x256xi32>
    %c15_i32 = arith.constant 15 : i32
    %3 = vector.broadcast %c15_i32 : i32 to vector<1x256xi32>
    %4 = arith.andi %2, %3 : vector<1x256xi32>
    %cst = arith.constant 0.000000e+00 : f32
    %5 = vector.broadcast %cst : f32 to vector<8x256xf32>
    %c17_i32 = arith.constant 17 : i32
    %6 = tpu.dynamic_rotate %1 by %c17_i32 dim 1 : vector<17x256xf32>, i32 -> vector<17x256xf32>
    %c16_i32 = arith.constant 16 : i32
    %7 = vector.broadcast %c16_i32 : i32 to vector<1x256xi32>
    %8 = arith.cmpi sge, %2, %7 : vector<1x256xi32>
    %c1_i32 = arith.constant 1 : i32
    %9 = vector.broadcast %c1_i32 : i32 to vector<1x256xi32>
    %10 = arith.cmpi sge, %4, %9 : vector<1x256xi32>
    %11 = arith.andi %8, %10 : vector<1x256xi1>
    %cst_2 = arith.constant 1.000000e+00 : f32
    %cst_3 = arith.constant 0.000000e+00 : f32
    %12 = vector.broadcast %cst_2 : f32 to vector<1x256xf32>
    %13 = vector.broadcast %cst_3 : f32 to vector<1x256xf32>
    %14 = arith.select %11, %12, %13 : vector<1x256xi1>, vector<1x256xf32>
    %15 = vector.broadcast %14 : vector<1x256xf32> to vector<17x256xf32>
    %16 = arith.mulf %6, %15 : vector<17x256xf32>
    %c0_4 = arith.constant 0 : index
    %c0_5 = arith.constant 0 : index
    %c0_6 = arith.constant 0 : index
    %17 = vector.load %arg2[%c0_4, %c0_5, %c0_6] : memref<9x8x17xf32, #tpu.memory_space<vmem>>, vector<1x8x17xf32>
    %18 = vector.shape_cast %17 : vector<1x8x17xf32> to vector<8x17xf32>
    %cst_7 = arith.constant dense<0.000000e+00> : vector<8x256xf32>
    %19 = tpu.matmul %18, %16, %cst_7 {dimension_numbers = #tpu.dot_dimension_numbers<[1], [0], [0], [1], [0, 0, 1, 1], [], []>} : vector<8x17xf32>, vector<17x256xf32>, vector<8x256xf32> -> vector<8x256xf32>
    %20 = arith.addf %5, %19 : vector<8x256xf32>
    %c16_i32_8 = arith.constant 16 : i32
    %21 = tpu.dynamic_rotate %1 by %c16_i32_8 dim 1 : vector<17x256xf32>, i32 -> vector<17x256xf32>
    %c16_i32_9 = arith.constant 16 : i32
    %22 = vector.broadcast %c16_i32_9 : i32 to vector<1x256xi32>
    %23 = arith.cmpi sge, %2, %22 : vector<1x256xi32>
    %cst_10 = arith.constant 1.000000e+00 : f32
    %cst_11 = arith.constant 0.000000e+00 : f32
    %24 = vector.broadcast %cst_10 : f32 to vector<1x256xf32>
    %25 = vector.broadcast %cst_11 : f32 to vector<1x256xf32>
    %26 = arith.select %23, %24, %25 : vector<1x256xi1>, vector<1x256xf32>
    %27 = vector.broadcast %26 : vector<1x256xf32> to vector<17x256xf32>
    %28 = arith.mulf %21, %27 : vector<17x256xf32>
    %c1 = arith.constant 1 : index
    %c0_12 = arith.constant 0 : index
    %c0_13 = arith.constant 0 : index
    %29 = vector.load %arg2[%c1, %c0_12, %c0_13] : memref<9x8x17xf32, #tpu.memory_space<vmem>>, vector<1x8x17xf32>
    %30 = vector.shape_cast %29 : vector<1x8x17xf32> to vector<8x17xf32>
    %cst_14 = arith.constant dense<0.000000e+00> : vector<8x256xf32>
    %31 = tpu.matmul %30, %28, %cst_14 {dimension_numbers = #tpu.dot_dimension_numbers<[1], [0], [0], [1], [0, 0, 1, 1], [], []>} : vector<8x17xf32>, vector<17x256xf32>, vector<8x256xf32> -> vector<8x256xf32>
    %32 = arith.addf %20, %31 : vector<8x256xf32>
    %c15_i32_15 = arith.constant 15 : i32
    %33 = tpu.dynamic_rotate %1 by %c15_i32_15 dim 1 : vector<17x256xf32>, i32 -> vector<17x256xf32>
    %c16_i32_16 = arith.constant 16 : i32
    %34 = vector.broadcast %c16_i32_16 : i32 to vector<1x256xi32>
    %35 = arith.cmpi sge, %2, %34 : vector<1x256xi32>
    %c15_i32_17 = arith.constant 15 : i32
    %36 = vector.broadcast %c15_i32_17 : i32 to vector<1x256xi32>
    %37 = arith.cmpi slt, %4, %36 : vector<1x256xi32>
    %38 = arith.andi %35, %37 : vector<1x256xi1>
    %cst_18 = arith.constant 1.000000e+00 : f32
    %cst_19 = arith.constant 0.000000e+00 : f32
    %39 = vector.broadcast %cst_18 : f32 to vector<1x256xf32>
    %40 = vector.broadcast %cst_19 : f32 to vector<1x256xf32>
    %41 = arith.select %38, %39, %40 : vector<1x256xi1>, vector<1x256xf32>
    %42 = vector.broadcast %41 : vector<1x256xf32> to vector<17x256xf32>
    %43 = arith.mulf %33, %42 : vector<17x256xf32>
    %c2 = arith.constant 2 : index
    %c0_20 = arith.constant 0 : index
    %c0_21 = arith.constant 0 : index
    %44 = vector.load %arg2[%c2, %c0_20, %c0_21] : memref<9x8x17xf32, #tpu.memory_space<vmem>>, vector<1x8x17xf32>
    %45 = vector.shape_cast %44 : vector<1x8x17xf32> to vector<8x17xf32>
    %cst_22 = arith.constant dense<0.000000e+00> : vector<8x256xf32>
    %46 = tpu.matmul %45, %43, %cst_22 {dimension_numbers = #tpu.dot_dimension_numbers<[1], [0], [0], [1], [0, 0, 1, 1], [], []>} : vector<8x17xf32>, vector<17x256xf32>, vector<8x256xf32> -> vector<8x256xf32>
    %47 = arith.addf %32, %46 : vector<8x256xf32>
    %c1_i32_23 = arith.constant 1 : i32
    %48 = tpu.dynamic_rotate %1 by %c1_i32_23 dim 1 : vector<17x256xf32>, i32 -> vector<17x256xf32>
    %c1_i32_24 = arith.constant 1 : i32
    %49 = vector.broadcast %c1_i32_24 : i32 to vector<1x256xi32>
    %50 = arith.cmpi sge, %4, %49 : vector<1x256xi32>
    %cst_25 = arith.constant 1.000000e+00 : f32
    %cst_26 = arith.constant 0.000000e+00 : f32
    %51 = vector.broadcast %cst_25 : f32 to vector<1x256xf32>
    %52 = vector.broadcast %cst_26 : f32 to vector<1x256xf32>
    %53 = arith.select %50, %51, %52 : vector<1x256xi1>, vector<1x256xf32>
    %54 = vector.broadcast %53 : vector<1x256xf32> to vector<17x256xf32>
    %55 = arith.mulf %48, %54 : vector<17x256xf32>
    %c3 = arith.constant 3 : index
    %c0_27 = arith.constant 0 : index
    %c0_28 = arith.constant 0 : index
    %56 = vector.load %arg2[%c3, %c0_27, %c0_28] : memref<9x8x17xf32, #tpu.memory_space<vmem>>, vector<1x8x17xf32>
    %57 = vector.shape_cast %56 : vector<1x8x17xf32> to vector<8x17xf32>
    %cst_29 = arith.constant dense<0.000000e+00> : vector<8x256xf32>
    %58 = tpu.matmul %57, %55, %cst_29 {dimension_numbers = #tpu.dot_dimension_numbers<[1], [0], [0], [1], [0, 0, 1, 1], [], []>} : vector<8x17xf32>, vector<17x256xf32>, vector<8x256xf32> -> vector<8x256xf32>
    %59 = arith.addf %47, %58 : vector<8x256xf32>
    %c4 = arith.constant 4 : index
    %c0_30 = arith.constant 0 : index
    %c0_31 = arith.constant 0 : index
    %60 = vector.load %arg2[%c4, %c0_30, %c0_31] : memref<9x8x17xf32, #tpu.memory_space<vmem>>, vector<1x8x17xf32>
    %61 = vector.shape_cast %60 : vector<1x8x17xf32> to vector<8x17xf32>
    %cst_32 = arith.constant dense<0.000000e+00> : vector<8x256xf32>
    %62 = tpu.matmul %61, %1, %cst_32 {dimension_numbers = #tpu.dot_dimension_numbers<[1], [0], [0], [1], [0, 0, 1, 1], [], []>} : vector<8x17xf32>, vector<17x256xf32>, vector<8x256xf32> -> vector<8x256xf32>
    %63 = arith.addf %59, %62 : vector<8x256xf32>
    %c255_i32 = arith.constant 255 : i32
    %64 = tpu.dynamic_rotate %1 by %c255_i32 dim 1 : vector<17x256xf32>, i32 -> vector<17x256xf32>
    %c15_i32_33 = arith.constant 15 : i32
    %65 = vector.broadcast %c15_i32_33 : i32 to vector<1x256xi32>
    %66 = arith.cmpi slt, %4, %65 : vector<1x256xi32>
    %cst_34 = arith.constant 1.000000e+00 : f32
    %cst_35 = arith.constant 0.000000e+00 : f32
    %67 = vector.broadcast %cst_34 : f32 to vector<1x256xf32>
    %68 = vector.broadcast %cst_35 : f32 to vector<1x256xf32>
    %69 = arith.select %66, %67, %68 : vector<1x256xi1>, vector<1x256xf32>
    %70 = vector.broadcast %69 : vector<1x256xf32> to vector<17x256xf32>
    %71 = arith.mulf %64, %70 : vector<17x256xf32>
    %c5 = arith.constant 5 : index
    %c0_36 = arith.constant 0 : index
    %c0_37 = arith.constant 0 : index
    %72 = vector.load %arg2[%c5, %c0_36, %c0_37] : memref<9x8x17xf32, #tpu.memory_space<vmem>>, vector<1x8x17xf32>
    %73 = vector.shape_cast %72 : vector<1x8x17xf32> to vector<8x17xf32>
    %cst_38 = arith.constant dense<0.000000e+00> : vector<8x256xf32>
    %74 = tpu.matmul %73, %71, %cst_38 {dimension_numbers = #tpu.dot_dimension_numbers<[1], [0], [0], [1], [0, 0, 1, 1], [], []>} : vector<8x17xf32>, vector<17x256xf32>, vector<8x256xf32> -> vector<8x256xf32>
    %75 = arith.addf %63, %74 : vector<8x256xf32>
    %c241_i32 = arith.constant 241 : i32
    %76 = tpu.dynamic_rotate %1 by %c241_i32 dim 1 : vector<17x256xf32>, i32 -> vector<17x256xf32>
    %c240_i32 = arith.constant 240 : i32
    %77 = vector.broadcast %c240_i32 : i32 to vector<1x256xi32>
    %78 = arith.cmpi slt, %2, %77 : vector<1x256xi32>
    %c1_i32_39 = arith.constant 1 : i32
    %79 = vector.broadcast %c1_i32_39 : i32 to vector<1x256xi32>
    %80 = arith.cmpi sge, %4, %79 : vector<1x256xi32>
    %81 = arith.andi %78, %80 : vector<1x256xi1>
    %cst_40 = arith.constant 1.000000e+00 : f32
    %cst_41 = arith.constant 0.000000e+00 : f32
    %82 = vector.broadcast %cst_40 : f32 to vector<1x256xf32>
    %83 = vector.broadcast %cst_41 : f32 to vector<1x256xf32>
    %84 = arith.select %81, %82, %83 : vector<1x256xi1>, vector<1x256xf32>
    %85 = vector.broadcast %84 : vector<1x256xf32> to vector<17x256xf32>
    %86 = arith.mulf %76, %85 : vector<17x256xf32>
    %c6 = arith.constant 6 : index
    %c0_42 = arith.constant 0 : index
    %c0_43 = arith.constant 0 : index
    %87 = vector.load %arg2[%c6, %c0_42, %c0_43] : memref<9x8x17xf32, #tpu.memory_space<vmem>>, vector<1x8x17xf32>
    %88 = vector.shape_cast %87 : vector<1x8x17xf32> to vector<8x17xf32>
    %cst_44 = arith.constant dense<0.000000e+00> : vector<8x256xf32>
    %89 = tpu.matmul %88, %86, %cst_44 {dimension_numbers = #tpu.dot_dimension_numbers<[1], [0], [0], [1], [0, 0, 1, 1], [], []>} : vector<8x17xf32>, vector<17x256xf32>, vector<8x256xf32> -> vector<8x256xf32>
    %90 = arith.addf %75, %89 : vector<8x256xf32>
    %c240_i32_45 = arith.constant 240 : i32
    %91 = tpu.dynamic_rotate %1 by %c240_i32_45 dim 1 : vector<17x256xf32>, i32 -> vector<17x256xf32>
    %c240_i32_46 = arith.constant 240 : i32
    %92 = vector.broadcast %c240_i32_46 : i32 to vector<1x256xi32>
    %93 = arith.cmpi slt, %2, %92 : vector<1x256xi32>
    %cst_47 = arith.constant 1.000000e+00 : f32
    %cst_48 = arith.constant 0.000000e+00 : f32
    %94 = vector.broadcast %cst_47 : f32 to vector<1x256xf32>
    %95 = vector.broadcast %cst_48 : f32 to vector<1x256xf32>
    %96 = arith.select %93, %94, %95 : vector<1x256xi1>, vector<1x256xf32>
    %97 = vector.broadcast %96 : vector<1x256xf32> to vector<17x256xf32>
    %98 = arith.mulf %91, %97 : vector<17x256xf32>
    %c7 = arith.constant 7 : index
    %c0_49 = arith.constant 0 : index
    %c0_50 = arith.constant 0 : index
    %99 = vector.load %arg2[%c7, %c0_49, %c0_50] : memref<9x8x17xf32, #tpu.memory_space<vmem>>, vector<1x8x17xf32>
    %100 = vector.shape_cast %99 : vector<1x8x17xf32> to vector<8x17xf32>
    %cst_51 = arith.constant dense<0.000000e+00> : vector<8x256xf32>
    %101 = tpu.matmul %100, %98, %cst_51 {dimension_numbers = #tpu.dot_dimension_numbers<[1], [0], [0], [1], [0, 0, 1, 1], [], []>} : vector<8x17xf32>, vector<17x256xf32>, vector<8x256xf32> -> vector<8x256xf32>
    %102 = arith.addf %90, %101 : vector<8x256xf32>
    %c239_i32 = arith.constant 239 : i32
    %103 = tpu.dynamic_rotate %1 by %c239_i32 dim 1 : vector<17x256xf32>, i32 -> vector<17x256xf32>
    %c240_i32_52 = arith.constant 240 : i32
    %104 = vector.broadcast %c240_i32_52 : i32 to vector<1x256xi32>
    %105 = arith.cmpi slt, %2, %104 : vector<1x256xi32>
    %c15_i32_53 = arith.constant 15 : i32
    %106 = vector.broadcast %c15_i32_53 : i32 to vector<1x256xi32>
    %107 = arith.cmpi slt, %4, %106 : vector<1x256xi32>
    %108 = arith.andi %105, %107 : vector<1x256xi1>
    %cst_54 = arith.constant 1.000000e+00 : f32
    %cst_55 = arith.constant 0.000000e+00 : f32
    %109 = vector.broadcast %cst_54 : f32 to vector<1x256xf32>
    %110 = vector.broadcast %cst_55 : f32 to vector<1x256xf32>
    %111 = arith.select %108, %109, %110 : vector<1x256xi1>, vector<1x256xf32>
    %112 = vector.broadcast %111 : vector<1x256xf32> to vector<17x256xf32>
    %113 = arith.mulf %103, %112 : vector<17x256xf32>
    %c8 = arith.constant 8 : index
    %c0_56 = arith.constant 0 : index
    %c0_57 = arith.constant 0 : index
    %114 = vector.load %arg2[%c8, %c0_56, %c0_57] : memref<9x8x17xf32, #tpu.memory_space<vmem>>, vector<1x8x17xf32>
    %115 = vector.shape_cast %114 : vector<1x8x17xf32> to vector<8x17xf32>
    %cst_58 = arith.constant dense<0.000000e+00> : vector<8x256xf32>
    %116 = tpu.matmul %115, %113, %cst_58 {dimension_numbers = #tpu.dot_dimension_numbers<[1], [0], [0], [1], [0, 0, 1, 1], [], []>} : vector<8x17xf32>, vector<17x256xf32>, vector<8x256xf32> -> vector<8x256xf32>
    %117 = arith.addf %102, %116 : vector<8x256xf32>
    %c0_59 = arith.constant 0 : index
    %c0_60 = arith.constant 0 : index
    %118 = vector.load %arg3[%c0_59, %c0_60] : memref<8x1xf32, #tpu.memory_space<vmem>>, vector<8x1xf32>
    %119 = vector.broadcast %118 : vector<8x1xf32> to vector<8x256xf32>
    %120 = arith.addf %117, %119 : vector<8x256xf32>
    %cst_61 = arith.constant dense<0.000000e+00> : vector<8xf32>
    %121 = vector.multi_reduction <add>, %120, %cst_61 [1] : vector<8x256xf32> to vector<8xf32>
    %122 = vector.shape_cast %121 : vector<8xf32> to vector<8x1xf32>
    %cst_62 = arith.constant dense<0.000000e+00> : vector<1xf32>
    %123 = vector.multi_reduction <add>, %122, %cst_62 [0] : vector<8x1xf32> to vector<1xf32>
    %124 = vector.shape_cast %123 : vector<1xf32> to vector<1x1xf32>
    %cst_63 = arith.constant 2.048000e+03 : f32
    %125 = vector.broadcast %cst_63 : f32 to vector<1x1xf32>
    %126 = arith.divf %124, %125 : vector<1x1xf32>
    %127 = vector.broadcast %126 : vector<1x1xf32> to vector<8x256xf32>
    %128 = arith.subf %120, %127 : vector<8x256xf32>
    %129 = arith.mulf %128, %128 : vector<8x256xf32>
    %cst_64 = arith.constant dense<0.000000e+00> : vector<8xf32>
    %130 = vector.multi_reduction <add>, %129, %cst_64 [1] : vector<8x256xf32> to vector<8xf32>
    %131 = vector.shape_cast %130 : vector<8xf32> to vector<8x1xf32>
    %cst_65 = arith.constant dense<0.000000e+00> : vector<1xf32>
    %132 = vector.multi_reduction <add>, %131, %cst_65 [0] : vector<8x1xf32> to vector<1xf32>
    %133 = vector.shape_cast %132 : vector<1xf32> to vector<1x1xf32>
    %cst_66 = arith.constant 2.048000e+03 : f32
    %134 = vector.broadcast %cst_66 : f32 to vector<1x1xf32>
    %135 = arith.divf %133, %134 : vector<1x1xf32>
    %cst_67 = arith.constant 9.99999974E-6 : f32
    %136 = vector.broadcast %cst_67 : f32 to vector<1x1xf32>
    %137 = arith.addf %135, %136 : vector<1x1xf32>
    %138 = math.rsqrt %137 : vector<1x1xf32>
    %139 = vector.broadcast %138 : vector<1x1xf32> to vector<8x256xf32>
    %140 = arith.mulf %128, %139 : vector<8x256xf32>
    %c0_68 = arith.constant 0 : index
    %c0_69 = arith.constant 0 : index
    %141 = vector.load %arg4[%c0_68, %c0_69] : memref<8x256xf32, #tpu.memory_space<vmem>>, vector<8x256xf32>
    %142 = arith.mulf %140, %141 : vector<8x256xf32>
    %c0_70 = arith.constant 0 : index
    %c0_71 = arith.constant 0 : index
    %143 = vector.load %arg5[%c0_70, %c0_71] : memref<8x256xf32, #tpu.memory_space<vmem>>, vector<8x256xf32>
    %144 = arith.addf %142, %143 : vector<8x256xf32>
    %c0_72 = arith.constant 0 : index
    %c0_73 = arith.constant 0 : index
    %c0_74 = arith.constant 0 : index
    %145 = vector.load %arg6[%c0_72, %c0_73, %c0_74] : memref<1x8x256xf32, #tpu.memory_space<vmem>>, vector<1x8x256xf32>
    %146 = vector.shape_cast %145 : vector<1x8x256xf32> to vector<8x256xf32>
    %147 = vector.shape_cast %144 : vector<8x256xf32> to vector<1x8x256xf32>
    tpu.vector_store %arg6[%c0_72, %c0_73, %c0_74], %147 {strides = array<i32>} : memref<1x8x256xf32, #tpu.memory_space<vmem>>, vector<1x8x256xf32>,
    return
  }
  func.func @transform_0(%arg0: i32) -> (i32, i32, i32) {
    %c0_i32 = arith.constant 0 : i32
    %c0_i32_0 = arith.constant 0 : i32
    %c0_i32_1 = arith.constant 0 : i32
    return %arg0, %c0_i32, %c0_i32_0 : i32, i32, i32
  }
  func.func @transform_1(%arg0: i32) -> (i32, i32, i32) {
    %c0_i32 = arith.constant 0 : i32
    %c0_i32_0 = arith.constant 0 : i32
    %c0_i32_1 = arith.constant 0 : i32
    %c0_i32_2 = arith.constant 0 : i32
    return %c0_i32, %c0_i32_0, %c0_i32_1 : i32, i32, i32
  }
  func.func @transform_2(%arg0: i32) -> (i32, i32) {
    %c0_i32 = arith.constant 0 : i32
    %c0_i32_0 = arith.constant 0 : i32
    %c0_i32_1 = arith.constant 0 : i32
    return %c0_i32, %c0_i32_0 : i32, i32
  }
  func.func @transform_3(%arg0: i32) -> (i32, i32) {
    %c0_i32 = arith.constant 0 : i32
    %c0_i32_0 = arith.constant 0 : i32
    %c0_i32_1 = arith.constant 0 : i32
    return %c0_i32, %c0_i32_0 : i32, i32
  }
  func.func @transform_4(%arg0: i32) -> (i32, i32) {
    %c0_i32 = arith.constant 0 : i32
    %c0_i32_0 = arith.constant 0 : i32
    %c0_i32_1 = arith.constant 0 : i32
    return %c0_i32, %c0_i32_0 : i32, i32
  }
  func.func @transform_5(%arg0: i32) -> (i32, i32, i32) {
    %c0_i32 = arith.constant 0 : i32
    %c0_i32_0 = arith.constant 0 : i32
    %c0_i32_1 = arith.constant 0 : i32
    return %arg0, %c0_i32, %c0_i32_0 : i32, i32, i32
  }
}

module attributes {stable_mosaic.version = 11 : i64} {
  func.func @_pbmsa_kernel(%arg0: memref<32x128xf32, #tpu.memory_space<vmem>>, %arg1: memref<128x256xbf16, #tpu.memory_space<vmem>>, %arg2: memref<1x256xf32, #tpu.memory_space<vmem>>, %arg3: memref<256x768xbf16, #tpu.memory_space<vmem>>, %arg4: memref<1x768xf32, #tpu.memory_space<vmem>>, %arg5: memref<256x256xbf16, #tpu.memory_space<vmem>>, %arg6: memref<1x256xf32, #tpu.memory_space<vmem>>, %arg7: memref<256x128xbf16, #tpu.memory_space<vmem>>, %arg8: memref<1x128xf32, #tpu.memory_space<vmem>>, %arg9: memref<256x8xf32, #tpu.memory_space<vmem>>, %arg10: memref<8x256xf32, #tpu.memory_space<vmem>>, %arg11: memref<32x128xf32, #tpu.memory_space<vmem>>) attributes {dimension_semantics = [], scalar_prefetch = 0 : i64, scratch_operands = 0 : i64, tpu.core_type = #tpu.core_type<tc>} {
    %c0 = arith.constant 0 : index
    %c0_0 = arith.constant 0 : index
    %0 = vector.load %arg0[%c0, %c0_0] : memref<32x128xf32, #tpu.memory_space<vmem>>, vector<32x128xf32>
    %1 = arith.truncf %0 : vector<32x128xf32> to vector<32x128xbf16>
    %c0_1 = arith.constant 0 : index
    %c0_2 = arith.constant 0 : index
    %2 = vector.load %arg1[%c0_1, %c0_2] : memref<128x256xbf16, #tpu.memory_space<vmem>>, vector<128x256xbf16>
    %cst = arith.constant dense<0.000000e+00> : vector<32x256xf32>
    %3 = tpu.matmul %1, %2, %cst {dimension_numbers = #tpu.dot_dimension_numbers<[1], [0], [0], [1], [0, 0, 1, 1], [], []>} : vector<32x128xbf16>, vector<128x256xbf16>, vector<32x256xf32> -> vector<32x256xf32>
    %c0_3 = arith.constant 0 : index
    %c0_4 = arith.constant 0 : index
    %4 = vector.load %arg2[%c0_3, %c0_4] : memref<1x256xf32, #tpu.memory_space<vmem>>, vector<1x256xf32>
    %5 = vector.broadcast %4 : vector<1x256xf32> to vector<32x256xf32>
    %6 = arith.addf %3, %5 : vector<32x256xf32>
    %7 = arith.truncf %6 : vector<32x256xf32> to vector<32x256xbf16>
    %c0_5 = arith.constant 0 : index
    %c0_6 = arith.constant 0 : index
    %8 = vector.load %arg3[%c0_5, %c0_6] : memref<256x768xbf16, #tpu.memory_space<vmem>>, vector<256x768xbf16>
    %cst_7 = arith.constant dense<0.000000e+00> : vector<32x768xf32>
    %9 = tpu.matmul %7, %8, %cst_7 {dimension_numbers = #tpu.dot_dimension_numbers<[1], [0], [0], [1], [0, 0, 1, 1], [], []>} : vector<32x256xbf16>, vector<256x768xbf16>, vector<32x768xf32> -> vector<32x768xf32>
    %c0_8 = arith.constant 0 : index
    %c0_9 = arith.constant 0 : index
    %10 = vector.load %arg4[%c0_8, %c0_9] : memref<1x768xf32, #tpu.memory_space<vmem>>, vector<1x768xf32>
    %11 = vector.broadcast %10 : vector<1x768xf32> to vector<32x768xf32>
    %12 = arith.addf %9, %11 : vector<32x768xf32>
    %13 = vector.extract_strided_slice %12 {offsets = [0, 0], sizes = [32, 256], strides = [1, 1]} : vector<32x768xf32> to vector<32x256xf32>
    %14 = vector.extract_strided_slice %12 {offsets = [0, 256], sizes = [32, 256], strides = [1, 1]} : vector<32x768xf32> to vector<32x256xf32>
    %15 = vector.extract_strided_slice %12 {offsets = [0, 512], sizes = [32, 256], strides = [1, 1]} : vector<32x768xf32> to vector<32x256xf32>
    %c0_10 = arith.constant 0 : index
    %c0_11 = arith.constant 0 : index
    %16 = vector.load %arg9[%c0_10, %c0_11] : memref<256x8xf32, #tpu.memory_space<vmem>>, vector<256x8xf32>
    %c0_12 = arith.constant 0 : index
    %c0_13 = arith.constant 0 : index
    %17 = vector.load %arg10[%c0_12, %c0_13] : memref<8x256xf32, #tpu.memory_space<vmem>>, vector<8x256xf32>
    %18 = vector.extract_strided_slice %13 {offsets = [0, 0], sizes = [16, 256], strides = [1, 1]} : vector<32x256xf32> to vector<16x256xf32>
    %19 = vector.extract_strided_slice %13 {offsets = [16, 0], sizes = [16, 256], strides = [1, 1]} : vector<32x256xf32> to vector<16x256xf32>
    %20 = vector.extract_strided_slice %14 {offsets = [0, 0], sizes = [16, 256], strides = [1, 1]} : vector<32x256xf32> to vector<16x256xf32>
    %21 = vector.extract_strided_slice %14 {offsets = [16, 0], sizes = [16, 256], strides = [1, 1]} : vector<32x256xf32> to vector<16x256xf32>
    %22 = vector.extract_strided_slice %15 {offsets = [0, 0], sizes = [16, 256], strides = [1, 1]} : vector<32x256xf32> to vector<16x256xf32>
    %23 = vector.extract_strided_slice %15 {offsets = [16, 0], sizes = [16, 256], strides = [1, 1]} : vector<32x256xf32> to vector<16x256xf32>
    %24 = arith.mulf %18, %20 : vector<16x256xf32>
    %cst_14 = arith.constant dense<0.000000e+00> : vector<16x8xf32>
    %25 = tpu.matmul %24, %16, %cst_14 {dimension_numbers = #tpu.dot_dimension_numbers<[1], [0], [0], [1], [0, 0, 1, 1], [], []>} : vector<16x256xf32>, vector<256x8xf32>, vector<16x8xf32> -> vector<16x8xf32>
    %cst_15 = arith.constant 0.176776692 : f32
    %26 = vector.broadcast %cst_15 : f32 to vector<16x8xf32>
    %27 = arith.mulf %25, %26 : vector<16x8xf32>
    %28 = arith.mulf %18, %21 : vector<16x256xf32>
    %cst_16 = arith.constant dense<0.000000e+00> : vector<16x8xf32>
    %29 = tpu.matmul %28, %16, %cst_16 {dimension_numbers = #tpu.dot_dimension_numbers<[1], [0], [0], [1], [0, 0, 1, 1], [], []>} : vector<16x256xf32>, vector<256x8xf32>, vector<16x8xf32> -> vector<16x8xf32>
    %cst_17 = arith.constant 0.176776692 : f32
    %30 = vector.broadcast %cst_17 : f32 to vector<16x8xf32>
    %31 = arith.mulf %29, %30 : vector<16x8xf32>
    %32 = arith.maximumf %27, %31 : vector<16x8xf32>
    %33 = arith.subf %27, %32 : vector<16x8xf32>
    %34 = math.exp %33 : vector<16x8xf32>
    %35 = arith.subf %31, %32 : vector<16x8xf32>
    %36 = math.exp %35 : vector<16x8xf32>
    %37 = arith.addf %34, %36 : vector<16x8xf32>
    %cst_18 = arith.constant 1.000000e+00 : f32
    %38 = vector.broadcast %cst_18 : f32 to vector<16x8xf32>
    %39 = arith.divf %38, %37 : vector<16x8xf32>
    %40 = arith.mulf %34, %39 : vector<16x8xf32>
    %cst_19 = arith.constant dense<0.000000e+00> : vector<16x256xf32>
    %41 = tpu.matmul %40, %17, %cst_19 {dimension_numbers = #tpu.dot_dimension_numbers<[1], [0], [0], [1], [0, 0, 1, 1], [], []>} : vector<16x8xf32>, vector<8x256xf32>, vector<16x256xf32> -> vector<16x256xf32>
    %42 = arith.mulf %41, %22 : vector<16x256xf32>
    %43 = arith.mulf %36, %39 : vector<16x8xf32>
    %cst_20 = arith.constant dense<0.000000e+00> : vector<16x256xf32>
    %44 = tpu.matmul %43, %17, %cst_20 {dimension_numbers = #tpu.dot_dimension_numbers<[1], [0], [0], [1], [0, 0, 1, 1], [], []>} : vector<16x8xf32>, vector<8x256xf32>, vector<16x256xf32> -> vector<16x256xf32>
    %45 = arith.mulf %44, %23 : vector<16x256xf32>
    %46 = arith.addf %42, %45 : vector<16x256xf32>
    %47 = arith.truncf %46 : vector<16x256xf32> to vector<16x256xbf16>
    %c0_21 = arith.constant 0 : index
    %c0_22 = arith.constant 0 : index
    %48 = vector.load %arg5[%c0_21, %c0_22] : memref<256x256xbf16, #tpu.memory_space<vmem>>, vector<256x256xbf16>
    %cst_23 = arith.constant dense<0.000000e+00> : vector<16x256xf32>
    %49 = tpu.matmul %47, %48, %cst_23 {dimension_numbers = #tpu.dot_dimension_numbers<[1], [0], [0], [1], [0, 0, 1, 1], [], []>} : vector<16x256xbf16>, vector<256x256xbf16>, vector<16x256xf32> -> vector<16x256xf32>
    %c0_24 = arith.constant 0 : index
    %c0_25 = arith.constant 0 : index
    %50 = vector.load %arg6[%c0_24, %c0_25] : memref<1x256xf32, #tpu.memory_space<vmem>>, vector<1x256xf32>
    %51 = vector.broadcast %50 : vector<1x256xf32> to vector<16x256xf32>
    %52 = arith.addf %49, %51 : vector<16x256xf32>
    %53 = arith.truncf %52 : vector<16x256xf32> to vector<16x256xbf16>
    %c0_26 = arith.constant 0 : index
    %c0_27 = arith.constant 0 : index
    %54 = vector.load %arg7[%c0_26, %c0_27] : memref<256x128xbf16, #tpu.memory_space<vmem>>, vector<256x128xbf16>
    %cst_28 = arith.constant dense<0.000000e+00> : vector<16x128xf32>
    %55 = tpu.matmul %53, %54, %cst_28 {dimension_numbers = #tpu.dot_dimension_numbers<[1], [0], [0], [1], [0, 0, 1, 1], [], []>} : vector<16x256xbf16>, vector<256x128xbf16>, vector<16x128xf32> -> vector<16x128xf32>
    %c0_29 = arith.constant 0 : index
    %c0_30 = arith.constant 0 : index
    %56 = vector.load %arg8[%c0_29, %c0_30] : memref<1x128xf32, #tpu.memory_space<vmem>>, vector<1x128xf32>
    %57 = vector.broadcast %56 : vector<1x128xf32> to vector<16x128xf32>
    %58 = arith.addf %55, %57 : vector<16x128xf32>
    %c0_31 = arith.constant 0 : index
    %c0_32 = arith.constant 0 : index
    %59 = vector.load %arg11[%c0_31, %c0_32] : memref<32x128xf32, #tpu.memory_space<vmem>>, vector<16x128xf32>
    tpu.vector_store %arg11[%c0_31, %c0_32], %58 {strides = array<i32>} : memref<32x128xf32, #tpu.memory_space<vmem>>, vector<16x128xf32>,
    %60 = arith.mulf %19, %20 : vector<16x256xf32>
    %cst_33 = arith.constant dense<0.000000e+00> : vector<16x8xf32>
    %61 = tpu.matmul %60, %16, %cst_33 {dimension_numbers = #tpu.dot_dimension_numbers<[1], [0], [0], [1], [0, 0, 1, 1], [], []>} : vector<16x256xf32>, vector<256x8xf32>, vector<16x8xf32> -> vector<16x8xf32>
    %cst_34 = arith.constant 0.176776692 : f32
    %62 = vector.broadcast %cst_34 : f32 to vector<16x8xf32>
    %63 = arith.mulf %61, %62 : vector<16x8xf32>
    %64 = arith.mulf %19, %21 : vector<16x256xf32>
    %cst_35 = arith.constant dense<0.000000e+00> : vector<16x8xf32>
    %65 = tpu.matmul %64, %16, %cst_35 {dimension_numbers = #tpu.dot_dimension_numbers<[1], [0], [0], [1], [0, 0, 1, 1], [], []>} : vector<16x256xf32>, vector<256x8xf32>, vector<16x8xf32> -> vector<16x8xf32>
    %cst_36 = arith.constant 0.176776692 : f32
    %66 = vector.broadcast %cst_36 : f32 to vector<16x8xf32>
    %67 = arith.mulf %65, %66 : vector<16x8xf32>
    %68 = arith.maximumf %63, %67 : vector<16x8xf32>
    %69 = arith.subf %63, %68 : vector<16x8xf32>
    %70 = math.exp %69 : vector<16x8xf32>
    %71 = arith.subf %67, %68 : vector<16x8xf32>
    %72 = math.exp %71 : vector<16x8xf32>
    %73 = arith.addf %70, %72 : vector<16x8xf32>
    %cst_37 = arith.constant 1.000000e+00 : f32
    %74 = vector.broadcast %cst_37 : f32 to vector<16x8xf32>
    %75 = arith.divf %74, %73 : vector<16x8xf32>
    %76 = arith.mulf %70, %75 : vector<16x8xf32>
    %cst_38 = arith.constant dense<0.000000e+00> : vector<16x256xf32>
    %77 = tpu.matmul %76, %17, %cst_38 {dimension_numbers = #tpu.dot_dimension_numbers<[1], [0], [0], [1], [0, 0, 1, 1], [], []>} : vector<16x8xf32>, vector<8x256xf32>, vector<16x256xf32> -> vector<16x256xf32>
    %78 = arith.mulf %77, %22 : vector<16x256xf32>
    %79 = arith.mulf %72, %75 : vector<16x8xf32>
    %cst_39 = arith.constant dense<0.000000e+00> : vector<16x256xf32>
    %80 = tpu.matmul %79, %17, %cst_39 {dimension_numbers = #tpu.dot_dimension_numbers<[1], [0], [0], [1], [0, 0, 1, 1], [], []>} : vector<16x8xf32>, vector<8x256xf32>, vector<16x256xf32> -> vector<16x256xf32>
    %81 = arith.mulf %80, %23 : vector<16x256xf32>
    %82 = arith.addf %78, %81 : vector<16x256xf32>
    %83 = arith.truncf %82 : vector<16x256xf32> to vector<16x256xbf16>
    %c0_40 = arith.constant 0 : index
    %c0_41 = arith.constant 0 : index
    %84 = vector.load %arg5[%c0_40, %c0_41] : memref<256x256xbf16, #tpu.memory_space<vmem>>, vector<256x256xbf16>
    %cst_42 = arith.constant dense<0.000000e+00> : vector<16x256xf32>
    %85 = tpu.matmul %83, %84, %cst_42 {dimension_numbers = #tpu.dot_dimension_numbers<[1], [0], [0], [1], [0, 0, 1, 1], [], []>} : vector<16x256xbf16>, vector<256x256xbf16>, vector<16x256xf32> -> vector<16x256xf32>
    %c0_43 = arith.constant 0 : index
    %c0_44 = arith.constant 0 : index
    %86 = vector.load %arg6[%c0_43, %c0_44] : memref<1x256xf32, #tpu.memory_space<vmem>>, vector<1x256xf32>
    %87 = vector.broadcast %86 : vector<1x256xf32> to vector<16x256xf32>
    %88 = arith.addf %85, %87 : vector<16x256xf32>
    %89 = arith.truncf %88 : vector<16x256xf32> to vector<16x256xbf16>
    %c0_45 = arith.constant 0 : index
    %c0_46 = arith.constant 0 : index
    %90 = vector.load %arg7[%c0_45, %c0_46] : memref<256x128xbf16, #tpu.memory_space<vmem>>, vector<256x128xbf16>
    %cst_47 = arith.constant dense<0.000000e+00> : vector<16x128xf32>
    %91 = tpu.matmul %89, %90, %cst_47 {dimension_numbers = #tpu.dot_dimension_numbers<[1], [0], [0], [1], [0, 0, 1, 1], [], []>} : vector<16x256xbf16>, vector<256x128xbf16>, vector<16x128xf32> -> vector<16x128xf32>
    %c0_48 = arith.constant 0 : index
    %c0_49 = arith.constant 0 : index
    %92 = vector.load %arg8[%c0_48, %c0_49] : memref<1x128xf32, #tpu.memory_space<vmem>>, vector<1x128xf32>
    %93 = vector.broadcast %92 : vector<1x128xf32> to vector<16x128xf32>
    %94 = arith.addf %91, %93 : vector<16x128xf32>
    %c16 = arith.constant 16 : index
    %c0_50 = arith.constant 0 : index
    %95 = vector.load %arg11[%c16, %c0_50] : memref<32x128xf32, #tpu.memory_space<vmem>>, vector<16x128xf32>
    tpu.vector_store %arg11[%c16, %c0_50], %94 {strides = array<i32>} : memref<32x128xf32, #tpu.memory_space<vmem>>, vector<16x128xf32>,
    return
  }
}

</mosaic_0001>

<llo_original>
// kernel: res_core_blocks_forward.72
$region0: #{res_core_blocks_forward.72}
  #allocation0 [shape = 'u32[]', space=smem, size = 0x4, offset = 0x4, fixed_abs, tag = 'smem constant byte address 0x4 - core index']
  #allocation1 [shape = 'u32[144,128]{1,0:T(1,128)}', space=vmem, size = 0x12000, scoped, tag = 'internal scratch']
  %s0 = inlined_call_operand.vmem [shape: f32[2,8,256], index: 0, kind: input, shape index: {}]
  %s1 = inlined_call_operand.vmem [shape: f32[8,1], index: 1, kind: input, shape index: {}]
  %s2 = inlined_call_operand.vmem [shape: f32[8,1], index: 2, kind: input, shape index: {}]
  %s3 = inlined_call_operand.vmem [shape: f32[9,1,3], index: 3, kind: input, shape index: {}]
  %s4 = inlined_call_operand.vmem [shape: f32[4,8], index: 4, kind: input, shape index: {}]
  %s5 = inlined_call_operand.vmem [shape: f32[8,4], index: 5, kind: input, shape index: {}]
  %s6 = inlined_call_operand.vmem [shape: f32[2,8,256], index: 6, kind: output, shape index: {0}]
  %s7 = inlined_call_operand.vmem [shape: f32[2,1,256], index: 7, kind: output, shape index: {1}]
  %s8 = inlined_call_operand.vmem [shape: f32[2,8,256], index: 8, kind: output, shape index: {2}]
  %9 = xla_tuple %s6, %s7, %s8
  %s10 = sld [smem:[#allocation0]]
  $region73: #{res_core_blocks_forward.72} parent=0
    _
  %s12 = ssub.s32 1, %s10
  %s13 = scalar_select 0, %s12, %s10
  loop: start=0, step=1, limit=4
  $region2: #{res_core_blocks_forward.72} parent=0 // loop_pre_header
    _
  $region3: #{res_core_blocks_forward.72} parent=0 // loop_header
    %s15 = sphi 0, %s19
    %p16 = scmp.ge.s32.totalorder %s15, 4
    %s25 = sphi 0, %s27
    %s28 = sphi 0, %s25
    %s29 = sphi 0, %s28
    %s45 = sphi 0, %s29
    %s49 = sphi 0, %s49
    %s51 = sphi 0, %s49
    %s52 = sphi 0, %s51
    %s66 = sphi 0, %s52
    %s70 = sphi 0, %s70
    %s72 = sphi 0, %s70
    %s73 = sphi 0, %s72
    %s87 = sphi 0, %s73
    %s91 = sphi 0, %s91
    %s93 = sphi 0, %s91
    %s94 = sphi 0, %s93
    %s108 = sphi 0, %s94
    %s112 = sphi 0, %s112
    %s114 = sphi 0, %s112
    %s115 = sphi 0, %s114
    %s129 = sphi 0, %s115
    %s133 = sphi 0, %s133
    %s135 = sphi 0, %s133
    %s136 = sphi 0, %s135
    %s150 = sphi 0, %s136
    %s156 = sphi 0, %s158
    %s159 = sphi 0, %s156
    %s160 = sphi 0, %s159
    %s176 = sphi 0, %s160
    %s182 = sphi 0, %s184
    %s185 = sphi 0, %s182
    %s186 = sphi 0, %s185
    %s202 = sphi 0, %s186
    %s208 = sphi 0, %s210
    %s211 = sphi 0, %s208
    %s212 = sphi 0, %s211
    %s228 = sphi 0, %s212
  $region4: #{res_core_blocks_forward.72} parent=0 // loop_header_branch
    %18 = sbr.rel (%p16) target = $region8
  $region5: #{res_core_blocks_forward.72} parent=0 // loop_body
    %s20 = ssub.s32 %s15, 1
    %s21 = ssub.s32 %s15, 2
    %s22 = sadd.s32 %s15, 1
    %s23 = ssub.s32 %s15, %s22
    %p24 = scmp.eq.s32.totalorder %s23, 0
    %s26 = sadd.s32 %s25, 1
    %s27 = scalar_select %p24, %s25, %s26
    %p30 = pneg %p24
    %p31 = scmp.eq.s32.totalorder %s15, 1
    %p32 = por %p30, %p31
    %p33 = scmp.ne.s32.totalorder %s25, %s28
    %p34 = scmp.eq.s32.totalorder %s15, 0
    %p35 = por %p33, %p34
    %p36 = scmp.ne.s32.totalorder %s25, %s28
    %p37 = scmp.eq.s32.totalorder %s20, 1
    %p38 = por %p36, %p37
    %p39 = scmp.ne.s32.totalorder %s28, %s29
    %p40 = scmp.eq.s32.totalorder %s20, 0
    %p41 = por %p39, %p40
    %p42 = scmp.ne.s32.totalorder %s28, %s29
    %p43 = scmp.eq.s32.totalorder %s21, 1
    %p44 = por %p42, %p43
    %p46 = scmp.ne.s32.totalorder %s29, %s45
    %p47 = scmp.eq.s32.totalorder %s21, 0
    %p48 = por %p46, %p47
    %s50 = sadd.s32 %s49, 1
    %p53 = scmp.eq.s32.totalorder %s15, 1
    %p54 = scmp.ne.s32.totalorder %s49, %s51
    %p55 = scmp.eq.s32.totalorder %s15, 0
    %p56 = por %p54, %p55
    %p57 = scmp.ne.s32.totalorder %s49, %s51
    %p58 = scmp.eq.s32.totalorder %s20, 1
    %p59 = por %p57, %p58
    %p60 = scmp.ne.s32.totalorder %s51, %s52
    %p61 = scmp.eq.s32.totalorder %s20, 0
    %p62 = por %p60, %p61
    %p63 = scmp.ne.s32.totalorder %s51, %s52
    %p64 = scmp.eq.s32.totalorder %s21, 1
    %p65 = por %p63, %p64
    %p67 = scmp.ne.s32.totalorder %s52, %s66
    %p68 = scmp.eq.s32.totalorder %s21, 0
    %p69 = por %p67, %p68
    %s71 = sadd.s32 %s70, 1
    %p74 = scmp.eq.s32.totalorder %s15, 1
    %p75 = scmp.ne.s32.totalorder %s70, %s72
    %p76 = scmp.eq.s32.totalorder %s15, 0
    %p77 = por %p75, %p76
    %p78 = scmp.ne.s32.totalorder %s70, %s72
    %p79 = scmp.eq.s32.totalorder %s20, 1
    %p80 = por %p78, %p79
    %p81 = scmp.ne.s32.totalorder %s72, %s73
    %p82 = scmp.eq.s32.totalorder %s20, 0
    %p83 = por %p81, %p82
    %p84 = scmp.ne.s32.totalorder %s72, %s73
    %p85 = scmp.eq.s32.totalorder %s21, 1
    %p86 = por %p84, %p85
    %p88 = scmp.ne.s32.totalorder %s73, %s87
    %p89 = scmp.eq.s32.totalorder %s21, 0
    %p90 = por %p88, %p89
    %s92 = sadd.s32 %s91, 1
    %p95 = scmp.eq.s32.totalorder %s15, 1
    %p96 = scmp.ne.s32.totalorder %s91, %s93
    %p97 = scmp.eq.s32.totalorder %s15, 0
    %p98 = por %p96, %p97
    %p99 = scmp.ne.s32.totalorder %s91, %s93
    %p100 = scmp.eq.s32.totalorder %s20, 1
    %p101 = por %p99, %p100
    %p102 = scmp.ne.s32.totalorder %s93, %s94
    %p103 = scmp.eq.s32.totalorder %s20, 0
    %p104 = por %p102, %p103
    %p105 = scmp.ne.s32.totalorder %s93, %s94
    %p106 = scmp.eq.s32.totalorder %s21, 1
    %p107 = por %p105, %p106
    %p109 = scmp.ne.s32.totalorder %s94, %s108
    %p110 = scmp.eq.s32.totalorder %s21, 0
    %p111 = por %p109, %p110
    %s113 = sadd.s32 %s112, 1
    %p116 = scmp.eq.s32.totalorder %s15, 1
    %p117 = scmp.ne.s32.totalorder %s112, %s114
    %p118 = scmp.eq.s32.totalorder %s15, 0
    %p119 = por %p117, %p118
    %p120 = scmp.ne.s32.totalorder %s112, %s114
    %p121 = scmp.eq.s32.totalorder %s20, 1
    %p122 = por %p120, %p121
    %p123 = scmp.ne.s32.totalorder %s114, %s115
    %p124 = scmp.eq.s32.totalorder %s20, 0
    %p125 = por %p123, %p124
    %p126 = scmp.ne.s32.totalorder %s114, %s115
    %p127 = scmp.eq.s32.totalorder %s21, 1
    %p128 = por %p126, %p127
    %p130 = scmp.ne.s32.totalorder %s115, %s129
    %p131 = scmp.eq.s32.totalorder %s21, 0
    %p132 = por %p130, %p131
    %s134 = sadd.s32 %s133, 1
    %p137 = scmp.eq.s32.totalorder %s15, 1
    %p138 = scmp.ne.s32.totalorder %s133, %s135
    %p139 = scmp.eq.s32.totalorder %s15, 0
    %p140 = por %p138, %p139
    %p141 = scmp.ne.s32.totalorder %s133, %s135
    %p142 = scmp.eq.s32.totalorder %s20, 1
    %p143 = por %p141, %p142
    %p144 = scmp.ne.s32.totalorder %s135, %s136
    %p145 = scmp.eq.s32.totalorder %s20, 0
    %p146 = por %p144, %p145
    %p147 = scmp.ne.s32.totalorder %s135, %s136
    %p148 = scmp.eq.s32.totalorder %s21, 1
    %p149 = por %p147, %p148
    %p151 = scmp.ne.s32.totalorder %s136, %s150
    %p152 = scmp.eq.s32.totalorder %s21, 0
    %p153 = por %p151, %p152
    %s154 = ssub.s32 %s15, %s22
    %p155 = scmp.eq.s32.totalorder %s154, 0
    %s157 = sadd.s32 %s156, 1
    %s158 = scalar_select %p155, %s156, %s157
    %p161 = pneg %p155
    %p162 = scmp.eq.s32.totalorder %s15, 1
    %p163 = por %p161, %p162
    %p164 = scmp.ne.s32.totalorder %s156, %s159
    %p165 = scmp.eq.s32.totalorder %s15, 0
    %p166 = por %p164, %p165
    %p167 = scmp.ne.s32.totalorder %s156, %s159
    %p168 = scmp.eq.s32.totalorder %s20, 1
    %p169 = por %p167, %p168
    %p170 = scmp.ne.s32.totalorder %s159, %s160
    %p171 = scmp.eq.s32.totalorder %s20, 0
    %p172 = por %p170, %p171
    %p173 = scmp.ne.s32.totalorder %s159, %s160
    %p174 = scmp.eq.s32.totalorder %s21, 1
    %p175 = por %p173, %p174
    %p177 = scmp.ne.s32.totalorder %s160, %s176
    %p178 = scmp.eq.s32.totalorder %s21, 0
    %p179 = por %p177, %p178
    %s180 = ssub.s32 %s15, %s22
    %p181 = scmp.eq.s32.totalorder %s180, 0
    %s183 = sadd.s32 %s182, 1
    %s184 = scalar_select %p181, %s182, %s183
    %p187 = pneg %p181
    %p188 = scmp.eq.s32.totalorder %s15, 1
    %p189 = por %p187, %p188
    %p190 = scmp.ne.s32.totalorder %s182, %s185
    %p191 = scmp.eq.s32.totalorder %s15, 0
    %p192 = por %p190, %p191
    %p193 = scmp.ne.s32.totalorder %s182, %s185
    %p194 = scmp.eq.s32.totalorder %s20, 1
    %p195 = por %p193, %p194
    %p196 = scmp.ne.s32.totalorder %s185, %s186
    %p197 = scmp.eq.s32.totalorder %s20, 0
    %p198 = por %p196, %p197
    %p199 = scmp.ne.s32.totalorder %s185, %s186
    %p200 = scmp.eq.s32.totalorder %s21, 1
    %p201 = por %p199, %p200
    %p203 = scmp.ne.s32.totalorder %s186, %s202
    %p204 = scmp.eq.s32.totalorder %s21, 0
    %p205 = por %p203, %p204
    %s206 = ssub.s32 %s15, %s22
    %p207 = scmp.eq.s32.totalorder %s206, 0
    %s209 = sadd.s32 %s208, 1
    %s210 = scalar_select %p207, %s208, %s209
    %p213 = pneg %p207
    %p214 = scmp.eq.s32.totalorder %s15, 1
    %p215 = por %p213, %p214
    %p216 = scmp.ne.s32.totalorder %s208, %s211
    %p217 = scmp.eq.s32.totalorder %s15, 0
    %p218 = por %p216, %p217
    %p219 = scmp.ne.s32.totalorder %s208, %s211
    %p220 = scmp.eq.s32.totalorder %s20, 1
    %p221 = por %p219, %p220
    %p222 = scmp.ne.s32.totalorder %s211, %s212
    %p223 = scmp.eq.s32.totalorder %s20, 0
    %p224 = por %p222, %p223
    %p225 = scmp.ne.s32.totalorder %s211, %s212
    %p226 = scmp.eq.s32.totalorder %s21, 1
    %p227 = por %p225, %p226
    %p229 = scmp.ne.s32.totalorder %s212, %s228
    %p230 = scmp.eq.s32.totalorder %s21, 0
    %p231 = por %p229, %p230
    %p232 = scmp.le.s32.totalorder 1, %s15
    %p233 = scmp.lt.s32.totalorder %s15, 3
    %p234 = pnand %p232, %p233
    %p235 = pneg %p234
    // Predicated region
    $region9: #{res_core_blocks_forward.72} parent=5 // pred_check
      _
    $region10: #{res_core_blocks_forward.72} parent=5 // pred_check_branch
      %237 = sbr.rel (%p234) target = $region12
    $region11: #{res_core_blocks_forward.72} parent=5 // pred_region
      %s238 = ssub.s32 %s15, 1
      // Predicated region
      $region13: #{res_core_blocks_forward.72} parent=11 // pred_check
        %p239 = pneg %p62
      $region14: #{res_core_blocks_forward.72} parent=11 // pred_check_branch
        %241 = sbr.rel (%p239) target = $region16
      $region15: #{res_core_blocks_forward.72} parent=11 // pred_region
        _
      $region16: #{res_core_blocks_forward.72} parent=11 // pred_fallthru
        _
      // Predicated region
      $region17: #{res_core_blocks_forward.72} parent=11 // pred_check
        %p242 = pneg %p83
      $region18: #{res_core_blocks_forward.72} parent=11 // pred_check_branch
        %244 = sbr.rel (%p242) target = $region20
      $region19: #{res_core_blocks_forward.72} parent=11 // pred_region
        _
      $region20: #{res_core_blocks_forward.72} parent=11 // pred_fallthru
        _
      // Predicated region
      $region21: #{res_core_blocks_forward.72} parent=11 // pred_check
        %p245 = pneg %p104
      $region22: #{res_core_blocks_forward.72} parent=11 // pred_check_branch
        %247 = sbr.rel (%p245) target = $region24
      $region23: #{res_core_blocks_forward.72} parent=11 // pred_region
        _
      $region24: #{res_core_blocks_forward.72} parent=11 // pred_fallthru
        _
      // Predicated region
      $region25: #{res_core_blocks_forward.72} parent=11 // pred_check
        %p248 = pneg %p125
      $region26: #{res_core_blocks_forward.72} parent=11 // pred_check_branch
        %250 = sbr.rel (%p248) target = $region28
      $region27: #{res_core_blocks_forward.72} parent=11 // pred_region
        _
      $region28: #{res_core_blocks_forward.72} parent=11 // pred_fallthru
        _
      // Predicated region
      $region29: #{res_core_blocks_forward.72} parent=11 // pred_check
        %p251 = pneg %p146
      $region30: #{res_core_blocks_forward.72} parent=11 // pred_check_branch
        %253 = sbr.rel (%p251) target = $region32
      $region31: #{res_core_blocks_forward.72} parent=11 // pred_region
        _
      $region32: #{res_core_blocks_forward.72} parent=11 // pred_fallthru
        _
    $region12: #{res_core_blocks_forward.72} parent=5 // pred_fallthru
      _
    %p254 = scmp.lt.s32.totalorder %s15, 2
    // Predicated region
    $region33: #{res_core_blocks_forward.72} parent=5 // pred_check
      %p255 = pneg %p254
    $region34: #{res_core_blocks_forward.72} parent=5 // pred_check_branch
      %257 = sbr.rel (%p255) target = $region36
    $region35: #{res_core_blocks_forward.72} parent=5 // pred_region
      // Predicated region
      $region37: #{res_core_blocks_forward.72} parent=35 // pred_check
        %p258 = pneg %p35
      $region38: #{res_core_blocks_forward.72} parent=35 // pred_check_branch
        %260 = sbr.rel (%p258) target = $region40
      $region39: #{res_core_blocks_forward.72} parent=35 // pred_region
        %p261 = scmp.lt.s32.totalorder %s15, 1
        %s262 = scalar_select %p261, %s15, 1
        %s263 = smul.addr %s262, 2
        %s264 = smul.addr %s263, 8
        %s265 = scalar_lea.vmem %s0, %s264
      $region40: #{res_core_blocks_forward.72} parent=35 // pred_fallthru
        _
    $region36: #{res_core_blocks_forward.72} parent=5 // pred_fallthru
      _
    %p266 = scmp.le.s32.totalorder 1, %s15
    %p267 = scmp.lt.s32.totalorder %s15, 3
    %p268 = pnand %p266, %p267
    %p269 = pneg %p268
    // Predicated region
    $region41: #{res_core_blocks_forward.72} parent=5 // pred_check
      _
    $region42: #{res_core_blocks_forward.72} parent=5 // pred_check_branch
      %271 = sbr.rel (%p268) target = $region44
    $region43: #{res_core_blocks_forward.72} parent=5 // pred_region
      %s272 = ssub.s32 %s15, 1
      %p273 = scmp.lt.s32.totalorder %s20, 1
      %s274 = scalar_select %p273, %s20, 1
      %s275 = smul.addr %s274, 2
      %s276 = smul.addr %s275, 8
      %s277 = scalar_lea.vmem %s0, %s276
      %p278 = pneg %p41
      %p279 = pneg %p38
      %p280 = pneg %p62
      %p281 = pneg %p59
      %p282 = pneg %p83
      %p283 = pneg %p80
      %p284 = pneg %p104
      %p285 = pneg %p101
      %p286 = pneg %p125
      %p287 = pneg %p122
      %p288 = pneg %p146
      %p289 = pneg %p143
      %p290 = pneg %p172
      %p291 = pneg %p169
      %p292 = scmp.lt.s32.totalorder %s20, 1
      %s293 = scalar_select %p292, %s20, 1
      %s294 = smul.addr %s293, 2
      %s295 = smul.addr %s294, 8
      %s296 = scalar_lea.vmem %s6, %s295
      %p297 = pneg %p198
      %p298 = pneg %p195
      %p299 = scmp.lt.s32.totalorder %s20, 1
      %s300 = scalar_select %p299, %s20, 1
      %s301 = smul.addr %s300, 2
      %s302 = scalar_lea.vmem %s7, %s301
      %p303 = pneg %p224
      %p304 = pneg %p221
      %p305 = scmp.lt.s32.totalorder %s20, 1
      %s306 = scalar_select %p305, %s20, 1
      %s307 = smul.addr %s306, 2
      %s308 = smul.addr %s307, 8
      %s309 = scalar_lea.vmem %s8, %s308
      %p310 = scmp.lt.s32.totalorder %s20, 1
      %s311 = scalar_select %p310, %s20, 1
      %s312 = smul.addr %s311, 2
      %s313 = smul.addr %s312, 8
      %s314 = scalar_lea.vmem %s0, %s313
      %p315 = scmp.lt.s32.totalorder %s20, 1
      %s316 = scalar_select %p315, %s20, 1
      %s317 = smul.addr %s316, 2
      %s318 = smul.addr %s317, 8
      %s319 = scalar_lea.vmem %s6, %s318
      %p320 = scmp.lt.s32.totalorder %s20, 1
      %s321 = scalar_select %p320, %s20, 1
      %s322 = smul.addr %s321, 2
      %s323 = scalar_lea.vmem %s7, %s322
      %p324 = scmp.lt.s32.totalorder %s20, 1
      %s325 = scalar_select %p324, %s20, 1
      %s326 = smul.addr %s325, 2
      %s327 = smul.addr %s326, 8
      %s328 = scalar_lea.vmem %s8, %s327
      %v329 = vld [vmem:[%s314] sm:$0xff]
      %v330 = vld [vmem:[%s314 + $0x8] sm:$0xff]
      %v331 = vadd.f32 %v329, %v330
      %332 = vadd.xlane.f32.xlu0 %v331
      %v333 = vpop.xlane.xlu0 %332
      %v334 = vrcp.pop 256.0
      %v335 = vmul.f32 %v333, %v334
      %v336 = vsub.f32 %v329, %v335
      %v337 = vsub.f32 %v330, %v335
      %v338 = vmul.f32 %v336, %v336
      %v339 = vmul.f32 %v337, %v337
      %v340 = vadd.f32 %v338, %v339
      %341 = vadd.xlane.f32.xlu0 %v340
      %v342 = vpop.xlane.xlu0 %341
      %v343 = vmul.f32 %v342, %v334
      %v344 = vadd.f32 %v343, 1e-05
      %v345 = vrsqrt.pop %v344
      %v346 = vmul.f32 %v336, %v345
      %v347 = vmul.f32 %v337, %v345
      %v348 = vld [vmem:[%s1] sm:$0xff]
      %350 = vset.pattern.permute.xlu0 0
      %351 = vperm.xlu0 %350, %v348
      %v352 = vpop.permute.xlu0 %351
      %v354 = vmul.f32 %v346, %v352
      %v355 = vmul.f32 %v347, %v352
      %v356 = vld [vmem:[%s2] sm:$0xff]
      %358 = vset.pattern.permute.xlu0 0
      %359 = vperm.xlu0 %358, %v356
      %v360 = vpop.permute.xlu0 %359
      %v362 = vadd.f32 %v354, %v360
      %v363 = vadd.f32 %v355, %v360
      %364 = vst [vmem:[%s319] sm:$0xff] %v362
      %365 = vst [vmem:[%s319 + $0x8] sm:$0xff] %v363
      %v366 = vrot.slane %v362, 4
      %v367 = vmin.f32 %v362, %v366
      %v368 = vrot.slane %v367, 2
      %v369 = vmin.f32 %v367, %v368
      %v370 = vrot.slane %v369, 1
      %v371 = vmin.f32 %v369, %v370
      %v372 = vrot.slane %v363, 4
      %v373 = vmin.f32 %v363, %v372
      %v374 = vrot.slane %v373, 2
      %v375 = vmin.f32 %v373, %v374
      %v376 = vrot.slane %v375, 1
      %v377 = vmin.f32 %v375, %v376
      %v378 = vrot.slane %v362, 4
      %v379 = vadd.f32 %v362, %v378
      %v380 = vrot.slane %v379, 2
      %v381 = vadd.f32 %v379, %v380
      %v382 = vrot.slane %v381, 1
      %v383 = vadd.f32 %v381, %v382
      %v384 = vrot.slane %v363, 4
      %v385 = vadd.f32 %v363, %v384
      %v386 = vrot.slane %v385, 2
      %v387 = vadd.f32 %v385, %v386
      %v388 = vrot.slane %v387, 1
      %v389 = vadd.f32 %v387, %v388
      %v390 = vrcp.pop 8.0
      %v391 = vmul.f32 %v383, %v390
      %v392 = vmul.f32 %v389, %v390
      %v393 = vrot.slane %v362, 4
      %v394 = vmax.f32 %v362, %v393
      %v395 = vrot.slane %v394, 2
      %v396 = vmax.f32 %v394, %v395
      %v397 = vrot.slane %v396, 1
      %v398 = vmax.f32 %v396, %v397
      %v399 = vrot.slane %v363, 4
      %v400 = vmax.f32 %v363, %v399
      %v401 = vrot.slane %v400, 2
      %v402 = vmax.f32 %v400, %v401
      %v403 = vrot.slane %v402, 1
      %v404 = vmax.f32 %v402, %v403
      %vm405 = vcmask 1040384
      %v406 = vsel %vm405, %v371, %v391
      %v407 = vsel %vm405, %v377, %v392
      %vm408 = vcmask 1041408
      %v409 = vsel %vm408, %v406, %v398
      %v410 = vsel %vm408, %v407, %v404
      %v411 = vlaneseq
      %v412 = vand.u32 %v411, 127
      %v413 = vadd.s32 %v412, 128
      %v414 = vand.u32 %v412, 15
      %v415 = vand.u32 %v413, 15
      %416 = vrot.lane.b32.xlu0 %v409, 17
      %v417 = vpop.permute.xlu0 %416
      %418 = vrot.lane.b32.xlu0 %v410, 17
      %v419 = vpop.permute.xlu0 %418
      %vm420 = vcmp.lt.s32.totalorder %v412, 17
      %v421 = vsel %vm420, %v417, %v419
      %v422 = vsel %vm420, %v419, %v417
      %vm423 = vcmp.ge.s32.totalorder %v412, 16
      %vm424 = vcmp.ge.s32.totalorder %v413, 16
      %vm425 = vcmp.ge.s32.totalorder %v414, 1
      %vm426 = vcmp.ge.s32.totalorder %v415, 1
      %vm427 = vmand %vm423, %vm425
      %vm428 = vmand %vm424, %vm426
      %v429 = vsel %vm427, 1.0, 0.0
      %v430 = vsel %vm428, 1.0, 0.0
      %v431 = vmul.f32 %v422, %v429
      %v432 = vmul.f32 %v421, %v430
      %v433 = vld [vmem:[%s3] sm:$0x1]
      %434 = vrot.lane.b32.xlu0 %v409, 16
      %v435 = vpop.permute.xlu0 %434
      %436 = vrot.lane.b32.xlu0 %v410, 16
      %v437 = vpop.permute.xlu0 %436
      %vm438 = vcmp.lt.s32.totalorder %v412, 16
      %v439 = vsel %vm438, %v435, %v437
      %v440 = vsel %vm438, %v437, %v435
      %v441 = vsel %vm423, 1.0, 0.0
      %v442 = vsel %vm424, 1.0, 0.0
      %v443 = vmul.f32 %v440, %v441
      %v444 = vmul.f32 %v439, %v442
      %s445 = scalar_lea.vmem %s3, 1
      %v446 = vld [vmem:[%s445] sm:$0x1]
      %vm447 = vcmask 23552
      %v449 = vsel %vm447, %v446, 0
      %vm451 = vcmask 1042432
      %v453 = vsel %vm451, %v443, 0
      %v456 = vsel %vm451, %v444, 0
      %458 = vmatprep.subr.mxu0 %v456
      %459 = vmatpush1.msra.mxu0 %v453
      %460 = vmatprep.subr.mxu0 0.0
      %461 = vmatpush1.msra.mxu0 0.0
      %462 = vmatprep.subr.mxu0 0.0
      %463 = vmatpush1.msra.mxu0 0.0
      %464 = vmatprep.subr.mxu0 0.0
      %465 = vmatpush1.msra.mxu0 0.0
      %466 = vmatprep.subr.mxu0 0.0
      %467 = vmatpush1.msra.mxu0 0.0
      %468 = vmatprep.subr.mxu0 0.0
      %469 = vmatpush1.msra.mxu0 0.0
      %470 = vmatprep.subr.mxu0 0.0
      %471 = vmatpush1.msra.mxu0 0.0
      %472 = vmatprep.subr.mxu0 0.0
      %473 = vmatpush1.msra.mxu0 0.0
      %474 = vmatprep.subr.mxu0 0.0
      %475 = vmatpush1.msra.mxu0 0.0
      %476 = vmatprep.subr.mxu0 0.0
      %477 = vmatpush1.msra.mxu0 0.0
      %478 = vmatprep.subr.mxu0 0.0
      %479 = vmatpush1.msra.mxu0 0.0
      %480 = vmatprep.subr.mxu0 0.0
      %481 = vmatpush1.msra.mxu0 0.0
      %482 = vmatprep.subr.mxu0 0.0
      %483 = vmatpush1.msra.mxu0 0.0
      %484 = vmatprep.subr.mxu0 0.0
      %485 = vmatpush1.msra.mxu0 0.0
      %486 = vmatprep.subr.mxu0 0.0
      %487 = vmatpush1.msra.mxu0 0.0
      %488 = vmatprep.subr.mxu0 0.0
      %489 = vmatpush1.msra.mxu0 0.0
      %490 = vmatprep.subr.mxu0 0.0
      %491 = vmatpush1.msra.mxu0 0.0
      %492 = vmatprep.subr.mxu0 0.0
      %493 = vmatpush1.msra.mxu0 0.0
      %494 = vmatprep.subr.mxu0 0.0
      %495 = vmatpush1.msra.mxu0 0.0
      %496 = vmatprep.subr.mxu0 0.0
      %497 = vmatpush1.msra.mxu0 0.0
      %498 = vmatprep.subr.mxu0 0.0
      %499 = vmatpush1.msra.mxu0 0.0
      %500 = vmatprep.subr.mxu0 0.0
      %501 = vmatpush1.msra.mxu0 0.0
      %502 = vmatprep.subr.mxu0 0.0
      %503 = vmatpush1.msra.mxu0 0.0
      %504 = vmatprep.subr.mxu0 0.0
      %505 = vmatpush1.msra.mxu0 0.0
      %506 = vmatprep.subr.mxu0 0.0
      %507 = vmatpush1.msra.mxu0 0.0
      %508 = vmatprep.subr.mxu0 0.0
      %509 = vmatpush1.msra.mxu0 0.0
      %510 = vmatprep.subr.mxu0 0.0
      %511 = vmatpush1.msra.mxu0 0.0
      %512 = vmatprep.subr.mxu0 0.0
      %513 = vmatpush1.msra.mxu0 0.0
      %514 = vmatprep.subr.mxu0 0.0
      %515 = vmatpush1.msra.mxu0 0.0
      %516 = vmatprep.subr.mxu0 0.0
      %517 = vmatpush1.msra.mxu0 0.0
      %518 = vmatprep.subr.mxu0 0.0
      %519 = vmatpush1.msra.mxu0 0.0
      %520 = vmatprep.subr.mxu0 0.0
      %521 = vmatpush1.msra.mxu0 0.0
      %522 = vmatprep.mubr.f32.mxu0 0.0
      %523 = vmatmul.mubr.f32.gmra.mrb[0].mxu0 %v449
      %v524 = vpop.f32.mrb[0].mxu0
      %v525 = vadd.f32 0.0, %v524
      %v526 = vpop.f32.mrb[0].mxu0
      %v527 = vadd.f32 0.0, %v526
      %528 = vdwg.mxu0
      %v530 = vsel %vm447, %v433, 0
      %v533 = vsel %vm451, %v431, 0
      %v536 = vsel %vm451, %v432, 0
      %538 = vmatprep.subr.mxu0 %v536
      %539 = vmatpush1.msra.mxu0 %v533
      %540 = vmatprep.subr.mxu0 0.0
      %541 = vmatpush1.msra.mxu0 0.0
      %542 = vmatprep.subr.mxu0 0.0
      %543 = vmatpush1.msra.mxu0 0.0
      %544 = vmatprep.subr.mxu0 0.0
      %545 = vmatpush1.msra.mxu0 0.0
      %546 = vmatprep.subr.mxu0 0.0
      %547 = vmatpush1.msra.mxu0 0.0
      %548 = vmatprep.subr.mxu0 0.0
      %549 = vmatpush1.msra.mxu0 0.0
      %550 = vmatprep.subr.mxu0 0.0
      %551 = vmatpush1.msra.mxu0 0.0
      %552 = vmatprep.subr.mxu0 0.0
      %553 = vmatpush1.msra.mxu0 0.0
      %554 = vmatprep.subr.mxu0 0.0
      %555 = vmatpush1.msra.mxu0 0.0
      %556 = vmatprep.subr.mxu0 0.0
      %557 = vmatpush1.msra.mxu0 0.0
      %558 = vmatprep.subr.mxu0 0.0
      %559 = vmatpush1.msra.mxu0 0.0
      %560 = vmatprep.subr.mxu0 0.0
      %561 = vmatpush1.msra.mxu0 0.0
      %562 = vmatprep.subr.mxu0 0.0
      %563 = vmatpush1.msra.mxu0 0.0
      %564 = vmatprep.subr.mxu0 0.0
      %565 = vmatpush1.msra.mxu0 0.0
      %566 = vmatprep.subr.mxu0 0.0
      %567 = vmatpush1.msra.mxu0 0.0
      %568 = vmatprep.subr.mxu0 0.0
      %569 = vmatpush1.msra.mxu0 0.0
      %570 = vmatprep.subr.mxu0 0.0
      %571 = vmatpush1.msra.mxu0 0.0
      %572 = vmatprep.subr.mxu0 0.0
      %573 = vmatpush1.msra.mxu0 0.0
      %574 = vmatprep.subr.mxu0 0.0
      %575 = vmatpush1.msra.mxu0 0.0
      %576 = vmatprep.subr.mxu0 0.0
      %577 = vmatpush1.msra.mxu0 0.0
      %578 = vmatprep.subr.mxu0 0.0
      %579 = vmatpush1.msra.mxu0 0.0
      %580 = vmatprep.subr.mxu0 0.0
      %581 = vmatpush1.msra.mxu0 0.0
      %582 = vmatprep.subr.mxu0 0.0
      %583 = vmatpush1.msra.mxu0 0.0
      %584 = vmatprep.subr.mxu0 0.0
      %585 = vmatpush1.msra.mxu0 0.0
      %586 = vmatprep.subr.mxu0 0.0
      %587 = vmatpush1.msra.mxu0 0.0
      %588 = vmatprep.subr.mxu0 0.0
      %589 = vmatpush1.msra.mxu0 0.0
      %590 = vmatprep.subr.mxu0 0.0
      %591 = vmatpush1.msra.mxu0 0.0
      %592 = vmatprep.subr.mxu0 0.0
      %593 = vmatpush1.msra.mxu0 0.0
      %594 = vmatprep.subr.mxu0 0.0
      %595 = vmatpush1.msra.mxu0 0.0
      %596 = vmatprep.subr.mxu0 0.0
      %597 = vmatpush1.msra.mxu0 0.0
      %598 = vmatprep.subr.mxu0 0.0
      %599 = vmatpush1.msra.mxu0 0.0
      %600 = vmatprep.subr.mxu0 0.0
      %601 = vmatpush1.msra.mxu0 0.0
      %602 = vmatprep.mubr.f32.mxu0 0.0
      %603 = vmatmul.mubr.f32.gmra.mrb[0].mxu0 %v530
      %v604 = vpop.f32.mrb[0].mxu0
      %v605 = vadd.f32 %v525, %v604
      %v606 = vpop.f32.mrb[0].mxu0
      %v607 = vadd.f32 %v527, %v606
      %608 = vdwg.mxu0
      %609 = vrot.lane.b32.xlu0 %v409, 15
      %v610 = vpop.permute.xlu0 %609
      %611 = vrot.lane.b32.xlu0 %v410, 15
      %v612 = vpop.permute.xlu0 %611
      %vm613 = vcmp.lt.s32.totalorder %v412, 15
      %v614 = vsel %vm613, %v610, %v612
      %v615 = vsel %vm613, %v612, %v610
      %vm616 = vcmp.lt.s32.totalorder %v414, 15
      %vm617 = vcmp.lt.s32.totalorder %v415, 15
      %vm618 = vmand %vm423, %vm616
      %vm619 = vmand %vm424, %vm617
      %v620 = vsel %vm618, 1.0, 0.0
      %v621 = vsel %vm619, 1.0, 0.0
      %v622 = vmul.f32 %v615, %v620
      %v623 = vmul.f32 %v614, %v621
      %s624 = scalar_lea.vmem %s3, 2
      %v625 = vld [vmem:[%s624] sm:$0x1]
      %v627 = vsel %vm447, %v625, 0
      %v630 = vsel %vm451, %v622, 0
      %v633 = vsel %vm451, %v623, 0
      %635 = vmatprep.subr.mxu0 %v633
      %636 = vmatpush1.msra.mxu0 %v630
      %637 = vmatprep.subr.mxu0 0.0
      %638 = vmatpush1.msra.mxu0 0.0
      %639 = vmatprep.subr.mxu0 0.0
      %640 = vmatpush1.msra.mxu0 0.0
      %641 = vmatprep.subr.mxu0 0.0
      %642 = vmatpush1.msra.mxu0 0.0
      %643 = vmatprep.subr.mxu0 0.0
      %644 = vmatpush1.msra.mxu0 0.0
      %645 = vmatprep.subr.mxu0 0.0
      %646 = vmatpush1.msra.mxu0 0.0
      %647 = vmatprep.subr.mxu0 0.0
      %648 = vmatpush1.msra.mxu0 0.0
      %649 = vmatprep.subr.mxu0 0.0
      %650 = vmatpush1.msra.mxu0 0.0
      %651 = vmatprep.subr.mxu0 0.0
      %652 = vmatpush1.msra.mxu0 0.0
      %653 = vmatprep.subr.mxu0 0.0
      %654 = vmatpush1.msra.mxu0 0.0
      %655 = vmatprep.subr.mxu0 0.0
      %656 = vmatpush1.msra.mxu0 0.0
      %657 = vmatprep.subr.mxu0 0.0
      %658 = vmatpush1.msra.mxu0 0.0
      %659 = vmatprep.subr.mxu0 0.0
      %660 = vmatpush1.msra.mxu0 0.0
      %661 = vmatprep.subr.mxu0 0.0
      %662 = vmatpush1.msra.mxu0 0.0
      %663 = vmatprep.subr.mxu0 0.0
      %664 = vmatpush1.msra.mxu0 0.0
      %665 = vmatprep.subr.mxu0 0.0
      %666 = vmatpush1.msra.mxu0 0.0
      %667 = vmatprep.subr.mxu0 0.0
      %668 = vmatpush1.msra.mxu0 0.0
      %669 = vmatprep.subr.mxu0 0.0
      %670 = vmatpush1.msra.mxu0 0.0
      %671 = vmatprep.subr.mxu0 0.0
      %672 = vmatpush1.msra.mxu0 0.0
      %673 = vmatprep.subr.mxu0 0.0
      %674 = vmatpush1.msra.mxu0 0.0
      %675 = vmatprep.subr.mxu0 0.0
      %676 = vmatpush1.msra.mxu0 0.0
      %677 = vmatprep.subr.mxu0 0.0
      %678 = vmatpush1.msra.mxu0 0.0
      %679 = vmatprep.subr.mxu0 0.0
      %680 = vmatpush1.msra.mxu0 0.0
      %681 = vmatprep.subr.mxu0 0.0
      %682 = vmatpush1.msra.mxu0 0.0
      %683 = vmatprep.subr.mxu0 0.0
      %684 = vmatpush1.msra.mxu0 0.0
      %685 = vmatprep.subr.mxu0 0.0
      %686 = vmatpush1.msra.mxu0 0.0
      %687 = vmatprep.subr.mxu0 0.0
      %688 = vmatpush1.msra.mxu0 0.0
      %689 = vmatprep.subr.mxu0 0.0
      %690 = vmatpush1.msra.mxu0 0.0
      %691 = vmatprep.subr.mxu0 0.0
      %692 = vmatpush1.msra.mxu0 0.0
      %693 = vmatprep.subr.mxu0 0.0
      %694 = vmatpush1.msra.mxu0 0.0
      %695 = vmatprep.subr.mxu0 0.0
      %696 = vmatpush1.msra.mxu0 0.0
      %697 = vmatprep.subr.mxu0 0.0
      %698 = vmatpush1.msra.mxu0 0.0
      %699 = vmatprep.mubr.f32.mxu0 0.0
      %700 = vmatmul.mubr.f32.gmra.mrb[0].mxu0 %v627
      %v701 = vpop.f32.mrb[0].mxu0
      %v702 = vadd.f32 0.0, %v701
      %v703 = vpop.f32.mrb[0].mxu0
      %v704 = vadd.f32 0.0, %v703
      %705 = vdwg.mxu0
      %v706 = vadd.f32 %v605, %v702
      %v707 = vadd.f32 %v607, %v704
      %708 = vrot.lane.b32.xlu0 %v409, 1
      %v709 = vpop.permute.xlu0 %708
      %710 = vrot.lane.b32.xlu0 %v410, 1
      %v711 = vpop.permute.xlu0 %710
      %vm712 = vcmp.lt.s32.totalorder %v412, 1
      %v713 = vsel %vm712, %v709, %v711
      %v714 = vsel %vm712, %v711, %v709
      %v715 = vsel %vm425, 1.0, 0.0
      %v716 = vsel %vm426, 1.0, 0.0
      %v717 = vmul.f32 %v714, %v715
      %v718 = vmul.f32 %v713, %v716
      %s719 = scalar_lea.vmem %s3, 3
      %v720 = vld [vmem:[%s719] sm:$0x1]
      %v722 = vsel %vm447, %v720, 0
      %v725 = vsel %vm451, %v717, 0
      %v728 = vsel %vm451, %v718, 0
      %730 = vmatprep.subr.mxu0 %v728
      %731 = vmatpush1.msra.mxu0 %v725
      %732 = vmatprep.subr.mxu0 0.0
      %733 = vmatpush1.msra.mxu0 0.0
      %734 = vmatprep.subr.mxu0 0.0
      %735 = vmatpush1.msra.mxu0 0.0
      %736 = vmatprep.subr.mxu0 0.0
      %737 = vmatpush1.msra.mxu0 0.0
      %738 = vmatprep.subr.mxu0 0.0
      %739 = vmatpush1.msra.mxu0 0.0
      %740 = vmatprep.subr.mxu0 0.0
      %741 = vmatpush1.msra.mxu0 0.0
      %742 = vmatprep.subr.mxu0 0.0
      %743 = vmatpush1.msra.mxu0 0.0
      %744 = vmatprep.subr.mxu0 0.0
      %745 = vmatpush1.msra.mxu0 0.0
      %746 = vmatprep.subr.mxu0 0.0
      %747 = vmatpush1.msra.mxu0 0.0
      %748 = vmatprep.subr.mxu0 0.0
      %749 = vmatpush1.msra.mxu0 0.0
      %750 = vmatprep.subr.mxu0 0.0
      %751 = vmatpush1.msra.mxu0 0.0
      %752 = vmatprep.subr.mxu0 0.0
      %753 = vmatpush1.msra.mxu0 0.0
      %754 = vmatprep.subr.mxu0 0.0
      %755 = vmatpush1.msra.mxu0 0.0
      %756 = vmatprep.subr.mxu0 0.0
      %757 = vmatpush1.msra.mxu0 0.0
      %758 = vmatprep.subr.mxu0 0.0
      %759 = vmatpush1.msra.mxu0 0.0
      %760 = vmatprep.subr.mxu0 0.0
      %761 = vmatpush1.msra.mxu0 0.0
      %762 = vmatprep.subr.mxu0 0.0
      %763 = vmatpush1.msra.mxu0 0.0
      %764 = vmatprep.subr.mxu0 0.0
      %765 = vmatpush1.msra.mxu0 0.0
      %766 = vmatprep.subr.mxu0 0.0
      %767 = vmatpush1.msra.mxu0 0.0
      %768 = vmatprep.subr.mxu0 0.0
      %769 = vmatpush1.msra.mxu0 0.0
      %770 = vmatprep.subr.mxu0 0.0
      %771 = vmatpush1.msra.mxu0 0.0
      %772 = vmatprep.subr.mxu0 0.0
      %773 = vmatpush1.msra.mxu0 0.0
      %774 = vmatprep.subr.mxu0 0.0
      %775 = vmatpush1.msra.mxu0 0.0
      %776 = vmatprep.subr.mxu0 0.0
      %777 = vmatpush1.msra.mxu0 0.0
      %778 = vmatprep.subr.mxu0 0.0
      %779 = vmatpush1.msra.mxu0 0.0
      %780 = vmatprep.subr.mxu0 0.0
      %781 = vmatpush1.msra.mxu0 0.0
      %782 = vmatprep.subr.mxu0 0.0
      %783 = vmatpush1.msra.mxu0 0.0
      %784 = vmatprep.subr.mxu0 0.0
      %785 = vmatpush1.msra.mxu0 0.0
      %786 = vmatprep.subr.mxu0 0.0
      %787 = vmatpush1.msra.mxu0 0.0
      %788 = vmatprep.subr.mxu0 0.0
      %789 = vmatpush1.msra.mxu0 0.0
      %790 = vmatprep.subr.mxu0 0.0
      %791 = vmatpush1.msra.mxu0 0.0
      %792 = vmatprep.subr.mxu0 0.0
      %793 = vmatpush1.msra.mxu0 0.0
      %794 = vmatprep.mubr.f32.mxu0 0.0
      %795 = vmatmul.mubr.f32.gmra.mrb[0].mxu0 %v722
      %v796 = vpop.f32.mrb[0].mxu0
      %v797 = vadd.f32 0.0, %v796
      %v798 = vpop.f32.mrb[0].mxu0
      %v799 = vadd.f32 0.0, %v798
      %800 = vdwg.mxu0
      %v801 = vadd.f32 %v706, %v797
      %v802 = vadd.f32 %v707, %v799
      %s803 = scalar_lea.vmem %s3, 4
      %v804 = vld [vmem:[%s803] sm:$0x1]
      %v806 = vsel %vm447, %v804, 0
      %v809 = vsel %vm451, %v409, 0
      %v812 = vsel %vm451, %v410, 0
      %814 = vmatprep.subr.mxu0 %v812
      %815 = vmatpush1.msra.mxu0 %v809
      %816 = vmatprep.subr.mxu0 0.0
      %817 = vmatpush1.msra.mxu0 0.0
      %818 = vmatprep.subr.mxu0 0.0
      %819 = vmatpush1.msra.mxu0 0.0
      %820 = vmatprep.subr.mxu0 0.0
      %821 = vmatpush1.msra.mxu0 0.0
      %822 = vmatprep.subr.mxu0 0.0
      %823 = vmatpush1.msra.mxu0 0.0
      %824 = vmatprep.subr.mxu0 0.0
      %825 = vmatpush1.msra.mxu0 0.0
      %826 = vmatprep.subr.mxu0 0.0
      %827 = vmatpush1.msra.mxu0 0.0
      %828 = vmatprep.subr.mxu0 0.0
      %829 = vmatpush1.msra.mxu0 0.0
      %830 = vmatprep.subr.mxu0 0.0
      %831 = vmatpush1.msra.mxu0 0.0
      %832 = vmatprep.subr.mxu0 0.0
      %833 = vmatpush1.msra.mxu0 0.0
      %834 = vmatprep.subr.mxu0 0.0
      %835 = vmatpush1.msra.mxu0 0.0
      %836 = vmatprep.subr.mxu0 0.0
      %837 = vmatpush1.msra.mxu0 0.0
      %838 = vmatprep.subr.mxu0 0.0
      %839 = vmatpush1.msra.mxu0 0.0
      %840 = vmatprep.subr.mxu0 0.0
      %841 = vmatpush1.msra.mxu0 0.0
      %842 = vmatprep.subr.mxu0 0.0
      %843 = vmatpush1.msra.mxu0 0.0
      %844 = vmatprep.subr.mxu0 0.0
      %845 = vmatpush1.msra.mxu0 0.0
      %846 = vmatprep.subr.mxu0 0.0
      %847 = vmatpush1.msra.mxu0 0.0
      %848 = vmatprep.subr.mxu0 0.0
      %849 = vmatpush1.msra.mxu0 0.0
      %850 = vmatprep.subr.mxu0 0.0
      %851 = vmatpush1.msra.mxu0 0.0
      %852 = vmatprep.subr.mxu0 0.0
      %853 = vmatpush1.msra.mxu0 0.0
      %854 = vmatprep.subr.mxu0 0.0
      %855 = vmatpush1.msra.mxu0 0.0
      %856 = vmatprep.subr.mxu0 0.0
      %857 = vmatpush1.msra.mxu0 0.0
      %858 = vmatprep.subr.mxu0 0.0
      %859 = vmatpush1.msra.mxu0 0.0
      %860 = vmatprep.subr.mxu0 0.0
      %861 = vmatpush1.msra.mxu0 0.0
      %862 = vmatprep.subr.mxu0 0.0
      %863 = vmatpush1.msra.mxu0 0.0
      %864 = vmatprep.subr.mxu0 0.0
      %865 = vmatpush1.msra.mxu0 0.0
      %866 = vmatprep.subr.mxu0 0.0
      %867 = vmatpush1.msra.mxu0 0.0
      %868 = vmatprep.subr.mxu0 0.0
      %869 = vmatpush1.msra.mxu0 0.0
      %870 = vmatprep.subr.mxu0 0.0
      %871 = vmatpush1.msra.mxu0 0.0
      %872 = vmatprep.subr.mxu0 0.0
      %873 = vmatpush1.msra.mxu0 0.0
      %874 = vmatprep.subr.mxu0 0.0
      %875 = vmatpush1.msra.mxu0 0.0
      %876 = vmatprep.subr.mxu0 0.0
      %877 = vmatpush1.msra.mxu0 0.0
      %878 = vmatprep.mubr.f32.mxu0 0.0
      %879 = vmatmul.mubr.f32.gmra.mrb[0].mxu0 %v806
      %v880 = vpop.f32.mrb[0].mxu0
      %v881 = vadd.f32 0.0, %v880
      %v882 = vpop.f32.mrb[0].mxu0
      %v883 = vadd.f32 0.0, %v882
      %884 = vdwg.mxu0
      %v885 = vadd.f32 %v801, %v881
      %v886 = vadd.f32 %v802, %v883
      %887 = vrot.lane.b32.xlu0 %v409, 127
      %v888 = vpop.permute.xlu0 %887
      %889 = vrot.lane.b32.xlu0 %v410, 127
      %v890 = vpop.permute.xlu0 %889
      %vm891 = vcmp.lt.s32.totalorder %v412, 127
      %v892 = vsel %vm891, %v888, %v890
      %v893 = vsel %vm891, %v890, %v888
      %v894 = vsel %vm616, 1.0, 0.0
      %v895 = vsel %vm617, 1.0, 0.0
      %v896 = vmul.f32 %v892, %v894
      %v897 = vmul.f32 %v893, %v895
      %s898 = scalar_lea.vmem %s3, 5
      %v899 = vld [vmem:[%s898] sm:$0x1]
      %v901 = vsel %vm447, %v899, 0
      %v904 = vsel %vm451, %v896, 0
      %v907 = vsel %vm451, %v897, 0
      %909 = vmatprep.subr.mxu0 %v907
      %910 = vmatpush1.msra.mxu0 %v904
      %911 = vmatprep.subr.mxu0 0.0
      %912 = vmatpush1.msra.mxu0 0.0
      %913 = vmatprep.subr.mxu0 0.0
      %914 = vmatpush1.msra.mxu0 0.0
      %915 = vmatprep.subr.mxu0 0.0
      %916 = vmatpush1.msra.mxu0 0.0
      %917 = vmatprep.subr.mxu0 0.0
      %918 = vmatpush1.msra.mxu0 0.0
      %919 = vmatprep.subr.mxu0 0.0
      %920 = vmatpush1.msra.mxu0 0.0
      %921 = vmatprep.subr.mxu0 0.0
      %922 = vmatpush1.msra.mxu0 0.0
      %923 = vmatprep.subr.mxu0 0.0
      %924 = vmatpush1.msra.mxu0 0.0
      %925 = vmatprep.subr.mxu0 0.0
      %926 = vmatpush1.msra.mxu0 0.0
      %927 = vmatprep.subr.mxu0 0.0
      %928 = vmatpush1.msra.mxu0 0.0
      %929 = vmatprep.subr.mxu0 0.0
      %930 = vmatpush1.msra.mxu0 0.0
      %931 = vmatprep.subr.mxu0 0.0
      %932 = vmatpush1.msra.mxu0 0.0
      %933 = vmatprep.subr.mxu0 0.0
      %934 = vmatpush1.msra.mxu0 0.0
      %935 = vmatprep.subr.mxu0 0.0
      %936 = vmatpush1.msra.mxu0 0.0
      %937 = vmatprep.subr.mxu0 0.0
      %938 = vmatpush1.msra.mxu0 0.0
      %939 = vmatprep.subr.mxu0 0.0
      %940 = vmatpush1.msra.mxu0 0.0
      %941 = vmatprep.subr.mxu0 0.0
      %942 = vmatpush1.msra.mxu0 0.0
      %943 = vmatprep.subr.mxu0 0.0
      %944 = vmatpush1.msra.mxu0 0.0
      %945 = vmatprep.subr.mxu0 0.0
      %946 = vmatpush1.msra.mxu0 0.0
      %947 = vmatprep.subr.mxu0 0.0
      %948 = vmatpush1.msra.mxu0 0.0
      %949 = vmatprep.subr.mxu0 0.0
      %950 = vmatpush1.msra.mxu0 0.0
      %951 = vmatprep.subr.mxu0 0.0
      %952 = vmatpush1.msra.mxu0 0.0
      %953 = vmatprep.subr.mxu0 0.0
      %954 = vmatpush1.msra.mxu0 0.0
      %955 = vmatprep.subr.mxu0 0.0
      %956 = vmatpush1.msra.mxu0 0.0
      %957 = vmatprep.subr.mxu0 0.0
      %958 = vmatpush1.msra.mxu0 0.0
      %959 = vmatprep.subr.mxu0 0.0
      %960 = vmatpush1.msra.mxu0 0.0
      %961 = vmatprep.subr.mxu0 0.0
      %962 = vmatpush1.msra.mxu0 0.0
      %963 = vmatprep.subr.mxu0 0.0
      %964 = vmatpush1.msra.mxu0 0.0
      %965 = vmatprep.subr.mxu0 0.0
      %966 = vmatpush1.msra.mxu0 0.0
      %967 = vmatprep.subr.mxu0 0.0
      %968 = vmatpush1.msra.mxu0 0.0
      %969 = vmatprep.subr.mxu0 0.0
      %970 = vmatpush1.msra.mxu0 0.0
      %971 = vmatprep.subr.mxu0 0.0
      %972 = vmatpush1.msra.mxu0 0.0
      %973 = vmatprep.mubr.f32.mxu0 0.0
      %974 = vmatmul.mubr.f32.gmra.mrb[0].mxu0 %v901
      %v975 = vpop.f32.mrb[0].mxu0
      %v976 = vadd.f32 0.0, %v975
      %v977 = vpop.f32.mrb[0].mxu0
      %v978 = vadd.f32 0.0, %v977
      %979 = vdwg.mxu0
      %v980 = vadd.f32 %v885, %v976
      %v981 = vadd.f32 %v886, %v978
      %982 = vrot.lane.b32.xlu0 %v409, 113
      %v983 = vpop.permute.xlu0 %982
      %984 = vrot.lane.b32.xlu0 %v410, 113
      %v985 = vpop.permute.xlu0 %984
      %vm986 = vcmp.lt.s32.totalorder %v412, 113
      %v987 = vsel %vm986, %v983, %v985
      %v988 = vsel %vm986, %v985, %v983
      %vm989 = vcmp.lt.s32.totalorder %v412, 240
      %vm990 = vcmp.lt.s32.totalorder %v413, 240
      %vm991 = vmand %vm989, %vm425
      %vm992 = vmand %vm990, %vm426
      %v993 = vsel %vm991, 1.0, 0.0
      %v994 = vsel %vm992, 1.0, 0.0
      %v995 = vmul.f32 %v987, %v993
      %v996 = vmul.f32 %v988, %v994
      %s997 = scalar_lea.vmem %s3, 6
      %v998 = vld [vmem:[%s997] sm:$0x1]
      %v1000 = vsel %vm447, %v998, 0
      %v1003 = vsel %vm451, %v995, 0
      %v1006 = vsel %vm451, %v996, 0
      %1008 = vmatprep.subr.mxu0 %v1006
      %1009 = vmatpush1.msra.mxu0 %v1003
      %1010 = vmatprep.subr.mxu0 0.0
      %1011 = vmatpush1.msra.mxu0 0.0
      %1012 = vmatprep.subr.mxu0 0.0
      %1013 = vmatpush1.msra.mxu0 0.0
      %1014 = vmatprep.subr.mxu0 0.0
      %1015 = vmatpush1.msra.mxu0 0.0
      %1016 = vmatprep.subr.mxu0 0.0
      %1017 = vmatpush1.msra.mxu0 0.0
      %1018 = vmatprep.subr.mxu0 0.0
      %1019 = vmatpush1.msra.mxu0 0.0
      %1020 = vmatprep.subr.mxu0 0.0
      %1021 = vmatpush1.msra.mxu0 0.0
      %1022 = vmatprep.subr.mxu0 0.0
      %1023 = vmatpush1.msra.mxu0 0.0
      %1024 = vmatprep.subr.mxu0 0.0
      %1025 = vmatpush1.msra.mxu0 0.0
      %1026 = vmatprep.subr.mxu0 0.0
      %1027 = vmatpush1.msra.mxu0 0.0
      %1028 = vmatprep.subr.mxu0 0.0
      %1029 = vmatpush1.msra.mxu0 0.0
      %1030 = vmatprep.subr.mxu0 0.0
      %1031 = vmatpush1.msra.mxu0 0.0
      %1032 = vmatprep.subr.mxu0 0.0
      %1033 = vmatpush1.msra.mxu0 0.0
      %1034 = vmatprep.subr.mxu0 0.0
      %1035 = vmatpush1.msra.mxu0 0.0
      %1036 = vmatprep.subr.mxu0 0.0
      %1037 = vmatpush1.msra.mxu0 0.0
      %1038 = vmatprep.subr.mxu0 0.0
      %1039 = vmatpush1.msra.mxu0 0.0
      %1040 = vmatprep.subr.mxu0 0.0
      %1041 = vmatpush1.msra.mxu0 0.0
      %1042 = vmatprep.subr.mxu0 0.0
      %1043 = vmatpush1.msra.mxu0 0.0
      %1044 = vmatprep.subr.mxu0 0.0
      %1045 = vmatpush1.msra.mxu0 0.0
      %1046 = vmatprep.subr.mxu0 0.0
      %1047 = vmatpush1.msra.mxu0 0.0
      %1048 = vmatprep.subr.mxu0 0.0
      %1049 = vmatpush1.msra.mxu0 0.0
      %1050 = vmatprep.subr.mxu0 0.0
      %1051 = vmatpush1.msra.mxu0 0.0
      %1052 = vmatprep.subr.mxu0 0.0
      %1053 = vmatpush1.msra.mxu0 0.0
      %1054 = vmatprep.subr.mxu0 0.0
      %1055 = vmatpush1.msra.mxu0 0.0
      %1056 = vmatprep.subr.mxu0 0.0
      %1057 = vmatpush1.msra.mxu0 0.0
      %1058 = vmatprep.subr.mxu0 0.0
      %1059 = vmatpush1.msra.mxu0 0.0
      %1060 = vmatprep.subr.mxu0 0.0
      %1061 = vmatpush1.msra.mxu0 0.0
      %1062 = vmatprep.subr.mxu0 0.0
      %1063 = vmatpush1.msra.mxu0 0.0
      %1064 = vmatprep.subr.mxu0 0.0
      %1065 = vmatpush1.msra.mxu0 0.0
      %1066 = vmatprep.subr.mxu0 0.0
      %1067 = vmatpush1.msra.mxu0 0.0
      %1068 = vmatprep.subr.mxu0 0.0
      %1069 = vmatpush1.msra.mxu0 0.0
      %1070 = vmatprep.subr.mxu0 0.0
      %1071 = vmatpush1.msra.mxu0 0.0
      %1072 = vmatprep.mubr.f32.mxu0 0.0
      %1073 = vmatmul.mubr.f32.gmra.mrb[0].mxu0 %v1000
      %v1074 = vpop.f32.mrb[0].mxu0
      %v1075 = vadd.f32 0.0, %v1074
      %v1076 = vpop.f32.mrb[0].mxu0
      %v1077 = vadd.f32 0.0, %v1076
      %1078 = vdwg.mxu0
      %v1079 = vadd.f32 %v980, %v1075
      %v1080 = vadd.f32 %v981, %v1077
      %1081 = vrot.lane.b32.xlu0 %v409, 112
      %v1082 = vpop.permute.xlu0 %1081
      %1083 = vrot.lane.b32.xlu0 %v410, 112
      %v1084 = vpop.permute.xlu0 %1083
      %vm1085 = vcmp.lt.s32.totalorder %v412, 112
      %v1086 = vsel %vm1085, %v1082, %v1084
      %v1087 = vsel %vm1085, %v1084, %v1082
      %v1088 = vsel %vm989, 1.0, 0.0
      %v1089 = vsel %vm990, 1.0, 0.0
      %v1090 = vmul.f32 %v1086, %v1088
      %v1091 = vmul.f32 %v1087, %v1089
      %s1092 = scalar_lea.vmem %s3, 7
      %v1093 = vld [vmem:[%s1092] sm:$0x1]
      %v1095 = vsel %vm447, %v1093, 0
      %v1098 = vsel %vm451, %v1090, 0
      %v1101 = vsel %vm451, %v1091, 0
      %1103 = vmatprep.subr.mxu0 %v1101
      %1104 = vmatpush1.msra.mxu0 %v1098
      %1105 = vmatprep.subr.mxu0 0.0
      %1106 = vmatpush1.msra.mxu0 0.0
      %1107 = vmatprep.subr.mxu0 0.0
      %1108 = vmatpush1.msra.mxu0 0.0
      %1109 = vmatprep.subr.mxu0 0.0
      %1110 = vmatpush1.msra.mxu0 0.0
      %1111 = vmatprep.subr.mxu0 0.0
      %1112 = vmatpush1.msra.mxu0 0.0
      %1113 = vmatprep.subr.mxu0 0.0
      %1114 = vmatpush1.msra.mxu0 0.0
      %1115 = vmatprep.subr.mxu0 0.0
      %1116 = vmatpush1.msra.mxu0 0.0
      %1117 = vmatprep.subr.mxu0 0.0
      %1118 = vmatpush1.msra.mxu0 0.0
      %1119 = vmatprep.subr.mxu0 0.0
      %1120 = vmatpush1.msra.mxu0 0.0
      %1121 = vmatprep.subr.mxu0 0.0
      %1122 = vmatpush1.msra.mxu0 0.0
      %1123 = vmatprep.subr.mxu0 0.0
      %1124 = vmatpush1.msra.mxu0 0.0
      %1125 = vmatprep.subr.mxu0 0.0
      %1126 = vmatpush1.msra.mxu0 0.0
      %1127 = vmatprep.subr.mxu0 0.0
      %1128 = vmatpush1.msra.mxu0 0.0
      %1129 = vmatprep.subr.mxu0 0.0
      %1130 = vmatpush1.msra.mxu0 0.0
      %1131 = vmatprep.subr.mxu0 0.0
      %1132 = vmatpush1.msra.mxu0 0.0
      %1133 = vmatprep.subr.mxu0 0.0
      %1134 = vmatpush1.msra.mxu0 0.0
      %1135 = vmatprep.subr.mxu0 0.0
      %1136 = vmatpush1.msra.mxu0 0.0
      %1137 = vmatprep.subr.mxu0 0.0
      %1138 = vmatpush1.msra.mxu0 0.0
      %1139 = vmatprep.subr.mxu0 0.0
      %1140 = vmatpush1.msra.mxu0 0.0
      %1141 = vmatprep.subr.mxu0 0.0
      %1142 = vmatpush1.msra.mxu0 0.0
      %1143 = vmatprep.subr.mxu0 0.0
      %1144 = vmatpush1.msra.mxu0 0.0
      %1145 = vmatprep.subr.mxu0 0.0
      %1146 = vmatpush1.msra.mxu0 0.0
      %1147 = vmatprep.subr.mxu0 0.0
      %1148 = vmatpush1.msra.mxu0 0.0
      %1149 = vmatprep.subr.mxu0 0.0
      %1150 = vmatpush1.msra.mxu0 0.0
      %1151 = vmatprep.subr.mxu0 0.0
      %1152 = vmatpush1.msra.mxu0 0.0
      %1153 = vmatprep.subr.mxu0 0.0
      %1154 = vmatpush1.msra.mxu0 0.0
      %1155 = vmatprep.subr.mxu0 0.0
      %1156 = vmatpush1.msra.mxu0 0.0
      %1157 = vmatprep.subr.mxu0 0.0
      %1158 = vmatpush1.msra.mxu0 0.0
      %1159 = vmatprep.subr.mxu0 0.0
      %1160 = vmatpush1.msra.mxu0 0.0
      %1161 = vmatprep.subr.mxu0 0.0
      %1162 = vmatpush1.msra.mxu0 0.0
      %1163 = vmatprep.subr.mxu0 0.0
      %1164 = vmatpush1.msra.mxu0 0.0
      %1165 = vmatprep.subr.mxu0 0.0
      %1166 = vmatpush1.msra.mxu0 0.0
      %1167 = vmatprep.mubr.f32.mxu0 0.0
      %1168 = vmatmul.mubr.f32.gmra.mrb[0].mxu0 %v1095
      %v1169 = vpop.f32.mrb[0].mxu0
      %v1170 = vadd.f32 0.0, %v1169
      %v1171 = vpop.f32.mrb[0].mxu0
      %v1172 = vadd.f32 0.0, %v1171
      %1173 = vdwg.mxu0
      %v1174 = vadd.f32 %v1079, %v1170
      %v1175 = vadd.f32 %v1080, %v1172
      %1176 = vrot.lane.b32.xlu0 %v409, 111
      %v1177 = vpop.permute.xlu0 %1176
      %1178 = vrot.lane.b32.xlu0 %v410, 111
      %v1179 = vpop.permute.xlu0 %1178
      %vm1180 = vcmp.lt.s32.totalorder %v412, 111
      %v1181 = vsel %vm1180, %v1177, %v1179
      %v1182 = vsel %vm1180, %v1179, %v1177
      %vm1183 = vmand %vm989, %vm616
      %vm1184 = vmand %vm990, %vm617
      %v1185 = vsel %vm1183, 1.0, 0.0
      %v1186 = vsel %vm1184, 1.0, 0.0
      %v1187 = vmul.f32 %v1181, %v1185
      %v1188 = vmul.f32 %v1182, %v1186
      %s1189 = scalar_lea.vmem %s3, 8
      %v1190 = vld [vmem:[%s1189] sm:$0x1]
      %v1192 = vsel %vm447, %v1190, 0
      %v1195 = vsel %vm451, %v1187, 0
      %v1198 = vsel %vm451, %v1188, 0
      %1200 = vmatprep.subr.mxu0 %v1198
      %1201 = vmatpush1.msra.mxu0 %v1195
      %1202 = vmatprep.subr.mxu0 0.0
      %1203 = vmatpush1.msra.mxu0 0.0
      %1204 = vmatprep.subr.mxu0 0.0
      %1205 = vmatpush1.msra.mxu0 0.0
      %1206 = vmatprep.subr.mxu0 0.0
      %1207 = vmatpush1.msra.mxu0 0.0
      %1208 = vmatprep.subr.mxu0 0.0
      %1209 = vmatpush1.msra.mxu0 0.0
      %1210 = vmatprep.subr.mxu0 0.0
      %1211 = vmatpush1.msra.mxu0 0.0
      %1212 = vmatprep.subr.mxu0 0.0
      %1213 = vmatpush1.msra.mxu0 0.0
      %1214 = vmatprep.subr.mxu0 0.0
      %1215 = vmatpush1.msra.mxu0 0.0
      %1216 = vmatprep.subr.mxu0 0.0
      %1217 = vmatpush1.msra.mxu0 0.0
      %1218 = vmatprep.subr.mxu0 0.0
      %1219 = vmatpush1.msra.mxu0 0.0
      %1220 = vmatprep.subr.mxu0 0.0
      %1221 = vmatpush1.msra.mxu0 0.0
      %1222 = vmatprep.subr.mxu0 0.0
      %1223 = vmatpush1.msra.mxu0 0.0
      %1224 = vmatprep.subr.mxu0 0.0
      %1225 = vmatpush1.msra.mxu0 0.0
      %1226 = vmatprep.subr.mxu0 0.0
      %1227 = vmatpush1.msra.mxu0 0.0
      %1228 = vmatprep.subr.mxu0 0.0
      %1229 = vmatpush1.msra.mxu0 0.0
      %1230 = vmatprep.subr.mxu0 0.0
      %1231 = vmatpush1.msra.mxu0 0.0
      %1232 = vmatprep.subr.mxu0 0.0
      %1233 = vmatpush1.msra.mxu0 0.0
      %1234 = vmatprep.subr.mxu0 0.0
      %1235 = vmatpush1.msra.mxu0 0.0
      %1236 = vmatprep.subr.mxu0 0.0
      %1237 = vmatpush1.msra.mxu0 0.0
      %1238 = vmatprep.subr.mxu0 0.0
      %1239 = vmatpush1.msra.mxu0 0.0
      %1240 = vmatprep.subr.mxu0 0.0
      %1241 = vmatpush1.msra.mxu0 0.0
      %1242 = vmatprep.subr.mxu0 0.0
      %1243 = vmatpush1.msra.mxu0 0.0
      %1244 = vmatprep.subr.mxu0 0.0
      %1245 = vmatpush1.msra.mxu0 0.0
      %1246 = vmatprep.subr.mxu0 0.0
      %1247 = vmatpush1.msra.mxu0 0.0
      %1248 = vmatprep.subr.mxu0 0.0
      %1249 = vmatpush1.msra.mxu0 0.0
      %1250 = vmatprep.subr.mxu0 0.0
      %1251 = vmatpush1.msra.mxu0 0.0
      %1252 = vmatprep.subr.mxu0 0.0
      %1253 = vmatpush1.msra.mxu0 0.0
      %1254 = vmatprep.subr.mxu0 0.0
      %1255 = vmatpush1.msra.mxu0 0.0
      %1256 = vmatprep.subr.mxu0 0.0
      %1257 = vmatpush1.msra.mxu0 0.0
      %1258 = vmatprep.subr.mxu0 0.0
      %1259 = vmatpush1.msra.mxu0 0.0
      %1260 = vmatprep.subr.mxu0 0.0
      %1261 = vmatpush1.msra.mxu0 0.0
      %1262 = vmatprep.subr.mxu0 0.0
      %1263 = vmatpush1.msra.mxu0 0.0
      %1264 = vmatprep.mubr.f32.mxu0 0.0
      %1265 = vmatmul.mubr.f32.gmra.mrb[0].mxu0 %v1192
      %v1266 = vpop.f32.mrb[0].mxu0
      %v1267 = vadd.f32 0.0, %v1266
      %v1268 = vpop.f32.mrb[0].mxu0
      %v1269 = vadd.f32 0.0, %v1268
      %1270 = vdwg.mxu0
      %v1271 = vadd.f32 %v1174, %v1267
      %v1272 = vadd.f32 %v1175, %v1269
      %v1273 = vsub.f32 0.0, %v1271
      %v1274 = vsub.f32 0.0, %v1272
      %v1275 = vmul.f32 %v1273, 1.442695
      %v1276 = vpow.pop %v1275
      %v1277 = vmul.f32 %v1274, 1.442695
      %v1278 = vpow.pop %v1277
      %v1279 = vadd.f32 %v1276, 1.0
      %v1280 = vadd.f32 %v1278, 1.0
      %v1281 = vrcp.pop %v1279
      %v1282 = vmul.f32 1.0, %v1281
      %v1283 = vrcp.pop %v1280
      %v1284 = vmul.f32 1.0, %v1283
      %v1287 = vcombine.low %v1282, %v1284
      %v1289 = vunpack.c.l.s4 1966171168
      %v1290 = vunpack.c.0.s8 %v1289
      %v1291 = vlaneseq
      %v1292 = vshrl.u32 %v1291, 7
      %v1293 = vsub.s32 %v1290, %v1292
      %v1294 = vrot.slane %v1287, %v1293
      %v1296 = vunpack.c.l.s4 1966171168
      %v1297 = vunpack.c.0.s8 %v1296
      %v1298 = vlaneseq
      %v1299 = vshrl.u32 %v1298, 7
      %v1300 = vsub.s32 %v1297, %v1299
      %v1301 = vrot.slane %v1294, %v1300
      %v1303 = vlaneseq
      %vm1304 = vcmp.ge.s32.totalorder %v1303, 0
      %vm1305 = vcmp.lt.s32.totalorder %v1303, 256
      %vm1306 = vmand %vm1304, %vm1305
      %1307 = vst.msk [vmem:[%s323] sm:$0x3] %vm1306, %v1301
      %v1308 = vadd.f32 %v362, %v363
      %1309 = vadd.xlane.f32.xlu0 %v1308
      %v1310 = vpop.xlane.xlu0 %1309
      %v1311 = vmul.f32 %v1310, %v334
      %v1312 = vld [vmem:[%s4] sm:$0xf]
      %vm1313 = vcmask 64512
      %v1315 = vsel %vm1313, %v1312, 0
      %1317 = vmatprep.subr.mxu0 0.0
      %1318 = vmatpush1.msra.mxu0 %v1311
      %1319 = vmatprep.subr.mxu0 0.0
      %1320 = vmatpush1.msra.mxu0 0.0
      %1321 = vmatprep.subr.mxu0 0.0
      %1322 = vmatpush1.msra.mxu0 0.0
      %1323 = vmatprep.subr.mxu0 0.0
      %1324 = vmatpush1.msra.mxu0 0.0
      %1325 = vmatprep.subr.mxu0 0.0
      %1326 = vmatpush1.msra.mxu0 0.0
      %1327 = vmatprep.subr.mxu0 0.0
      %1328 = vmatpush1.msra.mxu0 0.0
      %1329 = vmatprep.subr.mxu0 0.0
      %1330 = vmatpush1.msra.mxu0 0.0
      %1331 = vmatprep.subr.mxu0 0.0
      %1332 = vmatpush1.msra.mxu0 0.0
      %1333 = vmatprep.subr.mxu0 0.0
      %1334 = vmatpush1.msra.mxu0 0.0
      %1335 = vmatprep.subr.mxu0 0.0
      %1336 = vmatpush1.msra.mxu0 0.0
      %1337 = vmatprep.subr.mxu0 0.0
      %1338 = vmatpush1.msra.mxu0 0.0
      %1339 = vmatprep.subr.mxu0 0.0
      %1340 = vmatpush1.msra.mxu0 0.0
      %1341 = vmatprep.subr.mxu0 0.0
      %1342 = vmatpush1.msra.mxu0 0.0
      %1343 = vmatprep.subr.mxu0 0.0
      %1344 = vmatpush1.msra.mxu0 0.0
      %1345 = vmatprep.subr.mxu0 0.0
      %1346 = vmatpush1.msra.mxu0 0.0
      %1347 = vmatprep.subr.mxu0 0.0
      %1348 = vmatpush1.msra.mxu0 0.0
      %1349 = vmatprep.subr.mxu0 0.0
      %1350 = vmatpush1.msra.mxu0 0.0
      %1351 = vmatprep.subr.mxu0 0.0
      %1352 = vmatpush1.msra.mxu0 0.0
      %1353 = vmatprep.subr.mxu0 0.0
      %1354 = vmatpush1.msra.mxu0 0.0
      %1355 = vmatprep.subr.mxu0 0.0
      %1356 = vmatpush1.msra.mxu0 0.0
      %1357 = vmatprep.subr.mxu0 0.0
      %1358 = vmatpush1.msra.mxu0 0.0
      %1359 = vmatprep.subr.mxu0 0.0
      %1360 = vmatpush1.msra.mxu0 0.0
      %1361 = vmatprep.subr.mxu0 0.0
      %1362 = vmatpush1.msra.mxu0 0.0
      %1363 = vmatprep.subr.mxu0 0.0
      %1364 = vmatpush1.msra.mxu0 0.0
      %1365 = vmatprep.subr.mxu0 0.0
      %1366 = vmatpush1.msra.mxu0 0.0
      %1367 = vmatprep.subr.mxu0 0.0
      %1368 = vmatpush1.msra.mxu0 0.0
      %1369 = vmatprep.subr.mxu0 0.0
      %1370 = vmatpush1.msra.mxu0 0.0
      %1371 = vmatprep.subr.mxu0 0.0
      %1372 = vmatpush1.msra.mxu0 0.0
      %1373 = vmatprep.subr.mxu0 0.0
      %1374 = vmatpush1.msra.mxu0 0.0
      %1375 = vmatprep.subr.mxu0 0.0
      %1376 = vmatpush1.msra.mxu0 0.0
      %1377 = vmatprep.subr.mxu0 0.0
      %1378 = vmatpush1.msra.mxu0 0.0
      %1379 = vmatprep.subr.mxu0 0.0
      %1380 = vmatpush1.msra.mxu0 0.0
      %1381 = vmatprep.mubr.f32.mxu0 0.0
      %1382 = vmatmul.mubr.f32.gmra.mrb[0].mxu0 %v1315
      %v1383 = vpop.f32.mrb[0].mxu0
      %v1384 = vadd.f32 0.0, %v1383
      %v1385 = vpop.f32.mrb[0].mxu0
      %1386 = vdwg.mxu0
      %v1387 = vmax.f32 %v1384, 0.0
      %v1388 = vld [vmem:[%s5] sm:$0xff]
      %vm1389 = vcmask 31744
      %v1391 = vsel %vm1389, %v1388, 0
      %vm1393 = vcmask 1043456
      %v1395 = vsel %vm1393, %v1387, 0
      %1397 = vmatprep.subr.mxu0 0.0
      %1398 = vmatpush1.msra.mxu0 %v1395
      %1399 = vmatprep.subr.mxu0 0.0
      %1400 = vmatpush1.msra.mxu0 0.0
      %1401 = vmatprep.subr.mxu0 0.0
      %1402 = vmatpush1.msra.mxu0 0.0
      %1403 = vmatprep.subr.mxu0 0.0
      %1404 = vmatpush1.msra.mxu0 0.0
      %1405 = vmatprep.subr.mxu0 0.0
      %1406 = vmatpush1.msra.mxu0 0.0
      %1407 = vmatprep.subr.mxu0 0.0
      %1408 = vmatpush1.msra.mxu0 0.0
      %1409 = vmatprep.subr.mxu0 0.0
      %1410 = vmatpush1.msra.mxu0 0.0
      %1411 = vmatprep.subr.mxu0 0.0
      %1412 = vmatpush1.msra.mxu0 0.0
      %1413 = vmatprep.subr.mxu0 0.0
      %1414 = vmatpush1.msra.mxu0 0.0
      %1415 = vmatprep.subr.mxu0 0.0
      %1416 = vmatpush1.msra.mxu0 0.0
      %1417 = vmatprep.subr.mxu0 0.0
      %1418 = vmatpush1.msra.mxu0 0.0
      %1419 = vmatprep.subr.mxu0 0.0
      %1420 = vmatpush1.msra.mxu0 0.0
      %1421 = vmatprep.subr.mxu0 0.0
      %1422 = vmatpush1.msra.mxu0 0.0
      %1423 = vmatprep.subr.mxu0 0.0
      %1424 = vmatpush1.msra.mxu0 0.0
      %1425 = vmatprep.subr.mxu0 0.0
      %1426 = vmatpush1.msra.mxu0 0.0
      %1427 = vmatprep.subr.mxu0 0.0
      %1428 = vmatpush1.msra.mxu0 0.0
      %1429 = vmatprep.subr.mxu0 0.0
      %1430 = vmatpush1.msra.mxu0 0.0
      %1431 = vmatprep.subr.mxu0 0.0
      %1432 = vmatpush1.msra.mxu0 0.0
      %1433 = vmatprep.subr.mxu0 0.0
      %1434 = vmatpush1.msra.mxu0 0.0
      %1435 = vmatprep.subr.mxu0 0.0
      %1436 = vmatpush1.msra.mxu0 0.0
      %1437 = vmatprep.subr.mxu0 0.0
      %1438 = vmatpush1.msra.mxu0 0.0
      %1439 = vmatprep.subr.mxu0 0.0
      %1440 = vmatpush1.msra.mxu0 0.0
      %1441 = vmatprep.subr.mxu0 0.0
      %1442 = vmatpush1.msra.mxu0 0.0
      %1443 = vmatprep.subr.mxu0 0.0
      %1444 = vmatpush1.msra.mxu0 0.0
      %1445 = vmatprep.subr.mxu0 0.0
      %1446 = vmatpush1.msra.mxu0 0.0
      %1447 = vmatprep.subr.mxu0 0.0
      %1448 = vmatpush1.msra.mxu0 0.0
      %1449 = vmatprep.subr.mxu0 0.0
      %1450 = vmatpush1.msra.mxu0 0.0
      %1451 = vmatprep.subr.mxu0 0.0
      %1452 = vmatpush1.msra.mxu0 0.0
      %1453 = vmatprep.subr.mxu0 0.0
      %1454 = vmatpush1.msra.mxu0 0.0
      %1455 = vmatprep.subr.mxu0 0.0
      %1456 = vmatpush1.msra.mxu0 0.0
      %1457 = vmatprep.subr.mxu0 0.0
      %1458 = vmatpush1.msra.mxu0 0.0
      %1459 = vmatprep.subr.mxu0 0.0
      %1460 = vmatpush1.msra.mxu0 0.0
      %1461 = vmatprep.mubr.f32.mxu0 0.0
      %1462 = vmatmul.mubr.f32.gmra.mrb[0].mxu0 %v1391
      %v1463 = vpop.f32.mrb[0].mxu0
      %v1464 = vadd.f32 0.0, %v1463
      %v1465 = vpop.f32.mrb[0].mxu0
      %1466 = vdwg.mxu0
      %v1467 = vsub.f32 0.0, %v1464
      %v1468 = vmul.f32 %v1467, 1.442695
      %v1469 = vpow.pop %v1468
      %v1470 = vadd.f32 %v1469, 1.0
      %v1471 = vrcp.pop %v1470
      %v1472 = vmul.f32 1.0, %v1471
      %1474 = vset.pattern.permute.xlu0 0
      %1475 = vperm.xlu0 %1474, %v1472
      %v1476 = vpop.permute.xlu0 %1475
      %v1478 = vmul.f32 %v362, %v1476
      %v1479 = vmul.f32 %v363, %v1476
      %1480 = vst [vmem:[%s328] sm:$0xff] %v1478
      %1481 = vst [vmem:[%s328 + $0x8] sm:$0xff] %v1479
      %p1482 = scmp.lt.s32.totalorder %s20, 1
      %s1483 = scalar_select %p1482, %s20, 1
      %s1484 = smul.addr %s1483, 2
      %s1485 = smul.addr %s1484, 8
      %s1486 = scalar_lea.vmem %s6, %s1485
      %p1487 = scmp.lt.s32.totalorder %s20, 1
      %s1488 = scalar_select %p1487, %s20, 1
      %s1489 = smul.addr %s1488, 2
      %s1490 = scalar_lea.vmem %s7, %s1489
      %p1491 = scmp.lt.s32.totalorder %s20, 1
      %s1492 = scalar_select %p1491, %s20, 1
      %s1493 = smul.addr %s1492, 2
      %s1494 = smul.addr %s1493, 8
      %s1495 = scalar_lea.vmem %s8, %s1494
      // Predicated region
      $region45: #{res_core_blocks_forward.72} parent=43 // pred_check
        %p1496 = pneg %p169
      $region46: #{res_core_blocks_forward.72} parent=43 // pred_check_branch
        %1498 = sbr.rel (%p1496) target = $region48
      $region47: #{res_core_blocks_forward.72} parent=43 // pred_region
        _
      $region48: #{res_core_blocks_forward.72} parent=43 // pred_fallthru
        _
      // Predicated region
      $region49: #{res_core_blocks_forward.72} parent=43 // pred_check
        %p1499 = pneg %p195
      $region50: #{res_core_blocks_forward.72} parent=43 // pred_check_branch
        %1501 = sbr.rel (%p1499) target = $region52
      $region51: #{res_core_blocks_forward.72} parent=43 // pred_region
        _
      $region52: #{res_core_blocks_forward.72} parent=43 // pred_fallthru
        _
      // Predicated region
      $region53: #{res_core_blocks_forward.72} parent=43 // pred_check
        %p1502 = pneg %p221
      $region54: #{res_core_blocks_forward.72} parent=43 // pred_check_branch
        %1504 = sbr.rel (%p1502) target = $region56
      $region55: #{res_core_blocks_forward.72} parent=43 // pred_region
        _
      $region56: #{res_core_blocks_forward.72} parent=43 // pred_fallthru
        _
    $region44: #{res_core_blocks_forward.72} parent=5 // pred_fallthru
      _
    %p1505 = scmp.le.s32.totalorder 2, %s15
    // Predicated region
    $region57: #{res_core_blocks_forward.72} parent=5 // pred_check
      %p1506 = pneg %p1505
    $region58: #{res_core_blocks_forward.72} parent=5 // pred_check_branch
      %1508 = sbr.rel (%p1506) target = $region60
    $region59: #{res_core_blocks_forward.72} parent=5 // pred_region
      %s1509 = ssub.s32 %s15, 2
      // Predicated region
      $region61: #{res_core_blocks_forward.72} parent=59 // pred_check
        %p1510 = pneg %p175
      $region62: #{res_core_blocks_forward.72} parent=59 // pred_check_branch
        %1512 = sbr.rel (%p1510) target = $region64
      $region63: #{res_core_blocks_forward.72} parent=59 // pred_region
        %p1513 = scmp.lt.s32.totalorder %s21, 1
        %s1514 = scalar_select %p1513, %s21, 1
        %s1515 = smul.addr %s1514, 2
        %s1516 = smul.addr %s1515, 8
        %s1517 = scalar_lea.vmem %s6, %s1516
      $region64: #{res_core_blocks_forward.72} parent=59 // pred_fallthru
        _
      // Predicated region
      $region65: #{res_core_blocks_forward.72} parent=59 // pred_check
        %p1518 = pneg %p201
      $region66: #{res_core_blocks_forward.72} parent=59 // pred_check_branch
        %1520 = sbr.rel (%p1518) target = $region68
      $region67: #{res_core_blocks_forward.72} parent=59 // pred_region
        %p1521 = scmp.lt.s32.totalorder %s21, 1
        %s1522 = scalar_select %p1521, %s21, 1
        %s1523 = smul.addr %s1522, 2
        %s1524 = scalar_lea.vmem %s7, %s1523
      $region68: #{res_core_blocks_forward.72} parent=59 // pred_fallthru
        _
      // Predicated region
      $region69: #{res_core_blocks_forward.72} parent=59 // pred_check
        %p1525 = pneg %p227
      $region70: #{res_core_blocks_forward.72} parent=59 // pred_check_branch
        %1527 = sbr.rel (%p1525) target = $region72
      $region71: #{res_core_blocks_forward.72} parent=59 // pred_region
        %p1528 = scmp.lt.s32.totalorder %s21, 1
        %s1529 = scalar_select %p1528, %s21, 1
        %s1530 = smul.addr %s1529, 2
        %s1531 = smul.addr %s1530, 8
        %s1532 = scalar_lea.vmem %s8, %s1531
      $region72: #{res_core_blocks_forward.72} parent=59 // pred_fallthru
        _
    $region60: #{res_core_blocks_forward.72} parent=5 // pred_fallthru
      _
  $region6: #{res_core_blocks_forward.72} parent=0 // loop_footer
    %s19 = sadd.s32 1, %s15
  $region7: #{res_core_blocks_forward.72} parent=0 // loop_footer_branch
    %14 = sbr.rel target = $region3
  $region8: #{res_core_blocks_forward.72} parent=0 // loop_exit
    _

// kernel: res_core_blocks_forward.73
$region0: #{res_core_blocks_forward.73}
  #allocation0 [shape = 'u32[]', space=smem, size = 0x4, offset = 0x4, fixed_abs, tag = 'smem constant byte address 0x4 - core index']
  #allocation1 [shape = 'u32[144,128]{1,0:T(1,128)}', space=vmem, size = 0x12000, scoped, tag = 'internal scratch']
  %s0 = inlined_call_operand.vmem [shape: f32[128,32], index: 0, kind: input, shape index: {}]
  %s1 = inlined_call_operand.vmem [shape: bf16[32,256], index: 1, kind: input, shape index: {}]
  %s2 = inlined_call_operand.vmem [shape: f32[1,256], index: 2, kind: input, shape index: {}]
  %s3 = inlined_call_operand.vmem [shape: bf16[256,768], index: 3, kind: input, shape index: {}]
  %s4 = inlined_call_operand.vmem [shape: f32[1,768], index: 4, kind: input, shape index: {}]
  %s5 = inlined_call_operand.vmem [shape: bf16[256,256], index: 5, kind: input, shape index: {}]
  %s6 = inlined_call_operand.vmem [shape: f32[1,256], index: 6, kind: input, shape index: {}]
  %s7 = inlined_call_operand.vmem [shape: bf16[256,32], index: 7, kind: input, shape index: {}]
  %s8 = inlined_call_operand.vmem [shape: f32[1,32], index: 8, kind: input, shape index: {}]
  %s9 = inlined_call_operand.vmem [shape: f32[256,8], index: 9, kind: input, shape index: {}]
  %s10 = inlined_call_operand.vmem [shape: f32[8,256], index: 10, kind: input, shape index: {}]
  %s11 = inlined_call_operand.vmem [shape: f32[128,32], index: 11, kind: output, shape index: {}]
  %s12 = sld [smem:[#allocation0]]
  $region54: #{res_core_blocks_forward.73} parent=0
    _
  %s14 = ssub.s32 1, %s12
  %s15 = scalar_select 0, %s14, %s12
  // Predicated region
  $region2: #{res_core_blocks_forward.73} parent=0 // pred_check
    _
  $region3: #{res_core_blocks_forward.73} parent=0 // pred_check_branch
    %17 = sbr.rel (0) target = $region5
  $region4: #{res_core_blocks_forward.73} parent=0 // pred_region
    _
  $region5: #{res_core_blocks_forward.73} parent=0 // pred_fallthru
    _
  // Predicated region
  $region6: #{res_core_blocks_forward.73} parent=0 // pred_check
    _
  $region7: #{res_core_blocks_forward.73} parent=0 // pred_check_branch
    %19 = sbr.rel (0) target = $region9
  $region8: #{res_core_blocks_forward.73} parent=0 // pred_region
    _
  $region9: #{res_core_blocks_forward.73} parent=0 // pred_fallthru
    _
  // Predicated region
  $region10: #{res_core_blocks_forward.73} parent=0 // pred_check
    _
  $region11: #{res_core_blocks_forward.73} parent=0 // pred_check_branch
    %21 = sbr.rel (0) target = $region13
  $region12: #{res_core_blocks_forward.73} parent=0 // pred_region
    _
  $region13: #{res_core_blocks_forward.73} parent=0 // pred_fallthru
    _
  // Predicated region
  $region14: #{res_core_blocks_forward.73} parent=0 // pred_check
    _
  $region15: #{res_core_blocks_forward.73} parent=0 // pred_check_branch
    %23 = sbr.rel (0) target = $region17
  $region16: #{res_core_blocks_forward.73} parent=0 // pred_region
    _
  $region17: #{res_core_blocks_forward.73} parent=0 // pred_fallthru
    _
  // Predicated region
  $region18: #{res_core_blocks_forward.73} parent=0 // pred_check
    _
  $region19: #{res_core_blocks_forward.73} parent=0 // pred_check_branch
    %25 = sbr.rel (0) target = $region21
  $region20: #{res_core_blocks_forward.73} parent=0 // pred_region
    _
  $region21: #{res_core_blocks_forward.73} parent=0 // pred_fallthru
    _
  // Predicated region
  $region22: #{res_core_blocks_forward.73} parent=0 // pred_check
    _
  $region23: #{res_core_blocks_forward.73} parent=0 // pred_check_branch
    %27 = sbr.rel (0) target = $region25
  $region24: #{res_core_blocks_forward.73} parent=0 // pred_region
    _
  $region25: #{res_core_blocks_forward.73} parent=0 // pred_fallthru
    _
  // Predicated region
  $region26: #{res_core_blocks_forward.73} parent=0 // pred_check
    _
  $region27: #{res_core_blocks_forward.73} parent=0 // pred_check_branch
    %29 = sbr.rel (0) target = $region29
  $region28: #{res_core_blocks_forward.73} parent=0 // pred_region
    _
  $region29: #{res_core_blocks_forward.73} parent=0 // pred_fallthru
    _
  // Predicated region
  $region30: #{res_core_blocks_forward.73} parent=0 // pred_check
    _
  $region31: #{res_core_blocks_forward.73} parent=0 // pred_check_branch
    %31 = sbr.rel (0) target = $region33
  $region32: #{res_core_blocks_forward.73} parent=0 // pred_region
    _
  $region33: #{res_core_blocks_forward.73} parent=0 // pred_fallthru
    _
  // Predicated region
  $region34: #{res_core_blocks_forward.73} parent=0 // pred_check
    _
  $region35: #{res_core_blocks_forward.73} parent=0 // pred_check_branch
    %33 = sbr.rel (0) target = $region37
  $region36: #{res_core_blocks_forward.73} parent=0 // pred_region
    _
  $region37: #{res_core_blocks_forward.73} parent=0 // pred_fallthru
    _
  // Predicated region
  $region38: #{res_core_blocks_forward.73} parent=0 // pred_check
    _
  $region39: #{res_core_blocks_forward.73} parent=0 // pred_check_branch
    %35 = sbr.rel (0) target = $region41
  $region40: #{res_core_blocks_forward.73} parent=0 // pred_region
    _
  $region41: #{res_core_blocks_forward.73} parent=0 // pred_fallthru
    _
  // Predicated region
  $region42: #{res_core_blocks_forward.73} parent=0 // pred_check
    _
  $region43: #{res_core_blocks_forward.73} parent=0 // pred_check_branch
    %37 = sbr.rel (0) target = $region45
  $region44: #{res_core_blocks_forward.73} parent=0 // pred_region
    _
  $region45: #{res_core_blocks_forward.73} parent=0 // pred_fallthru
    _
  %v39 = vld [vmem:[%s0] sm:$0xff]
  %v40 = vld [vmem:[%s0 + $0x8] sm:$0xff]
  %v41 = vld [vmem:[%s0 + $0x10] sm:$0xff]
  %v42 = vld [vmem:[%s0 + $0x18] sm:$0xff]
  %v43 = vld [vmem:[%s0 + $0x20] sm:$0xff]
  %v44 = vld [vmem:[%s0 + $0x28] sm:$0xff]
  %v45 = vld [vmem:[%s0 + $0x30] sm:$0xff]
  %v46 = vld [vmem:[%s0 + $0x38] sm:$0xff]
  %v47 = vld [vmem:[%s0 + $0x40] sm:$0xff]
  %v48 = vld [vmem:[%s0 + $0x48] sm:$0xff]
  %v49 = vld [vmem:[%s0 + $0x50] sm:$0xff]
  %v50 = vld [vmem:[%s0 + $0x58] sm:$0xff]
  %v51 = vld [vmem:[%s0 + $0x60] sm:$0xff]
  %v52 = vld [vmem:[%s0 + $0x68] sm:$0xff]
  %v53 = vld [vmem:[%s0 + $0x70] sm:$0xff]
  %v54 = vld [vmem:[%s0 + $0x78] sm:$0xff]
  %v55 = vpack.c.bf16 %v40, %v39
  %v56 = vpack.c.bf16 %v42, %v41
  %v57 = vpack.c.bf16 %v44, %v43
  %v58 = vpack.c.bf16 %v46, %v45
  %v59 = vpack.c.bf16 %v48, %v47
  %v60 = vpack.c.bf16 %v50, %v49
  %v61 = vpack.c.bf16 %v52, %v51
  %v62 = vpack.c.bf16 %v54, %v53
  %v63 = vld [vmem:[%s1] sm:$0xff]
  %v64 = vld [vmem:[%s1 + $0x8] sm:$0xff]
  %v65 = vld [vmem:[%s1 + $0x10] sm:$0xff]
  %v66 = vld [vmem:[%s1 + $0x18] sm:$0xff]
  %v67 = vld [vmem:[%s2] sm:$0x3]
  %v69 = vlaneseq
  %v70 = vshrl.u32 %v69, 7
  %v71 = vsub.s32 0, %v70
  %v72 = vrot.slane %v67, %v71
  %v73 = vlaneseq
  %v74 = vshrl.u32 %v73, 7
  %v75 = vsub.s32 1, %v74
  %v76 = vrot.slane %v67, %v75
  %v83 = vunpack.c.l.b16 %v63
  %v84 = vunpack.c.h.b16 %v63
  %v85 = vunpack.c.l.b16 %v64
  %v86 = vunpack.c.h.b16 %v64
  %v87 = vunpack.c.l.b16 %v65
  %v88 = vunpack.c.h.b16 %v65
  %v89 = vunpack.c.l.b16 %v66
  %v90 = vunpack.c.h.b16 %v66
  %v91 = vpack.c.b16 %v85, %v83
  %v92 = vpack.c.b16 %v86, %v84
  %v93 = vpack.c.b16 %v89, %v87
  %v94 = vpack.c.b16 %v90, %v88
  %vm99 = vcmask 261120
  %v101 = vsel %vm99, %v55, 0
  %v104 = vsel %vm99, %v56, 0
  %v107 = vsel %vm99, %v57, 0
  %v110 = vsel %vm99, %v58, 0
  %v113 = vsel %vm99, %v59, 0
  %v116 = vsel %vm99, %v60, 0
  %v119 = vsel %vm99, %v61, 0
  %v122 = vsel %vm99, %v62, 0
  %124 = vmatprep.subr.bf16.mxu0 %v92
  %125 = vmatpush1.bf16.msra.mxu0 %v91
  %126 = vmatprep.subr.bf16.mxu0 %v94
  %127 = vmatpush1.bf16.msra.mxu0 %v93
  %128 = vmatprep.subr.bf16.mxu0 0
  %129 = vmatpush1.bf16.msra.mxu0 0
  %130 = vmatprep.subr.bf16.mxu0 0
  %131 = vmatpush1.bf16.msra.mxu0 0
  %132 = vmatprep.subr.bf16.mxu0 0
  %133 = vmatpush1.bf16.msra.mxu0 0
  %134 = vmatprep.subr.bf16.mxu0 0
  %135 = vmatpush1.bf16.msra.mxu0 0
  %136 = vmatprep.subr.bf16.mxu0 0
  %137 = vmatpush1.bf16.msra.mxu0 0
  %138 = vmatprep.subr.bf16.mxu0 0
  %139 = vmatpush1.bf16.msra.mxu0 0
  %140 = vmatprep.subr.bf16.mxu0 0
  %141 = vmatpush1.bf16.msra.mxu0 0
  %142 = vmatprep.subr.bf16.mxu0 0
  %143 = vmatpush1.bf16.msra.mxu0 0
  %144 = vmatprep.subr.bf16.mxu0 0
  %145 = vmatpush1.bf16.msra.mxu0 0
  %146 = vmatprep.subr.bf16.mxu0 0
  %147 = vmatpush1.bf16.msra.mxu0 0
  %148 = vmatprep.subr.bf16.mxu0 0
  %149 = vmatpush1.bf16.msra.mxu0 0
  %150 = vmatprep.subr.bf16.mxu0 0
  %151 = vmatpush1.bf16.msra.mxu0 0
  %152 = vmatprep.subr.bf16.mxu0 0
  %153 = vmatpush1.bf16.msra.mxu0 0
  %154 = vmatprep.subr.bf16.mxu0 0
  %155 = vmatpush1.bf16.msra.mxu0 0
  %156 = vmatprep.mubr.bf16.mxu0 0
  %157 = vmatmul.mubr.bf16.gmra.mrb[0].mxu0 %v101
  %v158 = vpop.f32.mrb[0].mxu0
  %v159 = vadd.f32 %v72, %v158
  %v160 = vpop.f32.mrb[0].mxu0
  %v161 = vadd.f32 %v76, %v160
  %v162 = vpop.f32.mrb[0].mxu0
  %v163 = vadd.f32 %v72, %v162
  %v164 = vpop.f32.mrb[0].mxu0
  %v165 = vadd.f32 %v76, %v164
  %166 = vmatprep.mubr.bf16.mxu0 0
  %167 = vmatmul.mubr.bf16.gmra.mrb[0].mxu0 %v104
  %v168 = vpop.f32.mrb[0].mxu0
  %v169 = vadd.f32 %v72, %v168
  %v170 = vpop.f32.mrb[0].mxu0
  %v171 = vadd.f32 %v76, %v170
  %v172 = vpop.f32.mrb[0].mxu0
  %v173 = vadd.f32 %v72, %v172
  %v174 = vpop.f32.mrb[0].mxu0
  %v175 = vadd.f32 %v76, %v174
  %176 = vmatprep.mubr.bf16.mxu0 0
  %177 = vmatmul.mubr.bf16.gmra.mrb[0].mxu0 %v107
  %v178 = vpop.f32.mrb[0].mxu0
  %v179 = vadd.f32 %v72, %v178
  %v180 = vpop.f32.mrb[0].mxu0
  %v181 = vadd.f32 %v76, %v180
  %v182 = vpop.f32.mrb[0].mxu0
  %v183 = vadd.f32 %v72, %v182
  %v184 = vpop.f32.mrb[0].mxu0
  %v185 = vadd.f32 %v76, %v184
  %186 = vmatprep.mubr.bf16.mxu0 0
  %187 = vmatmul.mubr.bf16.gmra.mrb[0].mxu0 %v110
  %v188 = vpop.f32.mrb[0].mxu0
  %v189 = vadd.f32 %v72, %v188
  %v190 = vpop.f32.mrb[0].mxu0
  %v191 = vadd.f32 %v76, %v190
  %v192 = vpop.f32.mrb[0].mxu0
  %v193 = vadd.f32 %v72, %v192
  %v194 = vpop.f32.mrb[0].mxu0
  %v195 = vadd.f32 %v76, %v194
  %196 = vmatprep.mubr.bf16.mxu0 0
  %197 = vmatmul.mubr.bf16.gmra.mrb[0].mxu0 %v113
  %v198 = vpop.f32.mrb[0].mxu0
  %v199 = vadd.f32 %v72, %v198
  %v200 = vpop.f32.mrb[0].mxu0
  %v201 = vadd.f32 %v76, %v200
  %v202 = vpop.f32.mrb[0].mxu0
  %v203 = vadd.f32 %v72, %v202
  %v204 = vpop.f32.mrb[0].mxu0
  %v205 = vadd.f32 %v76, %v204
  %206 = vmatprep.mubr.bf16.mxu0 0
  %207 = vmatmul.mubr.bf16.gmra.mrb[0].mxu0 %v116
  %v208 = vpop.f32.mrb[0].mxu0
  %v209 = vadd.f32 %v72, %v208
  %v210 = vpop.f32.mrb[0].mxu0
  %v211 = vadd.f32 %v76, %v210
  %v212 = vpop.f32.mrb[0].mxu0
  %v213 = vadd.f32 %v72, %v212
  %v214 = vpop.f32.mrb[0].mxu0
  %v215 = vadd.f32 %v76, %v214
  %216 = vmatprep.mubr.bf16.mxu0 0
  %217 = vmatmul.mubr.bf16.gmra.mrb[0].mxu0 %v119
  %v218 = vpop.f32.mrb[0].mxu0
  %v219 = vadd.f32 %v72, %v218
  %v220 = vpop.f32.mrb[0].mxu0
  %v221 = vadd.f32 %v76, %v220
  %v222 = vpop.f32.mrb[0].mxu0
  %v223 = vadd.f32 %v72, %v222
  %v224 = vpop.f32.mrb[0].mxu0
  %v225 = vadd.f32 %v76, %v224
  %226 = vmatprep.mubr.bf16.mxu0 0
  %227 = vmatmul.mubr.bf16.gmra.mrb[0].mxu0 %v122
  %v228 = vpop.f32.mrb[0].mxu0
  %v229 = vadd.f32 %v72, %v228
  %v230 = vpop.f32.mrb[0].mxu0
  %v231 = vadd.f32 %v76, %v230
  %v232 = vpop.f32.mrb[0].mxu0
  %v233 = vadd.f32 %v72, %v232
  %v234 = vpop.f32.mrb[0].mxu0
  %v235 = vadd.f32 %v76, %v234
  %236 = vdwg.mxu0
  %v237 = vpack.c.bf16 %v163, %v159
  %v238 = vpack.c.bf16 %v165, %v161
  %v239 = vpack.c.bf16 %v173, %v169
  %v240 = vpack.c.bf16 %v175, %v171
  %v241 = vpack.c.bf16 %v183, %v179
  %v242 = vpack.c.bf16 %v185, %v181
  %v243 = vpack.c.bf16 %v193, %v189
  %v244 = vpack.c.bf16 %v195, %v191
  %v245 = vpack.c.bf16 %v203, %v199
  %v246 = vpack.c.bf16 %v205, %v201
  %v247 = vpack.c.bf16 %v213, %v209
  %v248 = vpack.c.bf16 %v215, %v211
  %v249 = vpack.c.bf16 %v223, %v219
  %v250 = vpack.c.bf16 %v225, %v221
  %v251 = vpack.c.bf16 %v233, %v229
  %v252 = vpack.c.bf16 %v235, %v231
  %v253 = vld [vmem:[%s3] sm:$0xff]
  %v254 = vld [vmem:[%s3 + $0x8] sm:$0xff]
  %v255 = vld [vmem:[%s3 + $0x10] sm:$0xff]
  %v256 = vld [vmem:[%s3 + $0x18] sm:$0xff]
  %v257 = vld [vmem:[%s3 + $0x20] sm:$0xff]
  %v258 = vld [vmem:[%s3 + $0x28] sm:$0xff]
  %v259 = vld [vmem:[%s3 + $0x30] sm:$0xff]
  %v260 = vld [vmem:[%s3 + $0x38] sm:$0xff]
  %v261 = vld [vmem:[%s3 + $0x40] sm:$0xff]
  %v262 = vld [vmem:[%s3 + $0x48] sm:$0xff]
  %v263 = vld [vmem:[%s3 + $0x50] sm:$0xff]
  %v264 = vld [vmem:[%s3 + $0x58] sm:$0xff]
  %v265 = vld [vmem:[%s3 + $0x60] sm:$0xff]
  %v266 = vld [vmem:[%s3 + $0x68] sm:$0xff]
  %v267 = vld [vmem:[%s3 + $0x70] sm:$0xff]
  %v268 = vld [vmem:[%s3 + $0x78] sm:$0xff]
  %v269 = vld [vmem:[%s3 + $0x80] sm:$0xff]
  %v270 = vld [vmem:[%s3 + $0x88] sm:$0xff]
  %v271 = vld [vmem:[%s3 + $0x90] sm:$0xff]
  %v272 = vld [vmem:[%s3 + $0x98] sm:$0xff]
  %v273 = vld [vmem:[%s3 + $0xa0] sm:$0xff]
  %v274 = vld [vmem:[%s3 + $0xa8] sm:$0xff]
  %v275 = vld [vmem:[%s3 + $0xb0] sm:$0xff]
  %v276 = vld [vmem:[%s3 + $0xb8] sm:$0xff]
  %v277 = vld [vmem:[%s3 + $0xc0] sm:$0xff]
  %v278 = vld [vmem:[%s3 + $0xc8] sm:$0xff]
  %v279 = vld [vmem:[%s3 + $0xd0] sm:$0xff]
  %v280 = vld [vmem:[%s3 + $0xd8] sm:$0xff]
  %v281 = vld [vmem:[%s3 + $0xe0] sm:$0xff]
  %v282 = vld [vmem:[%s3 + $0xe8] sm:$0xff]
  %v283 = vld [vmem:[%s3 + $0xf0] sm:$0xff]
  %v284 = vld [vmem:[%s3 + $0xf8] sm:$0xff]
  %v285 = vld [vmem:[%s3 + $0x100] sm:$0xff]
  %v286 = vld [vmem:[%s3 + $0x108] sm:$0xff]
  %v287 = vld [vmem:[%s3 + $0x110] sm:$0xff]
  %v288 = vld [vmem:[%s3 + $0x118] sm:$0xff]
  %v289 = vld [vmem:[%s3 + $0x120] sm:$0xff]
  %v290 = vld [vmem:[%s3 + $0x128] sm:$0xff]
  %v291 = vld [vmem:[%s3 + $0x130] sm:$0xff]
  %v292 = vld [vmem:[%s3 + $0x138] sm:$0xff]
  %v293 = vld [vmem:[%s3 + $0x140] sm:$0xff]
  %v294 = vld [vmem:[%s3 + $0x148] sm:$0xff]
  %v295 = vld [vmem:[%s3 + $0x150] sm:$0xff]
  %v296 = vld [vmem:[%s3 + $0x158] sm:$0xff]
  %v297 = vld [vmem:[%s3 + $0x160] sm:$0xff]
  %v298 = vld [vmem:[%s3 + $0x168] sm:$0xff]
  %v299 = vld [vmem:[%s3 + $0x170] sm:$0xff]
  %v300 = vld [vmem:[%s3 + $0x178] sm:$0xff]
  %v301 = vld [vmem:[%s3 + $0x180] sm:$0xff]
  %v302 = vld [vmem:[%s3 + $0x188] sm:$0xff]
  %v303 = vld [vmem:[%s3 + $0x190] sm:$0xff]
  %v304 = vld [vmem:[%s3 + $0x198] sm:$0xff]
  %v305 = vld [vmem:[%s3 + $0x1a0] sm:$0xff]
  %v306 = vld [vmem:[%s3 + $0x1a8] sm:$0xff]
  %v307 = vld [vmem:[%s3 + $0x1b0] sm:$0xff]
  %v308 = vld [vmem:[%s3 + $0x1b8] sm:$0xff]
  %v309 = vld [vmem:[%s3 + $0x1c0] sm:$0xff]
  %v310 = vld [vmem:[%s3 + $0x1c8] sm:$0xff]
  %v311 = vld [vmem:[%s3 + $0x1d0] sm:$0xff]
  %v312 = vld [vmem:[%s3 + $0x1d8] sm:$0xff]
  %v313 = vld [vmem:[%s3 + $0x1e0] sm:$0xff]
  %v314 = vld [vmem:[%s3 + $0x1e8] sm:$0xff]
  %v315 = vld [vmem:[%s3 + $0x1f0] sm:$0xff]
  %v316 = vld [vmem:[%s3 + $0x1f8] sm:$0xff]
  %v317 = vld [vmem:[%s3 + $0x200] sm:$0xff]
  %v318 = vld [vmem:[%s3 + $0x208] sm:$0xff]
  %v319 = vld [vmem:[%s3 + $0x210] sm:$0xff]
  %v320 = vld [vmem:[%s3 + $0x218] sm:$0xff]
  %v321 = vld [vmem:[%s3 + $0x220] sm:$0xff]
  %v322 = vld [vmem:[%s3 + $0x228] sm:$0xff]
  %v323 = vld [vmem:[%s3 + $0x230] sm:$0xff]
  %v324 = vld [vmem:[%s3 + $0x238] sm:$0xff]
  %v325 = vld [vmem:[%s3 + $0x240] sm:$0xff]
  %v326 = vld [vmem:[%s3 + $0x248] sm:$0xff]
  %v327 = vld [vmem:[%s3 + $0x250] sm:$0xff]
  %v328 = vld [vmem:[%s3 + $0x258] sm:$0xff]
  %v329 = vld [vmem:[%s3 + $0x260] sm:$0xff]
  %v330 = vld [vmem:[%s3 + $0x268] sm:$0xff]
  %v331 = vld [vmem:[%s3 + $0x270] sm:$0xff]
  %v332 = vld [vmem:[%s3 + $0x278] sm:$0xff]
  %v333 = vld [vmem:[%s3 + $0x280] sm:$0xff]
  %v334 = vld [vmem:[%s3 + $0x288] sm:$0xff]
  %v335 = vld [vmem:[%s3 + $0x290] sm:$0xff]
  %v336 = vld [vmem:[%s3 + $0x298] sm:$0xff]
  %v337 = vld [vmem:[%s3 + $0x2a0] sm:$0xff]
  %v338 = vld [vmem:[%s3 + $0x2a8] sm:$0xff]
  %v339 = vld [vmem:[%s3 + $0x2b0] sm:$0xff]
  %v340 = vld [vmem:[%s3 + $0x2b8] sm:$0xff]
  %v341 = vld [vmem:[%s3 + $0x2c0] sm:$0xff]
  %v342 = vld [vmem:[%s3 + $0x2c8] sm:$0xff]
  %v343 = vld [vmem:[%s3 + $0x2d0] sm:$0xff]
  %v344 = vld [vmem:[%s3 + $0x2d8] sm:$0xff]
  %v345 = vld [vmem:[%s3 + $0x2e0] sm:$0xff]
  %v346 = vld [vmem:[%s3 + $0x2e8] sm:$0xff]
  %v347 = vld [vmem:[%s3 + $0x2f0] sm:$0xff]
  %v348 = vld [vmem:[%s3 + $0x2f8] sm:$0xff]
  %v349 = vld [vmem:[%s4] sm:$0x3f]
  %v351 = vlaneseq
  %v352 = vshrl.u32 %v351, 7
  %v353 = vsub.s32 0, %v352
  %v354 = vrot.slane %v349, %v353
  %v355 = vlaneseq
  %v356 = vshrl.u32 %v355, 7
  %v357 = vsub.s32 1, %v356
  %v358 = vrot.slane %v349, %v357
  %v359 = vlaneseq
  %v360 = vshrl.u32 %v359, 7
  %v361 = vsub.s32 2, %v360
  %v362 = vrot.slane %v349, %v361
  %v363 = vlaneseq
  %v364 = vshrl.u32 %v363, 7
  %v365 = vsub.s32 3, %v364
  %v366 = vrot.slane %v349, %v365
  %v367 = vlaneseq
  %v368 = vshrl.u32 %v367, 7
  %v369 = vsub.s32 4, %v368
  %v370 = vrot.slane %v349, %v369
  %v371 = vlaneseq
  %v372 = vshrl.u32 %v371, 7
  %v373 = vsub.s32 5, %v372
  %v374 = vrot.slane %v349, %v373
  %v477 = vunpack.c.l.b16 %v253
  %v478 = vunpack.c.h.b16 %v253
  %v479 = vunpack.c.l.b16 %v254
  %v480 = vunpack.c.h.b16 %v254
  %v481 = vunpack.c.l.b16 %v255
  %v482 = vunpack.c.h.b16 %v255
  %v483 = vunpack.c.l.b16 %v256
  %v484 = vunpack.c.h.b16 %v256
  %v485 = vunpack.c.l.b16 %v257
  %v486 = vunpack.c.h.b16 %v257
  %v487 = vunpack.c.l.b16 %v258
  %v488 = vunpack.c.h.b16 %v258
  %v489 = vunpack.c.l.b16 %v259
  %v490 = vunpack.c.h.b16 %v259
  %v491 = vunpack.c.l.b16 %v260
  %v492 = vunpack.c.h.b16 %v260
  %v493 = vunpack.c.l.b16 %v261
  %v494 = vunpack.c.h.b16 %v261
  %v495 = vunpack.c.l.b16 %v262
  %v496 = vunpack.c.h.b16 %v262
  %v497 = vunpack.c.l.b16 %v263
  %v498 = vunpack.c.h.b16 %v263
  %v499 = vunpack.c.l.b16 %v264
  %v500 = vunpack.c.h.b16 %v264
  %v501 = vunpack.c.l.b16 %v265
  %v502 = vunpack.c.h.b16 %v265
  %v503 = vunpack.c.l.b16 %v266
  %v504 = vunpack.c.h.b16 %v266
  %v505 = vunpack.c.l.b16 %v267
  %v506 = vunpack.c.h.b16 %v267
  %v507 = vunpack.c.l.b16 %v268
  %v508 = vunpack.c.h.b16 %v268
  %v509 = vunpack.c.l.b16 %v269
  %v510 = vunpack.c.h.b16 %v269
  %v511 = vunpack.c.l.b16 %v270
  %v512 = vunpack.c.h.b16 %v270
  %v513 = vunpack.c.l.b16 %v271
  %v514 = vunpack.c.h.b16 %v271
  %v515 = vunpack.c.l.b16 %v272
  %v516 = vunpack.c.h.b16 %v272
  %v517 = vunpack.c.l.b16 %v273
  %v518 = vunpack.c.h.b16 %v273
  %v519 = vunpack.c.l.b16 %v274
  %v520 = vunpack.c.h.b16 %v274
  %v521 = vunpack.c.l.b16 %v275
  %v522 = vunpack.c.h.b16 %v275
  %v523 = vunpack.c.l.b16 %v276
  %v524 = vunpack.c.h.b16 %v276
  %v525 = vunpack.c.l.b16 %v277
  %v526 = vunpack.c.h.b16 %v277
  %v527 = vunpack.c.l.b16 %v278
  %v528 = vunpack.c.h.b16 %v278
  %v529 = vunpack.c.l.b16 %v279
  %v530 = vunpack.c.h.b16 %v279
  %v531 = vunpack.c.l.b16 %v280
  %v532 = vunpack.c.h.b16 %v280
  %v533 = vunpack.c.l.b16 %v281
  %v534 = vunpack.c.h.b16 %v281
  %v535 = vunpack.c.l.b16 %v282
  %v536 = vunpack.c.h.b16 %v282
  %v537 = vunpack.c.l.b16 %v283
  %v538 = vunpack.c.h.b16 %v283
  %v539 = vunpack.c.l.b16 %v284
  %v540 = vunpack.c.h.b16 %v284
  %v541 = vunpack.c.l.b16 %v285
  %v542 = vunpack.c.h.b16 %v285
  %v543 = vunpack.c.l.b16 %v286
  %v544 = vunpack.c.h.b16 %v286
  %v545 = vunpack.c.l.b16 %v287
  %v546 = vunpack.c.h.b16 %v287
  %v547 = vunpack.c.l.b16 %v288
  %v548 = vunpack.c.h.b16 %v288
  %v549 = vunpack.c.l.b16 %v289
  %v550 = vunpack.c.h.b16 %v289
  %v551 = vunpack.c.l.b16 %v290
  %v552 = vunpack.c.h.b16 %v290
  %v553 = vunpack.c.l.b16 %v291
  %v554 = vunpack.c.h.b16 %v291
  %v555 = vunpack.c.l.b16 %v292
  %v556 = vunpack.c.h.b16 %v292
  %v557 = vunpack.c.l.b16 %v293
  %v558 = vunpack.c.h.b16 %v293
  %v559 = vunpack.c.l.b16 %v294
  %v560 = vunpack.c.h.b16 %v294
  %v561 = vunpack.c.l.b16 %v295
  %v562 = vunpack.c.h.b16 %v295
  %v563 = vunpack.c.l.b16 %v296
  %v564 = vunpack.c.h.b16 %v296
  %v565 = vunpack.c.l.b16 %v297
  %v566 = vunpack.c.h.b16 %v297
  %v567 = vunpack.c.l.b16 %v298
  %v568 = vunpack.c.h.b16 %v298
  %v569 = vunpack.c.l.b16 %v299
  %v570 = vunpack.c.h.b16 %v299
  %v571 = vunpack.c.l.b16 %v300
  %v572 = vunpack.c.h.b16 %v300
  %v573 = vunpack.c.l.b16 %v301
  %v574 = vunpack.c.h.b16 %v301
  %v575 = vunpack.c.l.b16 %v302
  %v576 = vunpack.c.h.b16 %v302
  %v577 = vunpack.c.l.b16 %v303
  %v578 = vunpack.c.h.b16 %v303
  %v579 = vunpack.c.l.b16 %v304
  %v580 = vunpack.c.h.b16 %v304
  %v581 = vunpack.c.l.b16 %v305
  %v582 = vunpack.c.h.b16 %v305
  %v583 = vunpack.c.l.b16 %v306
  %v584 = vunpack.c.h.b16 %v306
  %v585 = vunpack.c.l.b16 %v307
  %v586 = vunpack.c.h.b16 %v307
  %v587 = vunpack.c.l.b16 %v308
  %v588 = vunpack.c.h.b16 %v308
  %v589 = vunpack.c.l.b16 %v309
  %v590 = vunpack.c.h.b16 %v309
  %v591 = vunpack.c.l.b16 %v310
  %v592 = vunpack.c.h.b16 %v310
  %v593 = vunpack.c.l.b16 %v311
  %v594 = vunpack.c.h.b16 %v311
  %v595 = vunpack.c.l.b16 %v312
  %v596 = vunpack.c.h.b16 %v312
  %v597 = vunpack.c.l.b16 %v313
  %v598 = vunpack.c.h.b16 %v313
  %v599 = vunpack.c.l.b16 %v314
  %v600 = vunpack.c.h.b16 %v314
  %v601 = vunpack.c.l.b16 %v315
  %v602 = vunpack.c.h.b16 %v315
  %v603 = vunpack.c.l.b16 %v316
  %v604 = vunpack.c.h.b16 %v316
  %v605 = vunpack.c.l.b16 %v317
  %v606 = vunpack.c.h.b16 %v317
  %v607 = vunpack.c.l.b16 %v318
  %v608 = vunpack.c.h.b16 %v318
  %v609 = vunpack.c.l.b16 %v319
  %v610 = vunpack.c.h.b16 %v319
  %v611 = vunpack.c.l.b16 %v320
  %v612 = vunpack.c.h.b16 %v320
  %v613 = vunpack.c.l.b16 %v321
  %v614 = vunpack.c.h.b16 %v321
  %v615 = vunpack.c.l.b16 %v322
  %v616 = vunpack.c.h.b16 %v322
  %v617 = vunpack.c.l.b16 %v323
  %v618 = vunpack.c.h.b16 %v323
  %v619 = vunpack.c.l.b16 %v324
  %v620 = vunpack.c.h.b16 %v324
  %v621 = vunpack.c.l.b16 %v325
  %v622 = vunpack.c.h.b16 %v325
  %v623 = vunpack.c.l.b16 %v326
  %v624 = vunpack.c.h.b16 %v326
  %v625 = vunpack.c.l.b16 %v327
  %v626 = vunpack.c.h.b16 %v327
  %v627 = vunpack.c.l.b16 %v328
  %v628 = vunpack.c.h.b16 %v328
  %v629 = vunpack.c.l.b16 %v329
  %v630 = vunpack.c.h.b16 %v329
  %v631 = vunpack.c.l.b16 %v330
  %v632 = vunpack.c.h.b16 %v330
  %v633 = vunpack.c.l.b16 %v331
  %v634 = vunpack.c.h.b16 %v331
  %v635 = vunpack.c.l.b16 %v332
  %v636 = vunpack.c.h.b16 %v332
  %v637 = vunpack.c.l.b16 %v333
  %v638 = vunpack.c.h.b16 %v333
  %v639 = vunpack.c.l.b16 %v334
  %v640 = vunpack.c.h.b16 %v334
  %v641 = vunpack.c.l.b16 %v335
  %v642 = vunpack.c.h.b16 %v335
  %v643 = vunpack.c.l.b16 %v336
  %v644 = vunpack.c.h.b16 %v336
  %v645 = vunpack.c.l.b16 %v337
  %v646 = vunpack.c.h.b16 %v337
  %v647 = vunpack.c.l.b16 %v338
  %v648 = vunpack.c.h.b16 %v338
  %v649 = vunpack.c.l.b16 %v339
  %v650 = vunpack.c.h.b16 %v339
  %v651 = vunpack.c.l.b16 %v340
  %v652 = vunpack.c.h.b16 %v340
  %v653 = vunpack.c.l.b16 %v341
  %v654 = vunpack.c.h.b16 %v341
  %v655 = vunpack.c.l.b16 %v342
  %v656 = vunpack.c.h.b16 %v342
  %v657 = vunpack.c.l.b16 %v343
  %v658 = vunpack.c.h.b16 %v343
  %v659 = vunpack.c.l.b16 %v344
  %v660 = vunpack.c.h.b16 %v344
  %v661 = vunpack.c.l.b16 %v345
  %v662 = vunpack.c.h.b16 %v345
  %v663 = vunpack.c.l.b16 %v346
  %v664 = vunpack.c.h.b16 %v346
  %v665 = vunpack.c.l.b16 %v347
  %v666 = vunpack.c.h.b16 %v347
  %v667 = vunpack.c.l.b16 %v348
  %v668 = vunpack.c.h.b16 %v348
  %v669 = vpack.c.b16 %v483, %v477
  %v670 = vpack.c.b16 %v484, %v478
  %v671 = vpack.c.b16 %v485, %v479
  %v672 = vpack.c.b16 %v486, %v480
  %v673 = vpack.c.b16 %v487, %v481
  %v674 = vpack.c.b16 %v488, %v482
  %v675 = vpack.c.b16 %v495, %v489
  %v676 = vpack.c.b16 %v496, %v490
  %v677 = vpack.c.b16 %v497, %v491
  %v678 = vpack.c.b16 %v498, %v492
  %v679 = vpack.c.b16 %v499, %v493
  %v680 = vpack.c.b16 %v500, %v494
  %v681 = vpack.c.b16 %v507, %v501
  %v682 = vpack.c.b16 %v508, %v502
  %v683 = vpack.c.b16 %v509, %v503
  %v684 = vpack.c.b16 %v510, %v504
  %v685 = vpack.c.b16 %v511, %v505
  %v686 = vpack.c.b16 %v512, %v506
  %v687 = vpack.c.b16 %v519, %v513
  %v688 = vpack.c.b16 %v520, %v514
  %v689 = vpack.c.b16 %v521, %v515
  %v690 = vpack.c.b16 %v522, %v516
  %v691 = vpack.c.b16 %v523, %v517
  %v692 = vpack.c.b16 %v524, %v518
  %v693 = vpack.c.b16 %v531, %v525
  %v694 = vpack.c.b16 %v532, %v526
  %v695 = vpack.c.b16 %v533, %v527
  %v696 = vpack.c.b16 %v534, %v528
  %v697 = vpack.c.b16 %v535, %v529
  %v698 = vpack.c.b16 %v536, %v530
  %v699 = vpack.c.b16 %v543, %v537
  %v700 = vpack.c.b16 %v544, %v538
  %v701 = vpack.c.b16 %v545, %v539
  %v702 = vpack.c.b16 %v546, %v540
  %v703 = vpack.c.b16 %v547, %v541
  %v704 = vpack.c.b16 %v548, %v542
  %v705 = vpack.c.b16 %v555, %v549
  %v706 = vpack.c.b16 %v556, %v550
  %v707 = vpack.c.b16 %v557, %v551
  %v708 = vpack.c.b16 %v558, %v552
  %v709 = vpack.c.b16 %v559, %v553
  %v710 = vpack.c.b16 %v560, %v554
  %v711 = vpack.c.b16 %v567, %v561
  %v712 = vpack.c.b16 %v568, %v562
  %v713 = vpack.c.b16 %v569, %v563
  %v714 = vpack.c.b16 %v570, %v564
  %v715 = vpack.c.b16 %v571, %v565
  %v716 = vpack.c.b16 %v572, %v566
  %v717 = vpack.c.b16 %v579, %v573
  %v718 = vpack.c.b16 %v580, %v574
  %v719 = vpack.c.b16 %v581, %v575
  %v720 = vpack.c.b16 %v582, %v576
  %v721 = vpack.c.b16 %v583, %v577
  %v722 = vpack.c.b16 %v584, %v578
  %v723 = vpack.c.b16 %v591, %v585
  %v724 = vpack.c.b16 %v592, %v586
  %v725 = vpack.c.b16 %v593, %v587
  %v726 = vpack.c.b16 %v594, %v588
  %v727 = vpack.c.b16 %v595, %v589
  %v728 = vpack.c.b16 %v596, %v590
  %v729 = vpack.c.b16 %v603, %v597
  %v730 = vpack.c.b16 %v604, %v598
  %v731 = vpack.c.b16 %v605, %v599
  %v732 = vpack.c.b16 %v606, %v600
  %v733 = vpack.c.b16 %v607, %v601
  %v734 = vpack.c.b16 %v608, %v602
  %v735 = vpack.c.b16 %v615, %v609
  %v736 = vpack.c.b16 %v616, %v610
  %v737 = vpack.c.b16 %v617, %v611
  %v738 = vpack.c.b16 %v618, %v612
  %v739 = vpack.c.b16 %v619, %v613
  %v740 = vpack.c.b16 %v620, %v614
  %v741 = vpack.c.b16 %v627, %v621
  %v742 = vpack.c.b16 %v628, %v622
  %v743 = vpack.c.b16 %v629, %v623
  %v744 = vpack.c.b16 %v630, %v624
  %v745 = vpack.c.b16 %v631, %v625
  %v746 = vpack.c.b16 %v632, %v626
  %v747 = vpack.c.b16 %v639, %v633
  %v748 = vpack.c.b16 %v640, %v634
  %v749 = vpack.c.b16 %v641, %v635
  %v750 = vpack.c.b16 %v642, %v636
  %v751 = vpack.c.b16 %v643, %v637
  %v752 = vpack.c.b16 %v644, %v638
  %v753 = vpack.c.b16 %v651, %v645
  %v754 = vpack.c.b16 %v652, %v646
  %v755 = vpack.c.b16 %v653, %v647
  %v756 = vpack.c.b16 %v654, %v648
  %v757 = vpack.c.b16 %v655, %v649
  %v758 = vpack.c.b16 %v656, %v650
  %v759 = vpack.c.b16 %v663, %v657
  %v760 = vpack.c.b16 %v664, %v658
  %v761 = vpack.c.b16 %v665, %v659
  %v762 = vpack.c.b16 %v666, %v660
  %v763 = vpack.c.b16 %v667, %v661
  %v764 = vpack.c.b16 %v668, %v662
  %861 = vmatprep.subr.bf16.mxu0 %v670
  %862 = vmatpush1.bf16.msra.mxu0 %v669
  %863 = vmatprep.subr.bf16.mxu0 %v676
  %864 = vmatpush1.bf16.msra.mxu0 %v675
  %865 = vmatprep.subr.bf16.mxu0 %v682
  %866 = vmatpush1.bf16.msra.mxu0 %v681
  %867 = vmatprep.subr.bf16.mxu0 %v688
  %868 = vmatpush1.bf16.msra.mxu0 %v687
  %869 = vmatprep.subr.bf16.mxu0 %v694
  %870 = vmatpush1.bf16.msra.mxu0 %v693
  %871 = vmatprep.subr.bf16.mxu0 %v700
  %872 = vmatpush1.bf16.msra.mxu0 %v699
  %873 = vmatprep.subr.bf16.mxu0 %v706
  %874 = vmatpush1.bf16.msra.mxu0 %v705
  %875 = vmatprep.subr.bf16.mxu0 %v712
  %876 = vmatpush1.bf16.msra.mxu0 %v711
  %877 = vmatprep.subr.bf16.mxu0 %v718
  %878 = vmatpush1.bf16.msra.mxu0 %v717
  %879 = vmatprep.subr.bf16.mxu0 %v724
  %880 = vmatpush1.bf16.msra.mxu0 %v723
  %881 = vmatprep.subr.bf16.mxu0 %v730
  %882 = vmatpush1.bf16.msra.mxu0 %v729
  %883 = vmatprep.subr.bf16.mxu0 %v736
  %884 = vmatpush1.bf16.msra.mxu0 %v735
  %885 = vmatprep.subr.bf16.mxu0 %v742
  %886 = vmatpush1.bf16.msra.mxu0 %v741
  %887 = vmatprep.subr.bf16.mxu0 %v748
  %888 = vmatpush1.bf16.msra.mxu0 %v747
  %889 = vmatprep.subr.bf16.mxu0 %v754
  %890 = vmatpush1.bf16.msra.mxu0 %v753
  %891 = vmatprep.subr.bf16.mxu0 %v760
  %892 = vmatpush1.bf16.msra.mxu0 %v759
  %893 = vmatprep.mubr.bf16.mxu0 %v238
  %894 = vmatmul.mubr.bf16.gmra.mrb[0].mxu0 %v237
  %v895 = vpop.f32.mrb[0].mxu0
  %v896 = vadd.f32 %v354, %v895
  %v897 = vpop.f32.mrb[0].mxu0
  %v898 = vadd.f32 %v358, %v897
  %v899 = vpop.f32.mrb[0].mxu0
  %v900 = vadd.f32 %v354, %v899
  %v901 = vpop.f32.mrb[0].mxu0
  %v902 = vadd.f32 %v358, %v901
  %903 = vmatprep.mubr.bf16.mxu0 %v240
  %904 = vmatmul.mubr.bf16.gmra.mrb[0].mxu0 %v239
  %v905 = vpop.f32.mrb[0].mxu0
  %v906 = vadd.f32 %v354, %v905
  %v907 = vpop.f32.mrb[0].mxu0
  %v908 = vadd.f32 %v358, %v907
  %v909 = vpop.f32.mrb[0].mxu0
  %v910 = vadd.f32 %v354, %v909
  %v911 = vpop.f32.mrb[0].mxu0
  %v912 = vadd.f32 %v358, %v911
  %913 = vmatprep.mubr.bf16.mxu0 %v242
  %914 = vmatmul.mubr.bf16.gmra.mrb[0].mxu0 %v241
  %v915 = vpop.f32.mrb[0].mxu0
  %v916 = vadd.f32 %v354, %v915
  %v917 = vpop.f32.mrb[0].mxu0
  %v918 = vadd.f32 %v358, %v917
  %v919 = vpop.f32.mrb[0].mxu0
  %v920 = vadd.f32 %v354, %v919
  %v921 = vpop.f32.mrb[0].mxu0
  %v922 = vadd.f32 %v358, %v921
  %923 = vmatprep.mubr.bf16.mxu0 %v244
  %924 = vmatmul.mubr.bf16.gmra.mrb[0].mxu0 %v243
  %v925 = vpop.f32.mrb[0].mxu0
  %v926 = vadd.f32 %v354, %v925
  %v927 = vpop.f32.mrb[0].mxu0
  %v928 = vadd.f32 %v358, %v927
  %v929 = vpop.f32.mrb[0].mxu0
  %v930 = vadd.f32 %v354, %v929
  %v931 = vpop.f32.mrb[0].mxu0
  %v932 = vadd.f32 %v358, %v931
  %933 = vmatprep.mubr.bf16.mxu0 %v246
  %934 = vmatmul.mubr.bf16.gmra.mrb[0].mxu0 %v245
  %v935 = vpop.f32.mrb[0].mxu0
  %v936 = vadd.f32 %v354, %v935
  %v937 = vpop.f32.mrb[0].mxu0
  %v938 = vadd.f32 %v358, %v937
  %v939 = vpop.f32.mrb[0].mxu0
  %v940 = vadd.f32 %v354, %v939
  %v941 = vpop.f32.mrb[0].mxu0
  %v942 = vadd.f32 %v358, %v941
  %943 = vmatprep.mubr.bf16.mxu0 %v248
  %944 = vmatmul.mubr.bf16.gmra.mrb[0].mxu0 %v247
  %v945 = vpop.f32.mrb[0].mxu0
  %v946 = vadd.f32 %v354, %v945
  %v947 = vpop.f32.mrb[0].mxu0
  %v948 = vadd.f32 %v358, %v947
  %v949 = vpop.f32.mrb[0].mxu0
  %v950 = vadd.f32 %v354, %v949
  %v951 = vpop.f32.mrb[0].mxu0
  %v952 = vadd.f32 %v358, %v951
  %953 = vmatprep.mubr.bf16.mxu0 %v250
  %954 = vmatmul.mubr.bf16.gmra.mrb[0].mxu0 %v249
  %v955 = vpop.f32.mrb[0].mxu0
  %v956 = vadd.f32 %v354, %v955
  %v957 = vpop.f32.mrb[0].mxu0
  %v958 = vadd.f32 %v358, %v957
  %v959 = vpop.f32.mrb[0].mxu0
  %v960 = vadd.f32 %v354, %v959
  %v961 = vpop.f32.mrb[0].mxu0
  %v962 = vadd.f32 %v358, %v961
  %963 = vmatprep.mubr.bf16.mxu0 %v252
  %964 = vmatmul.mubr.bf16.gmra.mrb[0].mxu0 %v251
  %v965 = vpop.f32.mrb[0].mxu0
  %v966 = vadd.f32 %v354, %v965
  %v967 = vpop.f32.mrb[0].mxu0
  %v968 = vadd.f32 %v358, %v967
  %v969 = vpop.f32.mrb[0].mxu0
  %v970 = vadd.f32 %v354, %v969
  %v971 = vpop.f32.mrb[0].mxu0
  %v972 = vadd.f32 %v358, %v971
  %973 = vdwg.mxu0
  %974 = vmatprep.subr.bf16.mxu0 %v672
  %975 = vmatpush1.bf16.msra.mxu0 %v671
  %976 = vmatprep.subr.bf16.mxu0 %v678
  %977 = vmatpush1.bf16.msra.mxu0 %v677
  %978 = vmatprep.subr.bf16.mxu0 %v684
  %979 = vmatpush1.bf16.msra.mxu0 %v683
  %980 = vmatprep.subr.bf16.mxu0 %v690
  %981 = vmatpush1.bf16.msra.mxu0 %v689
  %982 = vmatprep.subr.bf16.mxu0 %v696
  %983 = vmatpush1.bf16.msra.mxu0 %v695
  %984 = vmatprep.subr.bf16.mxu0 %v702
  %985 = vmatpush1.bf16.msra.mxu0 %v701
  %986 = vmatprep.subr.bf16.mxu0 %v708
  %987 = vmatpush1.bf16.msra.mxu0 %v707
  %988 = vmatprep.subr.bf16.mxu0 %v714
  %989 = vmatpush1.bf16.msra.mxu0 %v713
  %990 = vmatprep.subr.bf16.mxu0 %v720
  %991 = vmatpush1.bf16.msra.mxu0 %v719
  %992 = vmatprep.subr.bf16.mxu0 %v726
  %993 = vmatpush1.bf16.msra.mxu0 %v725
  %994 = vmatprep.subr.bf16.mxu0 %v732
  %995 = vmatpush1.bf16.msra.mxu0 %v731
  %996 = vmatprep.subr.bf16.mxu0 %v738
  %997 = vmatpush1.bf16.msra.mxu0 %v737
  %998 = vmatprep.subr.bf16.mxu0 %v744
  %999 = vmatpush1.bf16.msra.mxu0 %v743
  %1000 = vmatprep.subr.bf16.mxu0 %v750
  %1001 = vmatpush1.bf16.msra.mxu0 %v749
  %1002 = vmatprep.subr.bf16.mxu0 %v756
  %1003 = vmatpush1.bf16.msra.mxu0 %v755
  %1004 = vmatprep.subr.bf16.mxu0 %v762
  %1005 = vmatpush1.bf16.msra.mxu0 %v761
  %1006 = vmatprep.mubr.bf16.mxu0 %v238
  %1007 = vmatmul.mubr.bf16.gmra.mrb[0].mxu0 %v237
  %v1008 = vpop.f32.mrb[0].mxu0
  %v1009 = vadd.f32 %v362, %v1008
  %v1010 = vpop.f32.mrb[0].mxu0
  %v1011 = vadd.f32 %v366, %v1010
  %v1012 = vpop.f32.mrb[0].mxu0
  %v1013 = vadd.f32 %v362, %v1012
  %v1014 = vpop.f32.mrb[0].mxu0
  %v1015 = vadd.f32 %v366, %v1014
  %1016 = vmatprep.mubr.bf16.mxu0 %v240
  %1017 = vmatmul.mubr.bf16.gmra.mrb[0].mxu0 %v239
  %v1018 = vpop.f32.mrb[0].mxu0
  %v1019 = vadd.f32 %v362, %v1018
  %v1020 = vpop.f32.mrb[0].mxu0
  %v1021 = vadd.f32 %v366, %v1020
  %v1022 = vpop.f32.mrb[0].mxu0
  %v1023 = vadd.f32 %v362, %v1022
  %v1024 = vpop.f32.mrb[0].mxu0
  %v1025 = vadd.f32 %v366, %v1024
  %1026 = vmatprep.mubr.bf16.mxu0 %v242
  %1027 = vmatmul.mubr.bf16.gmra.mrb[0].mxu0 %v241
  %v1028 = vpop.f32.mrb[0].mxu0
  %v1029 = vadd.f32 %v362, %v1028
  %v1030 = vpop.f32.mrb[0].mxu0
  %v1031 = vadd.f32 %v366, %v1030
  %v1032 = vpop.f32.mrb[0].mxu0
  %v1033 = vadd.f32 %v362, %v1032
  %v1034 = vpop.f32.mrb[0].mxu0
  %v1035 = vadd.f32 %v366, %v1034
  %1036 = vmatprep.mubr.bf16.mxu0 %v244
  %1037 = vmatmul.mubr.bf16.gmra.mrb[0].mxu0 %v243
  %v1038 = vpop.f32.mrb[0].mxu0
  %v1039 = vadd.f32 %v362, %v1038
  %v1040 = vpop.f32.mrb[0].mxu0
  %v1041 = vadd.f32 %v366, %v1040
  %v1042 = vpop.f32.mrb[0].mxu0
  %v1043 = vadd.f32 %v362, %v1042
  %v1044 = vpop.f32.mrb[0].mxu0
  %v1045 = vadd.f32 %v366, %v1044
  %1046 = vmatprep.mubr.bf16.mxu0 %v246
  %1047 = vmatmul.mubr.bf16.gmra.mrb[0].mxu0 %v245
  %v1048 = vpop.f32.mrb[0].mxu0
  %v1049 = vadd.f32 %v362, %v1048
  %v1050 = vpop.f32.mrb[0].mxu0
  %v1051 = vadd.f32 %v366, %v1050
  %v1052 = vpop.f32.mrb[0].mxu0
  %v1053 = vadd.f32 %v362, %v1052
  %v1054 = vpop.f32.mrb[0].mxu0
  %v1055 = vadd.f32 %v366, %v1054
  %1056 = vmatprep.mubr.bf16.mxu0 %v248
  %1057 = vmatmul.mubr.bf16.gmra.mrb[0].mxu0 %v247
  %v1058 = vpop.f32.mrb[0].mxu0
  %v1059 = vadd.f32 %v362, %v1058
  %v1060 = vpop.f32.mrb[0].mxu0
  %v1061 = vadd.f32 %v366, %v1060
  %v1062 = vpop.f32.mrb[0].mxu0
  %v1063 = vadd.f32 %v362, %v1062
  %v1064 = vpop.f32.mrb[0].mxu0
  %v1065 = vadd.f32 %v366, %v1064
  %1066 = vmatprep.mubr.bf16.mxu0 %v250
  %1067 = vmatmul.mubr.bf16.gmra.mrb[0].mxu0 %v249
  %v1068 = vpop.f32.mrb[0].mxu0
  %v1069 = vadd.f32 %v362, %v1068
  %v1070 = vpop.f32.mrb[0].mxu0
  %v1071 = vadd.f32 %v366, %v1070
  %v1072 = vpop.f32.mrb[0].mxu0
  %v1073 = vadd.f32 %v362, %v1072
  %v1074 = vpop.f32.mrb[0].mxu0
  %v1075 = vadd.f32 %v366, %v1074
  %1076 = vmatprep.mubr.bf16.mxu0 %v252
  %1077 = vmatmul.mubr.bf16.gmra.mrb[0].mxu0 %v251
  %v1078 = vpop.f32.mrb[0].mxu0
  %v1079 = vadd.f32 %v362, %v1078
  %v1080 = vpop.f32.mrb[0].mxu0
  %v1081 = vadd.f32 %v366, %v1080
  %v1082 = vpop.f32.mrb[0].mxu0
  %v1083 = vadd.f32 %v362, %v1082
  %v1084 = vpop.f32.mrb[0].mxu0
  %v1085 = vadd.f32 %v366, %v1084
  %1086 = vdwg.mxu0
  %1087 = vmatprep.subr.bf16.mxu0 %v674
  %1088 = vmatpush1.bf16.msra.mxu0 %v673
  %1089 = vmatprep.subr.bf16.mxu0 %v680
  %1090 = vmatpush1.bf16.msra.mxu0 %v679
  %1091 = vmatprep.subr.bf16.mxu0 %v686
  %1092 = vmatpush1.bf16.msra.mxu0 %v685
  %1093 = vmatprep.subr.bf16.mxu0 %v692
  %1094 = vmatpush1.bf16.msra.mxu0 %v691
  %1095 = vmatprep.subr.bf16.mxu0 %v698
  %1096 = vmatpush1.bf16.msra.mxu0 %v697
  %1097 = vmatprep.subr.bf16.mxu0 %v704
  %1098 = vmatpush1.bf16.msra.mxu0 %v703
  %1099 = vmatprep.subr.bf16.mxu0 %v710
  %1100 = vmatpush1.bf16.msra.mxu0 %v709
  %1101 = vmatprep.subr.bf16.mxu0 %v716
  %1102 = vmatpush1.bf16.msra.mxu0 %v715
  %1103 = vmatprep.subr.bf16.mxu0 %v722
  %1104 = vmatpush1.bf16.msra.mxu0 %v721
  %1105 = vmatprep.subr.bf16.mxu0 %v728
  %1106 = vmatpush1.bf16.msra.mxu0 %v727
  %1107 = vmatprep.subr.bf16.mxu0 %v734
  %1108 = vmatpush1.bf16.msra.mxu0 %v733
  %1109 = vmatprep.subr.bf16.mxu0 %v740
  %1110 = vmatpush1.bf16.msra.mxu0 %v739
  %1111 = vmatprep.subr.bf16.mxu0 %v746
  %1112 = vmatpush1.bf16.msra.mxu0 %v745
  %1113 = vmatprep.subr.bf16.mxu0 %v752
  %1114 = vmatpush1.bf16.msra.mxu0 %v751
  %1115 = vmatprep.subr.bf16.mxu0 %v758
  %1116 = vmatpush1.bf16.msra.mxu0 %v757
  %1117 = vmatprep.subr.bf16.mxu0 %v764
  %1118 = vmatpush1.bf16.msra.mxu0 %v763
  %1119 = vmatprep.mubr.bf16.mxu0 %v238
  %1120 = vmatmul.mubr.bf16.gmra.mrb[0].mxu0 %v237
  %v1121 = vpop.f32.mrb[0].mxu0
  %v1122 = vadd.f32 %v370, %v1121
  %v1123 = vpop.f32.mrb[0].mxu0
  %v1124 = vadd.f32 %v374, %v1123
  %v1125 = vpop.f32.mrb[0].mxu0
  %v1126 = vadd.f32 %v370, %v1125
  %v1127 = vpop.f32.mrb[0].mxu0
  %v1128 = vadd.f32 %v374, %v1127
  %1129 = vmatprep.mubr.bf16.mxu0 %v240
  %1130 = vmatmul.mubr.bf16.gmra.mrb[0].mxu0 %v239
  %v1131 = vpop.f32.mrb[0].mxu0
  %v1132 = vadd.f32 %v370, %v1131
  %v1133 = vpop.f32.mrb[0].mxu0
  %v1134 = vadd.f32 %v374, %v1133
  %v1135 = vpop.f32.mrb[0].mxu0
  %v1136 = vadd.f32 %v370, %v1135
  %v1137 = vpop.f32.mrb[0].mxu0
  %v1138 = vadd.f32 %v374, %v1137
  %1139 = vmatprep.mubr.bf16.mxu0 %v242
  %1140 = vmatmul.mubr.bf16.gmra.mrb[0].mxu0 %v241
  %v1141 = vpop.f32.mrb[0].mxu0
  %v1142 = vadd.f32 %v370, %v1141
  %v1143 = vpop.f32.mrb[0].mxu0
  %v1144 = vadd.f32 %v374, %v1143
  %v1145 = vpop.f32.mrb[0].mxu0
  %v1146 = vadd.f32 %v370, %v1145
  %v1147 = vpop.f32.mrb[0].mxu0
  %v1148 = vadd.f32 %v374, %v1147
  %1149 = vmatprep.mubr.bf16.mxu0 %v244
  %1150 = vmatmul.mubr.bf16.gmra.mrb[0].mxu0 %v243
  %v1151 = vpop.f32.mrb[0].mxu0
  %v1152 = vadd.f32 %v370, %v1151
  %v1153 = vpop.f32.mrb[0].mxu0
  %v1154 = vadd.f32 %v374, %v1153
  %v1155 = vpop.f32.mrb[0].mxu0
  %v1156 = vadd.f32 %v370, %v1155
  %v1157 = vpop.f32.mrb[0].mxu0
  %v1158 = vadd.f32 %v374, %v1157
  %1159 = vmatprep.mubr.bf16.mxu0 %v246
  %1160 = vmatmul.mubr.bf16.gmra.mrb[0].mxu0 %v245
  %v1161 = vpop.f32.mrb[0].mxu0
  %v1162 = vadd.f32 %v370, %v1161
  %v1163 = vpop.f32.mrb[0].mxu0
  %v1164 = vadd.f32 %v374, %v1163
  %v1165 = vpop.f32.mrb[0].mxu0
  %v1166 = vadd.f32 %v370, %v1165
  %v1167 = vpop.f32.mrb[0].mxu0
  %v1168 = vadd.f32 %v374, %v1167
  %1169 = vmatprep.mubr.bf16.mxu0 %v248
  %1170 = vmatmul.mubr.bf16.gmra.mrb[0].mxu0 %v247
  %v1171 = vpop.f32.mrb[0].mxu0
  %v1172 = vadd.f32 %v370, %v1171
  %v1173 = vpop.f32.mrb[0].mxu0
  %v1174 = vadd.f32 %v374, %v1173
  %v1175 = vpop.f32.mrb[0].mxu0
  %v1176 = vadd.f32 %v370, %v1175
  %v1177 = vpop.f32.mrb[0].mxu0
  %v1178 = vadd.f32 %v374, %v1177
  %1179 = vmatprep.mubr.bf16.mxu0 %v250
  %1180 = vmatmul.mubr.bf16.gmra.mrb[0].mxu0 %v249
  %v1181 = vpop.f32.mrb[0].mxu0
  %v1182 = vadd.f32 %v370, %v1181
  %v1183 = vpop.f32.mrb[0].mxu0
  %v1184 = vadd.f32 %v374, %v1183
  %v1185 = vpop.f32.mrb[0].mxu0
  %v1186 = vadd.f32 %v370, %v1185
  %v1187 = vpop.f32.mrb[0].mxu0
  %v1188 = vadd.f32 %v374, %v1187
  %1189 = vmatprep.mubr.bf16.mxu0 %v252
  %1190 = vmatmul.mubr.bf16.gmra.mrb[0].mxu0 %v251
  %v1191 = vpop.f32.mrb[0].mxu0
  %v1192 = vadd.f32 %v370, %v1191
  %v1193 = vpop.f32.mrb[0].mxu0
  %v1194 = vadd.f32 %v374, %v1193
  %v1195 = vpop.f32.mrb[0].mxu0
  %v1196 = vadd.f32 %v370, %v1195
  %v1197 = vpop.f32.mrb[0].mxu0
  %v1198 = vadd.f32 %v374, %v1197
  %1199 = vdwg.mxu0
  %v1200 = vld [vmem:[%s9] sm:$0xff]
  %v1201 = vld [vmem:[%s9 + $0x8] sm:$0xff]
  %v1202 = vld [vmem:[%s9 + $0x10] sm:$0xff]
  %v1203 = vld [vmem:[%s9 + $0x18] sm:$0xff]
  %v1204 = vld [vmem:[%s9 + $0x20] sm:$0xff]
  %v1205 = vld [vmem:[%s9 + $0x28] sm:$0xff]
  %v1206 = vld [vmem:[%s9 + $0x30] sm:$0xff]
  %v1207 = vld [vmem:[%s9 + $0x38] sm:$0xff]
  %v1208 = vld [vmem:[%s9 + $0x40] sm:$0xff]
  %v1209 = vld [vmem:[%s9 + $0x48] sm:$0xff]
  %v1210 = vld [vmem:[%s9 + $0x50] sm:$0xff]
  %v1211 = vld [vmem:[%s9 + $0x58] sm:$0xff]
  %v1212 = vld [vmem:[%s9 + $0x60] sm:$0xff]
  %v1213 = vld [vmem:[%s9 + $0x68] sm:$0xff]
  %v1214 = vld [vmem:[%s9 + $0x70] sm:$0xff]
  %v1215 = vld [vmem:[%s9 + $0x78] sm:$0xff]
  %v1216 = vld [vmem:[%s9 + $0x80] sm:$0xff]
  %v1217 = vld [vmem:[%s9 + $0x88] sm:$0xff]
  %v1218 = vld [vmem:[%s9 + $0x90] sm:$0xff]
  %v1219 = vld [vmem:[%s9 + $0x98] sm:$0xff]
  %v1220 = vld [vmem:[%s9 + $0xa0] sm:$0xff]
  %v1221 = vld [vmem:[%s9 + $0xa8] sm:$0xff]
  %v1222 = vld [vmem:[%s9 + $0xb0] sm:$0xff]
  %v1223 = vld [vmem:[%s9 + $0xb8] sm:$0xff]
  %v1224 = vld [vmem:[%s9 + $0xc0] sm:$0xff]
  %v1225 = vld [vmem:[%s9 + $0xc8] sm:$0xff]
  %v1226 = vld [vmem:[%s9 + $0xd0] sm:$0xff]
  %v1227 = vld [vmem:[%s9 + $0xd8] sm:$0xff]
  %v1228 = vld [vmem:[%s9 + $0xe0] sm:$0xff]
  %v1229 = vld [vmem:[%s9 + $0xe8] sm:$0xff]
  %v1230 = vld [vmem:[%s9 + $0xf0] sm:$0xff]
  %v1231 = vld [vmem:[%s9 + $0xf8] sm:$0xff]
  %v1232 = vld [vmem:[%s10] sm:$0xff]
  %v1233 = vld [vmem:[%s10 + $0x8] sm:$0xff]
  %v1234 = vmul.f32 %v896, %v1009
  %v1235 = vmul.f32 %v898, %v1011
  %v1236 = vmul.f32 %v900, %v1013
  %v1237 = vmul.f32 %v902, %v1015
  %v1238 = vmul.f32 %v906, %v1019
  %v1239 = vmul.f32 %v908, %v1021
  %v1240 = vmul.f32 %v910, %v1023
  %v1241 = vmul.f32 %v912, %v1025
  %v1242 = vmul.f32 %v916, %v1029
  %v1243 = vmul.f32 %v918, %v1031
  %v1244 = vmul.f32 %v920, %v1033
  %v1245 = vmul.f32 %v922, %v1035
  %v1246 = vmul.f32 %v926, %v1039
  %v1247 = vmul.f32 %v928, %v1041
  %v1248 = vmul.f32 %v930, %v1043
  %v1249 = vmul.f32 %v932, %v1045
  %1250 = vmatprep.subr.mxu0 0.0
  %1251 = vmatpush1.msra.mxu0 %v1200
  %1252 = vmatprep.subr.mxu0 0.0
  %1253 = vmatpush1.msra.mxu0 %v1201
  %1254 = vmatprep.subr.mxu0 0.0
  %1255 = vmatpush1.msra.mxu0 %v1202
  %1256 = vmatprep.subr.mxu0 0.0
  %1257 = vmatpush1.msra.mxu0 %v1203
  %1258 = vmatprep.subr.mxu0 0.0
  %1259 = vmatpush1.msra.mxu0 %v1204
  %1260 = vmatprep.subr.mxu0 0.0
  %1261 = vmatpush1.msra.mxu0 %v1205
  %1262 = vmatprep.subr.mxu0 0.0
  %1263 = vmatpush1.msra.mxu0 %v1206
  %1264 = vmatprep.subr.mxu0 0.0
  %1265 = vmatpush1.msra.mxu0 %v1207
  %1266 = vmatprep.subr.mxu0 0.0
  %1267 = vmatpush1.msra.mxu0 %v1208
  %1268 = vmatprep.subr.mxu0 0.0
  %1269 = vmatpush1.msra.mxu0 %v1209
  %1270 = vmatprep.subr.mxu0 0.0
  %1271 = vmatpush1.msra.mxu0 %v1210
  %1272 = vmatprep.subr.mxu0 0.0
  %1273 = vmatpush1.msra.mxu0 %v1211
  %1274 = vmatprep.subr.mxu0 0.0
  %1275 = vmatpush1.msra.mxu0 %v1212
  %1276 = vmatprep.subr.mxu0 0.0
  %1277 = vmatpush1.msra.mxu0 %v1213
  %1278 = vmatprep.subr.mxu0 0.0
  %1279 = vmatpush1.msra.mxu0 %v1214
  %1280 = vmatprep.subr.mxu0 0.0
  %1281 = vmatpush1.msra.mxu0 %v1215
  %1282 = vmatprep.subr.mxu0 0.0
  %1283 = vmatpush1.msra.mxu0 %v1216
  %1284 = vmatprep.subr.mxu0 0.0
  %1285 = vmatpush1.msra.mxu0 %v1217
  %1286 = vmatprep.subr.mxu0 0.0
  %1287 = vmatpush1.msra.mxu0 %v1218
  %1288 = vmatprep.subr.mxu0 0.0
  %1289 = vmatpush1.msra.mxu0 %v1219
  %1290 = vmatprep.subr.mxu0 0.0
  %1291 = vmatpush1.msra.mxu0 %v1220
  %1292 = vmatprep.subr.mxu0 0.0
  %1293 = vmatpush1.msra.mxu0 %v1221
  %1294 = vmatprep.subr.mxu0 0.0
  %1295 = vmatpush1.msra.mxu0 %v1222
  %1296 = vmatprep.subr.mxu0 0.0
  %1297 = vmatpush1.msra.mxu0 %v1223
  %1298 = vmatprep.subr.mxu0 0.0
  %1299 = vmatpush1.msra.mxu0 %v1224
  %1300 = vmatprep.subr.mxu0 0.0
  %1301 = vmatpush1.msra.mxu0 %v1225
  %1302 = vmatprep.subr.mxu0 0.0
  %1303 = vmatpush1.msra.mxu0 %v1226
  %1304 = vmatprep.subr.mxu0 0.0
  %1305 = vmatpush1.msra.mxu0 %v1227
  %1306 = vmatprep.subr.mxu0 0.0
  %1307 = vmatpush1.msra.mxu0 %v1228
  %1308 = vmatprep.subr.mxu0 0.0
  %1309 = vmatpush1.msra.mxu0 %v1229
  %1310 = vmatprep.subr.mxu0 0.0
  %1311 = vmatpush1.msra.mxu0 %v1230
  %1312 = vmatprep.subr.mxu0 0.0
  %1313 = vmatpush1.msra.mxu0 %v1231
  %1314 = vmatprep.mubr.f32.mxu0 %v1235
  %1315 = vmatmul.mubr.f32.gmra.mrb[0].mxu0 %v1234
  %v1316 = vpop.f32.mrb[0].mxu0
  %v1317 = vadd.f32 0.0, %v1316
  %v1318 = vpop.f32.mrb[0].mxu0
  %1319 = vmatprep.mubr.f32.mxu0 %v1237
  %1320 = vmatmul.mubr.f32.gmra.mrb[0].mxu0 %v1236
  %v1321 = vpop.f32.mrb[0].mxu0
  %v1322 = vadd.f32 0.0, %v1321
  %v1323 = vpop.f32.mrb[0].mxu0
  %1324 = vmatprep.mubr.f32.mxu0 %v1239
  %1325 = vmatmul.mubr.f32.gmra.mrb[0].mxu0 %v1238
  %v1326 = vpop.f32.mrb[0].mxu0
  %v1327 = vadd.f32 0.0, %v1326
  %v1328 = vpop.f32.mrb[0].mxu0
  %1329 = vmatprep.mubr.f32.mxu0 %v1241
  %1330 = vmatmul.mubr.f32.gmra.mrb[0].mxu0 %v1240
  %v1331 = vpop.f32.mrb[0].mxu0
  %v1332 = vadd.f32 0.0, %v1331
  %v1333 = vpop.f32.mrb[0].mxu0
  %1334 = vmatprep.mubr.f32.mxu0 %v1243
  %1335 = vmatmul.mubr.f32.gmra.mrb[0].mxu0 %v1242
  %v1336 = vpop.f32.mrb[0].mxu0
  %v1337 = vadd.f32 0.0, %v1336
  %v1338 = vpop.f32.mrb[0].mxu0
  %1339 = vmatprep.mubr.f32.mxu0 %v1245
  %1340 = vmatmul.mubr.f32.gmra.mrb[0].mxu0 %v1244
  %v1341 = vpop.f32.mrb[0].mxu0
  %v1342 = vadd.f32 0.0, %v1341
  %v1343 = vpop.f32.mrb[0].mxu0
  %1344 = vmatprep.mubr.f32.mxu0 %v1247
  %1345 = vmatmul.mubr.f32.gmra.mrb[0].mxu0 %v1246
  %v1346 = vpop.f32.mrb[0].mxu0
  %v1347 = vadd.f32 0.0, %v1346
  %v1348 = vpop.f32.mrb[0].mxu0
  %1349 = vmatprep.mubr.f32.mxu0 %v1249
  %1350 = vmatmul.mubr.f32.gmra.mrb[0].mxu0 %v1248
  %v1351 = vpop.f32.mrb[0].mxu0
  %v1352 = vadd.f32 0.0, %v1351
  %v1353 = vpop.f32.mrb[0].mxu0
  %1354 = vdwg.mxu0
  %v1355 = vmul.f32 %v1317, 0.17677669
  %v1356 = vmul.f32 %v1322, 0.17677669
  %v1357 = vmul.f32 %v1327, 0.17677669
  %v1358 = vmul.f32 %v1332, 0.17677669
  %v1359 = vmul.f32 %v1337, 0.17677669
  %v1360 = vmul.f32 %v1342, 0.17677669
  %v1361 = vmul.f32 %v1347, 0.17677669
  %v1362 = vmul.f32 %v1352, 0.17677669
  %v1363 = vmul.f32 %v896, %v1049
  %v1364 = vmul.f32 %v898, %v1051
  %v1365 = vmul.f32 %v900, %v1053
  %v1366 = vmul.f32 %v902, %v1055
  %v1367 = vmul.f32 %v906, %v1059
  %v1368 = vmul.f32 %v908, %v1061
  %v1369 = vmul.f32 %v910, %v1063
  %v1370 = vmul.f32 %v912, %v1065
  %v1371 = vmul.f32 %v916, %v1069
  %v1372 = vmul.f32 %v918, %v1071
  %v1373 = vmul.f32 %v920, %v1073
  %v1374 = vmul.f32 %v922, %v1075
  %v1375 = vmul.f32 %v926, %v1079
  %v1376 = vmul.f32 %v928, %v1081
  %v1377 = vmul.f32 %v930, %v1083
  %v1378 = vmul.f32 %v932, %v1085
  %1379 = vmatprep.subr.mxu0 0.0
  %1380 = vmatpush1.msra.mxu0 %v1200
  %1381 = vmatprep.subr.mxu0 0.0
  %1382 = vmatpush1.msra.mxu0 %v1201
  %1383 = vmatprep.subr.mxu0 0.0
  %1384 = vmatpush1.msra.mxu0 %v1202
  %1385 = vmatprep.subr.mxu0 0.0
  %1386 = vmatpush1.msra.mxu0 %v1203
  %1387 = vmatprep.subr.mxu0 0.0
  %1388 = vmatpush1.msra.mxu0 %v1204
  %1389 = vmatprep.subr.mxu0 0.0
  %1390 = vmatpush1.msra.mxu0 %v1205
  %1391 = vmatprep.subr.mxu0 0.0
  %1392 = vmatpush1.msra.mxu0 %v1206
  %1393 = vmatprep.subr.mxu0 0.0
  %1394 = vmatpush1.msra.mxu0 %v1207
  %1395 = vmatprep.subr.mxu0 0.0
  %1396 = vmatpush1.msra.mxu0 %v1208
  %1397 = vmatprep.subr.mxu0 0.0
  %1398 = vmatpush1.msra.mxu0 %v1209
  %1399 = vmatprep.subr.mxu0 0.0
  %1400 = vmatpush1.msra.mxu0 %v1210
  %1401 = vmatprep.subr.mxu0 0.0
  %1402 = vmatpush1.msra.mxu0 %v1211
  %1403 = vmatprep.subr.mxu0 0.0
  %1404 = vmatpush1.msra.mxu0 %v1212
  %1405 = vmatprep.subr.mxu0 0.0
  %1406 = vmatpush1.msra.mxu0 %v1213
  %1407 = vmatprep.subr.mxu0 0.0
  %1408 = vmatpush1.msra.mxu0 %v1214
  %1409 = vmatprep.subr.mxu0 0.0
  %1410 = vmatpush1.msra.mxu0 %v1215
  %1411 = vmatprep.subr.mxu0 0.0
  %1412 = vmatpush1.msra.mxu0 %v1216
  %1413 = vmatprep.subr.mxu0 0.0
  %1414 = vmatpush1.msra.mxu0 %v1217
  %1415 = vmatprep.subr.mxu0 0.0
  %1416 = vmatpush1.msra.mxu0 %v1218
  %1417 = vmatprep.subr.mxu0 0.0
  %1418 = vmatpush1.msra.mxu0 %v1219
  %1419 = vmatprep.subr.mxu0 0.0
  %1420 = vmatpush1.msra.mxu0 %v1220
  %1421 = vmatprep.subr.mxu0 0.0
  %1422 = vmatpush1.msra.mxu0 %v1221
  %1423 = vmatprep.subr.mxu0 0.0
  %1424 = vmatpush1.msra.mxu0 %v1222
  %1425 = vmatprep.subr.mxu0 0.0
  %1426 = vmatpush1.msra.mxu0 %v1223
  %1427 = vmatprep.subr.mxu0 0.0
  %1428 = vmatpush1.msra.mxu0 %v1224
  %1429 = vmatprep.subr.mxu0 0.0
  %1430 = vmatpush1.msra.mxu0 %v1225
  %1431 = vmatprep.subr.mxu0 0.0
  %1432 = vmatpush1.msra.mxu0 %v1226
  %1433 = vmatprep.subr.mxu0 0.0
  %1434 = vmatpush1.msra.mxu0 %v1227
  %1435 = vmatprep.subr.mxu0 0.0
  %1436 = vmatpush1.msra.mxu0 %v1228
  %1437 = vmatprep.subr.mxu0 0.0
  %1438 = vmatpush1.msra.mxu0 %v1229
  %1439 = vmatprep.subr.mxu0 0.0
  %1440 = vmatpush1.msra.mxu0 %v1230
  %1441 = vmatprep.subr.mxu0 0.0
  %1442 = vmatpush1.msra.mxu0 %v1231
  %1443 = vmatprep.mubr.f32.mxu0 %v1364
  %1444 = vmatmul.mubr.f32.gmra.mrb[0].mxu0 %v1363
  %v1445 = vpop.f32.mrb[0].mxu0
  %v1446 = vadd.f32 0.0, %v1445
  %v1447 = vpop.f32.mrb[0].mxu0
  %1448 = vmatprep.mubr.f32.mxu0 %v1366
  %1449 = vmatmul.mubr.f32.gmra.mrb[0].mxu0 %v1365
  %v1450 = vpop.f32.mrb[0].mxu0
  %v1451 = vadd.f32 0.0, %v1450
  %v1452 = vpop.f32.mrb[0].mxu0
  %1453 = vmatprep.mubr.f32.mxu0 %v1368
  %1454 = vmatmul.mubr.f32.gmra.mrb[0].mxu0 %v1367
  %v1455 = vpop.f32.mrb[0].mxu0
  %v1456 = vadd.f32 0.0, %v1455
  %v1457 = vpop.f32.mrb[0].mxu0
  %1458 = vmatprep.mubr.f32.mxu0 %v1370
  %1459 = vmatmul.mubr.f32.gmra.mrb[0].mxu0 %v1369
  %v1460 = vpop.f32.mrb[0].mxu0
  %v1461 = vadd.f32 0.0, %v1460
  %v1462 = vpop.f32.mrb[0].mxu0
  %1463 = vmatprep.mubr.f32.mxu0 %v1372
  %1464 = vmatmul.mubr.f32.gmra.mrb[0].mxu0 %v1371
  %v1465 = vpop.f32.mrb[0].mxu0
  %v1466 = vadd.f32 0.0, %v1465
  %v1467 = vpop.f32.mrb[0].mxu0
  %1468 = vmatprep.mubr.f32.mxu0 %v1374
  %1469 = vmatmul.mubr.f32.gmra.mrb[0].mxu0 %v1373
  %v1470 = vpop.f32.mrb[0].mxu0
  %v1471 = vadd.f32 0.0, %v1470
  %v1472 = vpop.f32.mrb[0].mxu0
  %1473 = vmatprep.mubr.f32.mxu0 %v1376
  %1474 = vmatmul.mubr.f32.gmra.mrb[0].mxu0 %v1375
  %v1475 = vpop.f32.mrb[0].mxu0
  %v1476 = vadd.f32 0.0, %v1475
  %v1477 = vpop.f32.mrb[0].mxu0
  %1478 = vmatprep.mubr.f32.mxu0 %v1378
  %1479 = vmatmul.mubr.f32.gmra.mrb[0].mxu0 %v1377
  %v1480 = vpop.f32.mrb[0].mxu0
  %v1481 = vadd.f32 0.0, %v1480
  %v1482 = vpop.f32.mrb[0].mxu0
  %1483 = vdwg.mxu0
  %v1484 = vmul.f32 %v1446, 0.17677669
  %v1485 = vmul.f32 %v1451, 0.17677669
  %v1486 = vmul.f32 %v1456, 0.17677669
  %v1487 = vmul.f32 %v1461, 0.17677669
  %v1488 = vmul.f32 %v1466, 0.17677669
  %v1489 = vmul.f32 %v1471, 0.17677669
  %v1490 = vmul.f32 %v1476, 0.17677669
  %v1491 = vmul.f32 %v1481, 0.17677669
  %v1492 = vmax.f32 %v1355, %v1484
  %v1493 = vmax.f32 %v1356, %v1485
  %v1494 = vmax.f32 %v1357, %v1486
  %v1495 = vmax.f32 %v1358, %v1487
  %v1496 = vmax.f32 %v1359, %v1488
  %v1497 = vmax.f32 %v1360, %v1489
  %v1498 = vmax.f32 %v1361, %v1490
  %v1499 = vmax.f32 %v1362, %v1491
  %v1500 = vsub.f32 %v1355, %v1492
  %v1501 = vsub.f32 %v1356, %v1493
  %v1502 = vsub.f32 %v1357, %v1494
  %v1503 = vsub.f32 %v1358, %v1495
  %v1504 = vsub.f32 %v1359, %v1496
  %v1505 = vsub.f32 %v1360, %v1497
  %v1506 = vsub.f32 %v1361, %v1498
  %v1507 = vsub.f32 %v1362, %v1499
  %v1508 = vmul.f32 %v1500, 1.442695
  %v1509 = vpow.pop %v1508
  %v1510 = vmul.f32 %v1501, 1.442695
  %v1511 = vpow.pop %v1510
  %v1512 = vmul.f32 %v1502, 1.442695
  %v1513 = vpow.pop %v1512
  %v1514 = vmul.f32 %v1503, 1.442695
  %v1515 = vpow.pop %v1514
  %v1516 = vmul.f32 %v1504, 1.442695
  %v1517 = vpow.pop %v1516
  %v1518 = vmul.f32 %v1505, 1.442695
  %v1519 = vpow.pop %v1518
  %v1520 = vmul.f32 %v1506, 1.442695
  %v1521 = vpow.pop %v1520
  %v1522 = vmul.f32 %v1507, 1.442695
  %v1523 = vpow.pop %v1522
  %v1524 = vsub.f32 %v1484, %v1492
  %v1525 = vsub.f32 %v1485, %v1493
  %v1526 = vsub.f32 %v1486, %v1494
  %v1527 = vsub.f32 %v1487, %v1495
  %v1528 = vsub.f32 %v1488, %v1496
  %v1529 = vsub.f32 %v1489, %v1497
  %v1530 = vsub.f32 %v1490, %v1498
  %v1531 = vsub.f32 %v1491, %v1499
  %v1532 = vmul.f32 %v1524, 1.442695
  %v1533 = vpow.pop %v1532
  %v1534 = vmul.f32 %v1525, 1.442695
  %v1535 = vpow.pop %v1534
  %v1536 = vmul.f32 %v1526, 1.442695
  %v1537 = vpow.pop %v1536
  %v1538 = vmul.f32 %v1527, 1.442695
  %v1539 = vpow.pop %v1538
  %v1540 = vmul.f32 %v1528, 1.442695
  %v1541 = vpow.pop %v1540
  %v1542 = vmul.f32 %v1529, 1.442695
  %v1543 = vpow.pop %v1542
  %v1544 = vmul.f32 %v1530, 1.442695
  %v1545 = vpow.pop %v1544
  %v1546 = vmul.f32 %v1531, 1.442695
  %v1547 = vpow.pop %v1546
  %v1548 = vadd.f32 %v1509, %v1533
  %v1549 = vadd.f32 %v1511, %v1535
  %v1550 = vadd.f32 %v1513, %v1537
  %v1551 = vadd.f32 %v1515, %v1539
  %v1552 = vadd.f32 %v1517, %v1541
  %v1553 = vadd.f32 %v1519, %v1543
  %v1554 = vadd.f32 %v1521, %v1545
  %v1555 = vadd.f32 %v1523, %v1547
  %v1556 = vrcp.pop %v1548
  %v1557 = vmul.f32 1.0, %v1556
  %v1558 = vrcp.pop %v1549
  %v1559 = vmul.f32 1.0, %v1558
  %v1560 = vrcp.pop %v1550
  %v1561 = vmul.f32 1.0, %v1560
  %v1562 = vrcp.pop %v1551
  %v1563 = vmul.f32 1.0, %v1562
  %v1564 = vrcp.pop %v1552
  %v1565 = vmul.f32 1.0, %v1564
  %v1566 = vrcp.pop %v1553
  %v1567 = vmul.f32 1.0, %v1566
  %v1568 = vrcp.pop %v1554
  %v1569 = vmul.f32 1.0, %v1568
  %v1570 = vrcp.pop %v1555
  %v1571 = vmul.f32 1.0, %v1570
  %v1572 = vmul.f32 %v1509, %v1557
  %v1573 = vmul.f32 %v1511, %v1559
  %v1574 = vmul.f32 %v1513, %v1561
  %v1575 = vmul.f32 %v1515, %v1563
  %v1576 = vmul.f32 %v1517, %v1565
  %v1577 = vmul.f32 %v1519, %v1567
  %v1578 = vmul.f32 %v1521, %v1569
  %v1579 = vmul.f32 %v1523, %v1571
  %vm1580 = vcmask 64512
  %v1582 = vsel %vm1580, %v1572, 0
  %v1585 = vsel %vm1580, %v1573, 0
  %v1588 = vsel %vm1580, %v1574, 0
  %v1591 = vsel %vm1580, %v1575, 0
  %v1594 = vsel %vm1580, %v1576, 0
  %v1597 = vsel %vm1580, %v1577, 0
  %v1600 = vsel %vm1580, %v1578, 0
  %v1603 = vsel %vm1580, %v1579, 0
  %1605 = vmatprep.subr.mxu0 %v1233
  %1606 = vmatpush1.msra.mxu0 %v1232
  %1607 = vmatprep.subr.mxu0 0.0
  %1608 = vmatpush1.msra.mxu0 0.0
  %1609 = vmatprep.subr.mxu0 0.0
  %1610 = vmatpush1.msra.mxu0 0.0
  %1611 = vmatprep.subr.mxu0 0.0
  %1612 = vmatpush1.msra.mxu0 0.0
  %1613 = vmatprep.subr.mxu0 0.0
  %1614 = vmatpush1.msra.mxu0 0.0
  %1615 = vmatprep.subr.mxu0 0.0
  %1616 = vmatpush1.msra.mxu0 0.0
  %1617 = vmatprep.subr.mxu0 0.0
  %1618 = vmatpush1.msra.mxu0 0.0
  %1619 = vmatprep.subr.mxu0 0.0
  %1620 = vmatpush1.msra.mxu0 0.0
  %1621 = vmatprep.subr.mxu0 0.0
  %1622 = vmatpush1.msra.mxu0 0.0
  %1623 = vmatprep.subr.mxu0 0.0
  %1624 = vmatpush1.msra.mxu0 0.0
  %1625 = vmatprep.subr.mxu0 0.0
  %1626 = vmatpush1.msra.mxu0 0.0
  %1627 = vmatprep.subr.mxu0 0.0
  %1628 = vmatpush1.msra.mxu0 0.0
  %1629 = vmatprep.subr.mxu0 0.0
  %1630 = vmatpush1.msra.mxu0 0.0
  %1631 = vmatprep.subr.mxu0 0.0
  %1632 = vmatpush1.msra.mxu0 0.0
  %1633 = vmatprep.subr.mxu0 0.0
  %1634 = vmatpush1.msra.mxu0 0.0
  %1635 = vmatprep.subr.mxu0 0.0
  %1636 = vmatpush1.msra.mxu0 0.0
  %1637 = vmatprep.subr.mxu0 0.0
  %1638 = vmatpush1.msra.mxu0 0.0
  %1639 = vmatprep.subr.mxu0 0.0
  %1640 = vmatpush1.msra.mxu0 0.0
  %1641 = vmatprep.subr.mxu0 0.0
  %1642 = vmatpush1.msra.mxu0 0.0
  %1643 = vmatprep.subr.mxu0 0.0
  %1644 = vmatpush1.msra.mxu0 0.0
  %1645 = vmatprep.subr.mxu0 0.0
  %1646 = vmatpush1.msra.mxu0 0.0
  %1647 = vmatprep.subr.mxu0 0.0
  %1648 = vmatpush1.msra.mxu0 0.0
  %1649 = vmatprep.subr.mxu0 0.0
  %1650 = vmatpush1.msra.mxu0 0.0
  %1651 = vmatprep.subr.mxu0 0.0
  %1652 = vmatpush1.msra.mxu0 0.0
  %1653 = vmatprep.subr.mxu0 0.0
  %1654 = vmatpush1.msra.mxu0 0.0
  %1655 = vmatprep.subr.mxu0 0.0
  %1656 = vmatpush1.msra.mxu0 0.0
  %1657 = vmatprep.subr.mxu0 0.0
  %1658 = vmatpush1.msra.mxu0 0.0
  %1659 = vmatprep.subr.mxu0 0.0
  %1660 = vmatpush1.msra.mxu0 0.0
  %1661 = vmatprep.subr.mxu0 0.0
  %1662 = vmatpush1.msra.mxu0 0.0
  %1663 = vmatprep.subr.mxu0 0.0
  %1664 = vmatpush1.msra.mxu0 0.0
  %1665 = vmatprep.subr.mxu0 0.0
  %1666 = vmatpush1.msra.mxu0 0.0
  %1667 = vmatprep.subr.mxu0 0.0
  %1668 = vmatpush1.msra.mxu0 0.0
  %1669 = vmatprep.mubr.f32.mxu0 0.0
  %1670 = vmatmul.mubr.f32.gmra.mrb[0].mxu0 %v1582
  %v1671 = vpop.f32.mrb[0].mxu0
  %v1672 = vadd.f32 0.0, %v1671
  %v1673 = vpop.f32.mrb[0].mxu0
  %v1674 = vadd.f32 0.0, %v1673
  %1675 = vmatprep.mubr.f32.mxu0 0.0
  %1676 = vmatmul.mubr.f32.gmra.mrb[0].mxu0 %v1585
  %v1677 = vpop.f32.mrb[0].mxu0
  %v1678 = vadd.f32 0.0, %v1677
  %v1679 = vpop.f32.mrb[0].mxu0
  %v1680 = vadd.f32 0.0, %v1679
  %1681 = vmatprep.mubr.f32.mxu0 0.0
  %1682 = vmatmul.mubr.f32.gmra.mrb[0].mxu0 %v1588
  %v1683 = vpop.f32.mrb[0].mxu0
  %v1684 = vadd.f32 0.0, %v1683
  %v1685 = vpop.f32.mrb[0].mxu0
  %v1686 = vadd.f32 0.0, %v1685
  %1687 = vmatprep.mubr.f32.mxu0 0.0
  %1688 = vmatmul.mubr.f32.gmra.mrb[0].mxu0 %v1591
  %v1689 = vpop.f32.mrb[0].mxu0
  %v1690 = vadd.f32 0.0, %v1689
  %v1691 = vpop.f32.mrb[0].mxu0
  %v1692 = vadd.f32 0.0, %v1691
  %1693 = vmatprep.mubr.f32.mxu0 0.0
  %1694 = vmatmul.mubr.f32.gmra.mrb[0].mxu0 %v1594
  %v1695 = vpop.f32.mrb[0].mxu0
  %v1696 = vadd.f32 0.0, %v1695
  %v1697 = vpop.f32.mrb[0].mxu0
  %v1698 = vadd.f32 0.0, %v1697
  %1699 = vmatprep.mubr.f32.mxu0 0.0
  %1700 = vmatmul.mubr.f32.gmra.mrb[0].mxu0 %v1597
  %v1701 = vpop.f32.mrb[0].mxu0
  %v1702 = vadd.f32 0.0, %v1701
  %v1703 = vpop.f32.mrb[0].mxu0
  %v1704 = vadd.f32 0.0, %v1703
  %1705 = vmatprep.mubr.f32.mxu0 0.0
  %1706 = vmatmul.mubr.f32.gmra.mrb[0].mxu0 %v1600
  %v1707 = vpop.f32.mrb[0].mxu0
  %v1708 = vadd.f32 0.0, %v1707
  %v1709 = vpop.f32.mrb[0].mxu0
  %v1710 = vadd.f32 0.0, %v1709
  %1711 = vmatprep.mubr.f32.mxu0 0.0
  %1712 = vmatmul.mubr.f32.gmra.mrb[0].mxu0 %v1603
  %v1713 = vpop.f32.mrb[0].mxu0
  %v1714 = vadd.f32 0.0, %v1713
  %v1715 = vpop.f32.mrb[0].mxu0
  %v1716 = vadd.f32 0.0, %v1715
  %1717 = vdwg.mxu0
  %v1718 = vmul.f32 %v1672, %v1122
  %v1719 = vmul.f32 %v1674, %v1124
  %v1720 = vmul.f32 %v1678, %v1126
  %v1721 = vmul.f32 %v1680, %v1128
  %v1722 = vmul.f32 %v1684, %v1132
  %v1723 = vmul.f32 %v1686, %v1134
  %v1724 = vmul.f32 %v1690, %v1136
  %v1725 = vmul.f32 %v1692, %v1138
  %v1726 = vmul.f32 %v1696, %v1142
  %v1727 = vmul.f32 %v1698, %v1144
  %v1728 = vmul.f32 %v1702, %v1146
  %v1729 = vmul.f32 %v1704, %v1148
  %v1730 = vmul.f32 %v1708, %v1152
  %v1731 = vmul.f32 %v1710, %v1154
  %v1732 = vmul.f32 %v1714, %v1156
  %v1733 = vmul.f32 %v1716, %v1158
  %v1734 = vmul.f32 %v1533, %v1557
  %v1735 = vmul.f32 %v1535, %v1559
  %v1736 = vmul.f32 %v1537, %v1561
  %v1737 = vmul.f32 %v1539, %v1563
  %v1738 = vmul.f32 %v1541, %v1565
  %v1739 = vmul.f32 %v1543, %v1567
  %v1740 = vmul.f32 %v1545, %v1569
  %v1741 = vmul.f32 %v1547, %v1571
  %v1743 = vsel %vm1580, %v1734, 0
  %v1746 = vsel %vm1580, %v1735, 0
  %v1749 = vsel %vm1580, %v1736, 0
  %v1752 = vsel %vm1580, %v1737, 0
  %v1755 = vsel %vm1580, %v1738, 0
  %v1758 = vsel %vm1580, %v1739, 0
  %v1761 = vsel %vm1580, %v1740, 0
  %v1764 = vsel %vm1580, %v1741, 0
  %1766 = vmatprep.subr.mxu0 %v1233
  %1767 = vmatpush1.msra.mxu0 %v1232
  %1768 = vmatprep.subr.mxu0 0.0
  %1769 = vmatpush1.msra.mxu0 0.0
  %1770 = vmatprep.subr.mxu0 0.0
  %1771 = vmatpush1.msra.mxu0 0.0
  %1772 = vmatprep.subr.mxu0 0.0
  %1773 = vmatpush1.msra.mxu0 0.0
  %1774 = vmatprep.subr.mxu0 0.0
  %1775 = vmatpush1.msra.mxu0 0.0
  %1776 = vmatprep.subr.mxu0 0.0
  %1777 = vmatpush1.msra.mxu0 0.0
  %1778 = vmatprep.subr.mxu0 0.0
  %1779 = vmatpush1.msra.mxu0 0.0
  %1780 = vmatprep.subr.mxu0 0.0
  %1781 = vmatpush1.msra.mxu0 0.0
  %1782 = vmatprep.subr.mxu0 0.0
  %1783 = vmatpush1.msra.mxu0 0.0
  %1784 = vmatprep.subr.mxu0 0.0
  %1785 = vmatpush1.msra.mxu0 0.0
  %1786 = vmatprep.subr.mxu0 0.0
  %1787 = vmatpush1.msra.mxu0 0.0
  %1788 = vmatprep.subr.mxu0 0.0
  %1789 = vmatpush1.msra.mxu0 0.0
  %1790 = vmatprep.subr.mxu0 0.0
  %1791 = vmatpush1.msra.mxu0 0.0
  %1792 = vmatprep.subr.mxu0 0.0
  %1793 = vmatpush1.msra.mxu0 0.0
  %1794 = vmatprep.subr.mxu0 0.0
  %1795 = vmatpush1.msra.mxu0 0.0
  %1796 = vmatprep.subr.mxu0 0.0
  %1797 = vmatpush1.msra.mxu0 0.0
  %1798 = vmatprep.subr.mxu0 0.0
  %1799 = vmatpush1.msra.mxu0 0.0
  %1800 = vmatprep.subr.mxu0 0.0
  %1801 = vmatpush1.msra.mxu0 0.0
  %1802 = vmatprep.subr.mxu0 0.0
  %1803 = vmatpush1.msra.mxu0 0.0
  %1804 = vmatprep.subr.mxu0 0.0
  %1805 = vmatpush1.msra.mxu0 0.0
  %1806 = vmatprep.subr.mxu0 0.0
  %1807 = vmatpush1.msra.mxu0 0.0
  %1808 = vmatprep.subr.mxu0 0.0
  %1809 = vmatpush1.msra.mxu0 0.0
  %1810 = vmatprep.subr.mxu0 0.0
  %1811 = vmatpush1.msra.mxu0 0.0
  %1812 = vmatprep.subr.mxu0 0.0
  %1813 = vmatpush1.msra.mxu0 0.0
  %1814 = vmatprep.subr.mxu0 0.0
  %1815 = vmatpush1.msra.mxu0 0.0
  %1816 = vmatprep.subr.mxu0 0.0
  %1817 = vmatpush1.msra.mxu0 0.0
  %1818 = vmatprep.subr.mxu0 0.0
  %1819 = vmatpush1.msra.mxu0 0.0
  %1820 = vmatprep.subr.mxu0 0.0
  %1821 = vmatpush1.msra.mxu0 0.0
  %1822 = vmatprep.subr.mxu0 0.0
  %1823 = vmatpush1.msra.mxu0 0.0
  %1824 = vmatprep.subr.mxu0 0.0
  %1825 = vmatpush1.msra.mxu0 0.0
  %1826 = vmatprep.subr.mxu0 0.0
  %1827 = vmatpush1.msra.mxu0 0.0
  %1828 = vmatprep.subr.mxu0 0.0
  %1829 = vmatpush1.msra.mxu0 0.0
  %1830 = vmatprep.mubr.f32.mxu0 0.0
  %1831 = vmatmul.mubr.f32.gmra.mrb[0].mxu0 %v1743
  %v1832 = vpop.f32.mrb[0].mxu0
  %v1833 = vadd.f32 0.0, %v1832
  %v1834 = vpop.f32.mrb[0].mxu0
  %v1835 = vadd.f32 0.0, %v1834
  %1836 = vmatprep.mubr.f32.mxu0 0.0
  %1837 = vmatmul.mubr.f32.gmra.mrb[0].mxu0 %v1746
  %v1838 = vpop.f32.mrb[0].mxu0
  %v1839 = vadd.f32 0.0, %v1838
  %v1840 = vpop.f32.mrb[0].mxu0
  %v1841 = vadd.f32 0.0, %v1840
  %1842 = vmatprep.mubr.f32.mxu0 0.0
  %1843 = vmatmul.mubr.f32.gmra.mrb[0].mxu0 %v1749
  %v1844 = vpop.f32.mrb[0].mxu0
  %v1845 = vadd.f32 0.0, %v1844
  %v1846 = vpop.f32.mrb[0].mxu0
  %v1847 = vadd.f32 0.0, %v1846
  %1848 = vmatprep.mubr.f32.mxu0 0.0
  %1849 = vmatmul.mubr.f32.gmra.mrb[0].mxu0 %v1752
  %v1850 = vpop.f32.mrb[0].mxu0
  %v1851 = vadd.f32 0.0, %v1850
  %v1852 = vpop.f32.mrb[0].mxu0
  %v1853 = vadd.f32 0.0, %v1852
  %1854 = vmatprep.mubr.f32.mxu0 0.0
  %1855 = vmatmul.mubr.f32.gmra.mrb[0].mxu0 %v1755
  %v1856 = vpop.f32.mrb[0].mxu0
  %v1857 = vadd.f32 0.0, %v1856
  %v1858 = vpop.f32.mrb[0].mxu0
  %v1859 = vadd.f32 0.0, %v1858
  %1860 = vmatprep.mubr.f32.mxu0 0.0
  %1861 = vmatmul.mubr.f32.gmra.mrb[0].mxu0 %v1758
  %v1862 = vpop.f32.mrb[0].mxu0
  %v1863 = vadd.f32 0.0, %v1862
  %v1864 = vpop.f32.mrb[0].mxu0
  %v1865 = vadd.f32 0.0, %v1864
  %1866 = vmatprep.mubr.f32.mxu0 0.0
  %1867 = vmatmul.mubr.f32.gmra.mrb[0].mxu0 %v1761
  %v1868 = vpop.f32.mrb[0].mxu0
  %v1869 = vadd.f32 0.0, %v1868
  %v1870 = vpop.f32.mrb[0].mxu0
  %v1871 = vadd.f32 0.0, %v1870
  %1872 = vmatprep.mubr.f32.mxu0 0.0
  %1873 = vmatmul.mubr.f32.gmra.mrb[0].mxu0 %v1764
  %v1874 = vpop.f32.mrb[0].mxu0
  %v1875 = vadd.f32 0.0, %v1874
  %v1876 = vpop.f32.mrb[0].mxu0
  %v1877 = vadd.f32 0.0, %v1876
  %1878 = vdwg.mxu0
  %v1879 = vmul.f32 %v1833, %v1162
  %v1880 = vmul.f32 %v1835, %v1164
  %v1881 = vmul.f32 %v1839, %v1166
  %v1882 = vmul.f32 %v1841, %v1168
  %v1883 = vmul.f32 %v1845, %v1172
  %v1884 = vmul.f32 %v1847, %v1174
  %v1885 = vmul.f32 %v1851, %v1176
  %v1886 = vmul.f32 %v1853, %v1178
  %v1887 = vmul.f32 %v1857, %v1182
  %v1888 = vmul.f32 %v1859, %v1184
  %v1889 = vmul.f32 %v1863, %v1186
  %v1890 = vmul.f32 %v1865, %v1188
  %v1891 = vmul.f32 %v1869, %v1192
  %v1892 = vmul.f32 %v1871, %v1194
  %v1893 = vmul.f32 %v1875, %v1196
  %v1894 = vmul.f32 %v1877, %v1198
  %v1895 = vadd.f32 %v1718, %v1879
  %v1896 = vadd.f32 %v1719, %v1880
  %v1897 = vadd.f32 %v1720, %v1881
  %v1898 = vadd.f32 %v1721, %v1882
  %v1899 = vadd.f32 %v1722, %v1883
  %v1900 = vadd.f32 %v1723, %v1884
  %v1901 = vadd.f32 %v1724, %v1885
  %v1902 = vadd.f32 %v1725, %v1886
  %v1903 = vadd.f32 %v1726, %v1887
  %v1904 = vadd.f32 %v1727, %v1888
  %v1905 = vadd.f32 %v1728, %v1889
  %v1906 = vadd.f32 %v1729, %v1890
  %v1907 = vadd.f32 %v1730, %v1891
  %v1908 = vadd.f32 %v1731, %v1892
  %v1909 = vadd.f32 %v1732, %v1893
  %v1910 = vadd.f32 %v1733, %v1894
  %v1911 = vpack.c.bf16 %v1897, %v1895
  %v1912 = vpack.c.bf16 %v1898, %v1896
  %v1913 = vpack.c.bf16 %v1901, %v1899
  %v1914 = vpack.c.bf16 %v1902, %v1900
  %v1915 = vpack.c.bf16 %v1905, %v1903
  %v1916 = vpack.c.bf16 %v1906, %v1904
  %v1917 = vpack.c.bf16 %v1909, %v1907
  %v1918 = vpack.c.bf16 %v1910, %v1908
  %v1919 = vld [vmem:[%s5] sm:$0xff]
  %v1920 = vld [vmem:[%s5 + $0x8] sm:$0xff]
  %v1921 = vld [vmem:[%s5 + $0x10] sm:$0xff]
  %v1922 = vld [vmem:[%s5 + $0x18] sm:$0xff]
  %v1923 = vld [vmem:[%s5 + $0x20] sm:$0xff]
  %v1924 = vld [vmem:[%s5 + $0x28] sm:$0xff]
  %v1925 = vld [vmem:[%s5 + $0x30] sm:$0xff]
  %v1926 = vld [vmem:[%s5 + $0x38] sm:$0xff]
  %v1927 = vld [vmem:[%s5 + $0x40] sm:$0xff]
  %v1928 = vld [vmem:[%s5 + $0x48] sm:$0xff]
  %v1929 = vld [vmem:[%s5 + $0x50] sm:$0xff]
  %v1930 = vld [vmem:[%s5 + $0x58] sm:$0xff]
  %v1931 = vld [vmem:[%s5 + $0x60] sm:$0xff]
  %v1932 = vld [vmem:[%s5 + $0x68] sm:$0xff]
  %v1933 = vld [vmem:[%s5 + $0x70] sm:$0xff]
  %v1934 = vld [vmem:[%s5 + $0x78] sm:$0xff]
  %v1935 = vld [vmem:[%s5 + $0x80] sm:$0xff]
  %v1936 = vld [vmem:[%s5 + $0x88] sm:$0xff]
  %v1937 = vld [vmem:[%s5 + $0x90] sm:$0xff]
  %v1938 = vld [vmem:[%s5 + $0x98] sm:$0xff]
  %v1939 = vld [vmem:[%s5 + $0xa0] sm:$0xff]
  %v1940 = vld [vmem:[%s5 + $0xa8] sm:$0xff]
  %v1941 = vld [vmem:[%s5 + $0xb0] sm:$0xff]
  %v1942 = vld [vmem:[%s5 + $0xb8] sm:$0xff]
  %v1943 = vld [vmem:[%s5 + $0xc0] sm:$0xff]
  %v1944 = vld [vmem:[%s5 + $0xc8] sm:$0xff]
  %v1945 = vld [vmem:[%s5 + $0xd0] sm:$0xff]
  %v1946 = vld [vmem:[%s5 + $0xd8] sm:$0xff]
  %v1947 = vld [vmem:[%s5 + $0xe0] sm:$0xff]
  %v1948 = vld [vmem:[%s5 + $0xe8] sm:$0xff]
  %v1949 = vld [vmem:[%s5 + $0xf0] sm:$0xff]
  %v1950 = vld [vmem:[%s5 + $0xf8] sm:$0xff]
  %v1951 = vld [vmem:[%s6] sm:$0x3]
  %v1953 = vlaneseq
  %v1954 = vshrl.u32 %v1953, 7
  %v1955 = vsub.s32 0, %v1954
  %v1956 = vrot.slane %v1951, %v1955
  %v1957 = vlaneseq
  %v1958 = vshrl.u32 %v1957, 7
  %v1959 = vsub.s32 1, %v1958
  %v1960 = vrot.slane %v1951, %v1959
  %v1995 = vunpack.c.l.b16 %v1919
  %v1996 = vunpack.c.h.b16 %v1919
  %v1997 = vunpack.c.l.b16 %v1920
  %v1998 = vunpack.c.h.b16 %v1920
  %v1999 = vunpack.c.l.b16 %v1921
  %v2000 = vunpack.c.h.b16 %v1921
  %v2001 = vunpack.c.l.b16 %v1922
  %v2002 = vunpack.c.h.b16 %v1922
  %v2003 = vunpack.c.l.b16 %v1923
  %v2004 = vunpack.c.h.b16 %v1923
  %v2005 = vunpack.c.l.b16 %v1924
  %v2006 = vunpack.c.h.b16 %v1924
  %v2007 = vunpack.c.l.b16 %v1925
  %v2008 = vunpack.c.h.b16 %v1925
  %v2009 = vunpack.c.l.b16 %v1926
  %v2010 = vunpack.c.h.b16 %v1926
  %v2011 = vunpack.c.l.b16 %v1927
  %v2012 = vunpack.c.h.b16 %v1927
  %v2013 = vunpack.c.l.b16 %v1928
  %v2014 = vunpack.c.h.b16 %v1928
  %v2015 = vunpack.c.l.b16 %v1929
  %v2016 = vunpack.c.h.b16 %v1929
  %v2017 = vunpack.c.l.b16 %v1930
  %v2018 = vunpack.c.h.b16 %v1930
  %v2019 = vunpack.c.l.b16 %v1931
  %v2020 = vunpack.c.h.b16 %v1931
  %v2021 = vunpack.c.l.b16 %v1932
  %v2022 = vunpack.c.h.b16 %v1932
  %v2023 = vunpack.c.l.b16 %v1933
  %v2024 = vunpack.c.h.b16 %v1933
  %v2025 = vunpack.c.l.b16 %v1934
  %v2026 = vunpack.c.h.b16 %v1934
  %v2027 = vunpack.c.l.b16 %v1935
  %v2028 = vunpack.c.h.b16 %v1935
  %v2029 = vunpack.c.l.b16 %v1936
  %v2030 = vunpack.c.h.b16 %v1936
  %v2031 = vunpack.c.l.b16 %v1937
  %v2032 = vunpack.c.h.b16 %v1937
  %v2033 = vunpack.c.l.b16 %v1938
  %v2034 = vunpack.c.h.b16 %v1938
  %v2035 = vunpack.c.l.b16 %v1939
  %v2036 = vunpack.c.h.b16 %v1939
  %v2037 = vunpack.c.l.b16 %v1940
  %v2038 = vunpack.c.h.b16 %v1940
  %v2039 = vunpack.c.l.b16 %v1941
  %v2040 = vunpack.c.h.b16 %v1941
  %v2041 = vunpack.c.l.b16 %v1942
  %v2042 = vunpack.c.h.b16 %v1942
  %v2043 = vunpack.c.l.b16 %v1943
  %v2044 = vunpack.c.h.b16 %v1943
  %v2045 = vunpack.c.l.b16 %v1944
  %v2046 = vunpack.c.h.b16 %v1944
  %v2047 = vunpack.c.l.b16 %v1945
  %v2048 = vunpack.c.h.b16 %v1945
  %v2049 = vunpack.c.l.b16 %v1946
  %v2050 = vunpack.c.h.b16 %v1946
  %v2051 = vunpack.c.l.b16 %v1947
  %v2052 = vunpack.c.h.b16 %v1947
  %v2053 = vunpack.c.l.b16 %v1948
  %v2054 = vunpack.c.h.b16 %v1948
  %v2055 = vunpack.c.l.b16 %v1949
  %v2056 = vunpack.c.h.b16 %v1949
  %v2057 = vunpack.c.l.b16 %v1950
  %v2058 = vunpack.c.h.b16 %v1950
  %v2059 = vpack.c.b16 %v1997, %v1995
  %v2060 = vpack.c.b16 %v1998, %v1996
  %v2061 = vpack.c.b16 %v2001, %v1999
  %v2062 = vpack.c.b16 %v2002, %v2000
  %v2063 = vpack.c.b16 %v2005, %v2003
  %v2064 = vpack.c.b16 %v2006, %v2004
  %v2065 = vpack.c.b16 %v2009, %v2007
  %v2066 = vpack.c.b16 %v2010, %v2008
  %v2067 = vpack.c.b16 %v2013, %v2011
  %v2068 = vpack.c.b16 %v2014, %v2012
  %v2069 = vpack.c.b16 %v2017, %v2015
  %v2070 = vpack.c.b16 %v2018, %v2016
  %v2071 = vpack.c.b16 %v2021, %v2019
  %v2072 = vpack.c.b16 %v2022, %v2020
  %v2073 = vpack.c.b16 %v2025, %v2023
  %v2074 = vpack.c.b16 %v2026, %v2024
  %v2075 = vpack.c.b16 %v2029, %v2027
  %v2076 = vpack.c.b16 %v2030, %v2028
  %v2077 = vpack.c.b16 %v2033, %v2031
  %v2078 = vpack.c.b16 %v2034, %v2032
  %v2079 = vpack.c.b16 %v2037, %v2035
  %v2080 = vpack.c.b16 %v2038, %v2036
  %v2081 = vpack.c.b16 %v2041, %v2039
  %v2082 = vpack.c.b16 %v2042, %v2040
  %v2083 = vpack.c.b16 %v2045, %v2043
  %v2084 = vpack.c.b16 %v2046, %v2044
  %v2085 = vpack.c.b16 %v2049, %v2047
  %v2086 = vpack.c.b16 %v2050, %v2048
  %v2087 = vpack.c.b16 %v2053, %v2051
  %v2088 = vpack.c.b16 %v2054, %v2052
  %v2089 = vpack.c.b16 %v2057, %v2055
  %v2090 = vpack.c.b16 %v2058, %v2056
  %2123 = vmatprep.subr.bf16.mxu0 %v2060
  %2124 = vmatpush1.bf16.msra.mxu0 %v2059
  %2125 = vmatprep.subr.bf16.mxu0 %v2062
  %2126 = vmatpush1.bf16.msra.mxu0 %v2061
  %2127 = vmatprep.subr.bf16.mxu0 %v2064
  %2128 = vmatpush1.bf16.msra.mxu0 %v2063
  %2129 = vmatprep.subr.bf16.mxu0 %v2066
  %2130 = vmatpush1.bf16.msra.mxu0 %v2065
  %2131 = vmatprep.subr.bf16.mxu0 %v2068
  %2132 = vmatpush1.bf16.msra.mxu0 %v2067
  %2133 = vmatprep.subr.bf16.mxu0 %v2070
  %2134 = vmatpush1.bf16.msra.mxu0 %v2069
  %2135 = vmatprep.subr.bf16.mxu0 %v2072
  %2136 = vmatpush1.bf16.msra.mxu0 %v2071
  %2137 = vmatprep.subr.bf16.mxu0 %v2074
  %2138 = vmatpush1.bf16.msra.mxu0 %v2073
  %2139 = vmatprep.subr.bf16.mxu0 %v2076
  %2140 = vmatpush1.bf16.msra.mxu0 %v2075
  %2141 = vmatprep.subr.bf16.mxu0 %v2078
  %2142 = vmatpush1.bf16.msra.mxu0 %v2077
  %2143 = vmatprep.subr.bf16.mxu0 %v2080
  %2144 = vmatpush1.bf16.msra.mxu0 %v2079
  %2145 = vmatprep.subr.bf16.mxu0 %v2082
  %2146 = vmatpush1.bf16.msra.mxu0 %v2081
  %2147 = vmatprep.subr.bf16.mxu0 %v2084
  %2148 = vmatpush1.bf16.msra.mxu0 %v2083
  %2149 = vmatprep.subr.bf16.mxu0 %v2086
  %2150 = vmatpush1.bf16.msra.mxu0 %v2085
  %2151 = vmatprep.subr.bf16.mxu0 %v2088
  %2152 = vmatpush1.bf16.msra.mxu0 %v2087
  %2153 = vmatprep.subr.bf16.mxu0 %v2090
  %2154 = vmatpush1.bf16.msra.mxu0 %v2089
  %2155 = vmatprep.mubr.bf16.mxu0 %v1912
  %2156 = vmatmul.mubr.bf16.gmra.mrb[0].mxu0 %v1911
  %v2157 = vpop.f32.mrb[0].mxu0
  %v2158 = vadd.f32 %v1956, %v2157
  %v2159 = vpop.f32.mrb[0].mxu0
  %v2160 = vadd.f32 %v1960, %v2159
  %v2161 = vpop.f32.mrb[0].mxu0
  %v2162 = vadd.f32 %v1956, %v2161
  %v2163 = vpop.f32.mrb[0].mxu0
  %v2164 = vadd.f32 %v1960, %v2163
  %2165 = vmatprep.mubr.bf16.mxu0 %v1914
  %2166 = vmatmul.mubr.bf16.gmra.mrb[0].mxu0 %v1913
  %v2167 = vpop.f32.mrb[0].mxu0
  %v2168 = vadd.f32 %v1956, %v2167
  %v2169 = vpop.f32.mrb[0].mxu0
  %v2170 = vadd.f32 %v1960, %v2169
  %v2171 = vpop.f32.mrb[0].mxu0
  %v2172 = vadd.f32 %v1956, %v2171
  %v2173 = vpop.f32.mrb[0].mxu0
  %v2174 = vadd.f32 %v1960, %v2173
  %2175 = vmatprep.mubr.bf16.mxu0 %v1916
  %2176 = vmatmul.mubr.bf16.gmra.mrb[0].mxu0 %v1915
  %v2177 = vpop.f32.mrb[0].mxu0
  %v2178 = vadd.f32 %v1956, %v2177
  %v2179 = vpop.f32.mrb[0].mxu0
  %v2180 = vadd.f32 %v1960, %v2179
  %v2181 = vpop.f32.mrb[0].mxu0
  %v2182 = vadd.f32 %v1956, %v2181
  %v2183 = vpop.f32.mrb[0].mxu0
  %v2184 = vadd.f32 %v1960, %v2183
  %2185 = vmatprep.mubr.bf16.mxu0 %v1918
  %2186 = vmatmul.mubr.bf16.gmra.mrb[0].mxu0 %v1917
  %v2187 = vpop.f32.mrb[0].mxu0
  %v2188 = vadd.f32 %v1956, %v2187
  %v2189 = vpop.f32.mrb[0].mxu0
  %v2190 = vadd.f32 %v1960, %v2189
  %v2191 = vpop.f32.mrb[0].mxu0
  %v2192 = vadd.f32 %v1956, %v2191
  %v2193 = vpop.f32.mrb[0].mxu0
  %v2194 = vadd.f32 %v1960, %v2193
  %2195 = vdwg.mxu0
  %v2196 = vpack.c.bf16 %v2162, %v2158
  %v2197 = vpack.c.bf16 %v2164, %v2160
  %v2198 = vpack.c.bf16 %v2172, %v2168
  %v2199 = vpack.c.bf16 %v2174, %v2170
  %v2200 = vpack.c.bf16 %v2182, %v2178
  %v2201 = vpack.c.bf16 %v2184, %v2180
  %v2202 = vpack.c.bf16 %v2192, %v2188
  %v2203 = vpack.c.bf16 %v2194, %v2190
  %v2204 = vld [vmem:[%s7] sm:$0xf]
  %v2205 = vld [vmem:[%s7 + $0x4] sm:$0xf]
  %v2206 = vld [vmem:[%s7 + $0x8] sm:$0xf]
  %v2207 = vld [vmem:[%s7 + $0xc] sm:$0xf]
  %v2208 = vld [vmem:[%s7 + $0x10] sm:$0xf]
  %v2209 = vld [vmem:[%s7 + $0x14] sm:$0xf]
  %v2210 = vld [vmem:[%s7 + $0x18] sm:$0xf]
  %v2211 = vld [vmem:[%s7 + $0x1c] sm:$0xf]
  %v2212 = vld [vmem:[%s7 + $0x20] sm:$0xf]
  %v2213 = vld [vmem:[%s7 + $0x24] sm:$0xf]
  %v2214 = vld [vmem:[%s7 + $0x28] sm:$0xf]
  %v2215 = vld [vmem:[%s7 + $0x2c] sm:$0xf]
  %v2216 = vld [vmem:[%s7 + $0x30] sm:$0xf]
  %v2217 = vld [vmem:[%s7 + $0x34] sm:$0xf]
  %v2218 = vld [vmem:[%s7 + $0x38] sm:$0xf]
  %v2219 = vld [vmem:[%s7 + $0x3c] sm:$0xf]
  %v2220 = vld [vmem:[%s7 + $0x40] sm:$0xf]
  %v2221 = vld [vmem:[%s7 + $0x44] sm:$0xf]
  %v2222 = vld [vmem:[%s7 + $0x48] sm:$0xf]
  %v2223 = vld [vmem:[%s7 + $0x4c] sm:$0xf]
  %v2224 = vld [vmem:[%s7 + $0x50] sm:$0xf]
  %v2225 = vld [vmem:[%s7 + $0x54] sm:$0xf]
  %v2226 = vld [vmem:[%s7 + $0x58] sm:$0xf]
  %v2227 = vld [vmem:[%s7 + $0x5c] sm:$0xf]
  %v2228 = vld [vmem:[%s7 + $0x60] sm:$0xf]
  %v2229 = vld [vmem:[%s7 + $0x64] sm:$0xf]
  %v2230 = vld [vmem:[%s7 + $0x68] sm:$0xf]
  %v2231 = vld [vmem:[%s7 + $0x6c] sm:$0xf]
  %v2232 = vld [vmem:[%s7 + $0x70] sm:$0xf]
  %v2233 = vld [vmem:[%s7 + $0x74] sm:$0xf]
  %v2234 = vld [vmem:[%s7 + $0x78] sm:$0xf]
  %v2235 = vld [vmem:[%s7 + $0x7c] sm:$0xf]
  %v2236 = vld [vmem:[%s8] sm:$0x1]
  %v2238 = vlaneseq
  %v2239 = vshrl.u32 %v2238, 7
  %v2240 = vsub.s32 0, %v2239
  %v2241 = vrot.slane %v2236, %v2240
  %v2275 = vunpack.c.l.b16 %v2204
  %v2276 = vunpack.c.l.b16 %v2205
  %v2277 = vunpack.c.l.b16 %v2206
  %v2278 = vunpack.c.l.b16 %v2207
  %v2279 = vunpack.c.l.b16 %v2208
  %v2280 = vunpack.c.l.b16 %v2209
  %v2281 = vunpack.c.l.b16 %v2210
  %v2282 = vunpack.c.l.b16 %v2211
  %v2283 = vunpack.c.l.b16 %v2212
  %v2284 = vunpack.c.l.b16 %v2213
  %v2285 = vunpack.c.l.b16 %v2214
  %v2286 = vunpack.c.l.b16 %v2215
  %v2287 = vunpack.c.l.b16 %v2216
  %v2288 = vunpack.c.l.b16 %v2217
  %v2289 = vunpack.c.l.b16 %v2218
  %v2290 = vunpack.c.l.b16 %v2219
  %v2291 = vunpack.c.l.b16 %v2220
  %v2292 = vunpack.c.l.b16 %v2221
  %v2293 = vunpack.c.l.b16 %v2222
  %v2294 = vunpack.c.l.b16 %v2223
  %v2295 = vunpack.c.l.b16 %v2224
  %v2296 = vunpack.c.l.b16 %v2225
  %v2297 = vunpack.c.l.b16 %v2226
  %v2298 = vunpack.c.l.b16 %v2227
  %v2299 = vunpack.c.l.b16 %v2228
  %v2300 = vunpack.c.l.b16 %v2229
  %v2301 = vunpack.c.l.b16 %v2230
  %v2302 = vunpack.c.l.b16 %v2231
  %v2303 = vunpack.c.l.b16 %v2232
  %v2304 = vunpack.c.l.b16 %v2233
  %v2305 = vunpack.c.l.b16 %v2234
  %v2306 = vunpack.c.l.b16 %v2235
  %v2307 = vpack.c.b16 %v2276, %v2275
  %v2308 = vpack.c.b16 %v2278, %v2277
  %v2309 = vpack.c.b16 %v2280, %v2279
  %v2310 = vpack.c.b16 %v2282, %v2281
  %v2311 = vpack.c.b16 %v2284, %v2283
  %v2312 = vpack.c.b16 %v2286, %v2285
  %v2313 = vpack.c.b16 %v2288, %v2287
  %v2314 = vpack.c.b16 %v2290, %v2289
  %v2315 = vpack.c.b16 %v2292, %v2291
  %v2316 = vpack.c.b16 %v2294, %v2293
  %v2317 = vpack.c.b16 %v2296, %v2295
  %v2318 = vpack.c.b16 %v2298, %v2297
  %v2319 = vpack.c.b16 %v2300, %v2299
  %v2320 = vpack.c.b16 %v2302, %v2301
  %v2321 = vpack.c.b16 %v2304, %v2303
  %v2322 = vpack.c.b16 %v2306, %v2305
  %2339 = vmatprep.subr.bf16.mxu0 0
  %2340 = vmatpush1.bf16.msra.mxu0 %v2307
  %2341 = vmatprep.subr.bf16.mxu0 0
  %2342 = vmatpush1.bf16.msra.mxu0 %v2308
  %2343 = vmatprep.subr.bf16.mxu0 0
  %2344 = vmatpush1.bf16.msra.mxu0 %v2309
  %2345 = vmatprep.subr.bf16.mxu0 0
  %2346 = vmatpush1.bf16.msra.mxu0 %v2310
  %2347 = vmatprep.subr.bf16.mxu0 0
  %2348 = vmatpush1.bf16.msra.mxu0 %v2311
  %2349 = vmatprep.subr.bf16.mxu0 0
  %2350 = vmatpush1.bf16.msra.mxu0 %v2312
  %2351 = vmatprep.subr.bf16.mxu0 0
  %2352 = vmatpush1.bf16.msra.mxu0 %v2313
  %2353 = vmatprep.subr.bf16.mxu0 0
  %2354 = vmatpush1.bf16.msra.mxu0 %v2314
  %2355 = vmatprep.subr.bf16.mxu0 0
  %2356 = vmatpush1.bf16.msra.mxu0 %v2315
  %2357 = vmatprep.subr.bf16.mxu0 0
  %2358 = vmatpush1.bf16.msra.mxu0 %v2316
  %2359 = vmatprep.subr.bf16.mxu0 0
  %2360 = vmatpush1.bf16.msra.mxu0 %v2317
  %2361 = vmatprep.subr.bf16.mxu0 0
  %2362 = vmatpush1.bf16.msra.mxu0 %v2318
  %2363 = vmatprep.subr.bf16.mxu0 0
  %2364 = vmatpush1.bf16.msra.mxu0 %v2319
  %2365 = vmatprep.subr.bf16.mxu0 0
  %2366 = vmatpush1.bf16.msra.mxu0 %v2320
  %2367 = vmatprep.subr.bf16.mxu0 0
  %2368 = vmatpush1.bf16.msra.mxu0 %v2321
  %2369 = vmatprep.subr.bf16.mxu0 0
  %2370 = vmatpush1.bf16.msra.mxu0 %v2322
  %2371 = vmatprep.mubr.bf16.mxu0 %v2197
  %2372 = vmatmul.mubr.bf16.gmra.mrb[0].mxu0 %v2196
  %v2373 = vpop.f32.mrb[0].mxu0
  %v2374 = vadd.f32 %v2241, %v2373
  %v2375 = vpop.f32.mrb[0].mxu0
  %v2376 = vpop.f32.mrb[0].mxu0
  %v2377 = vadd.f32 %v2241, %v2376
  %v2378 = vpop.f32.mrb[0].mxu0
  %2379 = vmatprep.mubr.bf16.mxu0 %v2199
  %2380 = vmatmul.mubr.bf16.gmra.mrb[0].mxu0 %v2198
  %v2381 = vpop.f32.mrb[0].mxu0
  %v2382 = vadd.f32 %v2241, %v2381
  %v2383 = vpop.f32.mrb[0].mxu0
  %v2384 = vpop.f32.mrb[0].mxu0
  %v2385 = vadd.f32 %v2241, %v2384
  %v2386 = vpop.f32.mrb[0].mxu0
  %2387 = vmatprep.mubr.bf16.mxu0 %v2201
  %2388 = vmatmul.mubr.bf16.gmra.mrb[0].mxu0 %v2200
  %v2389 = vpop.f32.mrb[0].mxu0
  %v2390 = vadd.f32 %v2241, %v2389
  %v2391 = vpop.f32.mrb[0].mxu0
  %v2392 = vpop.f32.mrb[0].mxu0
  %v2393 = vadd.f32 %v2241, %v2392
  %v2394 = vpop.f32.mrb[0].mxu0
  %2395 = vmatprep.mubr.bf16.mxu0 %v2203
  %2396 = vmatmul.mubr.bf16.gmra.mrb[0].mxu0 %v2202
  %v2397 = vpop.f32.mrb[0].mxu0
  %v2398 = vadd.f32 %v2241, %v2397
  %v2399 = vpop.f32.mrb[0].mxu0
  %v2400 = vpop.f32.mrb[0].mxu0
  %v2401 = vadd.f32 %v2241, %v2400
  %v2402 = vpop.f32.mrb[0].mxu0
  %2403 = vdwg.mxu0
  %2404 = vst.msk [vmem:[%s11] sm:$0xff] %vm99, %v2374
  %2405 = vst.msk [vmem:[%s11 + $0x8] sm:$0xff] %vm99, %v2377
  %2406 = vst.msk [vmem:[%s11 + $0x10] sm:$0xff] %vm99, %v2382
  %2407 = vst.msk [vmem:[%s11 + $0x18] sm:$0xff] %vm99, %v2385
  %2408 = vst.msk [vmem:[%s11 + $0x20] sm:$0xff] %vm99, %v2390
  %2409 = vst.msk [vmem:[%s11 + $0x28] sm:$0xff] %vm99, %v2393
  %2410 = vst.msk [vmem:[%s11 + $0x30] sm:$0xff] %vm99, %v2398
  %2411 = vst.msk [vmem:[%s11 + $0x38] sm:$0xff] %vm99, %v2401
  %v2412 = vmul.f32 %v936, %v1009
  %v2413 = vmul.f32 %v938, %v1011
  %v2414 = vmul.f32 %v940, %v1013
  %v2415 = vmul.f32 %v942, %v1015
  %v2416 = vmul.f32 %v946, %v1019
  %v2417 = vmul.f32 %v948, %v1021
  %v2418 = vmul.f32 %v950, %v1023
  %v2419 = vmul.f32 %v952, %v1025
  %v2420 = vmul.f32 %v956, %v1029
  %v2421 = vmul.f32 %v958, %v1031
  %v2422 = vmul.f32 %v960, %v1033
  %v2423 = vmul.f32 %v962, %v1035
  %v2424 = vmul.f32 %v966, %v1039
  %v2425 = vmul.f32 %v968, %v1041
  %v2426 = vmul.f32 %v970, %v1043
  %v2427 = vmul.f32 %v972, %v1045
  %2428 = vmatprep.subr.mxu0 0.0
  %2429 = vmatpush1.msra.mxu0 %v1200
  %2430 = vmatprep.subr.mxu0 0.0
  %2431 = vmatpush1.msra.mxu0 %v1201
  %2432 = vmatprep.subr.mxu0 0.0
  %2433 = vmatpush1.msra.mxu0 %v1202
  %2434 = vmatprep.subr.mxu0 0.0
  %2435 = vmatpush1.msra.mxu0 %v1203
  %2436 = vmatprep.subr.mxu0 0.0
  %2437 = vmatpush1.msra.mxu0 %v1204
  %2438 = vmatprep.subr.mxu0 0.0
  %2439 = vmatpush1.msra.mxu0 %v1205
  %2440 = vmatprep.subr.mxu0 0.0
  %2441 = vmatpush1.msra.mxu0 %v1206
  %2442 = vmatprep.subr.mxu0 0.0
  %2443 = vmatpush1.msra.mxu0 %v1207
  %2444 = vmatprep.subr.mxu0 0.0
  %2445 = vmatpush1.msra.mxu0 %v1208
  %2446 = vmatprep.subr.mxu0 0.0
  %2447 = vmatpush1.msra.mxu0 %v1209
  %2448 = vmatprep.subr.mxu0 0.0
  %2449 = vmatpush1.msra.mxu0 %v1210
  %2450 = vmatprep.subr.mxu0 0.0
  %2451 = vmatpush1.msra.mxu0 %v1211
  %2452 = vmatprep.subr.mxu0 0.0
  %2453 = vmatpush1.msra.mxu0 %v1212
  %2454 = vmatprep.subr.mxu0 0.0
  %2455 = vmatpush1.msra.mxu0 %v1213
  %2456 = vmatprep.subr.mxu0 0.0
  %2457 = vmatpush1.msra.mxu0 %v1214
  %2458 = vmatprep.subr.mxu0 0.0
  %2459 = vmatpush1.msra.mxu0 %v1215
  %2460 = vmatprep.subr.mxu0 0.0
  %2461 = vmatpush1.msra.mxu0 %v1216
  %2462 = vmatprep.subr.mxu0 0.0
  %2463 = vmatpush1.msra.mxu0 %v1217
  %2464 = vmatprep.subr.mxu0 0.0
  %2465 = vmatpush1.msra.mxu0 %v1218
  %2466 = vmatprep.subr.mxu0 0.0
  %2467 = vmatpush1.msra.mxu0 %v1219
  %2468 = vmatprep.subr.mxu0 0.0
  %2469 = vmatpush1.msra.mxu0 %v1220
  %2470 = vmatprep.subr.mxu0 0.0
  %2471 = vmatpush1.msra.mxu0 %v1221
  %2472 = vmatprep.subr.mxu0 0.0
  %2473 = vmatpush1.msra.mxu0 %v1222
  %2474 = vmatprep.subr.mxu0 0.0
  %2475 = vmatpush1.msra.mxu0 %v1223
  %2476 = vmatprep.subr.mxu0 0.0
  %2477 = vmatpush1.msra.mxu0 %v1224
  %2478 = vmatprep.subr.mxu0 0.0
  %2479 = vmatpush1.msra.mxu0 %v1225
  %2480 = vmatprep.subr.mxu0 0.0
  %2481 = vmatpush1.msra.mxu0 %v1226
  %2482 = vmatprep.subr.mxu0 0.0
  %2483 = vmatpush1.msra.mxu0 %v1227
  %2484 = vmatprep.subr.mxu0 0.0
  %2485 = vmatpush1.msra.mxu0 %v1228
  %2486 = vmatprep.subr.mxu0 0.0
  %2487 = vmatpush1.msra.mxu0 %v1229
  %2488 = vmatprep.subr.mxu0 0.0
  %2489 = vmatpush1.msra.mxu0 %v1230
  %2490 = vmatprep.subr.mxu0 0.0
  %2491 = vmatpush1.msra.mxu0 %v1231
  %2492 = vmatprep.mubr.f32.mxu0 %v2413
  %2493 = vmatmul.mubr.f32.gmra.mrb[0].mxu0 %v2412
  %v2494 = vpop.f32.mrb[0].mxu0
  %v2495 = vadd.f32 0.0, %v2494
  %v2496 = vpop.f32.mrb[0].mxu0
  %2497 = vmatprep.mubr.f32.mxu0 %v2415
  %2498 = vmatmul.mubr.f32.gmra.mrb[0].mxu0 %v2414
  %v2499 = vpop.f32.mrb[0].mxu0
  %v2500 = vadd.f32 0.0, %v2499
  %v2501 = vpop.f32.mrb[0].mxu0
  %2502 = vmatprep.mubr.f32.mxu0 %v2417
  %2503 = vmatmul.mubr.f32.gmra.mrb[0].mxu0 %v2416
  %v2504 = vpop.f32.mrb[0].mxu0
  %v2505 = vadd.f32 0.0, %v2504
  %v2506 = vpop.f32.mrb[0].mxu0
  %2507 = vmatprep.mubr.f32.mxu0 %v2419
  %2508 = vmatmul.mubr.f32.gmra.mrb[0].mxu0 %v2418
  %v2509 = vpop.f32.mrb[0].mxu0
  %v2510 = vadd.f32 0.0, %v2509
  %v2511 = vpop.f32.mrb[0].mxu0
  %2512 = vmatprep.mubr.f32.mxu0 %v2421
  %2513 = vmatmul.mubr.f32.gmra.mrb[0].mxu0 %v2420
  %v2514 = vpop.f32.mrb[0].mxu0
  %v2515 = vadd.f32 0.0, %v2514
  %v2516 = vpop.f32.mrb[0].mxu0
  %2517 = vmatprep.mubr.f32.mxu0 %v2423
  %2518 = vmatmul.mubr.f32.gmra.mrb[0].mxu0 %v2422
  %v2519 = vpop.f32.mrb[0].mxu0
  %v2520 = vadd.f32 0.0, %v2519
  %v2521 = vpop.f32.mrb[0].mxu0
  %2522 = vmatprep.mubr.f32.mxu0 %v2425
  %2523 = vmatmul.mubr.f32.gmra.mrb[0].mxu0 %v2424
  %v2524 = vpop.f32.mrb[0].mxu0
  %v2525 = vadd.f32 0.0, %v2524
  %v2526 = vpop.f32.mrb[0].mxu0
  %2527 = vmatprep.mubr.f32.mxu0 %v2427
  %2528 = vmatmul.mubr.f32.gmra.mrb[0].mxu0 %v2426
  %v2529 = vpop.f32.mrb[0].mxu0
  %v2530 = vadd.f32 0.0, %v2529
  %v2531 = vpop.f32.mrb[0].mxu0
  %2532 = vdwg.mxu0
  %v2533 = vmul.f32 %v2495, 0.17677669
  %v2534 = vmul.f32 %v2500, 0.17677669
  %v2535 = vmul.f32 %v2505, 0.17677669
  %v2536 = vmul.f32 %v2510, 0.17677669
  %v2537 = vmul.f32 %v2515, 0.17677669
  %v2538 = vmul.f32 %v2520, 0.17677669
  %v2539 = vmul.f32 %v2525, 0.17677669
  %v2540 = vmul.f32 %v2530, 0.17677669
  %v2541 = vmul.f32 %v936, %v1049
  %v2542 = vmul.f32 %v938, %v1051
  %v2543 = vmul.f32 %v940, %v1053
  %v2544 = vmul.f32 %v942, %v1055
  %v2545 = vmul.f32 %v946, %v1059
  %v2546 = vmul.f32 %v948, %v1061
  %v2547 = vmul.f32 %v950, %v1063
  %v2548 = vmul.f32 %v952, %v1065
  %v2549 = vmul.f32 %v956, %v1069
  %v2550 = vmul.f32 %v958, %v1071
  %v2551 = vmul.f32 %v960, %v1073
  %v2552 = vmul.f32 %v962, %v1075
  %v2553 = vmul.f32 %v966, %v1079
  %v2554 = vmul.f32 %v968, %v1081
  %v2555 = vmul.f32 %v970, %v1083
  %v2556 = vmul.f32 %v972, %v1085
  %2557 = vmatprep.subr.mxu0 0.0
  %2558 = vmatpush1.msra.mxu0 %v1200
  %2559 = vmatprep.subr.mxu0 0.0
  %2560 = vmatpush1.msra.mxu0 %v1201
  %2561 = vmatprep.subr.mxu0 0.0
  %2562 = vmatpush1.msra.mxu0 %v1202
  %2563 = vmatprep.subr.mxu0 0.0
  %2564 = vmatpush1.msra.mxu0 %v1203
  %2565 = vmatprep.subr.mxu0 0.0
  %2566 = vmatpush1.msra.mxu0 %v1204
  %2567 = vmatprep.subr.mxu0 0.0
  %2568 = vmatpush1.msra.mxu0 %v1205
  %2569 = vmatprep.subr.mxu0 0.0
  %2570 = vmatpush1.msra.mxu0 %v1206
  %2571 = vmatprep.subr.mxu0 0.0
  %2572 = vmatpush1.msra.mxu0 %v1207
  %2573 = vmatprep.subr.mxu0 0.0
  %2574 = vmatpush1.msra.mxu0 %v1208
  %2575 = vmatprep.subr.mxu0 0.0
  %2576 = vmatpush1.msra.mxu0 %v1209
  %2577 = vmatprep.subr.mxu0 0.0
  %2578 = vmatpush1.msra.mxu0 %v1210
  %2579 = vmatprep.subr.mxu0 0.0
  %2580 = vmatpush1.msra.mxu0 %v1211
  %2581 = vmatprep.subr.mxu0 0.0
  %2582 = vmatpush1.msra.mxu0 %v1212
  %2583 = vmatprep.subr.mxu0 0.0
  %2584 = vmatpush1.msra.mxu0 %v1213
  %2585 = vmatprep.subr.mxu0 0.0
  %2586 = vmatpush1.msra.mxu0 %v1214
  %2587 = vmatprep.subr.mxu0 0.0
  %2588 = vmatpush1.msra.mxu0 %v1215
  %2589 = vmatprep.subr.mxu0 0.0
  %2590 = vmatpush1.msra.mxu0 %v1216
  %2591 = vmatprep.subr.mxu0 0.0
  %2592 = vmatpush1.msra.mxu0 %v1217
  %2593 = vmatprep.subr.mxu0 0.0
  %2594 = vmatpush1.msra.mxu0 %v1218
  %2595 = vmatprep.subr.mxu0 0.0
  %2596 = vmatpush1.msra.mxu0 %v1219
  %2597 = vmatprep.subr.mxu0 0.0
  %2598 = vmatpush1.msra.mxu0 %v1220
  %2599 = vmatprep.subr.mxu0 0.0
  %2600 = vmatpush1.msra.mxu0 %v1221
  %2601 = vmatprep.subr.mxu0 0.0
  %2602 = vmatpush1.msra.mxu0 %v1222
  %2603 = vmatprep.subr.mxu0 0.0
  %2604 = vmatpush1.msra.mxu0 %v1223
  %2605 = vmatprep.subr.mxu0 0.0
  %2606 = vmatpush1.msra.mxu0 %v1224
  %2607 = vmatprep.subr.mxu0 0.0
  %2608 = vmatpush1.msra.mxu0 %v1225
  %2609 = vmatprep.subr.mxu0 0.0
  %2610 = vmatpush1.msra.mxu0 %v1226
  %2611 = vmatprep.subr.mxu0 0.0
  %2612 = vmatpush1.msra.mxu0 %v1227
  %2613 = vmatprep.subr.mxu0 0.0
  %2614 = vmatpush1.msra.mxu0 %v1228
  %2615 = vmatprep.subr.mxu0 0.0
  %2616 = vmatpush1.msra.mxu0 %v1229
  %2617 = vmatprep.subr.mxu0 0.0
  %2618 = vmatpush1.msra.mxu0 %v1230
  %2619 = vmatprep.subr.mxu0 0.0
  %2620 = vmatpush1.msra.mxu0 %v1231
  %2621 = vmatprep.mubr.f32.mxu0 %v2542
  %2622 = vmatmul.mubr.f32.gmra.mrb[0].mxu0 %v2541
  %v2623 = vpop.f32.mrb[0].mxu0
  %v2624 = vadd.f32 0.0, %v2623
  %v2625 = vpop.f32.mrb[0].mxu0
  %2626 = vmatprep.mubr.f32.mxu0 %v2544
  %2627 = vmatmul.mubr.f32.gmra.mrb[0].mxu0 %v2543
  %v2628 = vpop.f32.mrb[0].mxu0
  %v2629 = vadd.f32 0.0, %v2628
  %v2630 = vpop.f32.mrb[0].mxu0
  %2631 = vmatprep.mubr.f32.mxu0 %v2546
  %2632 = vmatmul.mubr.f32.gmra.mrb[0].mxu0 %v2545
  %v2633 = vpop.f32.mrb[0].mxu0
  %v2634 = vadd.f32 0.0, %v2633
  %v2635 = vpop.f32.mrb[0].mxu0
  %2636 = vmatprep.mubr.f32.mxu0 %v2548
  %2637 = vmatmul.mubr.f32.gmra.mrb[0].mxu0 %v2547
  %v2638 = vpop.f32.mrb[0].mxu0
  %v2639 = vadd.f32 0.0, %v2638
  %v2640 = vpop.f32.mrb[0].mxu0
  %2641 = vmatprep.mubr.f32.mxu0 %v2550
  %2642 = vmatmul.mubr.f32.gmra.mrb[0].mxu0 %v2549
  %v2643 = vpop.f32.mrb[0].mxu0
  %v2644 = vadd.f32 0.0, %v2643
  %v2645 = vpop.f32.mrb[0].mxu0
  %2646 = vmatprep.mubr.f32.mxu0 %v2552
  %2647 = vmatmul.mubr.f32.gmra.mrb[0].mxu0 %v2551
  %v2648 = vpop.f32.mrb[0].mxu0
  %v2649 = vadd.f32 0.0, %v2648
  %v2650 = vpop.f32.mrb[0].mxu0
  %2651 = vmatprep.mubr.f32.mxu0 %v2554
  %2652 = vmatmul.mubr.f32.gmra.mrb[0].mxu0 %v2553
  %v2653 = vpop.f32.mrb[0].mxu0
  %v2654 = vadd.f32 0.0, %v2653
  %v2655 = vpop.f32.mrb[0].mxu0
  %2656 = vmatprep.mubr.f32.mxu0 %v2556
  %2657 = vmatmul.mubr.f32.gmra.mrb[0].mxu0 %v2555
  %v2658 = vpop.f32.mrb[0].mxu0
  %v2659 = vadd.f32 0.0, %v2658
  %v2660 = vpop.f32.mrb[0].mxu0
  %2661 = vdwg.mxu0
  %v2662 = vmul.f32 %v2624, 0.17677669
  %v2663 = vmul.f32 %v2629, 0.17677669
  %v2664 = vmul.f32 %v2634, 0.17677669
  %v2665 = vmul.f32 %v2639, 0.17677669
  %v2666 = vmul.f32 %v2644, 0.17677669
  %v2667 = vmul.f32 %v2649, 0.17677669
  %v2668 = vmul.f32 %v2654, 0.17677669
  %v2669 = vmul.f32 %v2659, 0.17677669
  %v2670 = vmax.f32 %v2533, %v2662
  %v2671 = vmax.f32 %v2534, %v2663
  %v2672 = vmax.f32 %v2535, %v2664
  %v2673 = vmax.f32 %v2536, %v2665
  %v2674 = vmax.f32 %v2537, %v2666
  %v2675 = vmax.f32 %v2538, %v2667
  %v2676 = vmax.f32 %v2539, %v2668
  %v2677 = vmax.f32 %v2540, %v2669
  %v2678 = vsub.f32 %v2533, %v2670
  %v2679 = vsub.f32 %v2534, %v2671
  %v2680 = vsub.f32 %v2535, %v2672
  %v2681 = vsub.f32 %v2536, %v2673
  %v2682 = vsub.f32 %v2537, %v2674
  %v2683 = vsub.f32 %v2538, %v2675
  %v2684 = vsub.f32 %v2539, %v2676
  %v2685 = vsub.f32 %v2540, %v2677
  %v2686 = vmul.f32 %v2678, 1.442695
  %v2687 = vpow.pop %v2686
  %v2688 = vmul.f32 %v2679, 1.442695
  %v2689 = vpow.pop %v2688
  %v2690 = vmul.f32 %v2680, 1.442695
  %v2691 = vpow.pop %v2690
  %v2692 = vmul.f32 %v2681, 1.442695
  %v2693 = vpow.pop %v2692
  %v2694 = vmul.f32 %v2682, 1.442695
  %v2695 = vpow.pop %v2694
  %v2696 = vmul.f32 %v2683, 1.442695
  %v2697 = vpow.pop %v2696
  %v2698 = vmul.f32 %v2684, 1.442695
  %v2699 = vpow.pop %v2698
  %v2700 = vmul.f32 %v2685, 1.442695
  %v2701 = vpow.pop %v2700
  %v2702 = vsub.f32 %v2662, %v2670
  %v2703 = vsub.f32 %v2663, %v2671
  %v2704 = vsub.f32 %v2664, %v2672
  %v2705 = vsub.f32 %v2665, %v2673
  %v2706 = vsub.f32 %v2666, %v2674
  %v2707 = vsub.f32 %v2667, %v2675
  %v2708 = vsub.f32 %v2668, %v2676
  %v2709 = vsub.f32 %v2669, %v2677
  %v2710 = vmul.f32 %v2702, 1.442695
  %v2711 = vpow.pop %v2710
  %v2712 = vmul.f32 %v2703, 1.442695
  %v2713 = vpow.pop %v2712
  %v2714 = vmul.f32 %v2704, 1.442695
  %v2715 = vpow.pop %v2714
  %v2716 = vmul.f32 %v2705, 1.442695
  %v2717 = vpow.pop %v2716
  %v2718 = vmul.f32 %v2706, 1.442695
  %v2719 = vpow.pop %v2718
  %v2720 = vmul.f32 %v2707, 1.442695
  %v2721 = vpow.pop %v2720
  %v2722 = vmul.f32 %v2708, 1.442695
  %v2723 = vpow.pop %v2722
  %v2724 = vmul.f32 %v2709, 1.442695
  %v2725 = vpow.pop %v2724
  %v2726 = vadd.f32 %v2687, %v2711
  %v2727 = vadd.f32 %v2689, %v2713
  %v2728 = vadd.f32 %v2691, %v2715
  %v2729 = vadd.f32 %v2693, %v2717
  %v2730 = vadd.f32 %v2695, %v2719
  %v2731 = vadd.f32 %v2697, %v2721
  %v2732 = vadd.f32 %v2699, %v2723
  %v2733 = vadd.f32 %v2701, %v2725
  %v2734 = vrcp.pop %v2726
  %v2735 = vmul.f32 1.0, %v2734
  %v2736 = vrcp.pop %v2727
  %v2737 = vmul.f32 1.0, %v2736
  %v2738 = vrcp.pop %v2728
  %v2739 = vmul.f32 1.0, %v2738
  %v2740 = vrcp.pop %v2729
  %v2741 = vmul.f32 1.0, %v2740
  %v2742 = vrcp.pop %v2730
  %v2743 = vmul.f32 1.0, %v2742
  %v2744 = vrcp.pop %v2731
  %v2745 = vmul.f32 1.0, %v2744
  %v2746 = vrcp.pop %v2732
  %v2747 = vmul.f32 1.0, %v2746
  %v2748 = vrcp.pop %v2733
  %v2749 = vmul.f32 1.0, %v2748
  %v2750 = vmul.f32 %v2687, %v2735
  %v2751 = vmul.f32 %v2689, %v2737
  %v2752 = vmul.f32 %v2691, %v2739
  %v2753 = vmul.f32 %v2693, %v2741
  %v2754 = vmul.f32 %v2695, %v2743
  %v2755 = vmul.f32 %v2697, %v2745
  %v2756 = vmul.f32 %v2699, %v2747
  %v2757 = vmul.f32 %v2701, %v2749
  %v2759 = vsel %vm1580, %v2750, 0
  %v2762 = vsel %vm1580, %v2751, 0
  %v2765 = vsel %vm1580, %v2752, 0
  %v2768 = vsel %vm1580, %v2753, 0
  %v2771 = vsel %vm1580, %v2754, 0
  %v2774 = vsel %vm1580, %v2755, 0
  %v2777 = vsel %vm1580, %v2756, 0
  %v2780 = vsel %vm1580, %v2757, 0
  %2782 = vmatprep.subr.mxu0 %v1233
  %2783 = vmatpush1.msra.mxu0 %v1232
  %2784 = vmatprep.subr.mxu0 0.0
  %2785 = vmatpush1.msra.mxu0 0.0
  %2786 = vmatprep.subr.mxu0 0.0
  %2787 = vmatpush1.msra.mxu0 0.0
  %2788 = vmatprep.subr.mxu0 0.0
  %2789 = vmatpush1.msra.mxu0 0.0
  %2790 = vmatprep.subr.mxu0 0.0
  %2791 = vmatpush1.msra.mxu0 0.0
  %2792 = vmatprep.subr.mxu0 0.0
  %2793 = vmatpush1.msra.mxu0 0.0
  %2794 = vmatprep.subr.mxu0 0.0
  %2795 = vmatpush1.msra.mxu0 0.0
  %2796 = vmatprep.subr.mxu0 0.0
  %2797 = vmatpush1.msra.mxu0 0.0
  %2798 = vmatprep.subr.mxu0 0.0
  %2799 = vmatpush1.msra.mxu0 0.0
  %2800 = vmatprep.subr.mxu0 0.0
  %2801 = vmatpush1.msra.mxu0 0.0
  %2802 = vmatprep.subr.mxu0 0.0
  %2803 = vmatpush1.msra.mxu0 0.0
  %2804 = vmatprep.subr.mxu0 0.0
  %2805 = vmatpush1.msra.mxu0 0.0
  %2806 = vmatprep.subr.mxu0 0.0
  %2807 = vmatpush1.msra.mxu0 0.0
  %2808 = vmatprep.subr.mxu0 0.0
  %2809 = vmatpush1.msra.mxu0 0.0
  %2810 = vmatprep.subr.mxu0 0.0
  %2811 = vmatpush1.msra.mxu0 0.0
  %2812 = vmatprep.subr.mxu0 0.0
  %2813 = vmatpush1.msra.mxu0 0.0
  %2814 = vmatprep.subr.mxu0 0.0
  %2815 = vmatpush1.msra.mxu0 0.0
  %2816 = vmatprep.subr.mxu0 0.0
  %2817 = vmatpush1.msra.mxu0 0.0
  %2818 = vmatprep.subr.mxu0 0.0
  %2819 = vmatpush1.msra.mxu0 0.0
  %2820 = vmatprep.subr.mxu0 0.0
  %2821 = vmatpush1.msra.mxu0 0.0
  %2822 = vmatprep.subr.mxu0 0.0
  %2823 = vmatpush1.msra.mxu0 0.0
  %2824 = vmatprep.subr.mxu0 0.0
  %2825 = vmatpush1.msra.mxu0 0.0
  %2826 = vmatprep.subr.mxu0 0.0
  %2827 = vmatpush1.msra.mxu0 0.0
  %2828 = vmatprep.subr.mxu0 0.0
  %2829 = vmatpush1.msra.mxu0 0.0
  %2830 = vmatprep.subr.mxu0 0.0
  %2831 = vmatpush1.msra.mxu0 0.0
  %2832 = vmatprep.subr.mxu0 0.0
  %2833 = vmatpush1.msra.mxu0 0.0
  %2834 = vmatprep.subr.mxu0 0.0
  %2835 = vmatpush1.msra.mxu0 0.0
  %2836 = vmatprep.subr.mxu0 0.0
  %2837 = vmatpush1.msra.mxu0 0.0
  %2838 = vmatprep.subr.mxu0 0.0
  %2839 = vmatpush1.msra.mxu0 0.0
  %2840 = vmatprep.subr.mxu0 0.0
  %2841 = vmatpush1.msra.mxu0 0.0
  %2842 = vmatprep.subr.mxu0 0.0
  %2843 = vmatpush1.msra.mxu0 0.0
  %2844 = vmatprep.subr.mxu0 0.0
  %2845 = vmatpush1.msra.mxu0 0.0
  %2846 = vmatprep.mubr.f32.mxu0 0.0
  %2847 = vmatmul.mubr.f32.gmra.mrb[0].mxu0 %v2759
  %v2848 = vpop.f32.mrb[0].mxu0
  %v2849 = vadd.f32 0.0, %v2848
  %v2850 = vpop.f32.mrb[0].mxu0
  %v2851 = vadd.f32 0.0, %v2850
  %2852 = vmatprep.mubr.f32.mxu0 0.0
  %2853 = vmatmul.mubr.f32.gmra.mrb[0].mxu0 %v2762
  %v2854 = vpop.f32.mrb[0].mxu0
  %v2855 = vadd.f32 0.0, %v2854
  %v2856 = vpop.f32.mrb[0].mxu0
  %v2857 = vadd.f32 0.0, %v2856
  %2858 = vmatprep.mubr.f32.mxu0 0.0
  %2859 = vmatmul.mubr.f32.gmra.mrb[0].mxu0 %v2765
  %v2860 = vpop.f32.mrb[0].mxu0
  %v2861 = vadd.f32 0.0, %v2860
  %v2862 = vpop.f32.mrb[0].mxu0
  %v2863 = vadd.f32 0.0, %v2862
  %2864 = vmatprep.mubr.f32.mxu0 0.0
  %2865 = vmatmul.mubr.f32.gmra.mrb[0].mxu0 %v2768
  %v2866 = vpop.f32.mrb[0].mxu0
  %v2867 = vadd.f32 0.0, %v2866
  %v2868 = vpop.f32.mrb[0].mxu0
  %v2869 = vadd.f32 0.0, %v2868
  %2870 = vmatprep.mubr.f32.mxu0 0.0
  %2871 = vmatmul.mubr.f32.gmra.mrb[0].mxu0 %v2771
  %v2872 = vpop.f32.mrb[0].mxu0
  %v2873 = vadd.f32 0.0, %v2872
  %v2874 = vpop.f32.mrb[0].mxu0
  %v2875 = vadd.f32 0.0, %v2874
  %2876 = vmatprep.mubr.f32.mxu0 0.0
  %2877 = vmatmul.mubr.f32.gmra.mrb[0].mxu0 %v2774
  %v2878 = vpop.f32.mrb[0].mxu0
  %v2879 = vadd.f32 0.0, %v2878
  %v2880 = vpop.f32.mrb[0].mxu0
  %v2881 = vadd.f32 0.0, %v2880
  %2882 = vmatprep.mubr.f32.mxu0 0.0
  %2883 = vmatmul.mubr.f32.gmra.mrb[0].mxu0 %v2777
  %v2884 = vpop.f32.mrb[0].mxu0
  %v2885 = vadd.f32 0.0, %v2884
  %v2886 = vpop.f32.mrb[0].mxu0
  %v2887 = vadd.f32 0.0, %v2886
  %2888 = vmatprep.mubr.f32.mxu0 0.0
  %2889 = vmatmul.mubr.f32.gmra.mrb[0].mxu0 %v2780
  %v2890 = vpop.f32.mrb[0].mxu0
  %v2891 = vadd.f32 0.0, %v2890
  %v2892 = vpop.f32.mrb[0].mxu0
  %v2893 = vadd.f32 0.0, %v2892
  %2894 = vdwg.mxu0
  %v2895 = vmul.f32 %v2849, %v1122
  %v2896 = vmul.f32 %v2851, %v1124
  %v2897 = vmul.f32 %v2855, %v1126
  %v2898 = vmul.f32 %v2857, %v1128
  %v2899 = vmul.f32 %v2861, %v1132
  %v2900 = vmul.f32 %v2863, %v1134
  %v2901 = vmul.f32 %v2867, %v1136
  %v2902 = vmul.f32 %v2869, %v1138
  %v2903 = vmul.f32 %v2873, %v1142
  %v2904 = vmul.f32 %v2875, %v1144
  %v2905 = vmul.f32 %v2879, %v1146
  %v2906 = vmul.f32 %v2881, %v1148
  %v2907 = vmul.f32 %v2885, %v1152
  %v2908 = vmul.f32 %v2887, %v1154
  %v2909 = vmul.f32 %v2891, %v1156
  %v2910 = vmul.f32 %v2893, %v1158
  %v2911 = vmul.f32 %v2711, %v2735
  %v2912 = vmul.f32 %v2713, %v2737
  %v2913 = vmul.f32 %v2715, %v2739
  %v2914 = vmul.f32 %v2717, %v2741
  %v2915 = vmul.f32 %v2719, %v2743
  %v2916 = vmul.f32 %v2721, %v2745
  %v2917 = vmul.f32 %v2723, %v2747
  %v2918 = vmul.f32 %v2725, %v2749
  %v2920 = vsel %vm1580, %v2911, 0
  %v2923 = vsel %vm1580, %v2912, 0
  %v2926 = vsel %vm1580, %v2913, 0
  %v2929 = vsel %vm1580, %v2914, 0
  %v2932 = vsel %vm1580, %v2915, 0
  %v2935 = vsel %vm1580, %v2916, 0
  %v2938 = vsel %vm1580, %v2917, 0
  %v2941 = vsel %vm1580, %v2918, 0
  %2943 = vmatprep.subr.mxu0 %v1233
  %2944 = vmatpush1.msra.mxu0 %v1232
  %2945 = vmatprep.subr.mxu0 0.0
  %2946 = vmatpush1.msra.mxu0 0.0
  %2947 = vmatprep.subr.mxu0 0.0
  %2948 = vmatpush1.msra.mxu0 0.0
  %2949 = vmatprep.subr.mxu0 0.0
  %2950 = vmatpush1.msra.mxu0 0.0
  %2951 = vmatprep.subr.mxu0 0.0
  %2952 = vmatpush1.msra.mxu0 0.0
  %2953 = vmatprep.subr.mxu0 0.0
  %2954 = vmatpush1.msra.mxu0 0.0
  %2955 = vmatprep.subr.mxu0 0.0
  %2956 = vmatpush1.msra.mxu0 0.0
  %2957 = vmatprep.subr.mxu0 0.0
  %2958 = vmatpush1.msra.mxu0 0.0
  %2959 = vmatprep.subr.mxu0 0.0
  %2960 = vmatpush1.msra.mxu0 0.0
  %2961 = vmatprep.subr.mxu0 0.0
  %2962 = vmatpush1.msra.mxu0 0.0
  %2963 = vmatprep.subr.mxu0 0.0
  %2964 = vmatpush1.msra.mxu0 0.0
  %2965 = vmatprep.subr.mxu0 0.0
  %2966 = vmatpush1.msra.mxu0 0.0
  %2967 = vmatprep.subr.mxu0 0.0
  %2968 = vmatpush1.msra.mxu0 0.0
  %2969 = vmatprep.subr.mxu0 0.0
  %2970 = vmatpush1.msra.mxu0 0.0
  %2971 = vmatprep.subr.mxu0 0.0
  %2972 = vmatpush1.msra.mxu0 0.0
  %2973 = vmatprep.subr.mxu0 0.0
  %2974 = vmatpush1.msra.mxu0 0.0
  %2975 = vmatprep.subr.mxu0 0.0
  %2976 = vmatpush1.msra.mxu0 0.0
  %2977 = vmatprep.subr.mxu0 0.0
  %2978 = vmatpush1.msra.mxu0 0.0
  %2979 = vmatprep.subr.mxu0 0.0
  %2980 = vmatpush1.msra.mxu0 0.0
  %2981 = vmatprep.subr.mxu0 0.0
  %2982 = vmatpush1.msra.mxu0 0.0
  %2983 = vmatprep.subr.mxu0 0.0
  %2984 = vmatpush1.msra.mxu0 0.0
  %2985 = vmatprep.subr.mxu0 0.0
  %2986 = vmatpush1.msra.mxu0 0.0
  %2987 = vmatprep.subr.mxu0 0.0
  %2988 = vmatpush1.msra.mxu0 0.0
  %2989 = vmatprep.subr.mxu0 0.0
  %2990 = vmatpush1.msra.mxu0 0.0
  %2991 = vmatprep.subr.mxu0 0.0
  %2992 = vmatpush1.msra.mxu0 0.0
  %2993 = vmatprep.subr.mxu0 0.0
  %2994 = vmatpush1.msra.mxu0 0.0
  %2995 = vmatprep.subr.mxu0 0.0
  %2996 = vmatpush1.msra.mxu0 0.0
  %2997 = vmatprep.subr.mxu0 0.0
  %2998 = vmatpush1.msra.mxu0 0.0
  %2999 = vmatprep.subr.mxu0 0.0
  %3000 = vmatpush1.msra.mxu0 0.0
  %3001 = vmatprep.subr.mxu0 0.0
  %3002 = vmatpush1.msra.mxu0 0.0
  %3003 = vmatprep.subr.mxu0 0.0
  %3004 = vmatpush1.msra.mxu0 0.0
  %3005 = vmatprep.subr.mxu0 0.0
  %3006 = vmatpush1.msra.mxu0 0.0
  %3007 = vmatprep.mubr.f32.mxu0 0.0
  %3008 = vmatmul.mubr.f32.gmra.mrb[0].mxu0 %v2920
  %v3009 = vpop.f32.mrb[0].mxu0
  %v3010 = vadd.f32 0.0, %v3009
  %v3011 = vpop.f32.mrb[0].mxu0
  %v3012 = vadd.f32 0.0, %v3011
  %3013 = vmatprep.mubr.f32.mxu0 0.0
  %3014 = vmatmul.mubr.f32.gmra.mrb[0].mxu0 %v2923
  %v3015 = vpop.f32.mrb[0].mxu0
  %v3016 = vadd.f32 0.0, %v3015
  %v3017 = vpop.f32.mrb[0].mxu0
  %v3018 = vadd.f32 0.0, %v3017
  %3019 = vmatprep.mubr.f32.mxu0 0.0
  %3020 = vmatmul.mubr.f32.gmra.mrb[0].mxu0 %v2926
  %v3021 = vpop.f32.mrb[0].mxu0
  %v3022 = vadd.f32 0.0, %v3021
  %v3023 = vpop.f32.mrb[0].mxu0
  %v3024 = vadd.f32 0.0, %v3023
  %3025 = vmatprep.mubr.f32.mxu0 0.0
  %3026 = vmatmul.mubr.f32.gmra.mrb[0].mxu0 %v2929
  %v3027 = vpop.f32.mrb[0].mxu0
  %v3028 = vadd.f32 0.0, %v3027
  %v3029 = vpop.f32.mrb[0].mxu0
  %v3030 = vadd.f32 0.0, %v3029
  %3031 = vmatprep.mubr.f32.mxu0 0.0
  %3032 = vmatmul.mubr.f32.gmra.mrb[0].mxu0 %v2932
  %v3033 = vpop.f32.mrb[0].mxu0
  %v3034 = vadd.f32 0.0, %v3033
  %v3035 = vpop.f32.mrb[0].mxu0
  %v3036 = vadd.f32 0.0, %v3035
  %3037 = vmatprep.mubr.f32.mxu0 0.0
  %3038 = vmatmul.mubr.f32.gmra.mrb[0].mxu0 %v2935
  %v3039 = vpop.f32.mrb[0].mxu0
  %v3040 = vadd.f32 0.0, %v3039
  %v3041 = vpop.f32.mrb[0].mxu0
  %v3042 = vadd.f32 0.0, %v3041
  %3043 = vmatprep.mubr.f32.mxu0 0.0
  %3044 = vmatmul.mubr.f32.gmra.mrb[0].mxu0 %v2938
  %v3045 = vpop.f32.mrb[0].mxu0
  %v3046 = vadd.f32 0.0, %v3045
  %v3047 = vpop.f32.mrb[0].mxu0
  %v3048 = vadd.f32 0.0, %v3047
  %3049 = vmatprep.mubr.f32.mxu0 0.0
  %3050 = vmatmul.mubr.f32.gmra.mrb[0].mxu0 %v2941
  %v3051 = vpop.f32.mrb[0].mxu0
  %v3052 = vadd.f32 0.0, %v3051
  %v3053 = vpop.f32.mrb[0].mxu0
  %v3054 = vadd.f32 0.0, %v3053
  %3055 = vdwg.mxu0
  %v3056 = vmul.f32 %v3010, %v1162
  %v3057 = vmul.f32 %v3012, %v1164
  %v3058 = vmul.f32 %v3016, %v1166
  %v3059 = vmul.f32 %v3018, %v1168
  %v3060 = vmul.f32 %v3022, %v1172
  %v3061 = vmul.f32 %v3024, %v1174
  %v3062 = vmul.f32 %v3028, %v1176
  %v3063 = vmul.f32 %v3030, %v1178
  %v3064 = vmul.f32 %v3034, %v1182
  %v3065 = vmul.f32 %v3036, %v1184
  %v3066 = vmul.f32 %v3040, %v1186
  %v3067 = vmul.f32 %v3042, %v1188
  %v3068 = vmul.f32 %v3046, %v1192
  %v3069 = vmul.f32 %v3048, %v1194
  %v3070 = vmul.f32 %v3052, %v1196
  %v3071 = vmul.f32 %v3054, %v1198
  %v3072 = vadd.f32 %v2895, %v3056
  %v3073 = vadd.f32 %v2896, %v3057
  %v3074 = vadd.f32 %v2897, %v3058
  %v3075 = vadd.f32 %v2898, %v3059
  %v3076 = vadd.f32 %v2899, %v3060
  %v3077 = vadd.f32 %v2900, %v3061
  %v3078 = vadd.f32 %v2901, %v3062
  %v3079 = vadd.f32 %v2902, %v3063
  %v3080 = vadd.f32 %v2903, %v3064
  %v3081 = vadd.f32 %v2904, %v3065
  %v3082 = vadd.f32 %v2905, %v3066
  %v3083 = vadd.f32 %v2906, %v3067
  %v3084 = vadd.f32 %v2907, %v3068
  %v3085 = vadd.f32 %v2908, %v3069
  %v3086 = vadd.f32 %v2909, %v3070
  %v3087 = vadd.f32 %v2910, %v3071
  %v3088 = vpack.c.bf16 %v3074, %v3072
  %v3089 = vpack.c.bf16 %v3075, %v3073
  %v3090 = vpack.c.bf16 %v3078, %v3076
  %v3091 = vpack.c.bf16 %v3079, %v3077
  %v3092 = vpack.c.bf16 %v3082, %v3080
  %v3093 = vpack.c.bf16 %v3083, %v3081
  %v3094 = vpack.c.bf16 %v3086, %v3084
  %v3095 = vpack.c.bf16 %v3087, %v3085
  %v3096 = vld [vmem:[%s5] sm:$0xff]
  %v3097 = vld [vmem:[%s5 + $0x8] sm:$0xff]
  %v3098 = vld [vmem:[%s5 + $0x10] sm:$0xff]
  %v3099 = vld [vmem:[%s5 + $0x18] sm:$0xff]
  %v3100 = vld [vmem:[%s5 + $0x20] sm:$0xff]
  %v3101 = vld [vmem:[%s5 + $0x28] sm:$0xff]
  %v3102 = vld [vmem:[%s5 + $0x30] sm:$0xff]
  %v3103 = vld [vmem:[%s5 + $0x38] sm:$0xff]
  %v3104 = vld [vmem:[%s5 + $0x40] sm:$0xff]
  %v3105 = vld [vmem:[%s5 + $0x48] sm:$0xff]
  %v3106 = vld [vmem:[%s5 + $0x50] sm:$0xff]
  %v3107 = vld [vmem:[%s5 + $0x58] sm:$0xff]
  %v3108 = vld [vmem:[%s5 + $0x60] sm:$0xff]
  %v3109 = vld [vmem:[%s5 + $0x68] sm:$0xff]
  %v3110 = vld [vmem:[%s5 + $0x70] sm:$0xff]
  %v3111 = vld [vmem:[%s5 + $0x78] sm:$0xff]
  %v3112 = vld [vmem:[%s5 + $0x80] sm:$0xff]
  %v3113 = vld [vmem:[%s5 + $0x88] sm:$0xff]
  %v3114 = vld [vmem:[%s5 + $0x90] sm:$0xff]
  %v3115 = vld [vmem:[%s5 + $0x98] sm:$0xff]
  %v3116 = vld [vmem:[%s5 + $0xa0] sm:$0xff]
  %v3117 = vld [vmem:[%s5 + $0xa8] sm:$0xff]
  %v3118 = vld [vmem:[%s5 + $0xb0] sm:$0xff]
  %v3119 = vld [vmem:[%s5 + $0xb8] sm:$0xff]
  %v3120 = vld [vmem:[%s5 + $0xc0] sm:$0xff]
  %v3121 = vld [vmem:[%s5 + $0xc8] sm:$0xff]
  %v3122 = vld [vmem:[%s5 + $0xd0] sm:$0xff]
  %v3123 = vld [vmem:[%s5 + $0xd8] sm:$0xff]
  %v3124 = vld [vmem:[%s5 + $0xe0] sm:$0xff]
  %v3125 = vld [vmem:[%s5 + $0xe8] sm:$0xff]
  %v3126 = vld [vmem:[%s5 + $0xf0] sm:$0xff]
  %v3127 = vld [vmem:[%s5 + $0xf8] sm:$0xff]
  %v3128 = vld [vmem:[%s6] sm:$0x3]
  %v3130 = vlaneseq
  %v3131 = vshrl.u32 %v3130, 7
  %v3132 = vsub.s32 0, %v3131
  %v3133 = vrot.slane %v3128, %v3132
  %v3134 = vlaneseq
  %v3135 = vshrl.u32 %v3134, 7
  %v3136 = vsub.s32 1, %v3135
  %v3137 = vrot.slane %v3128, %v3136
  %v3172 = vunpack.c.l.b16 %v3096
  %v3173 = vunpack.c.h.b16 %v3096
  %v3174 = vunpack.c.l.b16 %v3097
  %v3175 = vunpack.c.h.b16 %v3097
  %v3176 = vunpack.c.l.b16 %v3098
  %v3177 = vunpack.c.h.b16 %v3098
  %v3178 = vunpack.c.l.b16 %v3099
  %v3179 = vunpack.c.h.b16 %v3099
  %v3180 = vunpack.c.l.b16 %v3100
  %v3181 = vunpack.c.h.b16 %v3100
  %v3182 = vunpack.c.l.b16 %v3101
  %v3183 = vunpack.c.h.b16 %v3101
  %v3184 = vunpack.c.l.b16 %v3102
  %v3185 = vunpack.c.h.b16 %v3102
  %v3186 = vunpack.c.l.b16 %v3103
  %v3187 = vunpack.c.h.b16 %v3103
  %v3188 = vunpack.c.l.b16 %v3104
  %v3189 = vunpack.c.h.b16 %v3104
  %v3190 = vunpack.c.l.b16 %v3105
  %v3191 = vunpack.c.h.b16 %v3105
  %v3192 = vunpack.c.l.b16 %v3106
  %v3193 = vunpack.c.h.b16 %v3106
  %v3194 = vunpack.c.l.b16 %v3107
  %v3195 = vunpack.c.h.b16 %v3107
  %v3196 = vunpack.c.l.b16 %v3108
  %v3197 = vunpack.c.h.b16 %v3108
  %v3198 = vunpack.c.l.b16 %v3109
  %v3199 = vunpack.c.h.b16 %v3109
  %v3200 = vunpack.c.l.b16 %v3110
  %v3201 = vunpack.c.h.b16 %v3110
  %v3202 = vunpack.c.l.b16 %v3111
  %v3203 = vunpack.c.h.b16 %v3111
  %v3204 = vunpack.c.l.b16 %v3112
  %v3205 = vunpack.c.h.b16 %v3112
  %v3206 = vunpack.c.l.b16 %v3113
  %v3207 = vunpack.c.h.b16 %v3113
  %v3208 = vunpack.c.l.b16 %v3114
  %v3209 = vunpack.c.h.b16 %v3114
  %v3210 = vunpack.c.l.b16 %v3115
  %v3211 = vunpack.c.h.b16 %v3115
  %v3212 = vunpack.c.l.b16 %v3116
  %v3213 = vunpack.c.h.b16 %v3116
  %v3214 = vunpack.c.l.b16 %v3117
  %v3215 = vunpack.c.h.b16 %v3117
  %v3216 = vunpack.c.l.b16 %v3118
  %v3217 = vunpack.c.h.b16 %v3118
  %v3218 = vunpack.c.l.b16 %v3119
  %v3219 = vunpack.c.h.b16 %v3119
  %v3220 = vunpack.c.l.b16 %v3120
  %v3221 = vunpack.c.h.b16 %v3120
  %v3222 = vunpack.c.l.b16 %v3121
  %v3223 = vunpack.c.h.b16 %v3121
  %v3224 = vunpack.c.l.b16 %v3122
  %v3225 = vunpack.c.h.b16 %v3122
  %v3226 = vunpack.c.l.b16 %v3123
  %v3227 = vunpack.c.h.b16 %v3123
  %v3228 = vunpack.c.l.b16 %v3124
  %v3229 = vunpack.c.h.b16 %v3124
  %v3230 = vunpack.c.l.b16 %v3125
  %v3231 = vunpack.c.h.b16 %v3125
  %v3232 = vunpack.c.l.b16 %v3126
  %v3233 = vunpack.c.h.b16 %v3126
  %v3234 = vunpack.c.l.b16 %v3127
  %v3235 = vunpack.c.h.b16 %v3127
  %v3236 = vpack.c.b16 %v3174, %v3172
  %v3237 = vpack.c.b16 %v3175, %v3173
  %v3238 = vpack.c.b16 %v3178, %v3176
  %v3239 = vpack.c.b16 %v3179, %v3177
  %v3240 = vpack.c.b16 %v3182, %v3180
  %v3241 = vpack.c.b16 %v3183, %v3181
  %v3242 = vpack.c.b16 %v3186, %v3184
  %v3243 = vpack.c.b16 %v3187, %v3185
  %v3244 = vpack.c.b16 %v3190, %v3188
  %v3245 = vpack.c.b16 %v3191, %v3189
  %v3246 = vpack.c.b16 %v3194, %v3192
  %v3247 = vpack.c.b16 %v3195, %v3193
  %v3248 = vpack.c.b16 %v3198, %v3196
  %v3249 = vpack.c.b16 %v3199, %v3197
  %v3250 = vpack.c.b16 %v3202, %v3200
  %v3251 = vpack.c.b16 %v3203, %v3201
  %v3252 = vpack.c.b16 %v3206, %v3204
  %v3253 = vpack.c.b16 %v3207, %v3205
  %v3254 = vpack.c.b16 %v3210, %v3208
  %v3255 = vpack.c.b16 %v3211, %v3209
  %v3256 = vpack.c.b16 %v3214, %v3212
  %v3257 = vpack.c.b16 %v3215, %v3213
  %v3258 = vpack.c.b16 %v3218, %v3216
  %v3259 = vpack.c.b16 %v3219, %v3217
  %v3260 = vpack.c.b16 %v3222, %v3220
  %v3261 = vpack.c.b16 %v3223, %v3221
  %v3262 = vpack.c.b16 %v3226, %v3224
  %v3263 = vpack.c.b16 %v3227, %v3225
  %v3264 = vpack.c.b16 %v3230, %v3228
  %v3265 = vpack.c.b16 %v3231, %v3229
  %v3266 = vpack.c.b16 %v3234, %v3232
  %v3267 = vpack.c.b16 %v3235, %v3233
  %3300 = vmatprep.subr.bf16.mxu0 %v3237
  %3301 = vmatpush1.bf16.msra.mxu0 %v3236
  %3302 = vmatprep.subr.bf16.mxu0 %v3239
  %3303 = vmatpush1.bf16.msra.mxu0 %v3238
  %3304 = vmatprep.subr.bf16.mxu0 %v3241
  %3305 = vmatpush1.bf16.msra.mxu0 %v3240
  %3306 = vmatprep.subr.bf16.mxu0 %v3243
  %3307 = vmatpush1.bf16.msra.mxu0 %v3242
  %3308 = vmatprep.subr.bf16.mxu0 %v3245
  %3309 = vmatpush1.bf16.msra.mxu0 %v3244
  %3310 = vmatprep.subr.bf16.mxu0 %v3247
  %3311 = vmatpush1.bf16.msra.mxu0 %v3246
  %3312 = vmatprep.subr.bf16.mxu0 %v3249
  %3313 = vmatpush1.bf16.msra.mxu0 %v3248
  %3314 = vmatprep.subr.bf16.mxu0 %v3251
  %3315 = vmatpush1.bf16.msra.mxu0 %v3250
  %3316 = vmatprep.subr.bf16.mxu0 %v3253
  %3317 = vmatpush1.bf16.msra.mxu0 %v3252
  %3318 = vmatprep.subr.bf16.mxu0 %v3255
  %3319 = vmatpush1.bf16.msra.mxu0 %v3254
  %3320 = vmatprep.subr.bf16.mxu0 %v3257
  %3321 = vmatpush1.bf16.msra.mxu0 %v3256
  %3322 = vmatprep.subr.bf16.mxu0 %v3259
  %3323 = vmatpush1.bf16.msra.mxu0 %v3258
  %3324 = vmatprep.subr.bf16.mxu0 %v3261
  %3325 = vmatpush1.bf16.msra.mxu0 %v3260
  %3326 = vmatprep.subr.bf16.mxu0 %v3263
  %3327 = vmatpush1.bf16.msra.mxu0 %v3262
  %3328 = vmatprep.subr.bf16.mxu0 %v3265
  %3329 = vmatpush1.bf16.msra.mxu0 %v3264
  %3330 = vmatprep.subr.bf16.mxu0 %v3267
  %3331 = vmatpush1.bf16.msra.mxu0 %v3266
  %3332 = vmatprep.mubr.bf16.mxu0 %v3089
  %3333 = vmatmul.mubr.bf16.gmra.mrb[0].mxu0 %v3088
  %v3334 = vpop.f32.mrb[0].mxu0
  %v3335 = vadd.f32 %v3133, %v3334
  %v3336 = vpop.f32.mrb[0].mxu0
  %v3337 = vadd.f32 %v3137, %v3336
  %v3338 = vpop.f32.mrb[0].mxu0
  %v3339 = vadd.f32 %v3133, %v3338
  %v3340 = vpop.f32.mrb[0].mxu0
  %v3341 = vadd.f32 %v3137, %v3340
  %3342 = vmatprep.mubr.bf16.mxu0 %v3091
  %3343 = vmatmul.mubr.bf16.gmra.mrb[0].mxu0 %v3090
  %v3344 = vpop.f32.mrb[0].mxu0
  %v3345 = vadd.f32 %v3133, %v3344
  %v3346 = vpop.f32.mrb[0].mxu0
  %v3347 = vadd.f32 %v3137, %v3346
  %v3348 = vpop.f32.mrb[0].mxu0
  %v3349 = vadd.f32 %v3133, %v3348
  %v3350 = vpop.f32.mrb[0].mxu0
  %v3351 = vadd.f32 %v3137, %v3350
  %3352 = vmatprep.mubr.bf16.mxu0 %v3093
  %3353 = vmatmul.mubr.bf16.gmra.mrb[0].mxu0 %v3092
  %v3354 = vpop.f32.mrb[0].mxu0
  %v3355 = vadd.f32 %v3133, %v3354
  %v3356 = vpop.f32.mrb[0].mxu0
  %v3357 = vadd.f32 %v3137, %v3356
  %v3358 = vpop.f32.mrb[0].mxu0
  %v3359 = vadd.f32 %v3133, %v3358
  %v3360 = vpop.f32.mrb[0].mxu0
  %v3361 = vadd.f32 %v3137, %v3360
  %3362 = vmatprep.mubr.bf16.mxu0 %v3095
  %3363 = vmatmul.mubr.bf16.gmra.mrb[0].mxu0 %v3094
  %v3364 = vpop.f32.mrb[0].mxu0
  %v3365 = vadd.f32 %v3133, %v3364
  %v3366 = vpop.f32.mrb[0].mxu0
  %v3367 = vadd.f32 %v3137, %v3366
  %v3368 = vpop.f32.mrb[0].mxu0
  %v3369 = vadd.f32 %v3133, %v3368
  %v3370 = vpop.f32.mrb[0].mxu0
  %v3371 = vadd.f32 %v3137, %v3370
  %3372 = vdwg.mxu0
  %v3373 = vpack.c.bf16 %v3339, %v3335
  %v3374 = vpack.c.bf16 %v3341, %v3337
  %v3375 = vpack.c.bf16 %v3349, %v3345
  %v3376 = vpack.c.bf16 %v3351, %v3347
  %v3377 = vpack.c.bf16 %v3359, %v3355
  %v3378 = vpack.c.bf16 %v3361, %v3357
  %v3379 = vpack.c.bf16 %v3369, %v3365
  %v3380 = vpack.c.bf16 %v3371, %v3367
  %v3381 = vld [vmem:[%s7] sm:$0xf]
  %v3382 = vld [vmem:[%s7 + $0x4] sm:$0xf]
  %v3383 = vld [vmem:[%s7 + $0x8] sm:$0xf]
  %v3384 = vld [vmem:[%s7 + $0xc] sm:$0xf]
  %v3385 = vld [vmem:[%s7 + $0x10] sm:$0xf]
  %v3386 = vld [vmem:[%s7 + $0x14] sm:$0xf]
  %v3387 = vld [vmem:[%s7 + $0x18] sm:$0xf]
  %v3388 = vld [vmem:[%s7 + $0x1c] sm:$0xf]
  %v3389 = vld [vmem:[%s7 + $0x20] sm:$0xf]
  %v3390 = vld [vmem:[%s7 + $0x24] sm:$0xf]
  %v3391 = vld [vmem:[%s7 + $0x28] sm:$0xf]
  %v3392 = vld [vmem:[%s7 + $0x2c] sm:$0xf]
  %v3393 = vld [vmem:[%s7 + $0x30] sm:$0xf]
  %v3394 = vld [vmem:[%s7 + $0x34] sm:$0xf]
  %v3395 = vld [vmem:[%s7 + $0x38] sm:$0xf]
  %v3396 = vld [vmem:[%s7 + $0x3c] sm:$0xf]
  %v3397 = vld [vmem:[%s7 + $0x40] sm:$0xf]
  %v3398 = vld [vmem:[%s7 + $0x44] sm:$0xf]
  %v3399 = vld [vmem:[%s7 + $0x48] sm:$0xf]
  %v3400 = vld [vmem:[%s7 + $0x4c] sm:$0xf]
  %v3401 = vld [vmem:[%s7 + $0x50] sm:$0xf]
  %v3402 = vld [vmem:[%s7 + $0x54] sm:$0xf]
  %v3403 = vld [vmem:[%s7 + $0x58] sm:$0xf]
  %v3404 = vld [vmem:[%s7 + $0x5c] sm:$0xf]
  %v3405 = vld [vmem:[%s7 + $0x60] sm:$0xf]
  %v3406 = vld [vmem:[%s7 + $0x64] sm:$0xf]
  %v3407 = vld [vmem:[%s7 + $0x68] sm:$0xf]
  %v3408 = vld [vmem:[%s7 + $0x6c] sm:$0xf]
  %v3409 = vld [vmem:[%s7 + $0x70] sm:$0xf]
  %v3410 = vld [vmem:[%s7 + $0x74] sm:$0xf]
  %v3411 = vld [vmem:[%s7 + $0x78] sm:$0xf]
  %v3412 = vld [vmem:[%s7 + $0x7c] sm:$0xf]
  %v3413 = vld [vmem:[%s8] sm:$0x1]
  %v3415 = vlaneseq
  %v3416 = vshrl.u32 %v3415, 7
  %v3417 = vsub.s32 0, %v3416
  %v3418 = vrot.slane %v3413, %v3417
  %v3452 = vunpack.c.l.b16 %v3381
  %v3453 = vunpack.c.l.b16 %v3382
  %v3454 = vunpack.c.l.b16 %v3383
  %v3455 = vunpack.c.l.b16 %v3384
  %v3456 = vunpack.c.l.b16 %v3385
  %v3457 = vunpack.c.l.b16 %v3386
  %v3458 = vunpack.c.l.b16 %v3387
  %v3459 = vunpack.c.l.b16 %v3388
  %v3460 = vunpack.c.l.b16 %v3389
  %v3461 = vunpack.c.l.b16 %v3390
  %v3462 = vunpack.c.l.b16 %v3391
  %v3463 = vunpack.c.l.b16 %v3392
  %v3464 = vunpack.c.l.b16 %v3393
  %v3465 = vunpack.c.l.b16 %v3394
  %v3466 = vunpack.c.l.b16 %v3395
  %v3467 = vunpack.c.l.b16 %v3396
  %v3468 = vunpack.c.l.b16 %v3397
  %v3469 = vunpack.c.l.b16 %v3398
  %v3470 = vunpack.c.l.b16 %v3399
  %v3471 = vunpack.c.l.b16 %v3400
  %v3472 = vunpack.c.l.b16 %v3401
  %v3473 = vunpack.c.l.b16 %v3402
  %v3474 = vunpack.c.l.b16 %v3403
  %v3475 = vunpack.c.l.b16 %v3404
  %v3476 = vunpack.c.l.b16 %v3405
  %v3477 = vunpack.c.l.b16 %v3406
  %v3478 = vunpack.c.l.b16 %v3407
  %v3479 = vunpack.c.l.b16 %v3408
  %v3480 = vunpack.c.l.b16 %v3409
  %v3481 = vunpack.c.l.b16 %v3410
  %v3482 = vunpack.c.l.b16 %v3411
  %v3483 = vunpack.c.l.b16 %v3412
  %v3484 = vpack.c.b16 %v3453, %v3452
  %v3485 = vpack.c.b16 %v3455, %v3454
  %v3486 = vpack.c.b16 %v3457, %v3456
  %v3487 = vpack.c.b16 %v3459, %v3458
  %v3488 = vpack.c.b16 %v3461, %v3460
  %v3489 = vpack.c.b16 %v3463, %v3462
  %v3490 = vpack.c.b16 %v3465, %v3464
  %v3491 = vpack.c.b16 %v3467, %v3466
  %v3492 = vpack.c.b16 %v3469, %v3468
  %v3493 = vpack.c.b16 %v3471, %v3470
  %v3494 = vpack.c.b16 %v3473, %v3472
  %v3495 = vpack.c.b16 %v3475, %v3474
  %v3496 = vpack.c.b16 %v3477, %v3476
  %v3497 = vpack.c.b16 %v3479, %v3478
  %v3498 = vpack.c.b16 %v3481, %v3480
  %v3499 = vpack.c.b16 %v3483, %v3482
  %3516 = vmatprep.subr.bf16.mxu0 0
  %3517 = vmatpush1.bf16.msra.mxu0 %v3484
  %3518 = vmatprep.subr.bf16.mxu0 0
  %3519 = vmatpush1.bf16.msra.mxu0 %v3485
  %3520 = vmatprep.subr.bf16.mxu0 0
  %3521 = vmatpush1.bf16.msra.mxu0 %v3486
  %3522 = vmatprep.subr.bf16.mxu0 0
  %3523 = vmatpush1.bf16.msra.mxu0 %v3487
  %3524 = vmatprep.subr.bf16.mxu0 0
  %3525 = vmatpush1.bf16.msra.mxu0 %v3488
  %3526 = vmatprep.subr.bf16.mxu0 0
  %3527 = vmatpush1.bf16.msra.mxu0 %v3489
  %3528 = vmatprep.subr.bf16.mxu0 0
  %3529 = vmatpush1.bf16.msra.mxu0 %v3490
  %3530 = vmatprep.subr.bf16.mxu0 0
  %3531 = vmatpush1.bf16.msra.mxu0 %v3491
  %3532 = vmatprep.subr.bf16.mxu0 0
  %3533 = vmatpush1.bf16.msra.mxu0 %v3492
  %3534 = vmatprep.subr.bf16.mxu0 0
  %3535 = vmatpush1.bf16.msra.mxu0 %v3493
  %3536 = vmatprep.subr.bf16.mxu0 0
  %3537 = vmatpush1.bf16.msra.mxu0 %v3494
  %3538 = vmatprep.subr.bf16.mxu0 0
  %3539 = vmatpush1.bf16.msra.mxu0 %v3495
  %3540 = vmatprep.subr.bf16.mxu0 0
  %3541 = vmatpush1.bf16.msra.mxu0 %v3496
  %3542 = vmatprep.subr.bf16.mxu0 0
  %3543 = vmatpush1.bf16.msra.mxu0 %v3497
  %3544 = vmatprep.subr.bf16.mxu0 0
  %3545 = vmatpush1.bf16.msra.mxu0 %v3498
  %3546 = vmatprep.subr.bf16.mxu0 0
  %3547 = vmatpush1.bf16.msra.mxu0 %v3499
  %3548 = vmatprep.mubr.bf16.mxu0 %v3374
  %3549 = vmatmul.mubr.bf16.gmra.mrb[0].mxu0 %v3373
  %v3550 = vpop.f32.mrb[0].mxu0
  %v3551 = vadd.f32 %v3418, %v3550
  %v3552 = vpop.f32.mrb[0].mxu0
  %v3553 = vpop.f32.mrb[0].mxu0
  %v3554 = vadd.f32 %v3418, %v3553
  %v3555 = vpop.f32.mrb[0].mxu0
  %3556 = vmatprep.mubr.bf16.mxu0 %v3376
  %3557 = vmatmul.mubr.bf16.gmra.mrb[0].mxu0 %v3375
  %v3558 = vpop.f32.mrb[0].mxu0
  %v3559 = vadd.f32 %v3418, %v3558
  %v3560 = vpop.f32.mrb[0].mxu0
  %v3561 = vpop.f32.mrb[0].mxu0
  %v3562 = vadd.f32 %v3418, %v3561
  %v3563 = vpop.f32.mrb[0].mxu0
  %3564 = vmatprep.mubr.bf16.mxu0 %v3378
  %3565 = vmatmul.mubr.bf16.gmra.mrb[0].mxu0 %v3377
  %v3566 = vpop.f32.mrb[0].mxu0
  %v3567 = vadd.f32 %v3418, %v3566
  %v3568 = vpop.f32.mrb[0].mxu0
  %v3569 = vpop.f32.mrb[0].mxu0
  %v3570 = vadd.f32 %v3418, %v3569
  %v3571 = vpop.f32.mrb[0].mxu0
  %3572 = vmatprep.mubr.bf16.mxu0 %v3380
  %3573 = vmatmul.mubr.bf16.gmra.mrb[0].mxu0 %v3379
  %v3574 = vpop.f32.mrb[0].mxu0
  %v3575 = vadd.f32 %v3418, %v3574
  %v3576 = vpop.f32.mrb[0].mxu0
  %v3577 = vpop.f32.mrb[0].mxu0
  %v3578 = vadd.f32 %v3418, %v3577
  %v3579 = vpop.f32.mrb[0].mxu0
  %3580 = vdwg.mxu0
  %3581 = vst.msk [vmem:[%s11 + $0x40] sm:$0xff] %vm99, %v3551
  %3582 = vst.msk [vmem:[%s11 + $0x48] sm:$0xff] %vm99, %v3554
  %3583 = vst.msk [vmem:[%s11 + $0x50] sm:$0xff] %vm99, %v3559
  %3584 = vst.msk [vmem:[%s11 + $0x58] sm:$0xff] %vm99, %v3562
  %3585 = vst.msk [vmem:[%s11 + $0x60] sm:$0xff] %vm99, %v3567
  %3586 = vst.msk [vmem:[%s11 + $0x68] sm:$0xff] %vm99, %v3570
  %3587 = vst.msk [vmem:[%s11 + $0x70] sm:$0xff] %vm99, %v3575
  %3588 = vst.msk [vmem:[%s11 + $0x78] sm:$0xff] %vm99, %v3578
  // Predicated region
  $region46: #{res_core_blocks_forward.73} parent=0 // pred_check
    _
  $region47: #{res_core_blocks_forward.73} parent=0 // pred_check_branch
    %3590 = sbr.rel (0) target = $region49
  $region48: #{res_core_blocks_forward.73} parent=0 // pred_region
    _
  $region49: #{res_core_blocks_forward.73} parent=0 // pred_fallthru
    _
  // Predicated region
  $region50: #{res_core_blocks_forward.73} parent=0 // pred_check
    _
  $region51: #{res_core_blocks_forward.73} parent=0 // pred_check_branch
    %3592 = sbr.rel (0) target = $region53
  $region52: #{res_core_blocks_forward.73} parent=0 // pred_region
    _
  $region53: #{res_core_blocks_forward.73} parent=0 // pred_fallthru
    _

// kernel: res_core_blocks_forward.74
$region0: #{res_core_blocks_forward.74}
  #allocation0 [shape = 'u32[]', space=smem, size = 0x4, offset = 0x4, fixed_abs, tag = 'smem constant byte address 0x4 - core index']
  #allocation1 [shape = 'u32[144,128]{1,0:T(1,128)}', space=vmem, size = 0x12000, scoped, tag = 'internal scratch']
  %s0 = inlined_call_operand.vmem [shape: f32[2,17,256], index: 0, kind: input, shape index: {}]
  %s1 = inlined_call_operand.vmem [shape: f32[9,8,17], index: 1, kind: input, shape index: {}]
  %s2 = inlined_call_operand.vmem [shape: f32[8,1], index: 2, kind: input, shape index: {}]
  %s3 = inlined_call_operand.vmem [shape: f32[8,256], index: 3, kind: input, shape index: {}]
  %s4 = inlined_call_operand.vmem [shape: f32[8,256], index: 4, kind: input, shape index: {}]
  %s5 = inlined_call_operand.vmem [shape: f32[2,8,256], index: 5, kind: output, shape index: {}]
  %s6 = sld [smem:[#allocation0]]
  $region53: #{res_core_blocks_forward.74} parent=0
    _
  %s8 = ssub.s32 1, %s6
  %s9 = scalar_select 0, %s8, %s6
  loop: start=0, step=1, limit=4
  $region2: #{res_core_blocks_forward.74} parent=0 // loop_pre_header
    _
  $region3: #{res_core_blocks_forward.74} parent=0 // loop_header
    %s11 = sphi 0, %s15
    %p12 = scmp.ge.s32.totalorder %s11, 4
    %s21 = sphi 0, %s23
    %s24 = sphi 0, %s21
    %s25 = sphi 0, %s24
    %s41 = sphi 0, %s25
    %s45 = sphi 0, %s45
    %s47 = sphi 0, %s45
    %s48 = sphi 0, %s47
    %s62 = sphi 0, %s48
    %s66 = sphi 0, %s66
    %s68 = sphi 0, %s66
    %s69 = sphi 0, %s68
    %s83 = sphi 0, %s69
    %s87 = sphi 0, %s87
    %s89 = sphi 0, %s87
    %s90 = sphi 0, %s89
    %s104 = sphi 0, %s90
    %s108 = sphi 0, %s108
    %s110 = sphi 0, %s108
    %s111 = sphi 0, %s110
    %s125 = sphi 0, %s111
    %s131 = sphi 0, %s133
    %s134 = sphi 0, %s131
    %s135 = sphi 0, %s134
    %s151 = sphi 0, %s135
  $region4: #{res_core_blocks_forward.74} parent=0 // loop_header_branch
    %14 = sbr.rel (%p12) target = $region8
  $region5: #{res_core_blocks_forward.74} parent=0 // loop_body
    %s16 = ssub.s32 %s11, 1
    %s17 = ssub.s32 %s11, 2
    %s18 = sadd.s32 %s11, 1
    %s19 = ssub.s32 %s11, %s18
    %p20 = scmp.eq.s32.totalorder %s19, 0
    %s22 = sadd.s32 %s21, 1
    %s23 = scalar_select %p20, %s21, %s22
    %p26 = pneg %p20
    %p27 = scmp.eq.s32.totalorder %s11, 1
    %p28 = por %p26, %p27
    %p29 = scmp.ne.s32.totalorder %s21, %s24
    %p30 = scmp.eq.s32.totalorder %s11, 0
    %p31 = por %p29, %p30
    %p32 = scmp.ne.s32.totalorder %s21, %s24
    %p33 = scmp.eq.s32.totalorder %s16, 1
    %p34 = por %p32, %p33
    %p35 = scmp.ne.s32.totalorder %s24, %s25
    %p36 = scmp.eq.s32.totalorder %s16, 0
    %p37 = por %p35, %p36
    %p38 = scmp.ne.s32.totalorder %s24, %s25
    %p39 = scmp.eq.s32.totalorder %s17, 1
    %p40 = por %p38, %p39
    %p42 = scmp.ne.s32.totalorder %s25, %s41
    %p43 = scmp.eq.s32.totalorder %s17, 0
    %p44 = por %p42, %p43
    %s46 = sadd.s32 %s45, 1
    %p49 = scmp.eq.s32.totalorder %s11, 1
    %p50 = scmp.ne.s32.totalorder %s45, %s47
    %p51 = scmp.eq.s32.totalorder %s11, 0
    %p52 = por %p50, %p51
    %p53 = scmp.ne.s32.totalorder %s45, %s47
    %p54 = scmp.eq.s32.totalorder %s16, 1
    %p55 = por %p53, %p54
    %p56 = scmp.ne.s32.totalorder %s47, %s48
    %p57 = scmp.eq.s32.totalorder %s16, 0
    %p58 = por %p56, %p57
    %p59 = scmp.ne.s32.totalorder %s47, %s48
    %p60 = scmp.eq.s32.totalorder %s17, 1
    %p61 = por %p59, %p60
    %p63 = scmp.ne.s32.totalorder %s48, %s62
    %p64 = scmp.eq.s32.totalorder %s17, 0
    %p65 = por %p63, %p64
    %s67 = sadd.s32 %s66, 1
    %p70 = scmp.eq.s32.totalorder %s11, 1
    %p71 = scmp.ne.s32.totalorder %s66, %s68
    %p72 = scmp.eq.s32.totalorder %s11, 0
    %p73 = por %p71, %p72
    %p74 = scmp.ne.s32.totalorder %s66, %s68
    %p75 = scmp.eq.s32.totalorder %s16, 1
    %p76 = por %p74, %p75
    %p77 = scmp.ne.s32.totalorder %s68, %s69
    %p78 = scmp.eq.s32.totalorder %s16, 0
    %p79 = por %p77, %p78
    %p80 = scmp.ne.s32.totalorder %s68, %s69
    %p81 = scmp.eq.s32.totalorder %s17, 1
    %p82 = por %p80, %p81
    %p84 = scmp.ne.s32.totalorder %s69, %s83
    %p85 = scmp.eq.s32.totalorder %s17, 0
    %p86 = por %p84, %p85
    %s88 = sadd.s32 %s87, 1
    %p91 = scmp.eq.s32.totalorder %s11, 1
    %p92 = scmp.ne.s32.totalorder %s87, %s89
    %p93 = scmp.eq.s32.totalorder %s11, 0
    %p94 = por %p92, %p93
    %p95 = scmp.ne.s32.totalorder %s87, %s89
    %p96 = scmp.eq.s32.totalorder %s16, 1
    %p97 = por %p95, %p96
    %p98 = scmp.ne.s32.totalorder %s89, %s90
    %p99 = scmp.eq.s32.totalorder %s16, 0
    %p100 = por %p98, %p99
    %p101 = scmp.ne.s32.totalorder %s89, %s90
    %p102 = scmp.eq.s32.totalorder %s17, 1
    %p103 = por %p101, %p102
    %p105 = scmp.ne.s32.totalorder %s90, %s104
    %p106 = scmp.eq.s32.totalorder %s17, 0
    %p107 = por %p105, %p106
    %s109 = sadd.s32 %s108, 1
    %p112 = scmp.eq.s32.totalorder %s11, 1
    %p113 = scmp.ne.s32.totalorder %s108, %s110
    %p114 = scmp.eq.s32.totalorder %s11, 0
    %p115 = por %p113, %p114
    %p116 = scmp.ne.s32.totalorder %s108, %s110
    %p117 = scmp.eq.s32.totalorder %s16, 1
    %p118 = por %p116, %p117
    %p119 = scmp.ne.s32.totalorder %s110, %s111
    %p120 = scmp.eq.s32.totalorder %s16, 0
    %p121 = por %p119, %p120
    %p122 = scmp.ne.s32.totalorder %s110, %s111
    %p123 = scmp.eq.s32.totalorder %s17, 1
    %p124 = por %p122, %p123
    %p126 = scmp.ne.s32.totalorder %s111, %s125
    %p127 = scmp.eq.s32.totalorder %s17, 0
    %p128 = por %p126, %p127
    %s129 = ssub.s32 %s11, %s18
    %p130 = scmp.eq.s32.totalorder %s129, 0
    %s132 = sadd.s32 %s131, 1
    %s133 = scalar_select %p130, %s131, %s132
    %p136 = pneg %p130
    %p137 = scmp.eq.s32.totalorder %s11, 1
    %p138 = por %p136, %p137
    %p139 = scmp.ne.s32.totalorder %s131, %s134
    %p140 = scmp.eq.s32.totalorder %s11, 0
    %p141 = por %p139, %p140
    %p142 = scmp.ne.s32.totalorder %s131, %s134
    %p143 = scmp.eq.s32.totalorder %s16, 1
    %p144 = por %p142, %p143
    %p145 = scmp.ne.s32.totalorder %s134, %s135
    %p146 = scmp.eq.s32.totalorder %s16, 0
    %p147 = por %p145, %p146
    %p148 = scmp.ne.s32.totalorder %s134, %s135
    %p149 = scmp.eq.s32.totalorder %s17, 1
    %p150 = por %p148, %p149
    %p152 = scmp.ne.s32.totalorder %s135, %s151
    %p153 = scmp.eq.s32.totalorder %s17, 0
    %p154 = por %p152, %p153
    %p155 = scmp.le.s32.totalorder 1, %s11
    %p156 = scmp.lt.s32.totalorder %s11, 3
    %p157 = pnand %p155, %p156
    %p158 = pneg %p157
    // Predicated region
    $region9: #{res_core_blocks_forward.74} parent=5 // pred_check
      _
    $region10: #{res_core_blocks_forward.74} parent=5 // pred_check_branch
      %160 = sbr.rel (%p157) target = $region12
    $region11: #{res_core_blocks_forward.74} parent=5 // pred_region
      %s161 = ssub.s32 %s11, 1
      // Predicated region
      $region13: #{res_core_blocks_forward.74} parent=11 // pred_check
        %p162 = pneg %p58
      $region14: #{res_core_blocks_forward.74} parent=11 // pred_check_branch
        %164 = sbr.rel (%p162) target = $region16
      $region15: #{res_core_blocks_forward.74} parent=11 // pred_region
        _
      $region16: #{res_core_blocks_forward.74} parent=11 // pred_fallthru
        _
      // Predicated region
      $region17: #{res_core_blocks_forward.74} parent=11 // pred_check
        %p165 = pneg %p79
      $region18: #{res_core_blocks_forward.74} parent=11 // pred_check_branch
        %167 = sbr.rel (%p165) target = $region20
      $region19: #{res_core_blocks_forward.74} parent=11 // pred_region
        _
      $region20: #{res_core_blocks_forward.74} parent=11 // pred_fallthru
        _
      // Predicated region
      $region21: #{res_core_blocks_forward.74} parent=11 // pred_check
        %p168 = pneg %p100
      $region22: #{res_core_blocks_forward.74} parent=11 // pred_check_branch
        %170 = sbr.rel (%p168) target = $region24
      $region23: #{res_core_blocks_forward.74} parent=11 // pred_region
        _
      $region24: #{res_core_blocks_forward.74} parent=11 // pred_fallthru
        _
      // Predicated region
      $region25: #{res_core_blocks_forward.74} parent=11 // pred_check
        %p171 = pneg %p121
      $region26: #{res_core_blocks_forward.74} parent=11 // pred_check_branch
        %173 = sbr.rel (%p171) target = $region28
      $region27: #{res_core_blocks_forward.74} parent=11 // pred_region
        _
      $region28: #{res_core_blocks_forward.74} parent=11 // pred_fallthru
        _
    $region12: #{res_core_blocks_forward.74} parent=5 // pred_fallthru
      _
    %p174 = scmp.lt.s32.totalorder %s11, 2
    // Predicated region
    $region29: #{res_core_blocks_forward.74} parent=5 // pred_check
      %p175 = pneg %p174
    $region30: #{res_core_blocks_forward.74} parent=5 // pred_check_branch
      %177 = sbr.rel (%p175) target = $region32
    $region31: #{res_core_blocks_forward.74} parent=5 // pred_region
      // Predicated region
      $region33: #{res_core_blocks_forward.74} parent=31 // pred_check
        %p178 = pneg %p31
      $region34: #{res_core_blocks_forward.74} parent=31 // pred_check_branch
        %180 = sbr.rel (%p178) target = $region36
      $region35: #{res_core_blocks_forward.74} parent=31 // pred_region
        %p181 = scmp.lt.s32.totalorder %s11, 1
        %s182 = scalar_select %p181, %s11, 1
        %s183 = smul.addr %s182, 6
        %s184 = smul.addr %s183, 8
        %s185 = scalar_lea.vmem %s0, %s184
      $region36: #{res_core_blocks_forward.74} parent=31 // pred_fallthru
        _
    $region32: #{res_core_blocks_forward.74} parent=5 // pred_fallthru
      _
    %p186 = scmp.le.s32.totalorder 1, %s11
    %p187 = scmp.lt.s32.totalorder %s11, 3
    %p188 = pnand %p186, %p187
    %p189 = pneg %p188
    // Predicated region
    $region37: #{res_core_blocks_forward.74} parent=5 // pred_check
      _
    $region38: #{res_core_blocks_forward.74} parent=5 // pred_check_branch
      %191 = sbr.rel (%p188) target = $region40
    $region39: #{res_core_blocks_forward.74} parent=5 // pred_region
      %s192 = ssub.s32 %s11, 1
      %p193 = scmp.lt.s32.totalorder %s16, 1
      %s194 = scalar_select %p193, %s16, 1
      %s195 = smul.addr %s194, 6
      %s196 = smul.addr %s195, 8
      %s197 = scalar_lea.vmem %s0, %s196
      %p198 = pneg %p37
      %p199 = pneg %p34
      %p200 = pneg %p58
      %p201 = pneg %p55
      %p202 = pneg %p79
      %p203 = pneg %p76
      %p204 = pneg %p100
      %p205 = pneg %p97
      %p206 = pneg %p121
      %p207 = pneg %p118
      %p208 = pneg %p147
      %p209 = pneg %p144
      %p210 = scmp.lt.s32.totalorder %s16, 1
      %s211 = scalar_select %p210, %s16, 1
      %s212 = smul.addr %s211, 2
      %s213 = smul.addr %s212, 8
      %s214 = scalar_lea.vmem %s5, %s213
      %p215 = scmp.lt.s32.totalorder %s16, 1
      %s216 = scalar_select %p215, %s16, 1
      %s217 = smul.addr %s216, 6
      %s218 = smul.addr %s217, 8
      %s219 = scalar_lea.vmem %s0, %s218
      %p220 = scmp.lt.s32.totalorder %s16, 1
      %s221 = scalar_select %p220, %s16, 1
      %s222 = smul.addr %s221, 2
      %s223 = smul.addr %s222, 8
      %s224 = scalar_lea.vmem %s5, %s223
      %v225 = vld [vmem:[%s219] sm:$0xff]
      %v226 = vld [vmem:[%s219 + $0x8] sm:$0xff]
      %v227 = vld [vmem:[%s219 + $0x10] sm:$0xff]
      %v228 = vld [vmem:[%s219 + $0x18] sm:$0xff]
      %v229 = vld [vmem:[%s219 + $0x20] sm:$0x1]
      %v230 = vld [vmem:[%s219 + $0x28] sm:$0x1]
      %v231 = vlaneseq
      %v232 = vand.u32 %v231, 127
      %v233 = vadd.s32 %v232, 128
      %v234 = vand.u32 %v232, 15
      %v235 = vand.u32 %v233, 15
      %236 = vrot.lane.b32.xlu0 %v225, 17
      %v237 = vpop.permute.xlu0 %236
      %238 = vrot.lane.b32.xlu0 %v227, 17
      %v239 = vpop.permute.xlu0 %238
      %240 = vrot.lane.b32.xlu0 %v229, 17
      %v241 = vpop.permute.xlu0 %240
      %242 = vrot.lane.b32.xlu0 %v226, 17
      %v243 = vpop.permute.xlu0 %242
      %244 = vrot.lane.b32.xlu0 %v228, 17
      %v245 = vpop.permute.xlu0 %244
      %246 = vrot.lane.b32.xlu0 %v230, 17
      %v247 = vpop.permute.xlu0 %246
      %vm248 = vcmp.lt.s32.totalorder %v232, 17
      %v249 = vsel %vm248, %v237, %v243
      %v250 = vsel %vm248, %v239, %v245
      %v251 = vsel %vm248, %v241, %v247
      %v252 = vsel %vm248, %v243, %v237
      %v253 = vsel %vm248, %v245, %v239
      %v254 = vsel %vm248, %v247, %v241
      %vm255 = vcmp.ge.s32.totalorder %v232, 16
      %vm256 = vcmp.ge.s32.totalorder %v233, 16
      %vm257 = vcmp.ge.s32.totalorder %v234, 1
      %vm258 = vcmp.ge.s32.totalorder %v235, 1
      %vm259 = vmand %vm255, %vm257
      %vm260 = vmand %vm256, %vm258
      %v261 = vsel %vm259, 1.0, 0.0
      %v262 = vsel %vm260, 1.0, 0.0
      %v263 = vmul.f32 %v252, %v261
      %v264 = vmul.f32 %v249, %v262
      %v265 = vmul.f32 %v253, %v261
      %v266 = vmul.f32 %v250, %v262
      %v267 = vmul.f32 %v254, %v261
      %v268 = vmul.f32 %v251, %v262
      %v269 = vld [vmem:[%s1] sm:$0xff]
      %270 = vrot.lane.b32.xlu0 %v225, 16
      %v271 = vpop.permute.xlu0 %270
      %272 = vrot.lane.b32.xlu0 %v227, 16
      %v273 = vpop.permute.xlu0 %272
      %274 = vrot.lane.b32.xlu0 %v229, 16
      %v275 = vpop.permute.xlu0 %274
      %276 = vrot.lane.b32.xlu0 %v226, 16
      %v277 = vpop.permute.xlu0 %276
      %278 = vrot.lane.b32.xlu0 %v228, 16
      %v279 = vpop.permute.xlu0 %278
      %280 = vrot.lane.b32.xlu0 %v230, 16
      %v281 = vpop.permute.xlu0 %280
      %vm282 = vcmp.lt.s32.totalorder %v232, 16
      %v283 = vsel %vm282, %v271, %v277
      %v284 = vsel %vm282, %v273, %v279
      %v285 = vsel %vm282, %v275, %v281
      %v286 = vsel %vm282, %v277, %v271
      %v287 = vsel %vm282, %v279, %v273
      %v288 = vsel %vm282, %v281, %v275
      %v289 = vsel %vm255, 1.0, 0.0
      %v290 = vsel %vm256, 1.0, 0.0
      %v291 = vmul.f32 %v286, %v289
      %v292 = vmul.f32 %v283, %v290
      %v293 = vmul.f32 %v287, %v289
      %v294 = vmul.f32 %v284, %v290
      %v295 = vmul.f32 %v288, %v289
      %v296 = vmul.f32 %v285, %v290
      %s297 = scalar_lea.vmem %s1, 8
      %v298 = vld [vmem:[%s297] sm:$0xff]
      %vm299 = vcmask 138240
      %v301 = vsel %vm299, %v298, 0
      %vm303 = vcmask 1040384
      %v305 = vsel %vm303, %v295, 0
      %v308 = vsel %vm303, %v296, 0
      %310 = vmatprep.subr.mxu0 %v292
      %311 = vmatpush1.msra.mxu0 %v291
      %312 = vmatprep.subr.mxu0 %v294
      %313 = vmatpush1.msra.mxu0 %v293
      %314 = vmatprep.subr.mxu0 %v308
      %315 = vmatpush1.msra.mxu0 %v305
      %316 = vmatprep.subr.mxu0 0.0
      %317 = vmatpush1.msra.mxu0 0.0
      %318 = vmatprep.subr.mxu0 0.0
      %319 = vmatpush1.msra.mxu0 0.0
      %320 = vmatprep.subr.mxu0 0.0
      %321 = vmatpush1.msra.mxu0 0.0
      %322 = vmatprep.subr.mxu0 0.0
      %323 = vmatpush1.msra.mxu0 0.0
      %324 = vmatprep.subr.mxu0 0.0
      %325 = vmatpush1.msra.mxu0 0.0
      %326 = vmatprep.subr.mxu0 0.0
      %327 = vmatpush1.msra.mxu0 0.0
      %328 = vmatprep.subr.mxu0 0.0
      %329 = vmatpush1.msra.mxu0 0.0
      %330 = vmatprep.subr.mxu0 0.0
      %331 = vmatpush1.msra.mxu0 0.0
      %332 = vmatprep.subr.mxu0 0.0
      %333 = vmatpush1.msra.mxu0 0.0
      %334 = vmatprep.subr.mxu0 0.0
      %335 = vmatpush1.msra.mxu0 0.0
      %336 = vmatprep.subr.mxu0 0.0
      %337 = vmatpush1.msra.mxu0 0.0
      %338 = vmatprep.subr.mxu0 0.0
      %339 = vmatpush1.msra.mxu0 0.0
      %340 = vmatprep.subr.mxu0 0.0
      %341 = vmatpush1.msra.mxu0 0.0
      %342 = vmatprep.subr.mxu0 0.0
      %343 = vmatpush1.msra.mxu0 0.0
      %344 = vmatprep.subr.mxu0 0.0
      %345 = vmatpush1.msra.mxu0 0.0
      %346 = vmatprep.subr.mxu0 0.0
      %347 = vmatpush1.msra.mxu0 0.0
      %348 = vmatprep.subr.mxu0 0.0
      %349 = vmatpush1.msra.mxu0 0.0
      %350 = vmatprep.subr.mxu0 0.0
      %351 = vmatpush1.msra.mxu0 0.0
      %352 = vmatprep.subr.mxu0 0.0
      %353 = vmatpush1.msra.mxu0 0.0
      %354 = vmatprep.subr.mxu0 0.0
      %355 = vmatpush1.msra.mxu0 0.0
      %356 = vmatprep.subr.mxu0 0.0
      %357 = vmatpush1.msra.mxu0 0.0
      %358 = vmatprep.subr.mxu0 0.0
      %359 = vmatpush1.msra.mxu0 0.0
      %360 = vmatprep.subr.mxu0 0.0
      %361 = vmatpush1.msra.mxu0 0.0
      %362 = vmatprep.subr.mxu0 0.0
      %363 = vmatpush1.msra.mxu0 0.0
      %364 = vmatprep.subr.mxu0 0.0
      %365 = vmatpush1.msra.mxu0 0.0
      %366 = vmatprep.subr.mxu0 0.0
      %367 = vmatpush1.msra.mxu0 0.0
      %368 = vmatprep.subr.mxu0 0.0
      %369 = vmatpush1.msra.mxu0 0.0
      %370 = vmatprep.subr.mxu0 0.0
      %371 = vmatpush1.msra.mxu0 0.0
      %372 = vmatprep.subr.mxu0 0.0
      %373 = vmatpush1.msra.mxu0 0.0
      %374 = vmatprep.mubr.f32.mxu0 0.0
      %375 = vmatmul.mubr.f32.gmra.mrb[0].mxu0 %v301
      %v376 = vpop.f32.mrb[0].mxu0
      %v377 = vadd.f32 0.0, %v376
      %v378 = vpop.f32.mrb[0].mxu0
      %v379 = vadd.f32 0.0, %v378
      %380 = vdwg.mxu0
      %v382 = vsel %vm299, %v269, 0
      %v385 = vsel %vm303, %v267, 0
      %v388 = vsel %vm303, %v268, 0
      %390 = vmatprep.subr.mxu0 %v264
      %391 = vmatpush1.msra.mxu0 %v263
      %392 = vmatprep.subr.mxu0 %v266
      %393 = vmatpush1.msra.mxu0 %v265
      %394 = vmatprep.subr.mxu0 %v388
      %395 = vmatpush1.msra.mxu0 %v385
      %396 = vmatprep.subr.mxu0 0.0
      %397 = vmatpush1.msra.mxu0 0.0
      %398 = vmatprep.subr.mxu0 0.0
      %399 = vmatpush1.msra.mxu0 0.0
      %400 = vmatprep.subr.mxu0 0.0
      %401 = vmatpush1.msra.mxu0 0.0
      %402 = vmatprep.subr.mxu0 0.0
      %403 = vmatpush1.msra.mxu0 0.0
      %404 = vmatprep.subr.mxu0 0.0
      %405 = vmatpush1.msra.mxu0 0.0
      %406 = vmatprep.subr.mxu0 0.0
      %407 = vmatpush1.msra.mxu0 0.0
      %408 = vmatprep.subr.mxu0 0.0
      %409 = vmatpush1.msra.mxu0 0.0
      %410 = vmatprep.subr.mxu0 0.0
      %411 = vmatpush1.msra.mxu0 0.0
      %412 = vmatprep.subr.mxu0 0.0
      %413 = vmatpush1.msra.mxu0 0.0
      %414 = vmatprep.subr.mxu0 0.0
      %415 = vmatpush1.msra.mxu0 0.0
      %416 = vmatprep.subr.mxu0 0.0
      %417 = vmatpush1.msra.mxu0 0.0
      %418 = vmatprep.subr.mxu0 0.0
      %419 = vmatpush1.msra.mxu0 0.0
      %420 = vmatprep.subr.mxu0 0.0
      %421 = vmatpush1.msra.mxu0 0.0
      %422 = vmatprep.subr.mxu0 0.0
      %423 = vmatpush1.msra.mxu0 0.0
      %424 = vmatprep.subr.mxu0 0.0
      %425 = vmatpush1.msra.mxu0 0.0
      %426 = vmatprep.subr.mxu0 0.0
      %427 = vmatpush1.msra.mxu0 0.0
      %428 = vmatprep.subr.mxu0 0.0
      %429 = vmatpush1.msra.mxu0 0.0
      %430 = vmatprep.subr.mxu0 0.0
      %431 = vmatpush1.msra.mxu0 0.0
      %432 = vmatprep.subr.mxu0 0.0
      %433 = vmatpush1.msra.mxu0 0.0
      %434 = vmatprep.subr.mxu0 0.0
      %435 = vmatpush1.msra.mxu0 0.0
      %436 = vmatprep.subr.mxu0 0.0
      %437 = vmatpush1.msra.mxu0 0.0
      %438 = vmatprep.subr.mxu0 0.0
      %439 = vmatpush1.msra.mxu0 0.0
      %440 = vmatprep.subr.mxu0 0.0
      %441 = vmatpush1.msra.mxu0 0.0
      %442 = vmatprep.subr.mxu0 0.0
      %443 = vmatpush1.msra.mxu0 0.0
      %444 = vmatprep.subr.mxu0 0.0
      %445 = vmatpush1.msra.mxu0 0.0
      %446 = vmatprep.subr.mxu0 0.0
      %447 = vmatpush1.msra.mxu0 0.0
      %448 = vmatprep.subr.mxu0 0.0
      %449 = vmatpush1.msra.mxu0 0.0
      %450 = vmatprep.subr.mxu0 0.0
      %451 = vmatpush1.msra.mxu0 0.0
      %452 = vmatprep.subr.mxu0 0.0
      %453 = vmatpush1.msra.mxu0 0.0
      %454 = vmatprep.mubr.f32.mxu0 0.0
      %455 = vmatmul.mubr.f32.gmra.mrb[0].mxu0 %v382
      %v456 = vpop.f32.mrb[0].mxu0
      %v457 = vadd.f32 %v377, %v456
      %v458 = vpop.f32.mrb[0].mxu0
      %v459 = vadd.f32 %v379, %v458
      %460 = vdwg.mxu0
      %461 = vrot.lane.b32.xlu0 %v225, 15
      %v462 = vpop.permute.xlu0 %461
      %463 = vrot.lane.b32.xlu0 %v227, 15
      %v464 = vpop.permute.xlu0 %463
      %465 = vrot.lane.b32.xlu0 %v229, 15
      %v466 = vpop.permute.xlu0 %465
      %467 = vrot.lane.b32.xlu0 %v226, 15
      %v468 = vpop.permute.xlu0 %467
      %469 = vrot.lane.b32.xlu0 %v228, 15
      %v470 = vpop.permute.xlu0 %469
      %471 = vrot.lane.b32.xlu0 %v230, 15
      %v472 = vpop.permute.xlu0 %471
      %vm473 = vcmp.lt.s32.totalorder %v232, 15
      %v474 = vsel %vm473, %v462, %v468
      %v475 = vsel %vm473, %v464, %v470
      %v476 = vsel %vm473, %v466, %v472
      %v477 = vsel %vm473, %v468, %v462
      %v478 = vsel %vm473, %v470, %v464
      %v479 = vsel %vm473, %v472, %v466
      %vm480 = vcmp.lt.s32.totalorder %v234, 15
      %vm481 = vcmp.lt.s32.totalorder %v235, 15
      %vm482 = vmand %vm255, %vm480
      %vm483 = vmand %vm256, %vm481
      %v484 = vsel %vm482, 1.0, 0.0
      %v485 = vsel %vm483, 1.0, 0.0
      %v486 = vmul.f32 %v477, %v484
      %v487 = vmul.f32 %v474, %v485
      %v488 = vmul.f32 %v478, %v484
      %v489 = vmul.f32 %v475, %v485
      %v490 = vmul.f32 %v479, %v484
      %v491 = vmul.f32 %v476, %v485
      %s492 = scalar_lea.vmem %s1, 16
      %v493 = vld [vmem:[%s492] sm:$0xff]
      %v495 = vsel %vm299, %v493, 0
      %v498 = vsel %vm303, %v490, 0
      %v501 = vsel %vm303, %v491, 0
      %503 = vmatprep.subr.mxu0 %v487
      %504 = vmatpush1.msra.mxu0 %v486
      %505 = vmatprep.subr.mxu0 %v489
      %506 = vmatpush1.msra.mxu0 %v488
      %507 = vmatprep.subr.mxu0 %v501
      %508 = vmatpush1.msra.mxu0 %v498
      %509 = vmatprep.subr.mxu0 0.0
      %510 = vmatpush1.msra.mxu0 0.0
      %511 = vmatprep.subr.mxu0 0.0
      %512 = vmatpush1.msra.mxu0 0.0
      %513 = vmatprep.subr.mxu0 0.0
      %514 = vmatpush1.msra.mxu0 0.0
      %515 = vmatprep.subr.mxu0 0.0
      %516 = vmatpush1.msra.mxu0 0.0
      %517 = vmatprep.subr.mxu0 0.0
      %518 = vmatpush1.msra.mxu0 0.0
      %519 = vmatprep.subr.mxu0 0.0
      %520 = vmatpush1.msra.mxu0 0.0
      %521 = vmatprep.subr.mxu0 0.0
      %522 = vmatpush1.msra.mxu0 0.0
      %523 = vmatprep.subr.mxu0 0.0
      %524 = vmatpush1.msra.mxu0 0.0
      %525 = vmatprep.subr.mxu0 0.0
      %526 = vmatpush1.msra.mxu0 0.0
      %527 = vmatprep.subr.mxu0 0.0
      %528 = vmatpush1.msra.mxu0 0.0
      %529 = vmatprep.subr.mxu0 0.0
      %530 = vmatpush1.msra.mxu0 0.0
      %531 = vmatprep.subr.mxu0 0.0
      %532 = vmatpush1.msra.mxu0 0.0
      %533 = vmatprep.subr.mxu0 0.0
      %534 = vmatpush1.msra.mxu0 0.0
      %535 = vmatprep.subr.mxu0 0.0
      %536 = vmatpush1.msra.mxu0 0.0
      %537 = vmatprep.subr.mxu0 0.0
      %538 = vmatpush1.msra.mxu0 0.0
      %539 = vmatprep.subr.mxu0 0.0
      %540 = vmatpush1.msra.mxu0 0.0
      %541 = vmatprep.subr.mxu0 0.0
      %542 = vmatpush1.msra.mxu0 0.0
      %543 = vmatprep.subr.mxu0 0.0
      %544 = vmatpush1.msra.mxu0 0.0
      %545 = vmatprep.subr.mxu0 0.0
      %546 = vmatpush1.msra.mxu0 0.0
      %547 = vmatprep.subr.mxu0 0.0
      %548 = vmatpush1.msra.mxu0 0.0
      %549 = vmatprep.subr.mxu0 0.0
      %550 = vmatpush1.msra.mxu0 0.0
      %551 = vmatprep.subr.mxu0 0.0
      %552 = vmatpush1.msra.mxu0 0.0
      %553 = vmatprep.subr.mxu0 0.0
      %554 = vmatpush1.msra.mxu0 0.0
      %555 = vmatprep.subr.mxu0 0.0
      %556 = vmatpush1.msra.mxu0 0.0
      %557 = vmatprep.subr.mxu0 0.0
      %558 = vmatpush1.msra.mxu0 0.0
      %559 = vmatprep.subr.mxu0 0.0
      %560 = vmatpush1.msra.mxu0 0.0
      %561 = vmatprep.subr.mxu0 0.0
      %562 = vmatpush1.msra.mxu0 0.0
      %563 = vmatprep.subr.mxu0 0.0
      %564 = vmatpush1.msra.mxu0 0.0
      %565 = vmatprep.subr.mxu0 0.0
      %566 = vmatpush1.msra.mxu0 0.0
      %567 = vmatprep.mubr.f32.mxu0 0.0
      %568 = vmatmul.mubr.f32.gmra.mrb[0].mxu0 %v495
      %v569 = vpop.f32.mrb[0].mxu0
      %v570 = vadd.f32 0.0, %v569
      %v571 = vpop.f32.mrb[0].mxu0
      %v572 = vadd.f32 0.0, %v571
      %573 = vdwg.mxu0
      %v574 = vadd.f32 %v457, %v570
      %v575 = vadd.f32 %v459, %v572
      %576 = vrot.lane.b32.xlu0 %v225, 1
      %v577 = vpop.permute.xlu0 %576
      %578 = vrot.lane.b32.xlu0 %v227, 1
      %v579 = vpop.permute.xlu0 %578
      %580 = vrot.lane.b32.xlu0 %v229, 1
      %v581 = vpop.permute.xlu0 %580
      %582 = vrot.lane.b32.xlu0 %v226, 1
      %v583 = vpop.permute.xlu0 %582
      %584 = vrot.lane.b32.xlu0 %v228, 1
      %v585 = vpop.permute.xlu0 %584
      %586 = vrot.lane.b32.xlu0 %v230, 1
      %v587 = vpop.permute.xlu0 %586
      %vm588 = vcmp.lt.s32.totalorder %v232, 1
      %v589 = vsel %vm588, %v577, %v583
      %v590 = vsel %vm588, %v579, %v585
      %v591 = vsel %vm588, %v581, %v587
      %v592 = vsel %vm588, %v583, %v577
      %v593 = vsel %vm588, %v585, %v579
      %v594 = vsel %vm588, %v587, %v581
      %v595 = vsel %vm257, 1.0, 0.0
      %v596 = vsel %vm258, 1.0, 0.0
      %v597 = vmul.f32 %v592, %v595
      %v598 = vmul.f32 %v589, %v596
      %v599 = vmul.f32 %v593, %v595
      %v600 = vmul.f32 %v590, %v596
      %v601 = vmul.f32 %v594, %v595
      %v602 = vmul.f32 %v591, %v596
      %s603 = scalar_lea.vmem %s1, 24
      %v604 = vld [vmem:[%s603] sm:$0xff]
      %v606 = vsel %vm299, %v604, 0
      %v609 = vsel %vm303, %v601, 0
      %v612 = vsel %vm303, %v602, 0
      %614 = vmatprep.subr.mxu0 %v598
      %615 = vmatpush1.msra.mxu0 %v597
      %616 = vmatprep.subr.mxu0 %v600
      %617 = vmatpush1.msra.mxu0 %v599
      %618 = vmatprep.subr.mxu0 %v612
      %619 = vmatpush1.msra.mxu0 %v609
      %620 = vmatprep.subr.mxu0 0.0
      %621 = vmatpush1.msra.mxu0 0.0
      %622 = vmatprep.subr.mxu0 0.0
      %623 = vmatpush1.msra.mxu0 0.0
      %624 = vmatprep.subr.mxu0 0.0
      %625 = vmatpush1.msra.mxu0 0.0
      %626 = vmatprep.subr.mxu0 0.0
      %627 = vmatpush1.msra.mxu0 0.0
      %628 = vmatprep.subr.mxu0 0.0
      %629 = vmatpush1.msra.mxu0 0.0
      %630 = vmatprep.subr.mxu0 0.0
      %631 = vmatpush1.msra.mxu0 0.0
      %632 = vmatprep.subr.mxu0 0.0
      %633 = vmatpush1.msra.mxu0 0.0
      %634 = vmatprep.subr.mxu0 0.0
      %635 = vmatpush1.msra.mxu0 0.0
      %636 = vmatprep.subr.mxu0 0.0
      %637 = vmatpush1.msra.mxu0 0.0
      %638 = vmatprep.subr.mxu0 0.0
      %639 = vmatpush1.msra.mxu0 0.0
      %640 = vmatprep.subr.mxu0 0.0
      %641 = vmatpush1.msra.mxu0 0.0
      %642 = vmatprep.subr.mxu0 0.0
      %643 = vmatpush1.msra.mxu0 0.0
      %644 = vmatprep.subr.mxu0 0.0
      %645 = vmatpush1.msra.mxu0 0.0
      %646 = vmatprep.subr.mxu0 0.0
      %647 = vmatpush1.msra.mxu0 0.0
      %648 = vmatprep.subr.mxu0 0.0
      %649 = vmatpush1.msra.mxu0 0.0
      %650 = vmatprep.subr.mxu0 0.0
      %651 = vmatpush1.msra.mxu0 0.0
      %652 = vmatprep.subr.mxu0 0.0
      %653 = vmatpush1.msra.mxu0 0.0
      %654 = vmatprep.subr.mxu0 0.0
      %655 = vmatpush1.msra.mxu0 0.0
      %656 = vmatprep.subr.mxu0 0.0
      %657 = vmatpush1.msra.mxu0 0.0
      %658 = vmatprep.subr.mxu0 0.0
      %659 = vmatpush1.msra.mxu0 0.0
      %660 = vmatprep.subr.mxu0 0.0
      %661 = vmatpush1.msra.mxu0 0.0
      %662 = vmatprep.subr.mxu0 0.0
      %663 = vmatpush1.msra.mxu0 0.0
      %664 = vmatprep.subr.mxu0 0.0
      %665 = vmatpush1.msra.mxu0 0.0
      %666 = vmatprep.subr.mxu0 0.0
      %667 = vmatpush1.msra.mxu0 0.0
      %668 = vmatprep.subr.mxu0 0.0
      %669 = vmatpush1.msra.mxu0 0.0
      %670 = vmatprep.subr.mxu0 0.0
      %671 = vmatpush1.msra.mxu0 0.0
      %672 = vmatprep.subr.mxu0 0.0
      %673 = vmatpush1.msra.mxu0 0.0
      %674 = vmatprep.subr.mxu0 0.0
      %675 = vmatpush1.msra.mxu0 0.0
      %676 = vmatprep.subr.mxu0 0.0
      %677 = vmatpush1.msra.mxu0 0.0
      %678 = vmatprep.mubr.f32.mxu0 0.0
      %679 = vmatmul.mubr.f32.gmra.mrb[0].mxu0 %v606
      %v680 = vpop.f32.mrb[0].mxu0
      %v681 = vadd.f32 0.0, %v680
      %v682 = vpop.f32.mrb[0].mxu0
      %v683 = vadd.f32 0.0, %v682
      %684 = vdwg.mxu0
      %v685 = vadd.f32 %v574, %v681
      %v686 = vadd.f32 %v575, %v683
      %s687 = scalar_lea.vmem %s1, 32
      %v688 = vld [vmem:[%s687] sm:$0xff]
      %v690 = vsel %vm299, %v688, 0
      %v693 = vsel %vm303, %v229, 0
      %v696 = vsel %vm303, %v230, 0
      %698 = vmatprep.subr.mxu0 %v226
      %699 = vmatpush1.msra.mxu0 %v225
      %700 = vmatprep.subr.mxu0 %v228
      %701 = vmatpush1.msra.mxu0 %v227
      %702 = vmatprep.subr.mxu0 %v696
      %703 = vmatpush1.msra.mxu0 %v693
      %704 = vmatprep.subr.mxu0 0.0
      %705 = vmatpush1.msra.mxu0 0.0
      %706 = vmatprep.subr.mxu0 0.0
      %707 = vmatpush1.msra.mxu0 0.0
      %708 = vmatprep.subr.mxu0 0.0
      %709 = vmatpush1.msra.mxu0 0.0
      %710 = vmatprep.subr.mxu0 0.0
      %711 = vmatpush1.msra.mxu0 0.0
      %712 = vmatprep.subr.mxu0 0.0
      %713 = vmatpush1.msra.mxu0 0.0
      %714 = vmatprep.subr.mxu0 0.0
      %715 = vmatpush1.msra.mxu0 0.0
      %716 = vmatprep.subr.mxu0 0.0
      %717 = vmatpush1.msra.mxu0 0.0
      %718 = vmatprep.subr.mxu0 0.0
      %719 = vmatpush1.msra.mxu0 0.0
      %720 = vmatprep.subr.mxu0 0.0
      %721 = vmatpush1.msra.mxu0 0.0
      %722 = vmatprep.subr.mxu0 0.0
      %723 = vmatpush1.msra.mxu0 0.0
      %724 = vmatprep.subr.mxu0 0.0
      %725 = vmatpush1.msra.mxu0 0.0
      %726 = vmatprep.subr.mxu0 0.0
      %727 = vmatpush1.msra.mxu0 0.0
      %728 = vmatprep.subr.mxu0 0.0
      %729 = vmatpush1.msra.mxu0 0.0
      %730 = vmatprep.subr.mxu0 0.0
      %731 = vmatpush1.msra.mxu0 0.0
      %732 = vmatprep.subr.mxu0 0.0
      %733 = vmatpush1.msra.mxu0 0.0
      %734 = vmatprep.subr.mxu0 0.0
      %735 = vmatpush1.msra.mxu0 0.0
      %736 = vmatprep.subr.mxu0 0.0
      %737 = vmatpush1.msra.mxu0 0.0
      %738 = vmatprep.subr.mxu0 0.0
      %739 = vmatpush1.msra.mxu0 0.0
      %740 = vmatprep.subr.mxu0 0.0
      %741 = vmatpush1.msra.mxu0 0.0
      %742 = vmatprep.subr.mxu0 0.0
      %743 = vmatpush1.msra.mxu0 0.0
      %744 = vmatprep.subr.mxu0 0.0
      %745 = vmatpush1.msra.mxu0 0.0
      %746 = vmatprep.subr.mxu0 0.0
      %747 = vmatpush1.msra.mxu0 0.0
      %748 = vmatprep.subr.mxu0 0.0
      %749 = vmatpush1.msra.mxu0 0.0
      %750 = vmatprep.subr.mxu0 0.0
      %751 = vmatpush1.msra.mxu0 0.0
      %752 = vmatprep.subr.mxu0 0.0
      %753 = vmatpush1.msra.mxu0 0.0
      %754 = vmatprep.subr.mxu0 0.0
      %755 = vmatpush1.msra.mxu0 0.0
      %756 = vmatprep.subr.mxu0 0.0
      %757 = vmatpush1.msra.mxu0 0.0
      %758 = vmatprep.subr.mxu0 0.0
      %759 = vmatpush1.msra.mxu0 0.0
      %760 = vmatprep.subr.mxu0 0.0
      %761 = vmatpush1.msra.mxu0 0.0
      %762 = vmatprep.mubr.f32.mxu0 0.0
      %763 = vmatmul.mubr.f32.gmra.mrb[0].mxu0 %v690
      %v764 = vpop.f32.mrb[0].mxu0
      %v765 = vadd.f32 0.0, %v764
      %v766 = vpop.f32.mrb[0].mxu0
      %v767 = vadd.f32 0.0, %v766
      %768 = vdwg.mxu0
      %v769 = vadd.f32 %v685, %v765
      %v770 = vadd.f32 %v686, %v767
      %771 = vrot.lane.b32.xlu0 %v225, 127
      %v772 = vpop.permute.xlu0 %771
      %773 = vrot.lane.b32.xlu0 %v227, 127
      %v774 = vpop.permute.xlu0 %773
      %775 = vrot.lane.b32.xlu0 %v229, 127
      %v776 = vpop.permute.xlu0 %775
      %777 = vrot.lane.b32.xlu0 %v226, 127
      %v778 = vpop.permute.xlu0 %777
      %779 = vrot.lane.b32.xlu0 %v228, 127
      %v780 = vpop.permute.xlu0 %779
      %781 = vrot.lane.b32.xlu0 %v230, 127
      %v782 = vpop.permute.xlu0 %781
      %vm783 = vcmp.lt.s32.totalorder %v232, 127
      %v784 = vsel %vm783, %v772, %v778
      %v785 = vsel %vm783, %v774, %v780
      %v786 = vsel %vm783, %v776, %v782
      %v787 = vsel %vm783, %v778, %v772
      %v788 = vsel %vm783, %v780, %v774
      %v789 = vsel %vm783, %v782, %v776
      %v790 = vsel %vm480, 1.0, 0.0
      %v791 = vsel %vm481, 1.0, 0.0
      %v792 = vmul.f32 %v784, %v790
      %v793 = vmul.f32 %v787, %v791
      %v794 = vmul.f32 %v785, %v790
      %v795 = vmul.f32 %v788, %v791
      %v796 = vmul.f32 %v786, %v790
      %v797 = vmul.f32 %v789, %v791
      %s798 = scalar_lea.vmem %s1, 40
      %v799 = vld [vmem:[%s798] sm:$0xff]
      %v801 = vsel %vm299, %v799, 0
      %v804 = vsel %vm303, %v796, 0
      %v807 = vsel %vm303, %v797, 0
      %809 = vmatprep.subr.mxu0 %v793
      %810 = vmatpush1.msra.mxu0 %v792
      %811 = vmatprep.subr.mxu0 %v795
      %812 = vmatpush1.msra.mxu0 %v794
      %813 = vmatprep.subr.mxu0 %v807
      %814 = vmatpush1.msra.mxu0 %v804
      %815 = vmatprep.subr.mxu0 0.0
      %816 = vmatpush1.msra.mxu0 0.0
      %817 = vmatprep.subr.mxu0 0.0
      %818 = vmatpush1.msra.mxu0 0.0
      %819 = vmatprep.subr.mxu0 0.0
      %820 = vmatpush1.msra.mxu0 0.0
      %821 = vmatprep.subr.mxu0 0.0
      %822 = vmatpush1.msra.mxu0 0.0
      %823 = vmatprep.subr.mxu0 0.0
      %824 = vmatpush1.msra.mxu0 0.0
      %825 = vmatprep.subr.mxu0 0.0
      %826 = vmatpush1.msra.mxu0 0.0
      %827 = vmatprep.subr.mxu0 0.0
      %828 = vmatpush1.msra.mxu0 0.0
      %829 = vmatprep.subr.mxu0 0.0
      %830 = vmatpush1.msra.mxu0 0.0
      %831 = vmatprep.subr.mxu0 0.0
      %832 = vmatpush1.msra.mxu0 0.0
      %833 = vmatprep.subr.mxu0 0.0
      %834 = vmatpush1.msra.mxu0 0.0
      %835 = vmatprep.subr.mxu0 0.0
      %836 = vmatpush1.msra.mxu0 0.0
      %837 = vmatprep.subr.mxu0 0.0
      %838 = vmatpush1.msra.mxu0 0.0
      %839 = vmatprep.subr.mxu0 0.0
      %840 = vmatpush1.msra.mxu0 0.0
      %841 = vmatprep.subr.mxu0 0.0
      %842 = vmatpush1.msra.mxu0 0.0
      %843 = vmatprep.subr.mxu0 0.0
      %844 = vmatpush1.msra.mxu0 0.0
      %845 = vmatprep.subr.mxu0 0.0
      %846 = vmatpush1.msra.mxu0 0.0
      %847 = vmatprep.subr.mxu0 0.0
      %848 = vmatpush1.msra.mxu0 0.0
      %849 = vmatprep.subr.mxu0 0.0
      %850 = vmatpush1.msra.mxu0 0.0
      %851 = vmatprep.subr.mxu0 0.0
      %852 = vmatpush1.msra.mxu0 0.0
      %853 = vmatprep.subr.mxu0 0.0
      %854 = vmatpush1.msra.mxu0 0.0
      %855 = vmatprep.subr.mxu0 0.0
      %856 = vmatpush1.msra.mxu0 0.0
      %857 = vmatprep.subr.mxu0 0.0
      %858 = vmatpush1.msra.mxu0 0.0
      %859 = vmatprep.subr.mxu0 0.0
      %860 = vmatpush1.msra.mxu0 0.0
      %861 = vmatprep.subr.mxu0 0.0
      %862 = vmatpush1.msra.mxu0 0.0
      %863 = vmatprep.subr.mxu0 0.0
      %864 = vmatpush1.msra.mxu0 0.0
      %865 = vmatprep.subr.mxu0 0.0
      %866 = vmatpush1.msra.mxu0 0.0
      %867 = vmatprep.subr.mxu0 0.0
      %868 = vmatpush1.msra.mxu0 0.0
      %869 = vmatprep.subr.mxu0 0.0
      %870 = vmatpush1.msra.mxu0 0.0
      %871 = vmatprep.subr.mxu0 0.0
      %872 = vmatpush1.msra.mxu0 0.0
      %873 = vmatprep.mubr.f32.mxu0 0.0
      %874 = vmatmul.mubr.f32.gmra.mrb[0].mxu0 %v801
      %v875 = vpop.f32.mrb[0].mxu0
      %v876 = vadd.f32 0.0, %v875
      %v877 = vpop.f32.mrb[0].mxu0
      %v878 = vadd.f32 0.0, %v877
      %879 = vdwg.mxu0
      %v880 = vadd.f32 %v769, %v876
      %v881 = vadd.f32 %v770, %v878
      %882 = vrot.lane.b32.xlu0 %v225, 113
      %v883 = vpop.permute.xlu0 %882
      %884 = vrot.lane.b32.xlu0 %v227, 113
      %v885 = vpop.permute.xlu0 %884
      %886 = vrot.lane.b32.xlu0 %v229, 113
      %v887 = vpop.permute.xlu0 %886
      %888 = vrot.lane.b32.xlu0 %v226, 113
      %v889 = vpop.permute.xlu0 %888
      %890 = vrot.lane.b32.xlu0 %v228, 113
      %v891 = vpop.permute.xlu0 %890
      %892 = vrot.lane.b32.xlu0 %v230, 113
      %v893 = vpop.permute.xlu0 %892
      %vm894 = vcmp.lt.s32.totalorder %v232, 113
      %v895 = vsel %vm894, %v883, %v889
      %v896 = vsel %vm894, %v885, %v891
      %v897 = vsel %vm894, %v887, %v893
      %v898 = vsel %vm894, %v889, %v883
      %v899 = vsel %vm894, %v891, %v885
      %v900 = vsel %vm894, %v893, %v887
      %vm901 = vcmp.lt.s32.totalorder %v232, 240
      %vm902 = vcmp.lt.s32.totalorder %v233, 240
      %vm903 = vmand %vm901, %vm257
      %vm904 = vmand %vm902, %vm258
      %v905 = vsel %vm903, 1.0, 0.0
      %v906 = vsel %vm904, 1.0, 0.0
      %v907 = vmul.f32 %v895, %v905
      %v908 = vmul.f32 %v898, %v906
      %v909 = vmul.f32 %v896, %v905
      %v910 = vmul.f32 %v899, %v906
      %v911 = vmul.f32 %v897, %v905
      %v912 = vmul.f32 %v900, %v906
      %s913 = scalar_lea.vmem %s1, 48
      %v914 = vld [vmem:[%s913] sm:$0xff]
      %v916 = vsel %vm299, %v914, 0
      %v919 = vsel %vm303, %v911, 0
      %v922 = vsel %vm303, %v912, 0
      %924 = vmatprep.subr.mxu0 %v908
      %925 = vmatpush1.msra.mxu0 %v907
      %926 = vmatprep.subr.mxu0 %v910
      %927 = vmatpush1.msra.mxu0 %v909
      %928 = vmatprep.subr.mxu0 %v922
      %929 = vmatpush1.msra.mxu0 %v919
      %930 = vmatprep.subr.mxu0 0.0
      %931 = vmatpush1.msra.mxu0 0.0
      %932 = vmatprep.subr.mxu0 0.0
      %933 = vmatpush1.msra.mxu0 0.0
      %934 = vmatprep.subr.mxu0 0.0
      %935 = vmatpush1.msra.mxu0 0.0
      %936 = vmatprep.subr.mxu0 0.0
      %937 = vmatpush1.msra.mxu0 0.0
      %938 = vmatprep.subr.mxu0 0.0
      %939 = vmatpush1.msra.mxu0 0.0
      %940 = vmatprep.subr.mxu0 0.0
      %941 = vmatpush1.msra.mxu0 0.0
      %942 = vmatprep.subr.mxu0 0.0
      %943 = vmatpush1.msra.mxu0 0.0
      %944 = vmatprep.subr.mxu0 0.0
      %945 = vmatpush1.msra.mxu0 0.0
      %946 = vmatprep.subr.mxu0 0.0
      %947 = vmatpush1.msra.mxu0 0.0
      %948 = vmatprep.subr.mxu0 0.0
      %949 = vmatpush1.msra.mxu0 0.0
      %950 = vmatprep.subr.mxu0 0.0
      %951 = vmatpush1.msra.mxu0 0.0
      %952 = vmatprep.subr.mxu0 0.0
      %953 = vmatpush1.msra.mxu0 0.0
      %954 = vmatprep.subr.mxu0 0.0
      %955 = vmatpush1.msra.mxu0 0.0
      %956 = vmatprep.subr.mxu0 0.0
      %957 = vmatpush1.msra.mxu0 0.0
      %958 = vmatprep.subr.mxu0 0.0
      %959 = vmatpush1.msra.mxu0 0.0
      %960 = vmatprep.subr.mxu0 0.0
      %961 = vmatpush1.msra.mxu0 0.0
      %962 = vmatprep.subr.mxu0 0.0
      %963 = vmatpush1.msra.mxu0 0.0
      %964 = vmatprep.subr.mxu0 0.0
      %965 = vmatpush1.msra.mxu0 0.0
      %966 = vmatprep.subr.mxu0 0.0
      %967 = vmatpush1.msra.mxu0 0.0
      %968 = vmatprep.subr.mxu0 0.0
      %969 = vmatpush1.msra.mxu0 0.0
      %970 = vmatprep.subr.mxu0 0.0
      %971 = vmatpush1.msra.mxu0 0.0
      %972 = vmatprep.subr.mxu0 0.0
      %973 = vmatpush1.msra.mxu0 0.0
      %974 = vmatprep.subr.mxu0 0.0
      %975 = vmatpush1.msra.mxu0 0.0
      %976 = vmatprep.subr.mxu0 0.0
      %977 = vmatpush1.msra.mxu0 0.0
      %978 = vmatprep.subr.mxu0 0.0
      %979 = vmatpush1.msra.mxu0 0.0
      %980 = vmatprep.subr.mxu0 0.0
      %981 = vmatpush1.msra.mxu0 0.0
      %982 = vmatprep.subr.mxu0 0.0
      %983 = vmatpush1.msra.mxu0 0.0
      %984 = vmatprep.subr.mxu0 0.0
      %985 = vmatpush1.msra.mxu0 0.0
      %986 = vmatprep.subr.mxu0 0.0
      %987 = vmatpush1.msra.mxu0 0.0
      %988 = vmatprep.mubr.f32.mxu0 0.0
      %989 = vmatmul.mubr.f32.gmra.mrb[0].mxu0 %v916
      %v990 = vpop.f32.mrb[0].mxu0
      %v991 = vadd.f32 0.0, %v990
      %v992 = vpop.f32.mrb[0].mxu0
      %v993 = vadd.f32 0.0, %v992
      %994 = vdwg.mxu0
      %v995 = vadd.f32 %v880, %v991
      %v996 = vadd.f32 %v881, %v993
      %997 = vrot.lane.b32.xlu0 %v225, 112
      %v998 = vpop.permute.xlu0 %997
      %999 = vrot.lane.b32.xlu0 %v227, 112
      %v1000 = vpop.permute.xlu0 %999
      %1001 = vrot.lane.b32.xlu0 %v229, 112
      %v1002 = vpop.permute.xlu0 %1001
      %1003 = vrot.lane.b32.xlu0 %v226, 112
      %v1004 = vpop.permute.xlu0 %1003
      %1005 = vrot.lane.b32.xlu0 %v228, 112
      %v1006 = vpop.permute.xlu0 %1005
      %1007 = vrot.lane.b32.xlu0 %v230, 112
      %v1008 = vpop.permute.xlu0 %1007
      %vm1009 = vcmp.lt.s32.totalorder %v232, 112
      %v1010 = vsel %vm1009, %v998, %v1004
      %v1011 = vsel %vm1009, %v1000, %v1006
      %v1012 = vsel %vm1009, %v1002, %v1008
      %v1013 = vsel %vm1009, %v1004, %v998
      %v1014 = vsel %vm1009, %v1006, %v1000
      %v1015 = vsel %vm1009, %v1008, %v1002
      %v1016 = vsel %vm901, 1.0, 0.0
      %v1017 = vsel %vm902, 1.0, 0.0
      %v1018 = vmul.f32 %v1010, %v1016
      %v1019 = vmul.f32 %v1013, %v1017
      %v1020 = vmul.f32 %v1011, %v1016
      %v1021 = vmul.f32 %v1014, %v1017
      %v1022 = vmul.f32 %v1012, %v1016
      %v1023 = vmul.f32 %v1015, %v1017
      %s1024 = scalar_lea.vmem %s1, 56
      %v1025 = vld [vmem:[%s1024] sm:$0xff]
      %v1027 = vsel %vm299, %v1025, 0
      %v1030 = vsel %vm303, %v1022, 0
      %v1033 = vsel %vm303, %v1023, 0
      %1035 = vmatprep.subr.mxu0 %v1019
      %1036 = vmatpush1.msra.mxu0 %v1018
      %1037 = vmatprep.subr.mxu0 %v1021
      %1038 = vmatpush1.msra.mxu0 %v1020
      %1039 = vmatprep.subr.mxu0 %v1033
      %1040 = vmatpush1.msra.mxu0 %v1030
      %1041 = vmatprep.subr.mxu0 0.0
      %1042 = vmatpush1.msra.mxu0 0.0
      %1043 = vmatprep.subr.mxu0 0.0
      %1044 = vmatpush1.msra.mxu0 0.0
      %1045 = vmatprep.subr.mxu0 0.0
      %1046 = vmatpush1.msra.mxu0 0.0
      %1047 = vmatprep.subr.mxu0 0.0
      %1048 = vmatpush1.msra.mxu0 0.0
      %1049 = vmatprep.subr.mxu0 0.0
      %1050 = vmatpush1.msra.mxu0 0.0
      %1051 = vmatprep.subr.mxu0 0.0
      %1052 = vmatpush1.msra.mxu0 0.0
      %1053 = vmatprep.subr.mxu0 0.0
      %1054 = vmatpush1.msra.mxu0 0.0
      %1055 = vmatprep.subr.mxu0 0.0
      %1056 = vmatpush1.msra.mxu0 0.0
      %1057 = vmatprep.subr.mxu0 0.0
      %1058 = vmatpush1.msra.mxu0 0.0
      %1059 = vmatprep.subr.mxu0 0.0
      %1060 = vmatpush1.msra.mxu0 0.0
      %1061 = vmatprep.subr.mxu0 0.0
      %1062 = vmatpush1.msra.mxu0 0.0
      %1063 = vmatprep.subr.mxu0 0.0
      %1064 = vmatpush1.msra.mxu0 0.0
      %1065 = vmatprep.subr.mxu0 0.0
      %1066 = vmatpush1.msra.mxu0 0.0
      %1067 = vmatprep.subr.mxu0 0.0
      %1068 = vmatpush1.msra.mxu0 0.0
      %1069 = vmatprep.subr.mxu0 0.0
      %1070 = vmatpush1.msra.mxu0 0.0
      %1071 = vmatprep.subr.mxu0 0.0
      %1072 = vmatpush1.msra.mxu0 0.0
      %1073 = vmatprep.subr.mxu0 0.0
      %1074 = vmatpush1.msra.mxu0 0.0
      %1075 = vmatprep.subr.mxu0 0.0
      %1076 = vmatpush1.msra.mxu0 0.0
      %1077 = vmatprep.subr.mxu0 0.0
      %1078 = vmatpush1.msra.mxu0 0.0
      %1079 = vmatprep.subr.mxu0 0.0
      %1080 = vmatpush1.msra.mxu0 0.0
      %1081 = vmatprep.subr.mxu0 0.0
      %1082 = vmatpush1.msra.mxu0 0.0
      %1083 = vmatprep.subr.mxu0 0.0
      %1084 = vmatpush1.msra.mxu0 0.0
      %1085 = vmatprep.subr.mxu0 0.0
      %1086 = vmatpush1.msra.mxu0 0.0
      %1087 = vmatprep.subr.mxu0 0.0
      %1088 = vmatpush1.msra.mxu0 0.0
      %1089 = vmatprep.subr.mxu0 0.0
      %1090 = vmatpush1.msra.mxu0 0.0
      %1091 = vmatprep.subr.mxu0 0.0
      %1092 = vmatpush1.msra.mxu0 0.0
      %1093 = vmatprep.subr.mxu0 0.0
      %1094 = vmatpush1.msra.mxu0 0.0
      %1095 = vmatprep.subr.mxu0 0.0
      %1096 = vmatpush1.msra.mxu0 0.0
      %1097 = vmatprep.subr.mxu0 0.0
      %1098 = vmatpush1.msra.mxu0 0.0
      %1099 = vmatprep.mubr.f32.mxu0 0.0
      %1100 = vmatmul.mubr.f32.gmra.mrb[0].mxu0 %v1027
      %v1101 = vpop.f32.mrb[0].mxu0
      %v1102 = vadd.f32 0.0, %v1101
      %v1103 = vpop.f32.mrb[0].mxu0
      %v1104 = vadd.f32 0.0, %v1103
      %1105 = vdwg.mxu0
      %v1106 = vadd.f32 %v995, %v1102
      %v1107 = vadd.f32 %v996, %v1104
      %1108 = vrot.lane.b32.xlu0 %v225, 111
      %v1109 = vpop.permute.xlu0 %1108
      %1110 = vrot.lane.b32.xlu0 %v227, 111
      %v1111 = vpop.permute.xlu0 %1110
      %1112 = vrot.lane.b32.xlu0 %v229, 111
      %v1113 = vpop.permute.xlu0 %1112
      %1114 = vrot.lane.b32.xlu0 %v226, 111
      %v1115 = vpop.permute.xlu0 %1114
      %1116 = vrot.lane.b32.xlu0 %v228, 111
      %v1117 = vpop.permute.xlu0 %1116
      %1118 = vrot.lane.b32.xlu0 %v230, 111
      %v1119 = vpop.permute.xlu0 %1118
      %vm1120 = vcmp.lt.s32.totalorder %v232, 111
      %v1121 = vsel %vm1120, %v1109, %v1115
      %v1122 = vsel %vm1120, %v1111, %v1117
      %v1123 = vsel %vm1120, %v1113, %v1119
      %v1124 = vsel %vm1120, %v1115, %v1109
      %v1125 = vsel %vm1120, %v1117, %v1111
      %v1126 = vsel %vm1120, %v1119, %v1113
      %vm1127 = vmand %vm901, %vm480
      %vm1128 = vmand %vm902, %vm481
      %v1129 = vsel %vm1127, 1.0, 0.0
      %v1130 = vsel %vm1128, 1.0, 0.0
      %v1131 = vmul.f32 %v1121, %v1129
      %v1132 = vmul.f32 %v1124, %v1130
      %v1133 = vmul.f32 %v1122, %v1129
      %v1134 = vmul.f32 %v1125, %v1130
      %v1135 = vmul.f32 %v1123, %v1129
      %v1136 = vmul.f32 %v1126, %v1130
      %s1137 = scalar_lea.vmem %s1, 64
      %v1138 = vld [vmem:[%s1137] sm:$0xff]
      %v1140 = vsel %vm299, %v1138, 0
      %v1143 = vsel %vm303, %v1135, 0
      %v1146 = vsel %vm303, %v1136, 0
      %1148 = vmatprep.subr.mxu0 %v1132
      %1149 = vmatpush1.msra.mxu0 %v1131
      %1150 = vmatprep.subr.mxu0 %v1134
      %1151 = vmatpush1.msra.mxu0 %v1133
      %1152 = vmatprep.subr.mxu0 %v1146
      %1153 = vmatpush1.msra.mxu0 %v1143
      %1154 = vmatprep.subr.mxu0 0.0
      %1155 = vmatpush1.msra.mxu0 0.0
      %1156 = vmatprep.subr.mxu0 0.0
      %1157 = vmatpush1.msra.mxu0 0.0
      %1158 = vmatprep.subr.mxu0 0.0
      %1159 = vmatpush1.msra.mxu0 0.0
      %1160 = vmatprep.subr.mxu0 0.0
      %1161 = vmatpush1.msra.mxu0 0.0
      %1162 = vmatprep.subr.mxu0 0.0
      %1163 = vmatpush1.msra.mxu0 0.0
      %1164 = vmatprep.subr.mxu0 0.0
      %1165 = vmatpush1.msra.mxu0 0.0
      %1166 = vmatprep.subr.mxu0 0.0
      %1167 = vmatpush1.msra.mxu0 0.0
      %1168 = vmatprep.subr.mxu0 0.0
      %1169 = vmatpush1.msra.mxu0 0.0
      %1170 = vmatprep.subr.mxu0 0.0
      %1171 = vmatpush1.msra.mxu0 0.0
      %1172 = vmatprep.subr.mxu0 0.0
      %1173 = vmatpush1.msra.mxu0 0.0
      %1174 = vmatprep.subr.mxu0 0.0
      %1175 = vmatpush1.msra.mxu0 0.0
      %1176 = vmatprep.subr.mxu0 0.0
      %1177 = vmatpush1.msra.mxu0 0.0
      %1178 = vmatprep.subr.mxu0 0.0
      %1179 = vmatpush1.msra.mxu0 0.0
      %1180 = vmatprep.subr.mxu0 0.0
      %1181 = vmatpush1.msra.mxu0 0.0
      %1182 = vmatprep.subr.mxu0 0.0
      %1183 = vmatpush1.msra.mxu0 0.0
      %1184 = vmatprep.subr.mxu0 0.0
      %1185 = vmatpush1.msra.mxu0 0.0
      %1186 = vmatprep.subr.mxu0 0.0
      %1187 = vmatpush1.msra.mxu0 0.0
      %1188 = vmatprep.subr.mxu0 0.0
      %1189 = vmatpush1.msra.mxu0 0.0
      %1190 = vmatprep.subr.mxu0 0.0
      %1191 = vmatpush1.msra.mxu0 0.0
      %1192 = vmatprep.subr.mxu0 0.0
      %1193 = vmatpush1.msra.mxu0 0.0
      %1194 = vmatprep.subr.mxu0 0.0
      %1195 = vmatpush1.msra.mxu0 0.0
      %1196 = vmatprep.subr.mxu0 0.0
      %1197 = vmatpush1.msra.mxu0 0.0
      %1198 = vmatprep.subr.mxu0 0.0
      %1199 = vmatpush1.msra.mxu0 0.0
      %1200 = vmatprep.subr.mxu0 0.0
      %1201 = vmatpush1.msra.mxu0 0.0
      %1202 = vmatprep.subr.mxu0 0.0
      %1203 = vmatpush1.msra.mxu0 0.0
      %1204 = vmatprep.subr.mxu0 0.0
      %1205 = vmatpush1.msra.mxu0 0.0
      %1206 = vmatprep.subr.mxu0 0.0
      %1207 = vmatpush1.msra.mxu0 0.0
      %1208 = vmatprep.subr.mxu0 0.0
      %1209 = vmatpush1.msra.mxu0 0.0
      %1210 = vmatprep.subr.mxu0 0.0
      %1211 = vmatpush1.msra.mxu0 0.0
      %1212 = vmatprep.mubr.f32.mxu0 0.0
      %1213 = vmatmul.mubr.f32.gmra.mrb[0].mxu0 %v1140
      %v1214 = vpop.f32.mrb[0].mxu0
      %v1215 = vadd.f32 0.0, %v1214
      %v1216 = vpop.f32.mrb[0].mxu0
      %v1217 = vadd.f32 0.0, %v1216
      %1218 = vdwg.mxu0
      %v1219 = vadd.f32 %v1106, %v1215
      %v1220 = vadd.f32 %v1107, %v1217
      %v1221 = vld [vmem:[%s2] sm:$0xff]
      %1223 = vset.pattern.permute.xlu0 0
      %1224 = vperm.xlu0 %1223, %v1221
      %v1225 = vpop.permute.xlu0 %1224
      %v1227 = vadd.f32 %v1219, %v1225
      %v1228 = vadd.f32 %v1220, %v1225
      %v1229 = vadd.f32 %v1227, %v1228
      %1230 = vadd.xlane.f32.xlu0 %v1229
      %v1231 = vpop.xlane.xlu0 %1230
      %v1232 = vrot.slane %v1231, 4
      %v1233 = vadd.f32 %v1231, %v1232
      %v1234 = vrot.slane %v1233, 2
      %v1235 = vadd.f32 %v1233, %v1234
      %v1236 = vrot.slane %v1235, 1
      %v1237 = vadd.f32 %v1235, %v1236
      %v1238 = vrcp.pop 2048.0
      %v1239 = vmul.f32 %v1237, %v1238
      %v1240 = vsub.f32 %v1227, %v1239
      %v1241 = vsub.f32 %v1228, %v1239
      %v1242 = vmul.f32 %v1240, %v1240
      %v1243 = vmul.f32 %v1241, %v1241
      %v1244 = vadd.f32 %v1242, %v1243
      %1245 = vadd.xlane.f32.xlu0 %v1244
      %v1246 = vpop.xlane.xlu0 %1245
      %v1247 = vrot.slane %v1246, 4
      %v1248 = vadd.f32 %v1246, %v1247
      %v1249 = vrot.slane %v1248, 2
      %v1250 = vadd.f32 %v1248, %v1249
      %v1251 = vrot.slane %v1250, 1
      %v1252 = vadd.f32 %v1250, %v1251
      %v1253 = vmul.f32 %v1252, %v1238
      %v1254 = vadd.f32 %v1253, 1e-05
      %v1255 = vrsqrt.pop %v1254
      %v1256 = vmul.f32 %v1240, %v1255
      %v1257 = vmul.f32 %v1241, %v1255
      %v1258 = vld [vmem:[%s3] sm:$0xff]
      %v1259 = vld [vmem:[%s3 + $0x8] sm:$0xff]
      %v1260 = vmul.f32 %v1256, %v1258
      %v1261 = vmul.f32 %v1257, %v1259
      %v1262 = vld [vmem:[%s4] sm:$0xff]
      %v1263 = vld [vmem:[%s4 + $0x8] sm:$0xff]
      %v1264 = vadd.f32 %v1260, %v1262
      %v1265 = vadd.f32 %v1261, %v1263
      %1266 = vst [vmem:[%s224] sm:$0xff] %v1264
      %1267 = vst [vmem:[%s224 + $0x8] sm:$0xff] %v1265
      %p1268 = scmp.lt.s32.totalorder %s16, 1
      %s1269 = scalar_select %p1268, %s16, 1
      %s1270 = smul.addr %s1269, 2
      %s1271 = smul.addr %s1270, 8
      %s1272 = scalar_lea.vmem %s5, %s1271
      // Predicated region
      $region41: #{res_core_blocks_forward.74} parent=39 // pred_check
        %p1273 = pneg %p144
      $region42: #{res_core_blocks_forward.74} parent=39 // pred_check_branch
        %1275 = sbr.rel (%p1273) target = $region44
      $region43: #{res_core_blocks_forward.74} parent=39 // pred_region
        _
      $region44: #{res_core_blocks_forward.74} parent=39 // pred_fallthru
        _
    $region40: #{res_core_blocks_forward.74} parent=5 // pred_fallthru
      _
    %p1276 = scmp.le.s32.totalorder 2, %s11
    // Predicated region
    $region45: #{res_core_blocks_forward.74} parent=5 // pred_check
      %p1277 = pneg %p1276
    $region46: #{res_core_blocks_forward.74} parent=5 // pred_check_branch
      %1279 = sbr.rel (%p1277) target = $region48
    $region47: #{res_core_blocks_forward.74} parent=5 // pred_region
      %s1280 = ssub.s32 %s11, 2
      // Predicated region
      $region49: #{res_core_blocks_forward.74} parent=47 // pred_check
        %p1281 = pneg %p150
      $region50: #{res_core_blocks_forward.74} parent=47 // pred_check_branch
        %1283 = sbr.rel (%p1281) target = $region52
      $region51: #{res_core_blocks_forward.74} parent=47 // pred_region
        %p1284 = scmp.lt.s32.totalorder %s17, 1
        %s1285 = scalar_select %p1284, %s17, 1
        %s1286 = smul.addr %s1285, 2
        %s1287 = smul.addr %s1286, 8
        %s1288 = scalar_lea.vmem %s5, %s1287
      $region52: #{res_core_blocks_forward.74} parent=47 // pred_fallthru
        _
    $region48: #{res_core_blocks_forward.74} parent=5 // pred_fallthru
      _
  $region6: #{res_core_blocks_forward.74} parent=0 // loop_footer
    %s15 = sadd.s32 1, %s11
  $region7: #{res_core_blocks_forward.74} parent=0 // loop_footer_branch
    %10 = sbr.rel target = $region3
  $region8: #{res_core_blocks_forward.74} parent=0 // loop_exit
    _

// kernel: res_core_blocks_forward.76
$region0: #{res_core_blocks_forward.76}
  #allocation0 [shape = 'u32[]', space=smem, size = 0x4, offset = 0x4, fixed_abs, tag = 'smem constant byte address 0x4 - core index']
  #allocation1 [shape = 'u32[144,128]{1,0:T(1,128)}', space=vmem, size = 0x12000, scoped, tag = 'internal scratch']
  %s0 = inlined_call_operand.vmem [shape: f32[32,128], index: 0, kind: input, shape index: {}]
  %s1 = inlined_call_operand.vmem [shape: bf16[128,256], index: 1, kind: input, shape index: {}]
  %s2 = inlined_call_operand.vmem [shape: f32[1,256], index: 2, kind: input, shape index: {}]
  %s3 = inlined_call_operand.vmem [shape: bf16[256,768], index: 3, kind: input, shape index: {}]
  %s4 = inlined_call_operand.vmem [shape: f32[1,768], index: 4, kind: input, shape index: {}]
  %s5 = inlined_call_operand.vmem [shape: bf16[256,256], index: 5, kind: input, shape index: {}]
  %s6 = inlined_call_operand.vmem [shape: f32[1,256], index: 6, kind: input, shape index: {}]
  %s7 = inlined_call_operand.vmem [shape: bf16[256,128], index: 7, kind: input, shape index: {}]
  %s8 = inlined_call_operand.vmem [shape: f32[1,128], index: 8, kind: input, shape index: {}]
  %s9 = inlined_call_operand.vmem [shape: f32[256,8], index: 9, kind: input, shape index: {}]
  %s10 = inlined_call_operand.vmem [shape: f32[8,256], index: 10, kind: input, shape index: {}]
  %s11 = inlined_call_operand.vmem [shape: f32[32,128], index: 11, kind: output, shape index: {}]
  %s12 = sld [smem:[#allocation0]]
  $region54: #{res_core_blocks_forward.76} parent=0
    _
  %s14 = ssub.s32 1, %s12
  %s15 = scalar_select 0, %s14, %s12
  // Predicated region
  $region2: #{res_core_blocks_forward.76} parent=0 // pred_check
    _
  $region3: #{res_core_blocks_forward.76} parent=0 // pred_check_branch
    %17 = sbr.rel (0) target = $region5
  $region4: #{res_core_blocks_forward.76} parent=0 // pred_region
    _
  $region5: #{res_core_blocks_forward.76} parent=0 // pred_fallthru
    _
  // Predicated region
  $region6: #{res_core_blocks_forward.76} parent=0 // pred_check
    _
  $region7: #{res_core_blocks_forward.76} parent=0 // pred_check_branch
    %19 = sbr.rel (0) target = $region9
  $region8: #{res_core_blocks_forward.76} parent=0 // pred_region
    _
  $region9: #{res_core_blocks_forward.76} parent=0 // pred_fallthru
    _
  // Predicated region
  $region10: #{res_core_blocks_forward.76} parent=0 // pred_check
    _
  $region11: #{res_core_blocks_forward.76} parent=0 // pred_check_branch
    %21 = sbr.rel (0) target = $region13
  $region12: #{res_core_blocks_forward.76} parent=0 // pred_region
    _
  $region13: #{res_core_blocks_forward.76} parent=0 // pred_fallthru
    _
  // Predicated region
  $region14: #{res_core_blocks_forward.76} parent=0 // pred_check
    _
  $region15: #{res_core_blocks_forward.76} parent=0 // pred_check_branch
    %23 = sbr.rel (0) target = $region17
  $region16: #{res_core_blocks_forward.76} parent=0 // pred_region
    _
  $region17: #{res_core_blocks_forward.76} parent=0 // pred_fallthru
    _
  // Predicated region
  $region18: #{res_core_blocks_forward.76} parent=0 // pred_check
    _
  $region19: #{res_core_blocks_forward.76} parent=0 // pred_check_branch
    %25 = sbr.rel (0) target = $region21
  $region20: #{res_core_blocks_forward.76} parent=0 // pred_region
    _
  $region21: #{res_core_blocks_forward.76} parent=0 // pred_fallthru
    _
  // Predicated region
  $region22: #{res_core_blocks_forward.76} parent=0 // pred_check
    _
  $region23: #{res_core_blocks_forward.76} parent=0 // pred_check_branch
    %27 = sbr.rel (0) target = $region25
  $region24: #{res_core_blocks_forward.76} parent=0 // pred_region
    _
  $region25: #{res_core_blocks_forward.76} parent=0 // pred_fallthru
    _
  // Predicated region
  $region26: #{res_core_blocks_forward.76} parent=0 // pred_check
    _
  $region27: #{res_core_blocks_forward.76} parent=0 // pred_check_branch
    %29 = sbr.rel (0) target = $region29
  $region28: #{res_core_blocks_forward.76} parent=0 // pred_region
    _
  $region29: #{res_core_blocks_forward.76} parent=0 // pred_fallthru
    _
  // Predicated region
  $region30: #{res_core_blocks_forward.76} parent=0 // pred_check
    _
  $region31: #{res_core_blocks_forward.76} parent=0 // pred_check_branch
    %31 = sbr.rel (0) target = $region33
  $region32: #{res_core_blocks_forward.76} parent=0 // pred_region
    _
  $region33: #{res_core_blocks_forward.76} parent=0 // pred_fallthru
    _
  // Predicated region
  $region34: #{res_core_blocks_forward.76} parent=0 // pred_check
    _
  $region35: #{res_core_blocks_forward.76} parent=0 // pred_check_branch
    %33 = sbr.rel (0) target = $region37
  $region36: #{res_core_blocks_forward.76} parent=0 // pred_region
    _
  $region37: #{res_core_blocks_forward.76} parent=0 // pred_fallthru
    _
  // Predicated region
  $region38: #{res_core_blocks_forward.76} parent=0 // pred_check
    _
  $region39: #{res_core_blocks_forward.76} parent=0 // pred_check_branch
    %35 = sbr.rel (0) target = $region41
  $region40: #{res_core_blocks_forward.76} parent=0 // pred_region
    _
  $region41: #{res_core_blocks_forward.76} parent=0 // pred_fallthru
    _
  // Predicated region
  $region42: #{res_core_blocks_forward.76} parent=0 // pred_check
    _
  $region43: #{res_core_blocks_forward.76} parent=0 // pred_check_branch
    %37 = sbr.rel (0) target = $region45
  $region44: #{res_core_blocks_forward.76} parent=0 // pred_region
    _
  $region45: #{res_core_blocks_forward.76} parent=0 // pred_fallthru
    _
  %v39 = vld [vmem:[%s0] sm:$0xff]
  %v40 = vld [vmem:[%s0 + $0x8] sm:$0xff]
  %v41 = vld [vmem:[%s0 + $0x10] sm:$0xff]
  %v42 = vld [vmem:[%s0 + $0x18] sm:$0xff]
  %v43 = vpack.c.bf16 %v40, %v39
  %v44 = vpack.c.bf16 %v42, %v41
  %v45 = vld [vmem:[%s1] sm:$0xff]
  %v46 = vld [vmem:[%s1 + $0x8] sm:$0xff]
  %v47 = vld [vmem:[%s1 + $0x10] sm:$0xff]
  %v48 = vld [vmem:[%s1 + $0x18] sm:$0xff]
  %v49 = vld [vmem:[%s1 + $0x20] sm:$0xff]
  %v50 = vld [vmem:[%s1 + $0x28] sm:$0xff]
  %v51 = vld [vmem:[%s1 + $0x30] sm:$0xff]
  %v52 = vld [vmem:[%s1 + $0x38] sm:$0xff]
  %v53 = vld [vmem:[%s1 + $0x40] sm:$0xff]
  %v54 = vld [vmem:[%s1 + $0x48] sm:$0xff]
  %v55 = vld [vmem:[%s1 + $0x50] sm:$0xff]
  %v56 = vld [vmem:[%s1 + $0x58] sm:$0xff]
  %v57 = vld [vmem:[%s1 + $0x60] sm:$0xff]
  %v58 = vld [vmem:[%s1 + $0x68] sm:$0xff]
  %v59 = vld [vmem:[%s1 + $0x70] sm:$0xff]
  %v60 = vld [vmem:[%s1 + $0x78] sm:$0xff]
  %v61 = vld [vmem:[%s2] sm:$0x3]
  %v63 = vlaneseq
  %v64 = vshrl.u32 %v63, 7
  %v65 = vsub.s32 0, %v64
  %v66 = vrot.slane %v61, %v65
  %v67 = vlaneseq
  %v68 = vshrl.u32 %v67, 7
  %v69 = vsub.s32 1, %v68
  %v70 = vrot.slane %v61, %v69
  %v89 = vunpack.c.l.b16 %v45
  %v90 = vunpack.c.h.b16 %v45
  %v91 = vunpack.c.l.b16 %v46
  %v92 = vunpack.c.h.b16 %v46
  %v93 = vunpack.c.l.b16 %v47
  %v94 = vunpack.c.h.b16 %v47
  %v95 = vunpack.c.l.b16 %v48
  %v96 = vunpack.c.h.b16 %v48
  %v97 = vunpack.c.l.b16 %v49
  %v98 = vunpack.c.h.b16 %v49
  %v99 = vunpack.c.l.b16 %v50
  %v100 = vunpack.c.h.b16 %v50
  %v101 = vunpack.c.l.b16 %v51
  %v102 = vunpack.c.h.b16 %v51
  %v103 = vunpack.c.l.b16 %v52
  %v104 = vunpack.c.h.b16 %v52
  %v105 = vunpack.c.l.b16 %v53
  %v106 = vunpack.c.h.b16 %v53
  %v107 = vunpack.c.l.b16 %v54
  %v108 = vunpack.c.h.b16 %v54
  %v109 = vunpack.c.l.b16 %v55
  %v110 = vunpack.c.h.b16 %v55
  %v111 = vunpack.c.l.b16 %v56
  %v112 = vunpack.c.h.b16 %v56
  %v113 = vunpack.c.l.b16 %v57
  %v114 = vunpack.c.h.b16 %v57
  %v115 = vunpack.c.l.b16 %v58
  %v116 = vunpack.c.h.b16 %v58
  %v117 = vunpack.c.l.b16 %v59
  %v118 = vunpack.c.h.b16 %v59
  %v119 = vunpack.c.l.b16 %v60
  %v120 = vunpack.c.h.b16 %v60
  %v121 = vpack.c.b16 %v91, %v89
  %v122 = vpack.c.b16 %v92, %v90
  %v123 = vpack.c.b16 %v95, %v93
  %v124 = vpack.c.b16 %v96, %v94
  %v125 = vpack.c.b16 %v99, %v97
  %v126 = vpack.c.b16 %v100, %v98
  %v127 = vpack.c.b16 %v103, %v101
  %v128 = vpack.c.b16 %v104, %v102
  %v129 = vpack.c.b16 %v107, %v105
  %v130 = vpack.c.b16 %v108, %v106
  %v131 = vpack.c.b16 %v111, %v109
  %v132 = vpack.c.b16 %v112, %v110
  %v133 = vpack.c.b16 %v115, %v113
  %v134 = vpack.c.b16 %v116, %v114
  %v135 = vpack.c.b16 %v119, %v117
  %v136 = vpack.c.b16 %v120, %v118
  %153 = vmatprep.subr.bf16.mxu0 %v122
  %154 = vmatpush1.bf16.msra.mxu0 %v121
  %155 = vmatprep.subr.bf16.mxu0 %v124
  %156 = vmatpush1.bf16.msra.mxu0 %v123
  %157 = vmatprep.subr.bf16.mxu0 %v126
  %158 = vmatpush1.bf16.msra.mxu0 %v125
  %159 = vmatprep.subr.bf16.mxu0 %v128
  %160 = vmatpush1.bf16.msra.mxu0 %v127
  %161 = vmatprep.subr.bf16.mxu0 %v130
  %162 = vmatpush1.bf16.msra.mxu0 %v129
  %163 = vmatprep.subr.bf16.mxu0 %v132
  %164 = vmatpush1.bf16.msra.mxu0 %v131
  %165 = vmatprep.subr.bf16.mxu0 %v134
  %166 = vmatpush1.bf16.msra.mxu0 %v133
  %167 = vmatprep.subr.bf16.mxu0 %v136
  %168 = vmatpush1.bf16.msra.mxu0 %v135
  %169 = vmatprep.subr.bf16.mxu0 0
  %170 = vmatpush1.bf16.msra.mxu0 0
  %171 = vmatprep.subr.bf16.mxu0 0
  %172 = vmatpush1.bf16.msra.mxu0 0
  %173 = vmatprep.subr.bf16.mxu0 0
  %174 = vmatpush1.bf16.msra.mxu0 0
  %175 = vmatprep.subr.bf16.mxu0 0
  %176 = vmatpush1.bf16.msra.mxu0 0
  %177 = vmatprep.subr.bf16.mxu0 0
  %178 = vmatpush1.bf16.msra.mxu0 0
  %179 = vmatprep.subr.bf16.mxu0 0
  %180 = vmatpush1.bf16.msra.mxu0 0
  %181 = vmatprep.subr.bf16.mxu0 0
  %182 = vmatpush1.bf16.msra.mxu0 0
  %183 = vmatprep.subr.bf16.mxu0 0
  %184 = vmatpush1.bf16.msra.mxu0 0
  %185 = vmatprep.mubr.bf16.mxu0 0
  %186 = vmatmul.mubr.bf16.gmra.mrb[0].mxu0 %v43
  %v187 = vpop.f32.mrb[0].mxu0
  %v188 = vadd.f32 %v66, %v187
  %v189 = vpop.f32.mrb[0].mxu0
  %v190 = vadd.f32 %v70, %v189
  %v191 = vpop.f32.mrb[0].mxu0
  %v192 = vadd.f32 %v66, %v191
  %v193 = vpop.f32.mrb[0].mxu0
  %v194 = vadd.f32 %v70, %v193
  %195 = vmatprep.mubr.bf16.mxu0 0
  %196 = vmatmul.mubr.bf16.gmra.mrb[0].mxu0 %v44
  %v197 = vpop.f32.mrb[0].mxu0
  %v198 = vadd.f32 %v66, %v197
  %v199 = vpop.f32.mrb[0].mxu0
  %v200 = vadd.f32 %v70, %v199
  %v201 = vpop.f32.mrb[0].mxu0
  %v202 = vadd.f32 %v66, %v201
  %v203 = vpop.f32.mrb[0].mxu0
  %v204 = vadd.f32 %v70, %v203
  %205 = vdwg.mxu0
  %v206 = vpack.c.bf16 %v192, %v188
  %v207 = vpack.c.bf16 %v194, %v190
  %v208 = vpack.c.bf16 %v202, %v198
  %v209 = vpack.c.bf16 %v204, %v200
  %v210 = vld [vmem:[%s3] sm:$0xff]
  %v211 = vld [vmem:[%s3 + $0x8] sm:$0xff]
  %v212 = vld [vmem:[%s3 + $0x10] sm:$0xff]
  %v213 = vld [vmem:[%s3 + $0x18] sm:$0xff]
  %v214 = vld [vmem:[%s3 + $0x20] sm:$0xff]
  %v215 = vld [vmem:[%s3 + $0x28] sm:$0xff]
  %v216 = vld [vmem:[%s3 + $0x30] sm:$0xff]
  %v217 = vld [vmem:[%s3 + $0x38] sm:$0xff]
  %v218 = vld [vmem:[%s3 + $0x40] sm:$0xff]
  %v219 = vld [vmem:[%s3 + $0x48] sm:$0xff]
  %v220 = vld [vmem:[%s3 + $0x50] sm:$0xff]
  %v221 = vld [vmem:[%s3 + $0x58] sm:$0xff]
  %v222 = vld [vmem:[%s3 + $0x60] sm:$0xff]
  %v223 = vld [vmem:[%s3 + $0x68] sm:$0xff]
  %v224 = vld [vmem:[%s3 + $0x70] sm:$0xff]
  %v225 = vld [vmem:[%s3 + $0x78] sm:$0xff]
  %v226 = vld [vmem:[%s3 + $0x80] sm:$0xff]
  %v227 = vld [vmem:[%s3 + $0x88] sm:$0xff]
  %v228 = vld [vmem:[%s3 + $0x90] sm:$0xff]
  %v229 = vld [vmem:[%s3 + $0x98] sm:$0xff]
  %v230 = vld [vmem:[%s3 + $0xa0] sm:$0xff]
  %v231 = vld [vmem:[%s3 + $0xa8] sm:$0xff]
  %v232 = vld [vmem:[%s3 + $0xb0] sm:$0xff]
  %v233 = vld [vmem:[%s3 + $0xb8] sm:$0xff]
  %v234 = vld [vmem:[%s3 + $0xc0] sm:$0xff]
  %v235 = vld [vmem:[%s3 + $0xc8] sm:$0xff]
  %v236 = vld [vmem:[%s3 + $0xd0] sm:$0xff]
  %v237 = vld [vmem:[%s3 + $0xd8] sm:$0xff]
  %v238 = vld [vmem:[%s3 + $0xe0] sm:$0xff]
  %v239 = vld [vmem:[%s3 + $0xe8] sm:$0xff]
  %v240 = vld [vmem:[%s3 + $0xf0] sm:$0xff]
  %v241 = vld [vmem:[%s3 + $0xf8] sm:$0xff]
  %v242 = vld [vmem:[%s3 + $0x100] sm:$0xff]
  %v243 = vld [vmem:[%s3 + $0x108] sm:$0xff]
  %v244 = vld [vmem:[%s3 + $0x110] sm:$0xff]
  %v245 = vld [vmem:[%s3 + $0x118] sm:$0xff]
  %v246 = vld [vmem:[%s3 + $0x120] sm:$0xff]
  %v247 = vld [vmem:[%s3 + $0x128] sm:$0xff]
  %v248 = vld [vmem:[%s3 + $0x130] sm:$0xff]
  %v249 = vld [vmem:[%s3 + $0x138] sm:$0xff]
  %v250 = vld [vmem:[%s3 + $0x140] sm:$0xff]
  %v251 = vld [vmem:[%s3 + $0x148] sm:$0xff]
  %v252 = vld [vmem:[%s3 + $0x150] sm:$0xff]
  %v253 = vld [vmem:[%s3 + $0x158] sm:$0xff]
  %v254 = vld [vmem:[%s3 + $0x160] sm:$0xff]
  %v255 = vld [vmem:[%s3 + $0x168] sm:$0xff]
  %v256 = vld [vmem:[%s3 + $0x170] sm:$0xff]
  %v257 = vld [vmem:[%s3 + $0x178] sm:$0xff]
  %v258 = vld [vmem:[%s3 + $0x180] sm:$0xff]
  %v259 = vld [vmem:[%s3 + $0x188] sm:$0xff]
  %v260 = vld [vmem:[%s3 + $0x190] sm:$0xff]
  %v261 = vld [vmem:[%s3 + $0x198] sm:$0xff]
  %v262 = vld [vmem:[%s3 + $0x1a0] sm:$0xff]
  %v263 = vld [vmem:[%s3 + $0x1a8] sm:$0xff]
  %v264 = vld [vmem:[%s3 + $0x1b0] sm:$0xff]
  %v265 = vld [vmem:[%s3 + $0x1b8] sm:$0xff]
  %v266 = vld [vmem:[%s3 + $0x1c0] sm:$0xff]
  %v267 = vld [vmem:[%s3 + $0x1c8] sm:$0xff]
  %v268 = vld [vmem:[%s3 + $0x1d0] sm:$0xff]
  %v269 = vld [vmem:[%s3 + $0x1d8] sm:$0xff]
  %v270 = vld [vmem:[%s3 + $0x1e0] sm:$0xff]
  %v271 = vld [vmem:[%s3 + $0x1e8] sm:$0xff]
  %v272 = vld [vmem:[%s3 + $0x1f0] sm:$0xff]
  %v273 = vld [vmem:[%s3 + $0x1f8] sm:$0xff]
  %v274 = vld [vmem:[%s3 + $0x200] sm:$0xff]
  %v275 = vld [vmem:[%s3 + $0x208] sm:$0xff]
  %v276 = vld [vmem:[%s3 + $0x210] sm:$0xff]
  %v277 = vld [vmem:[%s3 + $0x218] sm:$0xff]
  %v278 = vld [vmem:[%s3 + $0x220] sm:$0xff]
  %v279 = vld [vmem:[%s3 + $0x228] sm:$0xff]
  %v280 = vld [vmem:[%s3 + $0x230] sm:$0xff]
  %v281 = vld [vmem:[%s3 + $0x238] sm:$0xff]
  %v282 = vld [vmem:[%s3 + $0x240] sm:$0xff]
  %v283 = vld [vmem:[%s3 + $0x248] sm:$0xff]
  %v284 = vld [vmem:[%s3 + $0x250] sm:$0xff]
  %v285 = vld [vmem:[%s3 + $0x258] sm:$0xff]
  %v286 = vld [vmem:[%s3 + $0x260] sm:$0xff]
  %v287 = vld [vmem:[%s3 + $0x268] sm:$0xff]
  %v288 = vld [vmem:[%s3 + $0x270] sm:$0xff]
  %v289 = vld [vmem:[%s3 + $0x278] sm:$0xff]
  %v290 = vld [vmem:[%s3 + $0x280] sm:$0xff]
  %v291 = vld [vmem:[%s3 + $0x288] sm:$0xff]
  %v292 = vld [vmem:[%s3 + $0x290] sm:$0xff]
  %v293 = vld [vmem:[%s3 + $0x298] sm:$0xff]
  %v294 = vld [vmem:[%s3 + $0x2a0] sm:$0xff]
  %v295 = vld [vmem:[%s3 + $0x2a8] sm:$0xff]
  %v296 = vld [vmem:[%s3 + $0x2b0] sm:$0xff]
  %v297 = vld [vmem:[%s3 + $0x2b8] sm:$0xff]
  %v298 = vld [vmem:[%s3 + $0x2c0] sm:$0xff]
  %v299 = vld [vmem:[%s3 + $0x2c8] sm:$0xff]
  %v300 = vld [vmem:[%s3 + $0x2d0] sm:$0xff]
  %v301 = vld [vmem:[%s3 + $0x2d8] sm:$0xff]
  %v302 = vld [vmem:[%s3 + $0x2e0] sm:$0xff]
  %v303 = vld [vmem:[%s3 + $0x2e8] sm:$0xff]
  %v304 = vld [vmem:[%s3 + $0x2f0] sm:$0xff]
  %v305 = vld [vmem:[%s3 + $0x2f8] sm:$0xff]
  %v306 = vld [vmem:[%s4] sm:$0x3f]
  %v308 = vlaneseq
  %v309 = vshrl.u32 %v308, 7
  %v310 = vsub.s32 0, %v309
  %v311 = vrot.slane %v306, %v310
  %v312 = vlaneseq
  %v313 = vshrl.u32 %v312, 7
  %v314 = vsub.s32 1, %v313
  %v315 = vrot.slane %v306, %v314
  %v316 = vlaneseq
  %v317 = vshrl.u32 %v316, 7
  %v318 = vsub.s32 2, %v317
  %v319 = vrot.slane %v306, %v318
  %v320 = vlaneseq
  %v321 = vshrl.u32 %v320, 7
  %v322 = vsub.s32 3, %v321
  %v323 = vrot.slane %v306, %v322
  %v324 = vlaneseq
  %v325 = vshrl.u32 %v324, 7
  %v326 = vsub.s32 4, %v325
  %v327 = vrot.slane %v306, %v326
  %v328 = vlaneseq
  %v329 = vshrl.u32 %v328, 7
  %v330 = vsub.s32 5, %v329
  %v331 = vrot.slane %v306, %v330
  %v434 = vunpack.c.l.b16 %v210
  %v435 = vunpack.c.h.b16 %v210
  %v436 = vunpack.c.l.b16 %v211
  %v437 = vunpack.c.h.b16 %v211
  %v438 = vunpack.c.l.b16 %v212
  %v439 = vunpack.c.h.b16 %v212
  %v440 = vunpack.c.l.b16 %v213
  %v441 = vunpack.c.h.b16 %v213
  %v442 = vunpack.c.l.b16 %v214
  %v443 = vunpack.c.h.b16 %v214
  %v444 = vunpack.c.l.b16 %v215
  %v445 = vunpack.c.h.b16 %v215
  %v446 = vunpack.c.l.b16 %v216
  %v447 = vunpack.c.h.b16 %v216
  %v448 = vunpack.c.l.b16 %v217
  %v449 = vunpack.c.h.b16 %v217
  %v450 = vunpack.c.l.b16 %v218
  %v451 = vunpack.c.h.b16 %v218
  %v452 = vunpack.c.l.b16 %v219
  %v453 = vunpack.c.h.b16 %v219
  %v454 = vunpack.c.l.b16 %v220
  %v455 = vunpack.c.h.b16 %v220
  %v456 = vunpack.c.l.b16 %v221
  %v457 = vunpack.c.h.b16 %v221
  %v458 = vunpack.c.l.b16 %v222
  %v459 = vunpack.c.h.b16 %v222
  %v460 = vunpack.c.l.b16 %v223
  %v461 = vunpack.c.h.b16 %v223
  %v462 = vunpack.c.l.b16 %v224
  %v463 = vunpack.c.h.b16 %v224
  %v464 = vunpack.c.l.b16 %v225
  %v465 = vunpack.c.h.b16 %v225
  %v466 = vunpack.c.l.b16 %v226
  %v467 = vunpack.c.h.b16 %v226
  %v468 = vunpack.c.l.b16 %v227
  %v469 = vunpack.c.h.b16 %v227
  %v470 = vunpack.c.l.b16 %v228
  %v471 = vunpack.c.h.b16 %v228
  %v472 = vunpack.c.l.b16 %v229
  %v473 = vunpack.c.h.b16 %v229
  %v474 = vunpack.c.l.b16 %v230
  %v475 = vunpack.c.h.b16 %v230
  %v476 = vunpack.c.l.b16 %v231
  %v477 = vunpack.c.h.b16 %v231
  %v478 = vunpack.c.l.b16 %v232
  %v479 = vunpack.c.h.b16 %v232
  %v480 = vunpack.c.l.b16 %v233
  %v481 = vunpack.c.h.b16 %v233
  %v482 = vunpack.c.l.b16 %v234
  %v483 = vunpack.c.h.b16 %v234
  %v484 = vunpack.c.l.b16 %v235
  %v485 = vunpack.c.h.b16 %v235
  %v486 = vunpack.c.l.b16 %v236
  %v487 = vunpack.c.h.b16 %v236
  %v488 = vunpack.c.l.b16 %v237
  %v489 = vunpack.c.h.b16 %v237
  %v490 = vunpack.c.l.b16 %v238
  %v491 = vunpack.c.h.b16 %v238
  %v492 = vunpack.c.l.b16 %v239
  %v493 = vunpack.c.h.b16 %v239
  %v494 = vunpack.c.l.b16 %v240
  %v495 = vunpack.c.h.b16 %v240
  %v496 = vunpack.c.l.b16 %v241
  %v497 = vunpack.c.h.b16 %v241
  %v498 = vunpack.c.l.b16 %v242
  %v499 = vunpack.c.h.b16 %v242
  %v500 = vunpack.c.l.b16 %v243
  %v501 = vunpack.c.h.b16 %v243
  %v502 = vunpack.c.l.b16 %v244
  %v503 = vunpack.c.h.b16 %v244
  %v504 = vunpack.c.l.b16 %v245
  %v505 = vunpack.c.h.b16 %v245
  %v506 = vunpack.c.l.b16 %v246
  %v507 = vunpack.c.h.b16 %v246
  %v508 = vunpack.c.l.b16 %v247
  %v509 = vunpack.c.h.b16 %v247
  %v510 = vunpack.c.l.b16 %v248
  %v511 = vunpack.c.h.b16 %v248
  %v512 = vunpack.c.l.b16 %v249
  %v513 = vunpack.c.h.b16 %v249
  %v514 = vunpack.c.l.b16 %v250
  %v515 = vunpack.c.h.b16 %v250
  %v516 = vunpack.c.l.b16 %v251
  %v517 = vunpack.c.h.b16 %v251
  %v518 = vunpack.c.l.b16 %v252
  %v519 = vunpack.c.h.b16 %v252
  %v520 = vunpack.c.l.b16 %v253
  %v521 = vunpack.c.h.b16 %v253
  %v522 = vunpack.c.l.b16 %v254
  %v523 = vunpack.c.h.b16 %v254
  %v524 = vunpack.c.l.b16 %v255
  %v525 = vunpack.c.h.b16 %v255
  %v526 = vunpack.c.l.b16 %v256
  %v527 = vunpack.c.h.b16 %v256
  %v528 = vunpack.c.l.b16 %v257
  %v529 = vunpack.c.h.b16 %v257
  %v530 = vunpack.c.l.b16 %v258
  %v531 = vunpack.c.h.b16 %v258
  %v532 = vunpack.c.l.b16 %v259
  %v533 = vunpack.c.h.b16 %v259
  %v534 = vunpack.c.l.b16 %v260
  %v535 = vunpack.c.h.b16 %v260
  %v536 = vunpack.c.l.b16 %v261
  %v537 = vunpack.c.h.b16 %v261
  %v538 = vunpack.c.l.b16 %v262
  %v539 = vunpack.c.h.b16 %v262
  %v540 = vunpack.c.l.b16 %v263
  %v541 = vunpack.c.h.b16 %v263
  %v542 = vunpack.c.l.b16 %v264
  %v543 = vunpack.c.h.b16 %v264
  %v544 = vunpack.c.l.b16 %v265
  %v545 = vunpack.c.h.b16 %v265
  %v546 = vunpack.c.l.b16 %v266
  %v547 = vunpack.c.h.b16 %v266
  %v548 = vunpack.c.l.b16 %v267
  %v549 = vunpack.c.h.b16 %v267
  %v550 = vunpack.c.l.b16 %v268
  %v551 = vunpack.c.h.b16 %v268
  %v552 = vunpack.c.l.b16 %v269
  %v553 = vunpack.c.h.b16 %v269
  %v554 = vunpack.c.l.b16 %v270
  %v555 = vunpack.c.h.b16 %v270
  %v556 = vunpack.c.l.b16 %v271
  %v557 = vunpack.c.h.b16 %v271
  %v558 = vunpack.c.l.b16 %v272
  %v559 = vunpack.c.h.b16 %v272
  %v560 = vunpack.c.l.b16 %v273
  %v561 = vunpack.c.h.b16 %v273
  %v562 = vunpack.c.l.b16 %v274
  %v563 = vunpack.c.h.b16 %v274
  %v564 = vunpack.c.l.b16 %v275
  %v565 = vunpack.c.h.b16 %v275
  %v566 = vunpack.c.l.b16 %v276
  %v567 = vunpack.c.h.b16 %v276
  %v568 = vunpack.c.l.b16 %v277
  %v569 = vunpack.c.h.b16 %v277
  %v570 = vunpack.c.l.b16 %v278
  %v571 = vunpack.c.h.b16 %v278
  %v572 = vunpack.c.l.b16 %v279
  %v573 = vunpack.c.h.b16 %v279
  %v574 = vunpack.c.l.b16 %v280
  %v575 = vunpack.c.h.b16 %v280
  %v576 = vunpack.c.l.b16 %v281
  %v577 = vunpack.c.h.b16 %v281
  %v578 = vunpack.c.l.b16 %v282
  %v579 = vunpack.c.h.b16 %v282
  %v580 = vunpack.c.l.b16 %v283
  %v581 = vunpack.c.h.b16 %v283
  %v582 = vunpack.c.l.b16 %v284
  %v583 = vunpack.c.h.b16 %v284
  %v584 = vunpack.c.l.b16 %v285
  %v585 = vunpack.c.h.b16 %v285
  %v586 = vunpack.c.l.b16 %v286
  %v587 = vunpack.c.h.b16 %v286
  %v588 = vunpack.c.l.b16 %v287
  %v589 = vunpack.c.h.b16 %v287
  %v590 = vunpack.c.l.b16 %v288
  %v591 = vunpack.c.h.b16 %v288
  %v592 = vunpack.c.l.b16 %v289
  %v593 = vunpack.c.h.b16 %v289
  %v594 = vunpack.c.l.b16 %v290
  %v595 = vunpack.c.h.b16 %v290
  %v596 = vunpack.c.l.b16 %v291
  %v597 = vunpack.c.h.b16 %v291
  %v598 = vunpack.c.l.b16 %v292
  %v599 = vunpack.c.h.b16 %v292
  %v600 = vunpack.c.l.b16 %v293
  %v601 = vunpack.c.h.b16 %v293
  %v602 = vunpack.c.l.b16 %v294
  %v603 = vunpack.c.h.b16 %v294
  %v604 = vunpack.c.l.b16 %v295
  %v605 = vunpack.c.h.b16 %v295
  %v606 = vunpack.c.l.b16 %v296
  %v607 = vunpack.c.h.b16 %v296
  %v608 = vunpack.c.l.b16 %v297
  %v609 = vunpack.c.h.b16 %v297
  %v610 = vunpack.c.l.b16 %v298
  %v611 = vunpack.c.h.b16 %v298
  %v612 = vunpack.c.l.b16 %v299
  %v613 = vunpack.c.h.b16 %v299
  %v614 = vunpack.c.l.b16 %v300
  %v615 = vunpack.c.h.b16 %v300
  %v616 = vunpack.c.l.b16 %v301
  %v617 = vunpack.c.h.b16 %v301
  %v618 = vunpack.c.l.b16 %v302
  %v619 = vunpack.c.h.b16 %v302
  %v620 = vunpack.c.l.b16 %v303
  %v621 = vunpack.c.h.b16 %v303
  %v622 = vunpack.c.l.b16 %v304
  %v623 = vunpack.c.h.b16 %v304
  %v624 = vunpack.c.l.b16 %v305
  %v625 = vunpack.c.h.b16 %v305
  %v626 = vpack.c.b16 %v440, %v434
  %v627 = vpack.c.b16 %v441, %v435
  %v628 = vpack.c.b16 %v442, %v436
  %v629 = vpack.c.b16 %v443, %v437
  %v630 = vpack.c.b16 %v444, %v438
  %v631 = vpack.c.b16 %v445, %v439
  %v632 = vpack.c.b16 %v452, %v446
  %v633 = vpack.c.b16 %v453, %v447
  %v634 = vpack.c.b16 %v454, %v448
  %v635 = vpack.c.b16 %v455, %v449
  %v636 = vpack.c.b16 %v456, %v450
  %v637 = vpack.c.b16 %v457, %v451
  %v638 = vpack.c.b16 %v464, %v458
  %v639 = vpack.c.b16 %v465, %v459
  %v640 = vpack.c.b16 %v466, %v460
  %v641 = vpack.c.b16 %v467, %v461
  %v642 = vpack.c.b16 %v468, %v462
  %v643 = vpack.c.b16 %v469, %v463
  %v644 = vpack.c.b16 %v476, %v470
  %v645 = vpack.c.b16 %v477, %v471
  %v646 = vpack.c.b16 %v478, %v472
  %v647 = vpack.c.b16 %v479, %v473
  %v648 = vpack.c.b16 %v480, %v474
  %v649 = vpack.c.b16 %v481, %v475
  %v650 = vpack.c.b16 %v488, %v482
  %v651 = vpack.c.b16 %v489, %v483
  %v652 = vpack.c.b16 %v490, %v484
  %v653 = vpack.c.b16 %v491, %v485
  %v654 = vpack.c.b16 %v492, %v486
  %v655 = vpack.c.b16 %v493, %v487
  %v656 = vpack.c.b16 %v500, %v494
  %v657 = vpack.c.b16 %v501, %v495
  %v658 = vpack.c.b16 %v502, %v496
  %v659 = vpack.c.b16 %v503, %v497
  %v660 = vpack.c.b16 %v504, %v498
  %v661 = vpack.c.b16 %v505, %v499
  %v662 = vpack.c.b16 %v512, %v506
  %v663 = vpack.c.b16 %v513, %v507
  %v664 = vpack.c.b16 %v514, %v508
  %v665 = vpack.c.b16 %v515, %v509
  %v666 = vpack.c.b16 %v516, %v510
  %v667 = vpack.c.b16 %v517, %v511
  %v668 = vpack.c.b16 %v524, %v518
  %v669 = vpack.c.b16 %v525, %v519
  %v670 = vpack.c.b16 %v526, %v520
  %v671 = vpack.c.b16 %v527, %v521
  %v672 = vpack.c.b16 %v528, %v522
  %v673 = vpack.c.b16 %v529, %v523
  %v674 = vpack.c.b16 %v536, %v530
  %v675 = vpack.c.b16 %v537, %v531
  %v676 = vpack.c.b16 %v538, %v532
  %v677 = vpack.c.b16 %v539, %v533
  %v678 = vpack.c.b16 %v540, %v534
  %v679 = vpack.c.b16 %v541, %v535
  %v680 = vpack.c.b16 %v548, %v542
  %v681 = vpack.c.b16 %v549, %v543
  %v682 = vpack.c.b16 %v550, %v544
  %v683 = vpack.c.b16 %v551, %v545
  %v684 = vpack.c.b16 %v552, %v546
  %v685 = vpack.c.b16 %v553, %v547
  %v686 = vpack.c.b16 %v560, %v554
  %v687 = vpack.c.b16 %v561, %v555
  %v688 = vpack.c.b16 %v562, %v556
  %v689 = vpack.c.b16 %v563, %v557
  %v690 = vpack.c.b16 %v564, %v558
  %v691 = vpack.c.b16 %v565, %v559
  %v692 = vpack.c.b16 %v572, %v566
  %v693 = vpack.c.b16 %v573, %v567
  %v694 = vpack.c.b16 %v574, %v568
  %v695 = vpack.c.b16 %v575, %v569
  %v696 = vpack.c.b16 %v576, %v570
  %v697 = vpack.c.b16 %v577, %v571
  %v698 = vpack.c.b16 %v584, %v578
  %v699 = vpack.c.b16 %v585, %v579
  %v700 = vpack.c.b16 %v586, %v580
  %v701 = vpack.c.b16 %v587, %v581
  %v702 = vpack.c.b16 %v588, %v582
  %v703 = vpack.c.b16 %v589, %v583
  %v704 = vpack.c.b16 %v596, %v590
  %v705 = vpack.c.b16 %v597, %v591
  %v706 = vpack.c.b16 %v598, %v592
  %v707 = vpack.c.b16 %v599, %v593
  %v708 = vpack.c.b16 %v600, %v594
  %v709 = vpack.c.b16 %v601, %v595
  %v710 = vpack.c.b16 %v608, %v602
  %v711 = vpack.c.b16 %v609, %v603
  %v712 = vpack.c.b16 %v610, %v604
  %v713 = vpack.c.b16 %v611, %v605
  %v714 = vpack.c.b16 %v612, %v606
  %v715 = vpack.c.b16 %v613, %v607
  %v716 = vpack.c.b16 %v620, %v614
  %v717 = vpack.c.b16 %v621, %v615
  %v718 = vpack.c.b16 %v622, %v616
  %v719 = vpack.c.b16 %v623, %v617
  %v720 = vpack.c.b16 %v624, %v618
  %v721 = vpack.c.b16 %v625, %v619
  %818 = vmatprep.subr.bf16.mxu0 %v627
  %819 = vmatpush1.bf16.msra.mxu0 %v626
  %820 = vmatprep.subr.bf16.mxu0 %v633
  %821 = vmatpush1.bf16.msra.mxu0 %v632
  %822 = vmatprep.subr.bf16.mxu0 %v639
  %823 = vmatpush1.bf16.msra.mxu0 %v638
  %824 = vmatprep.subr.bf16.mxu0 %v645
  %825 = vmatpush1.bf16.msra.mxu0 %v644
  %826 = vmatprep.subr.bf16.mxu0 %v651
  %827 = vmatpush1.bf16.msra.mxu0 %v650
  %828 = vmatprep.subr.bf16.mxu0 %v657
  %829 = vmatpush1.bf16.msra.mxu0 %v656
  %830 = vmatprep.subr.bf16.mxu0 %v663
  %831 = vmatpush1.bf16.msra.mxu0 %v662
  %832 = vmatprep.subr.bf16.mxu0 %v669
  %833 = vmatpush1.bf16.msra.mxu0 %v668
  %834 = vmatprep.subr.bf16.mxu0 %v675
  %835 = vmatpush1.bf16.msra.mxu0 %v674
  %836 = vmatprep.subr.bf16.mxu0 %v681
  %837 = vmatpush1.bf16.msra.mxu0 %v680
  %838 = vmatprep.subr.bf16.mxu0 %v687
  %839 = vmatpush1.bf16.msra.mxu0 %v686
  %840 = vmatprep.subr.bf16.mxu0 %v693
  %841 = vmatpush1.bf16.msra.mxu0 %v692
  %842 = vmatprep.subr.bf16.mxu0 %v699
  %843 = vmatpush1.bf16.msra.mxu0 %v698
  %844 = vmatprep.subr.bf16.mxu0 %v705
  %845 = vmatpush1.bf16.msra.mxu0 %v704
  %846 = vmatprep.subr.bf16.mxu0 %v711
  %847 = vmatpush1.bf16.msra.mxu0 %v710
  %848 = vmatprep.subr.bf16.mxu0 %v717
  %849 = vmatpush1.bf16.msra.mxu0 %v716
  %850 = vmatprep.mubr.bf16.mxu0 %v207
  %851 = vmatmul.mubr.bf16.gmra.mrb[0].mxu0 %v206
  %v852 = vpop.f32.mrb[0].mxu0
  %v853 = vadd.f32 %v311, %v852
  %v854 = vpop.f32.mrb[0].mxu0
  %v855 = vadd.f32 %v315, %v854
  %v856 = vpop.f32.mrb[0].mxu0
  %v857 = vadd.f32 %v311, %v856
  %v858 = vpop.f32.mrb[0].mxu0
  %v859 = vadd.f32 %v315, %v858
  %860 = vmatprep.mubr.bf16.mxu0 %v209
  %861 = vmatmul.mubr.bf16.gmra.mrb[0].mxu0 %v208
  %v862 = vpop.f32.mrb[0].mxu0
  %v863 = vadd.f32 %v311, %v862
  %v864 = vpop.f32.mrb[0].mxu0
  %v865 = vadd.f32 %v315, %v864
  %v866 = vpop.f32.mrb[0].mxu0
  %v867 = vadd.f32 %v311, %v866
  %v868 = vpop.f32.mrb[0].mxu0
  %v869 = vadd.f32 %v315, %v868
  %870 = vdwg.mxu0
  %871 = vmatprep.subr.bf16.mxu0 %v629
  %872 = vmatpush1.bf16.msra.mxu0 %v628
  %873 = vmatprep.subr.bf16.mxu0 %v635
  %874 = vmatpush1.bf16.msra.mxu0 %v634
  %875 = vmatprep.subr.bf16.mxu0 %v641
  %876 = vmatpush1.bf16.msra.mxu0 %v640
  %877 = vmatprep.subr.bf16.mxu0 %v647
  %878 = vmatpush1.bf16.msra.mxu0 %v646
  %879 = vmatprep.subr.bf16.mxu0 %v653
  %880 = vmatpush1.bf16.msra.mxu0 %v652
  %881 = vmatprep.subr.bf16.mxu0 %v659
  %882 = vmatpush1.bf16.msra.mxu0 %v658
  %883 = vmatprep.subr.bf16.mxu0 %v665
  %884 = vmatpush1.bf16.msra.mxu0 %v664
  %885 = vmatprep.subr.bf16.mxu0 %v671
  %886 = vmatpush1.bf16.msra.mxu0 %v670
  %887 = vmatprep.subr.bf16.mxu0 %v677
  %888 = vmatpush1.bf16.msra.mxu0 %v676
  %889 = vmatprep.subr.bf16.mxu0 %v683
  %890 = vmatpush1.bf16.msra.mxu0 %v682
  %891 = vmatprep.subr.bf16.mxu0 %v689
  %892 = vmatpush1.bf16.msra.mxu0 %v688
  %893 = vmatprep.subr.bf16.mxu0 %v695
  %894 = vmatpush1.bf16.msra.mxu0 %v694
  %895 = vmatprep.subr.bf16.mxu0 %v701
  %896 = vmatpush1.bf16.msra.mxu0 %v700
  %897 = vmatprep.subr.bf16.mxu0 %v707
  %898 = vmatpush1.bf16.msra.mxu0 %v706
  %899 = vmatprep.subr.bf16.mxu0 %v713
  %900 = vmatpush1.bf16.msra.mxu0 %v712
  %901 = vmatprep.subr.bf16.mxu0 %v719
  %902 = vmatpush1.bf16.msra.mxu0 %v718
  %903 = vmatprep.mubr.bf16.mxu0 %v207
  %904 = vmatmul.mubr.bf16.gmra.mrb[0].mxu0 %v206
  %v905 = vpop.f32.mrb[0].mxu0
  %v906 = vadd.f32 %v319, %v905
  %v907 = vpop.f32.mrb[0].mxu0
  %v908 = vadd.f32 %v323, %v907
  %v909 = vpop.f32.mrb[0].mxu0
  %v910 = vadd.f32 %v319, %v909
  %v911 = vpop.f32.mrb[0].mxu0
  %v912 = vadd.f32 %v323, %v911
  %913 = vmatprep.mubr.bf16.mxu0 %v209
  %914 = vmatmul.mubr.bf16.gmra.mrb[0].mxu0 %v208
  %v915 = vpop.f32.mrb[0].mxu0
  %v916 = vadd.f32 %v319, %v915
  %v917 = vpop.f32.mrb[0].mxu0
  %v918 = vadd.f32 %v323, %v917
  %v919 = vpop.f32.mrb[0].mxu0
  %v920 = vadd.f32 %v319, %v919
  %v921 = vpop.f32.mrb[0].mxu0
  %v922 = vadd.f32 %v323, %v921
  %923 = vdwg.mxu0
  %924 = vmatprep.subr.bf16.mxu0 %v631
  %925 = vmatpush1.bf16.msra.mxu0 %v630
  %926 = vmatprep.subr.bf16.mxu0 %v637
  %927 = vmatpush1.bf16.msra.mxu0 %v636
  %928 = vmatprep.subr.bf16.mxu0 %v643
  %929 = vmatpush1.bf16.msra.mxu0 %v642
  %930 = vmatprep.subr.bf16.mxu0 %v649
  %931 = vmatpush1.bf16.msra.mxu0 %v648
  %932 = vmatprep.subr.bf16.mxu0 %v655
  %933 = vmatpush1.bf16.msra.mxu0 %v654
  %934 = vmatprep.subr.bf16.mxu0 %v661
  %935 = vmatpush1.bf16.msra.mxu0 %v660
  %936 = vmatprep.subr.bf16.mxu0 %v667
  %937 = vmatpush1.bf16.msra.mxu0 %v666
  %938 = vmatprep.subr.bf16.mxu0 %v673
  %939 = vmatpush1.bf16.msra.mxu0 %v672
  %940 = vmatprep.subr.bf16.mxu0 %v679
  %941 = vmatpush1.bf16.msra.mxu0 %v678
  %942 = vmatprep.subr.bf16.mxu0 %v685
  %943 = vmatpush1.bf16.msra.mxu0 %v684
  %944 = vmatprep.subr.bf16.mxu0 %v691
  %945 = vmatpush1.bf16.msra.mxu0 %v690
  %946 = vmatprep.subr.bf16.mxu0 %v697
  %947 = vmatpush1.bf16.msra.mxu0 %v696
  %948 = vmatprep.subr.bf16.mxu0 %v703
  %949 = vmatpush1.bf16.msra.mxu0 %v702
  %950 = vmatprep.subr.bf16.mxu0 %v709
  %951 = vmatpush1.bf16.msra.mxu0 %v708
  %952 = vmatprep.subr.bf16.mxu0 %v715
  %953 = vmatpush1.bf16.msra.mxu0 %v714
  %954 = vmatprep.subr.bf16.mxu0 %v721
  %955 = vmatpush1.bf16.msra.mxu0 %v720
  %956 = vmatprep.mubr.bf16.mxu0 %v207
  %957 = vmatmul.mubr.bf16.gmra.mrb[0].mxu0 %v206
  %v958 = vpop.f32.mrb[0].mxu0
  %v959 = vadd.f32 %v327, %v958
  %v960 = vpop.f32.mrb[0].mxu0
  %v961 = vadd.f32 %v331, %v960
  %v962 = vpop.f32.mrb[0].mxu0
  %v963 = vadd.f32 %v327, %v962
  %v964 = vpop.f32.mrb[0].mxu0
  %v965 = vadd.f32 %v331, %v964
  %966 = vmatprep.mubr.bf16.mxu0 %v209
  %967 = vmatmul.mubr.bf16.gmra.mrb[0].mxu0 %v208
  %v968 = vpop.f32.mrb[0].mxu0
  %v969 = vadd.f32 %v327, %v968
  %v970 = vpop.f32.mrb[0].mxu0
  %v971 = vadd.f32 %v331, %v970
  %v972 = vpop.f32.mrb[0].mxu0
  %v973 = vadd.f32 %v327, %v972
  %v974 = vpop.f32.mrb[0].mxu0
  %v975 = vadd.f32 %v331, %v974
  %976 = vdwg.mxu0
  %v977 = vld [vmem:[%s9] sm:$0xff]
  %v978 = vld [vmem:[%s9 + $0x8] sm:$0xff]
  %v979 = vld [vmem:[%s9 + $0x10] sm:$0xff]
  %v980 = vld [vmem:[%s9 + $0x18] sm:$0xff]
  %v981 = vld [vmem:[%s9 + $0x20] sm:$0xff]
  %v982 = vld [vmem:[%s9 + $0x28] sm:$0xff]
  %v983 = vld [vmem:[%s9 + $0x30] sm:$0xff]
  %v984 = vld [vmem:[%s9 + $0x38] sm:$0xff]
  %v985 = vld [vmem:[%s9 + $0x40] sm:$0xff]
  %v986 = vld [vmem:[%s9 + $0x48] sm:$0xff]
  %v987 = vld [vmem:[%s9 + $0x50] sm:$0xff]
  %v988 = vld [vmem:[%s9 + $0x58] sm:$0xff]
  %v989 = vld [vmem:[%s9 + $0x60] sm:$0xff]
  %v990 = vld [vmem:[%s9 + $0x68] sm:$0xff]
  %v991 = vld [vmem:[%s9 + $0x70] sm:$0xff]
  %v992 = vld [vmem:[%s9 + $0x78] sm:$0xff]
  %v993 = vld [vmem:[%s9 + $0x80] sm:$0xff]
  %v994 = vld [vmem:[%s9 + $0x88] sm:$0xff]
  %v995 = vld [vmem:[%s9 + $0x90] sm:$0xff]
  %v996 = vld [vmem:[%s9 + $0x98] sm:$0xff]
  %v997 = vld [vmem:[%s9 + $0xa0] sm:$0xff]
  %v998 = vld [vmem:[%s9 + $0xa8] sm:$0xff]
  %v999 = vld [vmem:[%s9 + $0xb0] sm:$0xff]
  %v1000 = vld [vmem:[%s9 + $0xb8] sm:$0xff]
  %v1001 = vld [vmem:[%s9 + $0xc0] sm:$0xff]
  %v1002 = vld [vmem:[%s9 + $0xc8] sm:$0xff]
  %v1003 = vld [vmem:[%s9 + $0xd0] sm:$0xff]
  %v1004 = vld [vmem:[%s9 + $0xd8] sm:$0xff]
  %v1005 = vld [vmem:[%s9 + $0xe0] sm:$0xff]
  %v1006 = vld [vmem:[%s9 + $0xe8] sm:$0xff]
  %v1007 = vld [vmem:[%s9 + $0xf0] sm:$0xff]
  %v1008 = vld [vmem:[%s9 + $0xf8] sm:$0xff]
  %v1009 = vld [vmem:[%s10] sm:$0xff]
  %v1010 = vld [vmem:[%s10 + $0x8] sm:$0xff]
  %v1011 = vmul.f32 %v853, %v906
  %v1012 = vmul.f32 %v855, %v908
  %v1013 = vmul.f32 %v857, %v910
  %v1014 = vmul.f32 %v859, %v912
  %1015 = vmatprep.subr.mxu0 0.0
  %1016 = vmatpush1.msra.mxu0 %v977
  %1017 = vmatprep.subr.mxu0 0.0
  %1018 = vmatpush1.msra.mxu0 %v978
  %1019 = vmatprep.subr.mxu0 0.0
  %1020 = vmatpush1.msra.mxu0 %v979
  %1021 = vmatprep.subr.mxu0 0.0
  %1022 = vmatpush1.msra.mxu0 %v980
  %1023 = vmatprep.subr.mxu0 0.0
  %1024 = vmatpush1.msra.mxu0 %v981
  %1025 = vmatprep.subr.mxu0 0.0
  %1026 = vmatpush1.msra.mxu0 %v982
  %1027 = vmatprep.subr.mxu0 0.0
  %1028 = vmatpush1.msra.mxu0 %v983
  %1029 = vmatprep.subr.mxu0 0.0
  %1030 = vmatpush1.msra.mxu0 %v984
  %1031 = vmatprep.subr.mxu0 0.0
  %1032 = vmatpush1.msra.mxu0 %v985
  %1033 = vmatprep.subr.mxu0 0.0
  %1034 = vmatpush1.msra.mxu0 %v986
  %1035 = vmatprep.subr.mxu0 0.0
  %1036 = vmatpush1.msra.mxu0 %v987
  %1037 = vmatprep.subr.mxu0 0.0
  %1038 = vmatpush1.msra.mxu0 %v988
  %1039 = vmatprep.subr.mxu0 0.0
  %1040 = vmatpush1.msra.mxu0 %v989
  %1041 = vmatprep.subr.mxu0 0.0
  %1042 = vmatpush1.msra.mxu0 %v990
  %1043 = vmatprep.subr.mxu0 0.0
  %1044 = vmatpush1.msra.mxu0 %v991
  %1045 = vmatprep.subr.mxu0 0.0
  %1046 = vmatpush1.msra.mxu0 %v992
  %1047 = vmatprep.subr.mxu0 0.0
  %1048 = vmatpush1.msra.mxu0 %v993
  %1049 = vmatprep.subr.mxu0 0.0
  %1050 = vmatpush1.msra.mxu0 %v994
  %1051 = vmatprep.subr.mxu0 0.0
  %1052 = vmatpush1.msra.mxu0 %v995
  %1053 = vmatprep.subr.mxu0 0.0
  %1054 = vmatpush1.msra.mxu0 %v996
  %1055 = vmatprep.subr.mxu0 0.0
  %1056 = vmatpush1.msra.mxu0 %v997
  %1057 = vmatprep.subr.mxu0 0.0
  %1058 = vmatpush1.msra.mxu0 %v998
  %1059 = vmatprep.subr.mxu0 0.0
  %1060 = vmatpush1.msra.mxu0 %v999
  %1061 = vmatprep.subr.mxu0 0.0
  %1062 = vmatpush1.msra.mxu0 %v1000
  %1063 = vmatprep.subr.mxu0 0.0
  %1064 = vmatpush1.msra.mxu0 %v1001
  %1065 = vmatprep.subr.mxu0 0.0
  %1066 = vmatpush1.msra.mxu0 %v1002
  %1067 = vmatprep.subr.mxu0 0.0
  %1068 = vmatpush1.msra.mxu0 %v1003
  %1069 = vmatprep.subr.mxu0 0.0
  %1070 = vmatpush1.msra.mxu0 %v1004
  %1071 = vmatprep.subr.mxu0 0.0
  %1072 = vmatpush1.msra.mxu0 %v1005
  %1073 = vmatprep.subr.mxu0 0.0
  %1074 = vmatpush1.msra.mxu0 %v1006
  %1075 = vmatprep.subr.mxu0 0.0
  %1076 = vmatpush1.msra.mxu0 %v1007
  %1077 = vmatprep.subr.mxu0 0.0
  %1078 = vmatpush1.msra.mxu0 %v1008
  %1079 = vmatprep.mubr.f32.mxu0 %v1012
  %1080 = vmatmul.mubr.f32.gmra.mrb[0].mxu0 %v1011
  %v1081 = vpop.f32.mrb[0].mxu0
  %v1082 = vadd.f32 0.0, %v1081
  %v1083 = vpop.f32.mrb[0].mxu0
  %1084 = vmatprep.mubr.f32.mxu0 %v1014
  %1085 = vmatmul.mubr.f32.gmra.mrb[0].mxu0 %v1013
  %v1086 = vpop.f32.mrb[0].mxu0
  %v1087 = vadd.f32 0.0, %v1086
  %v1088 = vpop.f32.mrb[0].mxu0
  %1089 = vdwg.mxu0
  %v1090 = vmul.f32 %v1082, 0.17677669
  %v1091 = vmul.f32 %v1087, 0.17677669
  %v1092 = vmul.f32 %v853, %v916
  %v1093 = vmul.f32 %v855, %v918
  %v1094 = vmul.f32 %v857, %v920
  %v1095 = vmul.f32 %v859, %v922
  %1096 = vmatprep.subr.mxu0 0.0
  %1097 = vmatpush1.msra.mxu0 %v977
  %1098 = vmatprep.subr.mxu0 0.0
  %1099 = vmatpush1.msra.mxu0 %v978
  %1100 = vmatprep.subr.mxu0 0.0
  %1101 = vmatpush1.msra.mxu0 %v979
  %1102 = vmatprep.subr.mxu0 0.0
  %1103 = vmatpush1.msra.mxu0 %v980
  %1104 = vmatprep.subr.mxu0 0.0
  %1105 = vmatpush1.msra.mxu0 %v981
  %1106 = vmatprep.subr.mxu0 0.0
  %1107 = vmatpush1.msra.mxu0 %v982
  %1108 = vmatprep.subr.mxu0 0.0
  %1109 = vmatpush1.msra.mxu0 %v983
  %1110 = vmatprep.subr.mxu0 0.0
  %1111 = vmatpush1.msra.mxu0 %v984
  %1112 = vmatprep.subr.mxu0 0.0
  %1113 = vmatpush1.msra.mxu0 %v985
  %1114 = vmatprep.subr.mxu0 0.0
  %1115 = vmatpush1.msra.mxu0 %v986
  %1116 = vmatprep.subr.mxu0 0.0
  %1117 = vmatpush1.msra.mxu0 %v987
  %1118 = vmatprep.subr.mxu0 0.0
  %1119 = vmatpush1.msra.mxu0 %v988
  %1120 = vmatprep.subr.mxu0 0.0
  %1121 = vmatpush1.msra.mxu0 %v989
  %1122 = vmatprep.subr.mxu0 0.0
  %1123 = vmatpush1.msra.mxu0 %v990
  %1124 = vmatprep.subr.mxu0 0.0
  %1125 = vmatpush1.msra.mxu0 %v991
  %1126 = vmatprep.subr.mxu0 0.0
  %1127 = vmatpush1.msra.mxu0 %v992
  %1128 = vmatprep.subr.mxu0 0.0
  %1129 = vmatpush1.msra.mxu0 %v993
  %1130 = vmatprep.subr.mxu0 0.0
  %1131 = vmatpush1.msra.mxu0 %v994
  %1132 = vmatprep.subr.mxu0 0.0
  %1133 = vmatpush1.msra.mxu0 %v995
  %1134 = vmatprep.subr.mxu0 0.0
  %1135 = vmatpush1.msra.mxu0 %v996
  %1136 = vmatprep.subr.mxu0 0.0
  %1137 = vmatpush1.msra.mxu0 %v997
  %1138 = vmatprep.subr.mxu0 0.0
  %1139 = vmatpush1.msra.mxu0 %v998
  %1140 = vmatprep.subr.mxu0 0.0
  %1141 = vmatpush1.msra.mxu0 %v999
  %1142 = vmatprep.subr.mxu0 0.0
  %1143 = vmatpush1.msra.mxu0 %v1000
  %1144 = vmatprep.subr.mxu0 0.0
  %1145 = vmatpush1.msra.mxu0 %v1001
  %1146 = vmatprep.subr.mxu0 0.0
  %1147 = vmatpush1.msra.mxu0 %v1002
  %1148 = vmatprep.subr.mxu0 0.0
  %1149 = vmatpush1.msra.mxu0 %v1003
  %1150 = vmatprep.subr.mxu0 0.0
  %1151 = vmatpush1.msra.mxu0 %v1004
  %1152 = vmatprep.subr.mxu0 0.0
  %1153 = vmatpush1.msra.mxu0 %v1005
  %1154 = vmatprep.subr.mxu0 0.0
  %1155 = vmatpush1.msra.mxu0 %v1006
  %1156 = vmatprep.subr.mxu0 0.0
  %1157 = vmatpush1.msra.mxu0 %v1007
  %1158 = vmatprep.subr.mxu0 0.0
  %1159 = vmatpush1.msra.mxu0 %v1008
  %1160 = vmatprep.mubr.f32.mxu0 %v1093
  %1161 = vmatmul.mubr.f32.gmra.mrb[0].mxu0 %v1092
  %v1162 = vpop.f32.mrb[0].mxu0
  %v1163 = vadd.f32 0.0, %v1162
  %v1164 = vpop.f32.mrb[0].mxu0
  %1165 = vmatprep.mubr.f32.mxu0 %v1095
  %1166 = vmatmul.mubr.f32.gmra.mrb[0].mxu0 %v1094
  %v1167 = vpop.f32.mrb[0].mxu0
  %v1168 = vadd.f32 0.0, %v1167
  %v1169 = vpop.f32.mrb[0].mxu0
  %1170 = vdwg.mxu0
  %v1171 = vmul.f32 %v1163, 0.17677669
  %v1172 = vmul.f32 %v1168, 0.17677669
  %v1173 = vmax.f32 %v1090, %v1171
  %v1174 = vmax.f32 %v1091, %v1172
  %v1175 = vsub.f32 %v1090, %v1173
  %v1176 = vsub.f32 %v1091, %v1174
  %v1177 = vmul.f32 %v1175, 1.442695
  %v1178 = vpow.pop %v1177
  %v1179 = vmul.f32 %v1176, 1.442695
  %v1180 = vpow.pop %v1179
  %v1181 = vsub.f32 %v1171, %v1173
  %v1182 = vsub.f32 %v1172, %v1174
  %v1183 = vmul.f32 %v1181, 1.442695
  %v1184 = vpow.pop %v1183
  %v1185 = vmul.f32 %v1182, 1.442695
  %v1186 = vpow.pop %v1185
  %v1187 = vadd.f32 %v1178, %v1184
  %v1188 = vadd.f32 %v1180, %v1186
  %v1189 = vrcp.pop %v1187
  %v1190 = vmul.f32 1.0, %v1189
  %v1191 = vrcp.pop %v1188
  %v1192 = vmul.f32 1.0, %v1191
  %v1193 = vmul.f32 %v1178, %v1190
  %v1194 = vmul.f32 %v1180, %v1192
  %vm1195 = vcmask 64512
  %v1197 = vsel %vm1195, %v1193, 0
  %v1200 = vsel %vm1195, %v1194, 0
  %1202 = vmatprep.subr.mxu0 %v1010
  %1203 = vmatpush1.msra.mxu0 %v1009
  %1204 = vmatprep.subr.mxu0 0.0
  %1205 = vmatpush1.msra.mxu0 0.0
  %1206 = vmatprep.subr.mxu0 0.0
  %1207 = vmatpush1.msra.mxu0 0.0
  %1208 = vmatprep.subr.mxu0 0.0
  %1209 = vmatpush1.msra.mxu0 0.0
  %1210 = vmatprep.subr.mxu0 0.0
  %1211 = vmatpush1.msra.mxu0 0.0
  %1212 = vmatprep.subr.mxu0 0.0
  %1213 = vmatpush1.msra.mxu0 0.0
  %1214 = vmatprep.subr.mxu0 0.0
  %1215 = vmatpush1.msra.mxu0 0.0
  %1216 = vmatprep.subr.mxu0 0.0
  %1217 = vmatpush1.msra.mxu0 0.0
  %1218 = vmatprep.subr.mxu0 0.0
  %1219 = vmatpush1.msra.mxu0 0.0
  %1220 = vmatprep.subr.mxu0 0.0
  %1221 = vmatpush1.msra.mxu0 0.0
  %1222 = vmatprep.subr.mxu0 0.0
  %1223 = vmatpush1.msra.mxu0 0.0
  %1224 = vmatprep.subr.mxu0 0.0
  %1225 = vmatpush1.msra.mxu0 0.0
  %1226 = vmatprep.subr.mxu0 0.0
  %1227 = vmatpush1.msra.mxu0 0.0
  %1228 = vmatprep.subr.mxu0 0.0
  %1229 = vmatpush1.msra.mxu0 0.0
  %1230 = vmatprep.subr.mxu0 0.0
  %1231 = vmatpush1.msra.mxu0 0.0
  %1232 = vmatprep.subr.mxu0 0.0
  %1233 = vmatpush1.msra.mxu0 0.0
  %1234 = vmatprep.subr.mxu0 0.0
  %1235 = vmatpush1.msra.mxu0 0.0
  %1236 = vmatprep.subr.mxu0 0.0
  %1237 = vmatpush1.msra.mxu0 0.0
  %1238 = vmatprep.subr.mxu0 0.0
  %1239 = vmatpush1.msra.mxu0 0.0
  %1240 = vmatprep.subr.mxu0 0.0
  %1241 = vmatpush1.msra.mxu0 0.0
  %1242 = vmatprep.subr.mxu0 0.0
  %1243 = vmatpush1.msra.mxu0 0.0
  %1244 = vmatprep.subr.mxu0 0.0
  %1245 = vmatpush1.msra.mxu0 0.0
  %1246 = vmatprep.subr.mxu0 0.0
  %1247 = vmatpush1.msra.mxu0 0.0
  %1248 = vmatprep.subr.mxu0 0.0
  %1249 = vmatpush1.msra.mxu0 0.0
  %1250 = vmatprep.subr.mxu0 0.0
  %1251 = vmatpush1.msra.mxu0 0.0
  %1252 = vmatprep.subr.mxu0 0.0
  %1253 = vmatpush1.msra.mxu0 0.0
  %1254 = vmatprep.subr.mxu0 0.0
  %1255 = vmatpush1.msra.mxu0 0.0
  %1256 = vmatprep.subr.mxu0 0.0
  %1257 = vmatpush1.msra.mxu0 0.0
  %1258 = vmatprep.subr.mxu0 0.0
  %1259 = vmatpush1.msra.mxu0 0.0
  %1260 = vmatprep.subr.mxu0 0.0
  %1261 = vmatpush1.msra.mxu0 0.0
  %1262 = vmatprep.subr.mxu0 0.0
  %1263 = vmatpush1.msra.mxu0 0.0
  %1264 = vmatprep.subr.mxu0 0.0
  %1265 = vmatpush1.msra.mxu0 0.0
  %1266 = vmatprep.mubr.f32.mxu0 0.0
  %1267 = vmatmul.mubr.f32.gmra.mrb[0].mxu0 %v1197
  %v1268 = vpop.f32.mrb[0].mxu0
  %v1269 = vadd.f32 0.0, %v1268
  %v1270 = vpop.f32.mrb[0].mxu0
  %v1271 = vadd.f32 0.0, %v1270
  %1272 = vmatprep.mubr.f32.mxu0 0.0
  %1273 = vmatmul.mubr.f32.gmra.mrb[0].mxu0 %v1200
  %v1274 = vpop.f32.mrb[0].mxu0
  %v1275 = vadd.f32 0.0, %v1274
  %v1276 = vpop.f32.mrb[0].mxu0
  %v1277 = vadd.f32 0.0, %v1276
  %1278 = vdwg.mxu0
  %v1279 = vmul.f32 %v1269, %v959
  %v1280 = vmul.f32 %v1271, %v961
  %v1281 = vmul.f32 %v1275, %v963
  %v1282 = vmul.f32 %v1277, %v965
  %v1283 = vmul.f32 %v1184, %v1190
  %v1284 = vmul.f32 %v1186, %v1192
  %v1286 = vsel %vm1195, %v1283, 0
  %v1289 = vsel %vm1195, %v1284, 0
  %1291 = vmatprep.subr.mxu0 %v1010
  %1292 = vmatpush1.msra.mxu0 %v1009
  %1293 = vmatprep.subr.mxu0 0.0
  %1294 = vmatpush1.msra.mxu0 0.0
  %1295 = vmatprep.subr.mxu0 0.0
  %1296 = vmatpush1.msra.mxu0 0.0
  %1297 = vmatprep.subr.mxu0 0.0
  %1298 = vmatpush1.msra.mxu0 0.0
  %1299 = vmatprep.subr.mxu0 0.0
  %1300 = vmatpush1.msra.mxu0 0.0
  %1301 = vmatprep.subr.mxu0 0.0
  %1302 = vmatpush1.msra.mxu0 0.0
  %1303 = vmatprep.subr.mxu0 0.0
  %1304 = vmatpush1.msra.mxu0 0.0
  %1305 = vmatprep.subr.mxu0 0.0
  %1306 = vmatpush1.msra.mxu0 0.0
  %1307 = vmatprep.subr.mxu0 0.0
  %1308 = vmatpush1.msra.mxu0 0.0
  %1309 = vmatprep.subr.mxu0 0.0
  %1310 = vmatpush1.msra.mxu0 0.0
  %1311 = vmatprep.subr.mxu0 0.0
  %1312 = vmatpush1.msra.mxu0 0.0
  %1313 = vmatprep.subr.mxu0 0.0
  %1314 = vmatpush1.msra.mxu0 0.0
  %1315 = vmatprep.subr.mxu0 0.0
  %1316 = vmatpush1.msra.mxu0 0.0
  %1317 = vmatprep.subr.mxu0 0.0
  %1318 = vmatpush1.msra.mxu0 0.0
  %1319 = vmatprep.subr.mxu0 0.0
  %1320 = vmatpush1.msra.mxu0 0.0
  %1321 = vmatprep.subr.mxu0 0.0
  %1322 = vmatpush1.msra.mxu0 0.0
  %1323 = vmatprep.subr.mxu0 0.0
  %1324 = vmatpush1.msra.mxu0 0.0
  %1325 = vmatprep.subr.mxu0 0.0
  %1326 = vmatpush1.msra.mxu0 0.0
  %1327 = vmatprep.subr.mxu0 0.0
  %1328 = vmatpush1.msra.mxu0 0.0
  %1329 = vmatprep.subr.mxu0 0.0
  %1330 = vmatpush1.msra.mxu0 0.0
  %1331 = vmatprep.subr.mxu0 0.0
  %1332 = vmatpush1.msra.mxu0 0.0
  %1333 = vmatprep.subr.mxu0 0.0
  %1334 = vmatpush1.msra.mxu0 0.0
  %1335 = vmatprep.subr.mxu0 0.0
  %1336 = vmatpush1.msra.mxu0 0.0
  %1337 = vmatprep.subr.mxu0 0.0
  %1338 = vmatpush1.msra.mxu0 0.0
  %1339 = vmatprep.subr.mxu0 0.0
  %1340 = vmatpush1.msra.mxu0 0.0
  %1341 = vmatprep.subr.mxu0 0.0
  %1342 = vmatpush1.msra.mxu0 0.0
  %1343 = vmatprep.subr.mxu0 0.0
  %1344 = vmatpush1.msra.mxu0 0.0
  %1345 = vmatprep.subr.mxu0 0.0
  %1346 = vmatpush1.msra.mxu0 0.0
  %1347 = vmatprep.subr.mxu0 0.0
  %1348 = vmatpush1.msra.mxu0 0.0
  %1349 = vmatprep.subr.mxu0 0.0
  %1350 = vmatpush1.msra.mxu0 0.0
  %1351 = vmatprep.subr.mxu0 0.0
  %1352 = vmatpush1.msra.mxu0 0.0
  %1353 = vmatprep.subr.mxu0 0.0
  %1354 = vmatpush1.msra.mxu0 0.0
  %1355 = vmatprep.mubr.f32.mxu0 0.0
  %1356 = vmatmul.mubr.f32.gmra.mrb[0].mxu0 %v1286
  %v1357 = vpop.f32.mrb[0].mxu0
  %v1358 = vadd.f32 0.0, %v1357
  %v1359 = vpop.f32.mrb[0].mxu0
  %v1360 = vadd.f32 0.0, %v1359
  %1361 = vmatprep.mubr.f32.mxu0 0.0
  %1362 = vmatmul.mubr.f32.gmra.mrb[0].mxu0 %v1289
  %v1363 = vpop.f32.mrb[0].mxu0
  %v1364 = vadd.f32 0.0, %v1363
  %v1365 = vpop.f32.mrb[0].mxu0
  %v1366 = vadd.f32 0.0, %v1365
  %1367 = vdwg.mxu0
  %v1368 = vmul.f32 %v1358, %v969
  %v1369 = vmul.f32 %v1360, %v971
  %v1370 = vmul.f32 %v1364, %v973
  %v1371 = vmul.f32 %v1366, %v975
  %v1372 = vadd.f32 %v1279, %v1368
  %v1373 = vadd.f32 %v1280, %v1369
  %v1374 = vadd.f32 %v1281, %v1370
  %v1375 = vadd.f32 %v1282, %v1371
  %v1376 = vpack.c.bf16 %v1374, %v1372
  %v1377 = vpack.c.bf16 %v1375, %v1373
  %v1378 = vld [vmem:[%s5] sm:$0xff]
  %v1379 = vld [vmem:[%s5 + $0x8] sm:$0xff]
  %v1380 = vld [vmem:[%s5 + $0x10] sm:$0xff]
  %v1381 = vld [vmem:[%s5 + $0x18] sm:$0xff]
  %v1382 = vld [vmem:[%s5 + $0x20] sm:$0xff]
  %v1383 = vld [vmem:[%s5 + $0x28] sm:$0xff]
  %v1384 = vld [vmem:[%s5 + $0x30] sm:$0xff]
  %v1385 = vld [vmem:[%s5 + $0x38] sm:$0xff]
  %v1386 = vld [vmem:[%s5 + $0x40] sm:$0xff]
  %v1387 = vld [vmem:[%s5 + $0x48] sm:$0xff]
  %v1388 = vld [vmem:[%s5 + $0x50] sm:$0xff]
  %v1389 = vld [vmem:[%s5 + $0x58] sm:$0xff]
  %v1390 = vld [vmem:[%s5 + $0x60] sm:$0xff]
  %v1391 = vld [vmem:[%s5 + $0x68] sm:$0xff]
  %v1392 = vld [vmem:[%s5 + $0x70] sm:$0xff]
  %v1393 = vld [vmem:[%s5 + $0x78] sm:$0xff]
  %v1394 = vld [vmem:[%s5 + $0x80] sm:$0xff]
  %v1395 = vld [vmem:[%s5 + $0x88] sm:$0xff]
  %v1396 = vld [vmem:[%s5 + $0x90] sm:$0xff]
  %v1397 = vld [vmem:[%s5 + $0x98] sm:$0xff]
  %v1398 = vld [vmem:[%s5 + $0xa0] sm:$0xff]
  %v1399 = vld [vmem:[%s5 + $0xa8] sm:$0xff]
  %v1400 = vld [vmem:[%s5 + $0xb0] sm:$0xff]
  %v1401 = vld [vmem:[%s5 + $0xb8] sm:$0xff]
  %v1402 = vld [vmem:[%s5 + $0xc0] sm:$0xff]
  %v1403 = vld [vmem:[%s5 + $0xc8] sm:$0xff]
  %v1404 = vld [vmem:[%s5 + $0xd0] sm:$0xff]
  %v1405 = vld [vmem:[%s5 + $0xd8] sm:$0xff]
  %v1406 = vld [vmem:[%s5 + $0xe0] sm:$0xff]
  %v1407 = vld [vmem:[%s5 + $0xe8] sm:$0xff]
  %v1408 = vld [vmem:[%s5 + $0xf0] sm:$0xff]
  %v1409 = vld [vmem:[%s5 + $0xf8] sm:$0xff]
  %v1410 = vld [vmem:[%s6] sm:$0x3]
  %v1412 = vlaneseq
  %v1413 = vshrl.u32 %v1412, 7
  %v1414 = vsub.s32 0, %v1413
  %v1415 = vrot.slane %v1410, %v1414
  %v1416 = vlaneseq
  %v1417 = vshrl.u32 %v1416, 7
  %v1418 = vsub.s32 1, %v1417
  %v1419 = vrot.slane %v1410, %v1418
  %v1454 = vunpack.c.l.b16 %v1378
  %v1455 = vunpack.c.h.b16 %v1378
  %v1456 = vunpack.c.l.b16 %v1379
  %v1457 = vunpack.c.h.b16 %v1379
  %v1458 = vunpack.c.l.b16 %v1380
  %v1459 = vunpack.c.h.b16 %v1380
  %v1460 = vunpack.c.l.b16 %v1381
  %v1461 = vunpack.c.h.b16 %v1381
  %v1462 = vunpack.c.l.b16 %v1382
  %v1463 = vunpack.c.h.b16 %v1382
  %v1464 = vunpack.c.l.b16 %v1383
  %v1465 = vunpack.c.h.b16 %v1383
  %v1466 = vunpack.c.l.b16 %v1384
  %v1467 = vunpack.c.h.b16 %v1384
  %v1468 = vunpack.c.l.b16 %v1385
  %v1469 = vunpack.c.h.b16 %v1385
  %v1470 = vunpack.c.l.b16 %v1386
  %v1471 = vunpack.c.h.b16 %v1386
  %v1472 = vunpack.c.l.b16 %v1387
  %v1473 = vunpack.c.h.b16 %v1387
  %v1474 = vunpack.c.l.b16 %v1388
  %v1475 = vunpack.c.h.b16 %v1388
  %v1476 = vunpack.c.l.b16 %v1389
  %v1477 = vunpack.c.h.b16 %v1389
  %v1478 = vunpack.c.l.b16 %v1390
  %v1479 = vunpack.c.h.b16 %v1390
  %v1480 = vunpack.c.l.b16 %v1391
  %v1481 = vunpack.c.h.b16 %v1391
  %v1482 = vunpack.c.l.b16 %v1392
  %v1483 = vunpack.c.h.b16 %v1392
  %v1484 = vunpack.c.l.b16 %v1393
  %v1485 = vunpack.c.h.b16 %v1393
  %v1486 = vunpack.c.l.b16 %v1394
  %v1487 = vunpack.c.h.b16 %v1394
  %v1488 = vunpack.c.l.b16 %v1395
  %v1489 = vunpack.c.h.b16 %v1395
  %v1490 = vunpack.c.l.b16 %v1396
  %v1491 = vunpack.c.h.b16 %v1396
  %v1492 = vunpack.c.l.b16 %v1397
  %v1493 = vunpack.c.h.b16 %v1397
  %v1494 = vunpack.c.l.b16 %v1398
  %v1495 = vunpack.c.h.b16 %v1398
  %v1496 = vunpack.c.l.b16 %v1399
  %v1497 = vunpack.c.h.b16 %v1399
  %v1498 = vunpack.c.l.b16 %v1400
  %v1499 = vunpack.c.h.b16 %v1400
  %v1500 = vunpack.c.l.b16 %v1401
  %v1501 = vunpack.c.h.b16 %v1401
  %v1502 = vunpack.c.l.b16 %v1402
  %v1503 = vunpack.c.h.b16 %v1402
  %v1504 = vunpack.c.l.b16 %v1403
  %v1505 = vunpack.c.h.b16 %v1403
  %v1506 = vunpack.c.l.b16 %v1404
  %v1507 = vunpack.c.h.b16 %v1404
  %v1508 = vunpack.c.l.b16 %v1405
  %v1509 = vunpack.c.h.b16 %v1405
  %v1510 = vunpack.c.l.b16 %v1406
  %v1511 = vunpack.c.h.b16 %v1406
  %v1512 = vunpack.c.l.b16 %v1407
  %v1513 = vunpack.c.h.b16 %v1407
  %v1514 = vunpack.c.l.b16 %v1408
  %v1515 = vunpack.c.h.b16 %v1408
  %v1516 = vunpack.c.l.b16 %v1409
  %v1517 = vunpack.c.h.b16 %v1409
  %v1518 = vpack.c.b16 %v1456, %v1454
  %v1519 = vpack.c.b16 %v1457, %v1455
  %v1520 = vpack.c.b16 %v1460, %v1458
  %v1521 = vpack.c.b16 %v1461, %v1459
  %v1522 = vpack.c.b16 %v1464, %v1462
  %v1523 = vpack.c.b16 %v1465, %v1463
  %v1524 = vpack.c.b16 %v1468, %v1466
  %v1525 = vpack.c.b16 %v1469, %v1467
  %v1526 = vpack.c.b16 %v1472, %v1470
  %v1527 = vpack.c.b16 %v1473, %v1471
  %v1528 = vpack.c.b16 %v1476, %v1474
  %v1529 = vpack.c.b16 %v1477, %v1475
  %v1530 = vpack.c.b16 %v1480, %v1478
  %v1531 = vpack.c.b16 %v1481, %v1479
  %v1532 = vpack.c.b16 %v1484, %v1482
  %v1533 = vpack.c.b16 %v1485, %v1483
  %v1534 = vpack.c.b16 %v1488, %v1486
  %v1535 = vpack.c.b16 %v1489, %v1487
  %v1536 = vpack.c.b16 %v1492, %v1490
  %v1537 = vpack.c.b16 %v1493, %v1491
  %v1538 = vpack.c.b16 %v1496, %v1494
  %v1539 = vpack.c.b16 %v1497, %v1495
  %v1540 = vpack.c.b16 %v1500, %v1498
  %v1541 = vpack.c.b16 %v1501, %v1499
  %v1542 = vpack.c.b16 %v1504, %v1502
  %v1543 = vpack.c.b16 %v1505, %v1503
  %v1544 = vpack.c.b16 %v1508, %v1506
  %v1545 = vpack.c.b16 %v1509, %v1507
  %v1546 = vpack.c.b16 %v1512, %v1510
  %v1547 = vpack.c.b16 %v1513, %v1511
  %v1548 = vpack.c.b16 %v1516, %v1514
  %v1549 = vpack.c.b16 %v1517, %v1515
  %1582 = vmatprep.subr.bf16.mxu0 %v1519
  %1583 = vmatpush1.bf16.msra.mxu0 %v1518
  %1584 = vmatprep.subr.bf16.mxu0 %v1521
  %1585 = vmatpush1.bf16.msra.mxu0 %v1520
  %1586 = vmatprep.subr.bf16.mxu0 %v1523
  %1587 = vmatpush1.bf16.msra.mxu0 %v1522
  %1588 = vmatprep.subr.bf16.mxu0 %v1525
  %1589 = vmatpush1.bf16.msra.mxu0 %v1524
  %1590 = vmatprep.subr.bf16.mxu0 %v1527
  %1591 = vmatpush1.bf16.msra.mxu0 %v1526
  %1592 = vmatprep.subr.bf16.mxu0 %v1529
  %1593 = vmatpush1.bf16.msra.mxu0 %v1528
  %1594 = vmatprep.subr.bf16.mxu0 %v1531
  %1595 = vmatpush1.bf16.msra.mxu0 %v1530
  %1596 = vmatprep.subr.bf16.mxu0 %v1533
  %1597 = vmatpush1.bf16.msra.mxu0 %v1532
  %1598 = vmatprep.subr.bf16.mxu0 %v1535
  %1599 = vmatpush1.bf16.msra.mxu0 %v1534
  %1600 = vmatprep.subr.bf16.mxu0 %v1537
  %1601 = vmatpush1.bf16.msra.mxu0 %v1536
  %1602 = vmatprep.subr.bf16.mxu0 %v1539
  %1603 = vmatpush1.bf16.msra.mxu0 %v1538
  %1604 = vmatprep.subr.bf16.mxu0 %v1541
  %1605 = vmatpush1.bf16.msra.mxu0 %v1540
  %1606 = vmatprep.subr.bf16.mxu0 %v1543
  %1607 = vmatpush1.bf16.msra.mxu0 %v1542
  %1608 = vmatprep.subr.bf16.mxu0 %v1545
  %1609 = vmatpush1.bf16.msra.mxu0 %v1544
  %1610 = vmatprep.subr.bf16.mxu0 %v1547
  %1611 = vmatpush1.bf16.msra.mxu0 %v1546
  %1612 = vmatprep.subr.bf16.mxu0 %v1549
  %1613 = vmatpush1.bf16.msra.mxu0 %v1548
  %1614 = vmatprep.mubr.bf16.mxu0 %v1377
  %1615 = vmatmul.mubr.bf16.gmra.mrb[0].mxu0 %v1376
  %v1616 = vpop.f32.mrb[0].mxu0
  %v1617 = vadd.f32 %v1415, %v1616
  %v1618 = vpop.f32.mrb[0].mxu0
  %v1619 = vadd.f32 %v1419, %v1618
  %v1620 = vpop.f32.mrb[0].mxu0
  %v1621 = vadd.f32 %v1415, %v1620
  %v1622 = vpop.f32.mrb[0].mxu0
  %v1623 = vadd.f32 %v1419, %v1622
  %1624 = vdwg.mxu0
  %v1625 = vpack.c.bf16 %v1621, %v1617
  %v1626 = vpack.c.bf16 %v1623, %v1619
  %v1627 = vld [vmem:[%s7] sm:$0xf]
  %v1628 = vld [vmem:[%s7 + $0x4] sm:$0xf]
  %v1629 = vld [vmem:[%s7 + $0x8] sm:$0xf]
  %v1630 = vld [vmem:[%s7 + $0xc] sm:$0xf]
  %v1631 = vld [vmem:[%s7 + $0x10] sm:$0xf]
  %v1632 = vld [vmem:[%s7 + $0x14] sm:$0xf]
  %v1633 = vld [vmem:[%s7 + $0x18] sm:$0xf]
  %v1634 = vld [vmem:[%s7 + $0x1c] sm:$0xf]
  %v1635 = vld [vmem:[%s7 + $0x20] sm:$0xf]
  %v1636 = vld [vmem:[%s7 + $0x24] sm:$0xf]
  %v1637 = vld [vmem:[%s7 + $0x28] sm:$0xf]
  %v1638 = vld [vmem:[%s7 + $0x2c] sm:$0xf]
  %v1639 = vld [vmem:[%s7 + $0x30] sm:$0xf]
  %v1640 = vld [vmem:[%s7 + $0x34] sm:$0xf]
  %v1641 = vld [vmem:[%s7 + $0x38] sm:$0xf]
  %v1642 = vld [vmem:[%s7 + $0x3c] sm:$0xf]
  %v1643 = vld [vmem:[%s7 + $0x40] sm:$0xf]
  %v1644 = vld [vmem:[%s7 + $0x44] sm:$0xf]
  %v1645 = vld [vmem:[%s7 + $0x48] sm:$0xf]
  %v1646 = vld [vmem:[%s7 + $0x4c] sm:$0xf]
  %v1647 = vld [vmem:[%s7 + $0x50] sm:$0xf]
  %v1648 = vld [vmem:[%s7 + $0x54] sm:$0xf]
  %v1649 = vld [vmem:[%s7 + $0x58] sm:$0xf]
  %v1650 = vld [vmem:[%s7 + $0x5c] sm:$0xf]
  %v1651 = vld [vmem:[%s7 + $0x60] sm:$0xf]
  %v1652 = vld [vmem:[%s7 + $0x64] sm:$0xf]
  %v1653 = vld [vmem:[%s7 + $0x68] sm:$0xf]
  %v1654 = vld [vmem:[%s7 + $0x6c] sm:$0xf]
  %v1655 = vld [vmem:[%s7 + $0x70] sm:$0xf]
  %v1656 = vld [vmem:[%s7 + $0x74] sm:$0xf]
  %v1657 = vld [vmem:[%s7 + $0x78] sm:$0xf]
  %v1658 = vld [vmem:[%s7 + $0x7c] sm:$0xf]
  %v1659 = vld [vmem:[%s8] sm:$0x1]
  %v1661 = vlaneseq
  %v1662 = vshrl.u32 %v1661, 7
  %v1663 = vsub.s32 0, %v1662
  %v1664 = vrot.slane %v1659, %v1663
  %v1698 = vunpack.c.l.b16 %v1627
  %v1699 = vunpack.c.l.b16 %v1628
  %v1700 = vunpack.c.l.b16 %v1629
  %v1701 = vunpack.c.l.b16 %v1630
  %v1702 = vunpack.c.l.b16 %v1631
  %v1703 = vunpack.c.l.b16 %v1632
  %v1704 = vunpack.c.l.b16 %v1633
  %v1705 = vunpack.c.l.b16 %v1634
  %v1706 = vunpack.c.l.b16 %v1635
  %v1707 = vunpack.c.l.b16 %v1636
  %v1708 = vunpack.c.l.b16 %v1637
  %v1709 = vunpack.c.l.b16 %v1638
  %v1710 = vunpack.c.l.b16 %v1639
  %v1711 = vunpack.c.l.b16 %v1640
  %v1712 = vunpack.c.l.b16 %v1641
  %v1713 = vunpack.c.l.b16 %v1642
  %v1714 = vunpack.c.l.b16 %v1643
  %v1715 = vunpack.c.l.b16 %v1644
  %v1716 = vunpack.c.l.b16 %v1645
  %v1717 = vunpack.c.l.b16 %v1646
  %v1718 = vunpack.c.l.b16 %v1647
  %v1719 = vunpack.c.l.b16 %v1648
  %v1720 = vunpack.c.l.b16 %v1649
  %v1721 = vunpack.c.l.b16 %v1650
  %v1722 = vunpack.c.l.b16 %v1651
  %v1723 = vunpack.c.l.b16 %v1652
  %v1724 = vunpack.c.l.b16 %v1653
  %v1725 = vunpack.c.l.b16 %v1654
  %v1726 = vunpack.c.l.b16 %v1655
  %v1727 = vunpack.c.l.b16 %v1656
  %v1728 = vunpack.c.l.b16 %v1657
  %v1729 = vunpack.c.l.b16 %v1658
  %v1730 = vpack.c.b16 %v1699, %v1698
  %v1731 = vpack.c.b16 %v1701, %v1700
  %v1732 = vpack.c.b16 %v1703, %v1702
  %v1733 = vpack.c.b16 %v1705, %v1704
  %v1734 = vpack.c.b16 %v1707, %v1706
  %v1735 = vpack.c.b16 %v1709, %v1708
  %v1736 = vpack.c.b16 %v1711, %v1710
  %v1737 = vpack.c.b16 %v1713, %v1712
  %v1738 = vpack.c.b16 %v1715, %v1714
  %v1739 = vpack.c.b16 %v1717, %v1716
  %v1740 = vpack.c.b16 %v1719, %v1718
  %v1741 = vpack.c.b16 %v1721, %v1720
  %v1742 = vpack.c.b16 %v1723, %v1722
  %v1743 = vpack.c.b16 %v1725, %v1724
  %v1744 = vpack.c.b16 %v1727, %v1726
  %v1745 = vpack.c.b16 %v1729, %v1728
  %1762 = vmatprep.subr.bf16.mxu0 0
  %1763 = vmatpush1.bf16.msra.mxu0 %v1730
  %1764 = vmatprep.subr.bf16.mxu0 0
  %1765 = vmatpush1.bf16.msra.mxu0 %v1731
  %1766 = vmatprep.subr.bf16.mxu0 0
  %1767 = vmatpush1.bf16.msra.mxu0 %v1732
  %1768 = vmatprep.subr.bf16.mxu0 0
  %1769 = vmatpush1.bf16.msra.mxu0 %v1733
  %1770 = vmatprep.subr.bf16.mxu0 0
  %1771 = vmatpush1.bf16.msra.mxu0 %v1734
  %1772 = vmatprep.subr.bf16.mxu0 0
  %1773 = vmatpush1.bf16.msra.mxu0 %v1735
  %1774 = vmatprep.subr.bf16.mxu0 0
  %1775 = vmatpush1.bf16.msra.mxu0 %v1736
  %1776 = vmatprep.subr.bf16.mxu0 0
  %1777 = vmatpush1.bf16.msra.mxu0 %v1737
  %1778 = vmatprep.subr.bf16.mxu0 0
  %1779 = vmatpush1.bf16.msra.mxu0 %v1738
  %1780 = vmatprep.subr.bf16.mxu0 0
  %1781 = vmatpush1.bf16.msra.mxu0 %v1739
  %1782 = vmatprep.subr.bf16.mxu0 0
  %1783 = vmatpush1.bf16.msra.mxu0 %v1740
  %1784 = vmatprep.subr.bf16.mxu0 0
  %1785 = vmatpush1.bf16.msra.mxu0 %v1741
  %1786 = vmatprep.subr.bf16.mxu0 0
  %1787 = vmatpush1.bf16.msra.mxu0 %v1742
  %1788 = vmatprep.subr.bf16.mxu0 0
  %1789 = vmatpush1.bf16.msra.mxu0 %v1743
  %1790 = vmatprep.subr.bf16.mxu0 0
  %1791 = vmatpush1.bf16.msra.mxu0 %v1744
  %1792 = vmatprep.subr.bf16.mxu0 0
  %1793 = vmatpush1.bf16.msra.mxu0 %v1745
  %1794 = vmatprep.mubr.bf16.mxu0 %v1626
  %1795 = vmatmul.mubr.bf16.gmra.mrb[0].mxu0 %v1625
  %v1796 = vpop.f32.mrb[0].mxu0
  %v1797 = vadd.f32 %v1664, %v1796
  %v1798 = vpop.f32.mrb[0].mxu0
  %v1799 = vpop.f32.mrb[0].mxu0
  %v1800 = vadd.f32 %v1664, %v1799
  %v1801 = vpop.f32.mrb[0].mxu0
  %1802 = vdwg.mxu0
  %1803 = vst [vmem:[%s11] sm:$0xff] %v1797
  %1804 = vst [vmem:[%s11 + $0x8] sm:$0xff] %v1800
  %v1805 = vmul.f32 %v863, %v906
  %v1806 = vmul.f32 %v865, %v908
  %v1807 = vmul.f32 %v867, %v910
  %v1808 = vmul.f32 %v869, %v912
  %1809 = vmatprep.subr.mxu0 0.0
  %1810 = vmatpush1.msra.mxu0 %v977
  %1811 = vmatprep.subr.mxu0 0.0
  %1812 = vmatpush1.msra.mxu0 %v978
  %1813 = vmatprep.subr.mxu0 0.0
  %1814 = vmatpush1.msra.mxu0 %v979
  %1815 = vmatprep.subr.mxu0 0.0
  %1816 = vmatpush1.msra.mxu0 %v980
  %1817 = vmatprep.subr.mxu0 0.0
  %1818 = vmatpush1.msra.mxu0 %v981
  %1819 = vmatprep.subr.mxu0 0.0
  %1820 = vmatpush1.msra.mxu0 %v982
  %1821 = vmatprep.subr.mxu0 0.0
  %1822 = vmatpush1.msra.mxu0 %v983
  %1823 = vmatprep.subr.mxu0 0.0
  %1824 = vmatpush1.msra.mxu0 %v984
  %1825 = vmatprep.subr.mxu0 0.0
  %1826 = vmatpush1.msra.mxu0 %v985
  %1827 = vmatprep.subr.mxu0 0.0
  %1828 = vmatpush1.msra.mxu0 %v986
  %1829 = vmatprep.subr.mxu0 0.0
  %1830 = vmatpush1.msra.mxu0 %v987
  %1831 = vmatprep.subr.mxu0 0.0
  %1832 = vmatpush1.msra.mxu0 %v988
  %1833 = vmatprep.subr.mxu0 0.0
  %1834 = vmatpush1.msra.mxu0 %v989
  %1835 = vmatprep.subr.mxu0 0.0
  %1836 = vmatpush1.msra.mxu0 %v990
  %1837 = vmatprep.subr.mxu0 0.0
  %1838 = vmatpush1.msra.mxu0 %v991
  %1839 = vmatprep.subr.mxu0 0.0
  %1840 = vmatpush1.msra.mxu0 %v992
  %1841 = vmatprep.subr.mxu0 0.0
  %1842 = vmatpush1.msra.mxu0 %v993
  %1843 = vmatprep.subr.mxu0 0.0
  %1844 = vmatpush1.msra.mxu0 %v994
  %1845 = vmatprep.subr.mxu0 0.0
  %1846 = vmatpush1.msra.mxu0 %v995
  %1847 = vmatprep.subr.mxu0 0.0
  %1848 = vmatpush1.msra.mxu0 %v996
  %1849 = vmatprep.subr.mxu0 0.0
  %1850 = vmatpush1.msra.mxu0 %v997
  %1851 = vmatprep.subr.mxu0 0.0
  %1852 = vmatpush1.msra.mxu0 %v998
  %1853 = vmatprep.subr.mxu0 0.0
  %1854 = vmatpush1.msra.mxu0 %v999
  %1855 = vmatprep.subr.mxu0 0.0
  %1856 = vmatpush1.msra.mxu0 %v1000
  %1857 = vmatprep.subr.mxu0 0.0
  %1858 = vmatpush1.msra.mxu0 %v1001
  %1859 = vmatprep.subr.mxu0 0.0
  %1860 = vmatpush1.msra.mxu0 %v1002
  %1861 = vmatprep.subr.mxu0 0.0
  %1862 = vmatpush1.msra.mxu0 %v1003
  %1863 = vmatprep.subr.mxu0 0.0
  %1864 = vmatpush1.msra.mxu0 %v1004
  %1865 = vmatprep.subr.mxu0 0.0
  %1866 = vmatpush1.msra.mxu0 %v1005
  %1867 = vmatprep.subr.mxu0 0.0
  %1868 = vmatpush1.msra.mxu0 %v1006
  %1869 = vmatprep.subr.mxu0 0.0
  %1870 = vmatpush1.msra.mxu0 %v1007
  %1871 = vmatprep.subr.mxu0 0.0
  %1872 = vmatpush1.msra.mxu0 %v1008
  %1873 = vmatprep.mubr.f32.mxu0 %v1806
  %1874 = vmatmul.mubr.f32.gmra.mrb[0].mxu0 %v1805
  %v1875 = vpop.f32.mrb[0].mxu0
  %v1876 = vadd.f32 0.0, %v1875
  %v1877 = vpop.f32.mrb[0].mxu0
  %1878 = vmatprep.mubr.f32.mxu0 %v1808
  %1879 = vmatmul.mubr.f32.gmra.mrb[0].mxu0 %v1807
  %v1880 = vpop.f32.mrb[0].mxu0
  %v1881 = vadd.f32 0.0, %v1880
  %v1882 = vpop.f32.mrb[0].mxu0
  %1883 = vdwg.mxu0
  %v1884 = vmul.f32 %v1876, 0.17677669
  %v1885 = vmul.f32 %v1881, 0.17677669
  %v1886 = vmul.f32 %v863, %v916
  %v1887 = vmul.f32 %v865, %v918
  %v1888 = vmul.f32 %v867, %v920
  %v1889 = vmul.f32 %v869, %v922
  %1890 = vmatprep.subr.mxu0 0.0
  %1891 = vmatpush1.msra.mxu0 %v977
  %1892 = vmatprep.subr.mxu0 0.0
  %1893 = vmatpush1.msra.mxu0 %v978
  %1894 = vmatprep.subr.mxu0 0.0
  %1895 = vmatpush1.msra.mxu0 %v979
  %1896 = vmatprep.subr.mxu0 0.0
  %1897 = vmatpush1.msra.mxu0 %v980
  %1898 = vmatprep.subr.mxu0 0.0
  %1899 = vmatpush1.msra.mxu0 %v981
  %1900 = vmatprep.subr.mxu0 0.0
  %1901 = vmatpush1.msra.mxu0 %v982
  %1902 = vmatprep.subr.mxu0 0.0
  %1903 = vmatpush1.msra.mxu0 %v983
  %1904 = vmatprep.subr.mxu0 0.0
  %1905 = vmatpush1.msra.mxu0 %v984
  %1906 = vmatprep.subr.mxu0 0.0
  %1907 = vmatpush1.msra.mxu0 %v985
  %1908 = vmatprep.subr.mxu0 0.0
  %1909 = vmatpush1.msra.mxu0 %v986
  %1910 = vmatprep.subr.mxu0 0.0
  %1911 = vmatpush1.msra.mxu0 %v987
  %1912 = vmatprep.subr.mxu0 0.0
  %1913 = vmatpush1.msra.mxu0 %v988
  %1914 = vmatprep.subr.mxu0 0.0
  %1915 = vmatpush1.msra.mxu0 %v989
  %1916 = vmatprep.subr.mxu0 0.0
  %1917 = vmatpush1.msra.mxu0 %v990
  %1918 = vmatprep.subr.mxu0 0.0
  %1919 = vmatpush1.msra.mxu0 %v991
  %1920 = vmatprep.subr.mxu0 0.0
  %1921 = vmatpush1.msra.mxu0 %v992
  %1922 = vmatprep.subr.mxu0 0.0
  %1923 = vmatpush1.msra.mxu0 %v993
  %1924 = vmatprep.subr.mxu0 0.0
  %1925 = vmatpush1.msra.mxu0 %v994
  %1926 = vmatprep.subr.mxu0 0.0
  %1927 = vmatpush1.msra.mxu0 %v995
  %1928 = vmatprep.subr.mxu0 0.0
  %1929 = vmatpush1.msra.mxu0 %v996
  %1930 = vmatprep.subr.mxu0 0.0
  %1931 = vmatpush1.msra.mxu0 %v997
  %1932 = vmatprep.subr.mxu0 0.0
  %1933 = vmatpush1.msra.mxu0 %v998
  %1934 = vmatprep.subr.mxu0 0.0
  %1935 = vmatpush1.msra.mxu0 %v999
  %1936 = vmatprep.subr.mxu0 0.0
  %1937 = vmatpush1.msra.mxu0 %v1000
  %1938 = vmatprep.subr.mxu0 0.0
  %1939 = vmatpush1.msra.mxu0 %v1001
  %1940 = vmatprep.subr.mxu0 0.0
  %1941 = vmatpush1.msra.mxu0 %v1002
  %1942 = vmatprep.subr.mxu0 0.0
  %1943 = vmatpush1.msra.mxu0 %v1003
  %1944 = vmatprep.subr.mxu0 0.0
  %1945 = vmatpush1.msra.mxu0 %v1004
  %1946 = vmatprep.subr.mxu0 0.0
  %1947 = vmatpush1.msra.mxu0 %v1005
  %1948 = vmatprep.subr.mxu0 0.0
  %1949 = vmatpush1.msra.mxu0 %v1006
  %1950 = vmatprep.subr.mxu0 0.0
  %1951 = vmatpush1.msra.mxu0 %v1007
  %1952 = vmatprep.subr.mxu0 0.0
  %1953 = vmatpush1.msra.mxu0 %v1008
  %1954 = vmatprep.mubr.f32.mxu0 %v1887
  %1955 = vmatmul.mubr.f32.gmra.mrb[0].mxu0 %v1886
  %v1956 = vpop.f32.mrb[0].mxu0
  %v1957 = vadd.f32 0.0, %v1956
  %v1958 = vpop.f32.mrb[0].mxu0
  %1959 = vmatprep.mubr.f32.mxu0 %v1889
  %1960 = vmatmul.mubr.f32.gmra.mrb[0].mxu0 %v1888
  %v1961 = vpop.f32.mrb[0].mxu0
  %v1962 = vadd.f32 0.0, %v1961
  %v1963 = vpop.f32.mrb[0].mxu0
  %1964 = vdwg.mxu0
  %v1965 = vmul.f32 %v1957, 0.17677669
  %v1966 = vmul.f32 %v1962, 0.17677669
  %v1967 = vmax.f32 %v1884, %v1965
  %v1968 = vmax.f32 %v1885, %v1966
  %v1969 = vsub.f32 %v1884, %v1967
  %v1970 = vsub.f32 %v1885, %v1968
  %v1971 = vmul.f32 %v1969, 1.442695
  %v1972 = vpow.pop %v1971
  %v1973 = vmul.f32 %v1970, 1.442695
  %v1974 = vpow.pop %v1973
  %v1975 = vsub.f32 %v1965, %v1967
  %v1976 = vsub.f32 %v1966, %v1968
  %v1977 = vmul.f32 %v1975, 1.442695
  %v1978 = vpow.pop %v1977
  %v1979 = vmul.f32 %v1976, 1.442695
  %v1980 = vpow.pop %v1979
  %v1981 = vadd.f32 %v1972, %v1978
  %v1982 = vadd.f32 %v1974, %v1980
  %v1983 = vrcp.pop %v1981
  %v1984 = vmul.f32 1.0, %v1983
  %v1985 = vrcp.pop %v1982
  %v1986 = vmul.f32 1.0, %v1985
  %v1987 = vmul.f32 %v1972, %v1984
  %v1988 = vmul.f32 %v1974, %v1986
  %v1990 = vsel %vm1195, %v1987, 0
  %v1993 = vsel %vm1195, %v1988, 0
  %1995 = vmatprep.subr.mxu0 %v1010
  %1996 = vmatpush1.msra.mxu0 %v1009
  %1997 = vmatprep.subr.mxu0 0.0
  %1998 = vmatpush1.msra.mxu0 0.0
  %1999 = vmatprep.subr.mxu0 0.0
  %2000 = vmatpush1.msra.mxu0 0.0
  %2001 = vmatprep.subr.mxu0 0.0
  %2002 = vmatpush1.msra.mxu0 0.0
  %2003 = vmatprep.subr.mxu0 0.0
  %2004 = vmatpush1.msra.mxu0 0.0
  %2005 = vmatprep.subr.mxu0 0.0
  %2006 = vmatpush1.msra.mxu0 0.0
  %2007 = vmatprep.subr.mxu0 0.0
  %2008 = vmatpush1.msra.mxu0 0.0
  %2009 = vmatprep.subr.mxu0 0.0
  %2010 = vmatpush1.msra.mxu0 0.0
  %2011 = vmatprep.subr.mxu0 0.0
  %2012 = vmatpush1.msra.mxu0 0.0
  %2013 = vmatprep.subr.mxu0 0.0
  %2014 = vmatpush1.msra.mxu0 0.0
  %2015 = vmatprep.subr.mxu0 0.0
  %2016 = vmatpush1.msra.mxu0 0.0
  %2017 = vmatprep.subr.mxu0 0.0
  %2018 = vmatpush1.msra.mxu0 0.0
  %2019 = vmatprep.subr.mxu0 0.0
  %2020 = vmatpush1.msra.mxu0 0.0
  %2021 = vmatprep.subr.mxu0 0.0
  %2022 = vmatpush1.msra.mxu0 0.0
  %2023 = vmatprep.subr.mxu0 0.0
  %2024 = vmatpush1.msra.mxu0 0.0
  %2025 = vmatprep.subr.mxu0 0.0
  %2026 = vmatpush1.msra.mxu0 0.0
  %2027 = vmatprep.subr.mxu0 0.0
  %2028 = vmatpush1.msra.mxu0 0.0
  %2029 = vmatprep.subr.mxu0 0.0
  %2030 = vmatpush1.msra.mxu0 0.0
  %2031 = vmatprep.subr.mxu0 0.0
  %2032 = vmatpush1.msra.mxu0 0.0
  %2033 = vmatprep.subr.mxu0 0.0
  %2034 = vmatpush1.msra.mxu0 0.0
  %2035 = vmatprep.subr.mxu0 0.0
  %2036 = vmatpush1.msra.mxu0 0.0
  %2037 = vmatprep.subr.mxu0 0.0
  %2038 = vmatpush1.msra.mxu0 0.0
  %2039 = vmatprep.subr.mxu0 0.0
  %2040 = vmatpush1.msra.mxu0 0.0
  %2041 = vmatprep.subr.mxu0 0.0
  %2042 = vmatpush1.msra.mxu0 0.0
  %2043 = vmatprep.subr.mxu0 0.0
  %2044 = vmatpush1.msra.mxu0 0.0
  %2045 = vmatprep.subr.mxu0 0.0
  %2046 = vmatpush1.msra.mxu0 0.0
  %2047 = vmatprep.subr.mxu0 0.0
  %2048 = vmatpush1.msra.mxu0 0.0
  %2049 = vmatprep.subr.mxu0 0.0
  %2050 = vmatpush1.msra.mxu0 0.0
  %2051 = vmatprep.subr.mxu0 0.0
  %2052 = vmatpush1.msra.mxu0 0.0
  %2053 = vmatprep.subr.mxu0 0.0
  %2054 = vmatpush1.msra.mxu0 0.0
  %2055 = vmatprep.subr.mxu0 0.0
  %2056 = vmatpush1.msra.mxu0 0.0
  %2057 = vmatprep.subr.mxu0 0.0
  %2058 = vmatpush1.msra.mxu0 0.0
  %2059 = vmatprep.mubr.f32.mxu0 0.0
  %2060 = vmatmul.mubr.f32.gmra.mrb[0].mxu0 %v1990
  %v2061 = vpop.f32.mrb[0].mxu0
  %v2062 = vadd.f32 0.0, %v2061
  %v2063 = vpop.f32.mrb[0].mxu0
  %v2064 = vadd.f32 0.0, %v2063
  %2065 = vmatprep.mubr.f32.mxu0 0.0
  %2066 = vmatmul.mubr.f32.gmra.mrb[0].mxu0 %v1993
  %v2067 = vpop.f32.mrb[0].mxu0
  %v2068 = vadd.f32 0.0, %v2067
  %v2069 = vpop.f32.mrb[0].mxu0
  %v2070 = vadd.f32 0.0, %v2069
  %2071 = vdwg.mxu0
  %v2072 = vmul.f32 %v2062, %v959
  %v2073 = vmul.f32 %v2064, %v961
  %v2074 = vmul.f32 %v2068, %v963
  %v2075 = vmul.f32 %v2070, %v965
  %v2076 = vmul.f32 %v1978, %v1984
  %v2077 = vmul.f32 %v1980, %v1986
  %v2079 = vsel %vm1195, %v2076, 0
  %v2082 = vsel %vm1195, %v2077, 0
  %2084 = vmatprep.subr.mxu0 %v1010
  %2085 = vmatpush1.msra.mxu0 %v1009
  %2086 = vmatprep.subr.mxu0 0.0
  %2087 = vmatpush1.msra.mxu0 0.0
  %2088 = vmatprep.subr.mxu0 0.0
  %2089 = vmatpush1.msra.mxu0 0.0
  %2090 = vmatprep.subr.mxu0 0.0
  %2091 = vmatpush1.msra.mxu0 0.0
  %2092 = vmatprep.subr.mxu0 0.0
  %2093 = vmatpush1.msra.mxu0 0.0
  %2094 = vmatprep.subr.mxu0 0.0
  %2095 = vmatpush1.msra.mxu0 0.0
  %2096 = vmatprep.subr.mxu0 0.0
  %2097 = vmatpush1.msra.mxu0 0.0
  %2098 = vmatprep.subr.mxu0 0.0
  %2099 = vmatpush1.msra.mxu0 0.0
  %2100 = vmatprep.subr.mxu0 0.0
  %2101 = vmatpush1.msra.mxu0 0.0
  %2102 = vmatprep.subr.mxu0 0.0
  %2103 = vmatpush1.msra.mxu0 0.0
  %2104 = vmatprep.subr.mxu0 0.0
  %2105 = vmatpush1.msra.mxu0 0.0
  %2106 = vmatprep.subr.mxu0 0.0
  %2107 = vmatpush1.msra.mxu0 0.0
  %2108 = vmatprep.subr.mxu0 0.0
  %2109 = vmatpush1.msra.mxu0 0.0
  %2110 = vmatprep.subr.mxu0 0.0
  %2111 = vmatpush1.msra.mxu0 0.0
  %2112 = vmatprep.subr.mxu0 0.0
  %2113 = vmatpush1.msra.mxu0 0.0
  %2114 = vmatprep.subr.mxu0 0.0
  %2115 = vmatpush1.msra.mxu0 0.0
  %2116 = vmatprep.subr.mxu0 0.0
  %2117 = vmatpush1.msra.mxu0 0.0
  %2118 = vmatprep.subr.mxu0 0.0
  %2119 = vmatpush1.msra.mxu0 0.0
  %2120 = vmatprep.subr.mxu0 0.0
  %2121 = vmatpush1.msra.mxu0 0.0
  %2122 = vmatprep.subr.mxu0 0.0
  %2123 = vmatpush1.msra.mxu0 0.0
  %2124 = vmatprep.subr.mxu0 0.0
  %2125 = vmatpush1.msra.mxu0 0.0
  %2126 = vmatprep.subr.mxu0 0.0
  %2127 = vmatpush1.msra.mxu0 0.0
  %2128 = vmatprep.subr.mxu0 0.0
  %2129 = vmatpush1.msra.mxu0 0.0
  %2130 = vmatprep.subr.mxu0 0.0
  %2131 = vmatpush1.msra.mxu0 0.0
  %2132 = vmatprep.subr.mxu0 0.0
  %2133 = vmatpush1.msra.mxu0 0.0
  %2134 = vmatprep.subr.mxu0 0.0
  %2135 = vmatpush1.msra.mxu0 0.0
  %2136 = vmatprep.subr.mxu0 0.0
  %2137 = vmatpush1.msra.mxu0 0.0
  %2138 = vmatprep.subr.mxu0 0.0
  %2139 = vmatpush1.msra.mxu0 0.0
  %2140 = vmatprep.subr.mxu0 0.0
  %2141 = vmatpush1.msra.mxu0 0.0
  %2142 = vmatprep.subr.mxu0 0.0
  %2143 = vmatpush1.msra.mxu0 0.0
  %2144 = vmatprep.subr.mxu0 0.0
  %2145 = vmatpush1.msra.mxu0 0.0
  %2146 = vmatprep.subr.mxu0 0.0
  %2147 = vmatpush1.msra.mxu0 0.0
  %2148 = vmatprep.mubr.f32.mxu0 0.0
  %2149 = vmatmul.mubr.f32.gmra.mrb[0].mxu0 %v2079
  %v2150 = vpop.f32.mrb[0].mxu0
  %v2151 = vadd.f32 0.0, %v2150
  %v2152 = vpop.f32.mrb[0].mxu0
  %v2153 = vadd.f32 0.0, %v2152
  %2154 = vmatprep.mubr.f32.mxu0 0.0
  %2155 = vmatmul.mubr.f32.gmra.mrb[0].mxu0 %v2082
  %v2156 = vpop.f32.mrb[0].mxu0
  %v2157 = vadd.f32 0.0, %v2156
  %v2158 = vpop.f32.mrb[0].mxu0
  %v2159 = vadd.f32 0.0, %v2158
  %2160 = vdwg.mxu0
  %v2161 = vmul.f32 %v2151, %v969
  %v2162 = vmul.f32 %v2153, %v971
  %v2163 = vmul.f32 %v2157, %v973
  %v2164 = vmul.f32 %v2159, %v975
  %v2165 = vadd.f32 %v2072, %v2161
  %v2166 = vadd.f32 %v2073, %v2162
  %v2167 = vadd.f32 %v2074, %v2163
  %v2168 = vadd.f32 %v2075, %v2164
  %v2169 = vpack.c.bf16 %v2167, %v2165
  %v2170 = vpack.c.bf16 %v2168, %v2166
  %v2171 = vld [vmem:[%s5] sm:$0xff]
  %v2172 = vld [vmem:[%s5 + $0x8] sm:$0xff]
  %v2173 = vld [vmem:[%s5 + $0x10] sm:$0xff]
  %v2174 = vld [vmem:[%s5 + $0x18] sm:$0xff]
  %v2175 = vld [vmem:[%s5 + $0x20] sm:$0xff]
  %v2176 = vld [vmem:[%s5 + $0x28] sm:$0xff]
  %v2177 = vld [vmem:[%s5 + $0x30] sm:$0xff]
  %v2178 = vld [vmem:[%s5 + $0x38] sm:$0xff]
  %v2179 = vld [vmem:[%s5 + $0x40] sm:$0xff]
  %v2180 = vld [vmem:[%s5 + $0x48] sm:$0xff]
  %v2181 = vld [vmem:[%s5 + $0x50] sm:$0xff]
  %v2182 = vld [vmem:[%s5 + $0x58] sm:$0xff]
  %v2183 = vld [vmem:[%s5 + $0x60] sm:$0xff]
  %v2184 = vld [vmem:[%s5 + $0x68] sm:$0xff]
  %v2185 = vld [vmem:[%s5 + $0x70] sm:$0xff]
  %v2186 = vld [vmem:[%s5 + $0x78] sm:$0xff]
  %v2187 = vld [vmem:[%s5 + $0x80] sm:$0xff]
  %v2188 = vld [vmem:[%s5 + $0x88] sm:$0xff]
  %v2189 = vld [vmem:[%s5 + $0x90] sm:$0xff]
  %v2190 = vld [vmem:[%s5 + $0x98] sm:$0xff]
  %v2191 = vld [vmem:[%s5 + $0xa0] sm:$0xff]
  %v2192 = vld [vmem:[%s5 + $0xa8] sm:$0xff]
  %v2193 = vld [vmem:[%s5 + $0xb0] sm:$0xff]
  %v2194 = vld [vmem:[%s5 + $0xb8] sm:$0xff]
  %v2195 = vld [vmem:[%s5 + $0xc0] sm:$0xff]
  %v2196 = vld [vmem:[%s5 + $0xc8] sm:$0xff]
  %v2197 = vld [vmem:[%s5 + $0xd0] sm:$0xff]
  %v2198 = vld [vmem:[%s5 + $0xd8] sm:$0xff]
  %v2199 = vld [vmem:[%s5 + $0xe0] sm:$0xff]
  %v2200 = vld [vmem:[%s5 + $0xe8] sm:$0xff]
  %v2201 = vld [vmem:[%s5 + $0xf0] sm:$0xff]
  %v2202 = vld [vmem:[%s5 + $0xf8] sm:$0xff]
  %v2203 = vld [vmem:[%s6] sm:$0x3]
  %v2205 = vlaneseq
  %v2206 = vshrl.u32 %v2205, 7
  %v2207 = vsub.s32 0, %v2206
  %v2208 = vrot.slane %v2203, %v2207
  %v2209 = vlaneseq
  %v2210 = vshrl.u32 %v2209, 7
  %v2211 = vsub.s32 1, %v2210
  %v2212 = vrot.slane %v2203, %v2211
  %v2247 = vunpack.c.l.b16 %v2171
  %v2248 = vunpack.c.h.b16 %v2171
  %v2249 = vunpack.c.l.b16 %v2172
  %v2250 = vunpack.c.h.b16 %v2172
  %v2251 = vunpack.c.l.b16 %v2173
  %v2252 = vunpack.c.h.b16 %v2173
  %v2253 = vunpack.c.l.b16 %v2174
  %v2254 = vunpack.c.h.b16 %v2174
  %v2255 = vunpack.c.l.b16 %v2175
  %v2256 = vunpack.c.h.b16 %v2175
  %v2257 = vunpack.c.l.b16 %v2176
  %v2258 = vunpack.c.h.b16 %v2176
  %v2259 = vunpack.c.l.b16 %v2177
  %v2260 = vunpack.c.h.b16 %v2177
  %v2261 = vunpack.c.l.b16 %v2178
  %v2262 = vunpack.c.h.b16 %v2178
  %v2263 = vunpack.c.l.b16 %v2179
  %v2264 = vunpack.c.h.b16 %v2179
  %v2265 = vunpack.c.l.b16 %v2180
  %v2266 = vunpack.c.h.b16 %v2180
  %v2267 = vunpack.c.l.b16 %v2181
  %v2268 = vunpack.c.h.b16 %v2181
  %v2269 = vunpack.c.l.b16 %v2182
  %v2270 = vunpack.c.h.b16 %v2182
  %v2271 = vunpack.c.l.b16 %v2183
  %v2272 = vunpack.c.h.b16 %v2183
  %v2273 = vunpack.c.l.b16 %v2184
  %v2274 = vunpack.c.h.b16 %v2184
  %v2275 = vunpack.c.l.b16 %v2185
  %v2276 = vunpack.c.h.b16 %v2185
  %v2277 = vunpack.c.l.b16 %v2186
  %v2278 = vunpack.c.h.b16 %v2186
  %v2279 = vunpack.c.l.b16 %v2187
  %v2280 = vunpack.c.h.b16 %v2187
  %v2281 = vunpack.c.l.b16 %v2188
  %v2282 = vunpack.c.h.b16 %v2188
  %v2283 = vunpack.c.l.b16 %v2189
  %v2284 = vunpack.c.h.b16 %v2189
  %v2285 = vunpack.c.l.b16 %v2190
  %v2286 = vunpack.c.h.b16 %v2190
  %v2287 = vunpack.c.l.b16 %v2191
  %v2288 = vunpack.c.h.b16 %v2191
  %v2289 = vunpack.c.l.b16 %v2192
  %v2290 = vunpack.c.h.b16 %v2192
  %v2291 = vunpack.c.l.b16 %v2193
  %v2292 = vunpack.c.h.b16 %v2193
  %v2293 = vunpack.c.l.b16 %v2194
  %v2294 = vunpack.c.h.b16 %v2194
  %v2295 = vunpack.c.l.b16 %v2195
  %v2296 = vunpack.c.h.b16 %v2195
  %v2297 = vunpack.c.l.b16 %v2196
  %v2298 = vunpack.c.h.b16 %v2196
  %v2299 = vunpack.c.l.b16 %v2197
  %v2300 = vunpack.c.h.b16 %v2197
  %v2301 = vunpack.c.l.b16 %v2198
  %v2302 = vunpack.c.h.b16 %v2198
  %v2303 = vunpack.c.l.b16 %v2199
  %v2304 = vunpack.c.h.b16 %v2199
  %v2305 = vunpack.c.l.b16 %v2200
  %v2306 = vunpack.c.h.b16 %v2200
  %v2307 = vunpack.c.l.b16 %v2201
  %v2308 = vunpack.c.h.b16 %v2201
  %v2309 = vunpack.c.l.b16 %v2202
  %v2310 = vunpack.c.h.b16 %v2202
  %v2311 = vpack.c.b16 %v2249, %v2247
  %v2312 = vpack.c.b16 %v2250, %v2248
  %v2313 = vpack.c.b16 %v2253, %v2251
  %v2314 = vpack.c.b16 %v2254, %v2252
  %v2315 = vpack.c.b16 %v2257, %v2255
  %v2316 = vpack.c.b16 %v2258, %v2256
  %v2317 = vpack.c.b16 %v2261, %v2259
  %v2318 = vpack.c.b16 %v2262, %v2260
  %v2319 = vpack.c.b16 %v2265, %v2263
  %v2320 = vpack.c.b16 %v2266, %v2264
  %v2321 = vpack.c.b16 %v2269, %v2267
  %v2322 = vpack.c.b16 %v2270, %v2268
  %v2323 = vpack.c.b16 %v2273, %v2271
  %v2324 = vpack.c.b16 %v2274, %v2272
  %v2325 = vpack.c.b16 %v2277, %v2275
  %v2326 = vpack.c.b16 %v2278, %v2276
  %v2327 = vpack.c.b16 %v2281, %v2279
  %v2328 = vpack.c.b16 %v2282, %v2280
  %v2329 = vpack.c.b16 %v2285, %v2283
  %v2330 = vpack.c.b16 %v2286, %v2284
  %v2331 = vpack.c.b16 %v2289, %v2287
  %v2332 = vpack.c.b16 %v2290, %v2288
  %v2333 = vpack.c.b16 %v2293, %v2291
  %v2334 = vpack.c.b16 %v2294, %v2292
  %v2335 = vpack.c.b16 %v2297, %v2295
  %v2336 = vpack.c.b16 %v2298, %v2296
  %v2337 = vpack.c.b16 %v2301, %v2299
  %v2338 = vpack.c.b16 %v2302, %v2300
  %v2339 = vpack.c.b16 %v2305, %v2303
  %v2340 = vpack.c.b16 %v2306, %v2304
  %v2341 = vpack.c.b16 %v2309, %v2307
  %v2342 = vpack.c.b16 %v2310, %v2308
  %2375 = vmatprep.subr.bf16.mxu0 %v2312
  %2376 = vmatpush1.bf16.msra.mxu0 %v2311
  %2377 = vmatprep.subr.bf16.mxu0 %v2314
  %2378 = vmatpush1.bf16.msra.mxu0 %v2313
  %2379 = vmatprep.subr.bf16.mxu0 %v2316
  %2380 = vmatpush1.bf16.msra.mxu0 %v2315
  %2381 = vmatprep.subr.bf16.mxu0 %v2318
  %2382 = vmatpush1.bf16.msra.mxu0 %v2317
  %2383 = vmatprep.subr.bf16.mxu0 %v2320
  %2384 = vmatpush1.bf16.msra.mxu0 %v2319
  %2385 = vmatprep.subr.bf16.mxu0 %v2322
  %2386 = vmatpush1.bf16.msra.mxu0 %v2321
  %2387 = vmatprep.subr.bf16.mxu0 %v2324
  %2388 = vmatpush1.bf16.msra.mxu0 %v2323
  %2389 = vmatprep.subr.bf16.mxu0 %v2326
  %2390 = vmatpush1.bf16.msra.mxu0 %v2325
  %2391 = vmatprep.subr.bf16.mxu0 %v2328
  %2392 = vmatpush1.bf16.msra.mxu0 %v2327
  %2393 = vmatprep.subr.bf16.mxu0 %v2330
  %2394 = vmatpush1.bf16.msra.mxu0 %v2329
  %2395 = vmatprep.subr.bf16.mxu0 %v2332
  %2396 = vmatpush1.bf16.msra.mxu0 %v2331
  %2397 = vmatprep.subr.bf16.mxu0 %v2334
  %2398 = vmatpush1.bf16.msra.mxu0 %v2333
  %2399 = vmatprep.subr.bf16.mxu0 %v2336
  %2400 = vmatpush1.bf16.msra.mxu0 %v2335
  %2401 = vmatprep.subr.bf16.mxu0 %v2338
  %2402 = vmatpush1.bf16.msra.mxu0 %v2337
  %2403 = vmatprep.subr.bf16.mxu0 %v2340
  %2404 = vmatpush1.bf16.msra.mxu0 %v2339
  %2405 = vmatprep.subr.bf16.mxu0 %v2342
  %2406 = vmatpush1.bf16.msra.mxu0 %v2341
  %2407 = vmatprep.mubr.bf16.mxu0 %v2170
  %2408 = vmatmul.mubr.bf16.gmra.mrb[0].mxu0 %v2169
  %v2409 = vpop.f32.mrb[0].mxu0
  %v2410 = vadd.f32 %v2208, %v2409
  %v2411 = vpop.f32.mrb[0].mxu0
  %v2412 = vadd.f32 %v2212, %v2411
  %v2413 = vpop.f32.mrb[0].mxu0
  %v2414 = vadd.f32 %v2208, %v2413
  %v2415 = vpop.f32.mrb[0].mxu0
  %v2416 = vadd.f32 %v2212, %v2415
  %2417 = vdwg.mxu0
  %v2418 = vpack.c.bf16 %v2414, %v2410
  %v2419 = vpack.c.bf16 %v2416, %v2412
  %v2420 = vld [vmem:[%s7] sm:$0xf]
  %v2421 = vld [vmem:[%s7 + $0x4] sm:$0xf]
  %v2422 = vld [vmem:[%s7 + $0x8] sm:$0xf]
  %v2423 = vld [vmem:[%s7 + $0xc] sm:$0xf]
  %v2424 = vld [vmem:[%s7 + $0x10] sm:$0xf]
  %v2425 = vld [vmem:[%s7 + $0x14] sm:$0xf]
  %v2426 = vld [vmem:[%s7 + $0x18] sm:$0xf]
  %v2427 = vld [vmem:[%s7 + $0x1c] sm:$0xf]
  %v2428 = vld [vmem:[%s7 + $0x20] sm:$0xf]
  %v2429 = vld [vmem:[%s7 + $0x24] sm:$0xf]
  %v2430 = vld [vmem:[%s7 + $0x28] sm:$0xf]
  %v2431 = vld [vmem:[%s7 + $0x2c] sm:$0xf]
  %v2432 = vld [vmem:[%s7 + $0x30] sm:$0xf]
  %v2433 = vld [vmem:[%s7 + $0x34] sm:$0xf]
  %v2434 = vld [vmem:[%s7 + $0x38] sm:$0xf]
  %v2435 = vld [vmem:[%s7 + $0x3c] sm:$0xf]
  %v2436 = vld [vmem:[%s7 + $0x40] sm:$0xf]
  %v2437 = vld [vmem:[%s7 + $0x44] sm:$0xf]
  %v2438 = vld [vmem:[%s7 + $0x48] sm:$0xf]
  %v2439 = vld [vmem:[%s7 + $0x4c] sm:$0xf]
  %v2440 = vld [vmem:[%s7 + $0x50] sm:$0xf]
  %v2441 = vld [vmem:[%s7 + $0x54] sm:$0xf]
  %v2442 = vld [vmem:[%s7 + $0x58] sm:$0xf]
  %v2443 = vld [vmem:[%s7 + $0x5c] sm:$0xf]
  %v2444 = vld [vmem:[%s7 + $0x60] sm:$0xf]
  %v2445 = vld [vmem:[%s7 + $0x64] sm:$0xf]
  %v2446 = vld [vmem:[%s7 + $0x68] sm:$0xf]
  %v2447 = vld [vmem:[%s7 + $0x6c] sm:$0xf]
  %v2448 = vld [vmem:[%s7 + $0x70] sm:$0xf]
  %v2449 = vld [vmem:[%s7 + $0x74] sm:$0xf]
  %v2450 = vld [vmem:[%s7 + $0x78] sm:$0xf]
  %v2451 = vld [vmem:[%s7 + $0x7c] sm:$0xf]
  %v2452 = vld [vmem:[%s8] sm:$0x1]
  %v2454 = vlaneseq
  %v2455 = vshrl.u32 %v2454, 7
  %v2456 = vsub.s32 0, %v2455
  %v2457 = vrot.slane %v2452, %v2456
  %v2491 = vunpack.c.l.b16 %v2420
  %v2492 = vunpack.c.l.b16 %v2421
  %v2493 = vunpack.c.l.b16 %v2422
  %v2494 = vunpack.c.l.b16 %v2423
  %v2495 = vunpack.c.l.b16 %v2424
  %v2496 = vunpack.c.l.b16 %v2425
  %v2497 = vunpack.c.l.b16 %v2426
  %v2498 = vunpack.c.l.b16 %v2427
  %v2499 = vunpack.c.l.b16 %v2428
  %v2500 = vunpack.c.l.b16 %v2429
  %v2501 = vunpack.c.l.b16 %v2430
  %v2502 = vunpack.c.l.b16 %v2431
  %v2503 = vunpack.c.l.b16 %v2432
  %v2504 = vunpack.c.l.b16 %v2433
  %v2505 = vunpack.c.l.b16 %v2434
  %v2506 = vunpack.c.l.b16 %v2435
  %v2507 = vunpack.c.l.b16 %v2436
  %v2508 = vunpack.c.l.b16 %v2437
  %v2509 = vunpack.c.l.b16 %v2438
  %v2510 = vunpack.c.l.b16 %v2439
  %v2511 = vunpack.c.l.b16 %v2440
  %v2512 = vunpack.c.l.b16 %v2441
  %v2513 = vunpack.c.l.b16 %v2442
  %v2514 = vunpack.c.l.b16 %v2443
  %v2515 = vunpack.c.l.b16 %v2444
  %v2516 = vunpack.c.l.b16 %v2445
  %v2517 = vunpack.c.l.b16 %v2446
  %v2518 = vunpack.c.l.b16 %v2447
  %v2519 = vunpack.c.l.b16 %v2448
  %v2520 = vunpack.c.l.b16 %v2449
  %v2521 = vunpack.c.l.b16 %v2450
  %v2522 = vunpack.c.l.b16 %v2451
  %v2523 = vpack.c.b16 %v2492, %v2491
  %v2524 = vpack.c.b16 %v2494, %v2493
  %v2525 = vpack.c.b16 %v2496, %v2495
  %v2526 = vpack.c.b16 %v2498, %v2497
  %v2527 = vpack.c.b16 %v2500, %v2499
  %v2528 = vpack.c.b16 %v2502, %v2501
  %v2529 = vpack.c.b16 %v2504, %v2503
  %v2530 = vpack.c.b16 %v2506, %v2505
  %v2531 = vpack.c.b16 %v2508, %v2507
  %v2532 = vpack.c.b16 %v2510, %v2509
  %v2533 = vpack.c.b16 %v2512, %v2511
  %v2534 = vpack.c.b16 %v2514, %v2513
  %v2535 = vpack.c.b16 %v2516, %v2515
  %v2536 = vpack.c.b16 %v2518, %v2517
  %v2537 = vpack.c.b16 %v2520, %v2519
  %v2538 = vpack.c.b16 %v2522, %v2521
  %2555 = vmatprep.subr.bf16.mxu0 0
  %2556 = vmatpush1.bf16.msra.mxu0 %v2523
  %2557 = vmatprep.subr.bf16.mxu0 0
  %2558 = vmatpush1.bf16.msra.mxu0 %v2524
  %2559 = vmatprep.subr.bf16.mxu0 0
  %2560 = vmatpush1.bf16.msra.mxu0 %v2525
  %2561 = vmatprep.subr.bf16.mxu0 0
  %2562 = vmatpush1.bf16.msra.mxu0 %v2526
  %2563 = vmatprep.subr.bf16.mxu0 0
  %2564 = vmatpush1.bf16.msra.mxu0 %v2527
  %2565 = vmatprep.subr.bf16.mxu0 0
  %2566 = vmatpush1.bf16.msra.mxu0 %v2528
  %2567 = vmatprep.subr.bf16.mxu0 0
  %2568 = vmatpush1.bf16.msra.mxu0 %v2529
  %2569 = vmatprep.subr.bf16.mxu0 0
  %2570 = vmatpush1.bf16.msra.mxu0 %v2530
  %2571 = vmatprep.subr.bf16.mxu0 0
  %2572 = vmatpush1.bf16.msra.mxu0 %v2531
  %2573 = vmatprep.subr.bf16.mxu0 0
  %2574 = vmatpush1.bf16.msra.mxu0 %v2532
  %2575 = vmatprep.subr.bf16.mxu0 0
  %2576 = vmatpush1.bf16.msra.mxu0 %v2533
  %2577 = vmatprep.subr.bf16.mxu0 0
  %2578 = vmatpush1.bf16.msra.mxu0 %v2534
  %2579 = vmatprep.subr.bf16.mxu0 0
  %2580 = vmatpush1.bf16.msra.mxu0 %v2535
  %2581 = vmatprep.subr.bf16.mxu0 0
  %2582 = vmatpush1.bf16.msra.mxu0 %v2536
  %2583 = vmatprep.subr.bf16.mxu0 0
  %2584 = vmatpush1.bf16.msra.mxu0 %v2537
  %2585 = vmatprep.subr.bf16.mxu0 0
  %2586 = vmatpush1.bf16.msra.mxu0 %v2538
  %2587 = vmatprep.mubr.bf16.mxu0 %v2419
  %2588 = vmatmul.mubr.bf16.gmra.mrb[0].mxu0 %v2418
  %v2589 = vpop.f32.mrb[0].mxu0
  %v2590 = vadd.f32 %v2457, %v2589
  %v2591 = vpop.f32.mrb[0].mxu0
  %v2592 = vpop.f32.mrb[0].mxu0
  %v2593 = vadd.f32 %v2457, %v2592
  %v2594 = vpop.f32.mrb[0].mxu0
  %2595 = vdwg.mxu0
  %2596 = vst [vmem:[%s11 + $0x10] sm:$0xff] %v2590
  %2597 = vst [vmem:[%s11 + $0x18] sm:$0xff] %v2593
  // Predicated region
  $region46: #{res_core_blocks_forward.76} parent=0 // pred_check
    _
  $region47: #{res_core_blocks_forward.76} parent=0 // pred_check_branch
    %2599 = sbr.rel (0) target = $region49
  $region48: #{res_core_blocks_forward.76} parent=0 // pred_region
    _
  $region49: #{res_core_blocks_forward.76} parent=0 // pred_fallthru
    _
  // Predicated region
  $region50: #{res_core_blocks_forward.76} parent=0 // pred_check
    _
  $region51: #{res_core_blocks_forward.76} parent=0 // pred_check_branch
    %2601 = sbr.rel (0) target = $region53
  $region52: #{res_core_blocks_forward.76} parent=0 // pred_region
    _
  $region53: #{res_core_blocks_forward.76} parent=0 // pred_fallthru
    _

</llo_original>
